<compile_context>
chip_gen: v5e
topology: v5e:2x2
jax: 0.10.0
libtpu: 0.0.40
codegen_flags: <defaults>
</compile_context>

<pallas_src>
import jax
import jax.numpy as jnp
import numpy as np
from jax.experimental import pallas as pl
from jax.experimental.pallas import tpu as pltpu

# static dimensions implied by the module (fc1 = 1620 forces 48x48 inputs)
IMG = 48                     # input height/width
K = 5                        # conv kernel size
C1, C2 = 10, 20              # conv output channels
H1 = (IMG - K + 1) // 2      # 22 : conv1 spatial size after 2x2 pool
H2 = (H1 - K + 1) // 2       # 9  : conv2 spatial size after 2x2 pool
L1 = H1 * C1                 # 220: a1 lane width  (pooled col, channel)
L2 = H2 * C2                 # 180: a2 lane width  (pooled col, channel)
FC_H, FC_O = 50, 7


# ---------------------------------------------------------------------------
# fused kernel: conv1+pool+relu -> conv2+pool+relu -> fc1+relu -> fc2
# ---------------------------------------------------------------------------
def _fused_net_kernel(x_ref, w1_ref, b1_ref, w2_ref, b2_ref,
                      f1_ref, fb1_ref, f2_ref, fb2_ref, o_ref):
    """Full forward for one block of B samples, entirely in VMEM.

    x_ref : (4, 1, 12*B, 48) f32  image rows split by (row mod 4); index in
                                  dim 2 is t*B + b with t = row // 4.
    w1_ref: (5, 48, 2*L1)  bf16   conv1 banded weights (per kh); columns are
                                  (col-parity, pooled col, cout).
    w2_ref: (5, L1, 2*L2)  bf16   conv2 banded weights; rows match a1 lanes.
    f1_ref: (9, L2, 50)    bf16   fc1 weights split by pooled row n.
    f2_ref: (50, 7)        bf16   fc2 weights.
    b*_ref: f32 biases, pre-tiled along lanes.
    o_ref : (B, 7) f32 logits.
    """
    B = x_ref.shape[2] // 12
    xv = x_ref[...]                                    # (4, 1, 12B, 48) f32

    # ---- stage 1: conv1 + 2x2 maxpool + relu -------------------------------
    # conv-output row oh = 4*m2 + 2*q + r (q = pooled-row parity, r = in-pool
    # row).  The image row needed for kernel row kh is 4*(m2+d) + e with
    # s = 2q + r + kh, e = s % 4, d = s // 4  ->  a contiguous 8-aligned slice.
    acc1 = [[None, None], [None, None]]                # [q][r] -> (11B, 2*L1)
    for kh in range(K):
        w1k = w1_ref[kh]                               # (48, 2*L1) bf16
        for q in range(2):
            for r in range(2):
                s = 2 * q + r + kh
                e, d = s % 4, s // 4
                lhs = xv[e, 0, d * B:(d + 11) * B, :].astype(jnp.bfloat16)
                pp = jnp.dot(lhs, w1k, preferred_element_type=jnp.float32)
                acc1[q][r] = pp if acc1[q][r] is None else acc1[q][r] + pp
    a1 = []                                            # a1[q]: (11B, L1) f32
    for q in range(2):
        y = jnp.maximum(jnp.maximum(acc1[q][0][:, :L1], acc1[q][0][:, L1:]),
                        jnp.maximum(acc1[q][1][:, :L1], acc1[q][1][:, L1:]))
        a1.append(jnp.maximum(y + b1_ref[...], 0.0))   # bias + ReLU

    # ---- stage 2: conv2 (+ eval-mode Dropout2d = identity) + pool + relu ---
    # conv2 output row i = 2*n + pi needs a1 row i + kh, which lives in
    # a1[(pi+kh) % 2] at pooled-row offset (pi+kh)//2 -> contiguous row slice.
    acc2 = [None, None]                                # [pi] -> (9B, 2*L2)
    for kh in range(K):
        w2k = w2_ref[kh]                               # (L1, 2*L2) bf16
        for pi in range(2):
            s = pi + kh
            d = s // 2
            lhs = a1[s % 2][d * B:(d + 9) * B, :].astype(jnp.bfloat16)
            pp = jnp.dot(lhs, w2k, preferred_element_type=jnp.float32)
            acc2[pi] = pp if acc2[pi] is None else acc2[pi] + pp
    y2 = jnp.maximum(jnp.maximum(acc2[0][:, :L2], acc2[0][:, L2:]),
                     jnp.maximum(acc2[1][:, :L2], acc2[1][:, L2:]))
    a2 = jnp.maximum(y2 + b2_ref[...], 0.0)            # (9B, L2) f32

    # ---- fc1 + relu (+ eval-mode dropout = identity) + fc2 -----------------
    h = None
    for n in range(H2):                                # accumulate over pooled rows
        blk = a2[n * B:(n + 1) * B, :].astype(jnp.bfloat16)       # (B, L2)
        pp = jnp.dot(blk, f1_ref[n], preferred_element_type=jnp.float32)
        h = pp if h is None else h + pp
    h = jnp.maximum(h + fb1_ref[...], 0.0).astype(jnp.bfloat16)   # (B, 50)
    logits = jnp.dot(h, f2_ref[...], preferred_element_type=jnp.float32)
    o_ref[...] = (logits + fb2_ref[...]).astype(o_ref.dtype)


# ---------------------------------------------------------------------------
# wrapper-side weight re-layout (tiny, weights only -- no per-sample blow-up)
# ---------------------------------------------------------------------------
def _conv1_bands(w):
    """(10,1,5,5) conv1 weight -> (5, 48, 2*L1) banded matrices, bf16."""
    wcol = np.arange(IMG)
    ow = 2 * np.arange(H1)[None, :] + np.arange(2)[:, None]       # (2, 22)
    kw = wcol[:, None, None] - ow[None, :, :]                     # (48, 2, 22)
    sel = ((kw >= 0) & (kw < K))[..., None] & \
          (np.arange(K)[None, None, None, :] == np.clip(kw, 0, K - 1)[..., None])
    sel = jnp.asarray(sel.astype(np.float32))                     # (48, 2, 22, 5)
    band = jnp.einsum('wpoq,chq->hwpoc', sel, w[:, 0])            # (5,48,2,22,10)
    return band.reshape(K, IMG, 2 * L1).astype(jnp.bfloat16)


def _conv2_bands(w):
    """(20,10,5,5) conv2 weight -> (5, L1, 2*L2) banded matrices, bf16."""
    u = np.arange(H1)
    j = 2 * np.arange(H2)[None, :] + np.arange(2)[:, None]        # (2, 9)
    kw = u[:, None, None] - j[None, :, :]                         # (22, 2, 9)
    sel = ((kw >= 0) & (kw < K))[..., None] & \
          (np.arange(K)[None, None, None, :] == np.clip(kw, 0, K - 1)[..., None])
    sel = jnp.asarray(sel.astype(np.float32))                     # (22, 2, 9, 5)
    band = jnp.einsum('upmq,ochq->hucpmo', sel, w)                # (5,22,10,2,9,20)
    return band.reshape(K, L1, 2 * L2).astype(jnp.bfloat16)


@jax.jit
def net_forward(x, p):
    """x: (N, 1, 48, 48) f32 NCHW (as in the PyTorch module) -> (N, 7) logits."""
    N = x.shape[0]
    B = 8 if N <= 8 else (16 if N <= 16 else 32)      # samples per grid step
    npad = (-N) % B
    npb = (N + npad) // B

    # images: pad batch, split rows by (row mod 4) and fold (row//4, sample)
    # into one dim so every in-kernel slice is contiguous and 8-aligned.
    xs = x[:, 0]                                                  # (N, 48, 48)
    if npad:
        xs = jnp.pad(xs, ((0, npad), (0, 0), (0, 0)))
    x6 = xs.reshape(npb, B, 12, 4, IMG).transpose(3, 0, 2, 1, 4)
    x6 = x6.reshape(4, npb, 12 * B, IMG)                          # (4, nb, 12B, 48)

    # weights -> banded / lane-ordered bf16 matrices; biases tiled over lanes
    w1b = _conv1_bands(p['conv1_w'])                              # (5, 48, 440)
    w2b = _conv2_bands(p['conv2_w'])                              # (5, 220, 360)
    b1l = jnp.tile(p['conv1_b'], H1).reshape(1, L1)               # (1, 220)
    b2l = jnp.tile(p['conv2_b'], H2).reshape(1, L2)               # (1, 180)
    # fc1: PyTorch flattens (c, h, w); our a2 has rows (h, b), lanes (w, c)
    f1 = p['fc1_w'].reshape(FC_H, C2, H2, H2).transpose(2, 3, 1, 0)
    f1 = f1.reshape(H2, L2, FC_H).astype(jnp.bfloat16)            # (9, 180, 50)
    fb1 = p['fc1_b'].reshape(1, FC_H)
    f2 = p['fc2_w'].T.astype(jnp.bfloat16)                        # (50, 7)
    fb2 = p['fc2_b'].reshape(1, FC_O)

    out = pl.pallas_call(
        _fused_net_kernel,
        out_shape=jax.ShapeDtypeStruct((npb * B, FC_O), jnp.float32),
        grid=(npb,),
        in_specs=[
            pl.BlockSpec((4, 1, 12 * B, IMG), lambda i: (0, i, 0, 0)),
            pl.BlockSpec((K, IMG, 2 * L1), lambda i: (0, 0, 0)),
            pl.BlockSpec((1, L1), lambda i: (0, 0)),
            pl.BlockSpec((K, L1, 2 * L2), lambda i: (0, 0, 0)),
            pl.BlockSpec((1, L2), lambda i: (0, 0)),
            pl.BlockSpec((H2, L2, FC_H), lambda i: (0, 0, 0)),
            pl.BlockSpec((1, FC_H), lambda i: (0, 0)),
            pl.BlockSpec((FC_H, FC_O), lambda i: (0, 0)),
            pl.BlockSpec((1, FC_O), lambda i: (0, 0)),
        ],
        out_specs=pl.BlockSpec((B, FC_O), lambda i: (i, 0)),
        compiler_params=pltpu.CompilerParams(
            dimension_semantics=("parallel",)),   # v7x: shard batch over both TCs
    )(x6, w1b, b1l, w2b, b2l, f1, fb1, f2, fb2)
    return out[:N]


# ---------------------------------------------------------------------------
# pure-JAX reference (matches PyTorch eval-mode forward) for validation
# ---------------------------------------------------------------------------
def ref_forward(x, p):
    def conv(x_, w, b):
        y = jax.lax.conv_general_dilated(
            x_, w, (1, 1), 'VALID', dimension_numbers=('NCHW', 'OIHW', 'NCHW'))
        return y + b[None, :, None, None]

    def pool2(x_):
        return jax.lax.reduce_window(x_, -jnp.inf, jax.lax.max,
                                     (1, 1, 2, 2), (1, 1, 2, 2), 'VALID')

    y = jax.nn.relu(pool2(conv(x, p['conv1_w'], p['conv1_b'])))
    y = jax.nn.relu(pool2(conv(y, p['conv2_w'], p['conv2_b'])))
    y = y.reshape(y.shape[0], -1)
    y = jax.nn.relu(y @ p['fc1_w'].T + p['fc1_b'])
    return y @ p['fc2_w'].T + p['fc2_b']


def make_params(key):
    ks = jax.random.split(key, 8)
    return {
        'conv1_w': jax.random.normal(ks[0], (10, 1, 5, 5), jnp.float32) * 0.2,
        'conv1_b': jax.random.normal(ks[1], (10,), jnp.float32) * 0.1,
        'conv2_w': jax.random.normal(ks[2], (20, 10, 5, 5), jnp.float32) * 0.06,
        'conv2_b': jax.random.normal(ks[3], (20,), jnp.float32) * 0.1,
        'fc1_w': jax.random.normal(ks[4], (50, 1620), jnp.float32) * 0.02,
        'fc1_b': jax.random.normal(ks[5], (50,), jnp.float32) * 0.1,
        'fc2_w': jax.random.normal(ks[6], (7, 50), jnp.float32) * 0.1,
        'fc2_b': jax.random.normal(ks[7], (7,), jnp.float32) * 0.1,
    }


if __name__ == "__main__":
    key = jax.random.PRNGKey(0)
    pkey, xkey = jax.random.split(key)
    params = make_params(pkey)
    x = jax.random.normal(xkey, (2, 1, 48, 48), jnp.float32)

    out = jax.block_until_ready(net_forward(x, params))
    assert out.shape == (2, 7), out.shape

    ref = jax.block_until_ready(ref_forward(x, params))
    # bf16 matmul operands with f32 accumulation -> slightly looser tolerance
    np.testing.assert_allclose(np.asarray(out), np.asarray(ref),
                               rtol=2e-2, atol=3e-2)
    print("KERNEL_OK")
</pallas_src>

<mosaic_0001>
module attributes {stable_mosaic.version = 11 : i64} {
  func.func @_fused_net_kernel(%arg0: i32, %arg1: memref<4x1x96x48xf32, #tpu.memory_space<vmem>>, %arg2: memref<5x48x440xbf16, #tpu.memory_space<vmem>>, %arg3: memref<1x220xf32, #tpu.memory_space<vmem>>, %arg4: memref<5x220x360xbf16, #tpu.memory_space<vmem>>, %arg5: memref<1x180xf32, #tpu.memory_space<vmem>>, %arg6: memref<9x180x50xbf16, #tpu.memory_space<vmem>>, %arg7: memref<1x50xf32, #tpu.memory_space<vmem>>, %arg8: memref<50x7xbf16, #tpu.memory_space<vmem>>, %arg9: memref<1x7xf32, #tpu.memory_space<vmem>>, %arg10: memref<8x7xf32, #tpu.memory_space<vmem>>) attributes {dimension_semantics = [#tpu.dimension_semantics<parallel>], iteration_bounds = array<i64: 1>, scalar_prefetch = 0 : i64, scratch_operands = 0 : i64, tpu.core_type = #tpu.core_type<tc>, window_params = [{transform_indices = @transform_0, window_bounds = array<i64: 4, 1, 96, 48>}, {pipeline_mode = #tpu.pipeline_mode<synchronous>, transform_indices = @transform_1, window_bounds = array<i64: 5, 48, 440>}, {pipeline_mode = #tpu.pipeline_mode<synchronous>, transform_indices = @transform_2, window_bounds = array<i64: 1, 220>}, {pipeline_mode = #tpu.pipeline_mode<synchronous>, transform_indices = @transform_3, window_bounds = array<i64: 5, 220, 360>}, {pipeline_mode = #tpu.pipeline_mode<synchronous>, transform_indices = @transform_4, window_bounds = array<i64: 1, 180>}, {pipeline_mode = #tpu.pipeline_mode<synchronous>, transform_indices = @transform_5, window_bounds = array<i64: 9, 180, 50>}, {pipeline_mode = #tpu.pipeline_mode<synchronous>, transform_indices = @transform_6, window_bounds = array<i64: 1, 50>}, {pipeline_mode = #tpu.pipeline_mode<synchronous>, transform_indices = @transform_7, window_bounds = array<i64: 50, 7>}, {pipeline_mode = #tpu.pipeline_mode<synchronous>, transform_indices = @transform_8, window_bounds = array<i64: 1, 7>}, {transform_indices = @transform_9, window_bounds = array<i64: 8, 7>}]} {
    %c0 = arith.constant 0 : index
    %c0_0 = arith.constant 0 : index
    %c0_1 = arith.constant 0 : index
    %c0_2 = arith.constant 0 : index
    %0 = vector.load %arg1[%c0, %c0_0, %c0_1, %c0_2] : memref<4x1x96x48xf32, #tpu.memory_space<vmem>>, vector<4x1x96x48xf32>
    %c0_3 = arith.constant 0 : index
    %c0_4 = arith.constant 0 : index
    %c0_5 = arith.constant 0 : index
    %1 = vector.load %arg2[%c0_3, %c0_4, %c0_5] : memref<5x48x440xbf16, #tpu.memory_space<vmem>>, vector<1x48x440xbf16>
    %2 = vector.shape_cast %1 : vector<1x48x440xbf16> to vector<48x440xbf16>
    %3 = vector.extract_strided_slice %0 {offsets = [0, 0, 0, 0], sizes = [1, 1, 88, 48], strides = [1, 1, 1, 1]} : vector<4x1x96x48xf32> to vector<1x1x88x48xf32>
    %4 = vector.shape_cast %3 : vector<1x1x88x48xf32> to vector<88x48xf32>
    %5 = arith.truncf %4 : vector<88x48xf32> to vector<88x48xbf16>
    %cst = arith.constant dense<0.000000e+00> : vector<88x440xf32>
    %6 = tpu.matmul %5, %2, %cst {dimension_numbers = #tpu.dot_dimension_numbers<[1], [0], [0], [1], [0, 0, 1, 1], [], []>} : vector<88x48xbf16>, vector<48x440xbf16>, vector<88x440xf32> -> vector<88x440xf32>
    %7 = vector.extract_strided_slice %0 {offsets = [1, 0, 0, 0], sizes = [1, 1, 88, 48], strides = [1, 1, 1, 1]} : vector<4x1x96x48xf32> to vector<1x1x88x48xf32>
    %8 = vector.shape_cast %7 : vector<1x1x88x48xf32> to vector<88x48xf32>
    %9 = arith.truncf %8 : vector<88x48xf32> to vector<88x48xbf16>
    %cst_6 = arith.constant dense<0.000000e+00> : vector<88x440xf32>
    %10 = tpu.matmul %9, %2, %cst_6 {dimension_numbers = #tpu.dot_dimension_numbers<[1], [0], [0], [1], [0, 0, 1, 1], [], []>} : vector<88x48xbf16>, vector<48x440xbf16>, vector<88x440xf32> -> vector<88x440xf32>
    %11 = vector.extract_strided_slice %0 {offsets = [2, 0, 0, 0], sizes = [1, 1, 88, 48], strides = [1, 1, 1, 1]} : vector<4x1x96x48xf32> to vector<1x1x88x48xf32>
    %12 = vector.shape_cast %11 : vector<1x1x88x48xf32> to vector<88x48xf32>
    %13 = arith.truncf %12 : vector<88x48xf32> to vector<88x48xbf16>
    %cst_7 = arith.constant dense<0.000000e+00> : vector<88x440xf32>
    %14 = tpu.matmul %13, %2, %cst_7 {dimension_numbers = #tpu.dot_dimension_numbers<[1], [0], [0], [1], [0, 0, 1, 1], [], []>} : vector<88x48xbf16>, vector<48x440xbf16>, vector<88x440xf32> -> vector<88x440xf32>
    %15 = vector.extract_strided_slice %0 {offsets = [3, 0, 0, 0], sizes = [1, 1, 88, 48], strides = [1, 1, 1, 1]} : vector<4x1x96x48xf32> to vector<1x1x88x48xf32>
    %16 = vector.shape_cast %15 : vector<1x1x88x48xf32> to vector<88x48xf32>
    %17 = arith.truncf %16 : vector<88x48xf32> to vector<88x48xbf16>
    %cst_8 = arith.constant dense<0.000000e+00> : vector<88x440xf32>
    %18 = tpu.matmul %17, %2, %cst_8 {dimension_numbers = #tpu.dot_dimension_numbers<[1], [0], [0], [1], [0, 0, 1, 1], [], []>} : vector<88x48xbf16>, vector<48x440xbf16>, vector<88x440xf32> -> vector<88x440xf32>
    %c1 = arith.constant 1 : index
    %c0_9 = arith.constant 0 : index
    %c0_10 = arith.constant 0 : index
    %19 = vector.load %arg2[%c1, %c0_9, %c0_10] : memref<5x48x440xbf16, #tpu.memory_space<vmem>>, vector<1x48x440xbf16>
    %20 = vector.shape_cast %19 : vector<1x48x440xbf16> to vector<48x440xbf16>
    %21 = vector.extract_strided_slice %0 {offsets = [1, 0, 0, 0], sizes = [1, 1, 88, 48], strides = [1, 1, 1, 1]} : vector<4x1x96x48xf32> to vector<1x1x88x48xf32>
    %22 = vector.shape_cast %21 : vector<1x1x88x48xf32> to vector<88x48xf32>
    %23 = arith.truncf %22 : vector<88x48xf32> to vector<88x48xbf16>
    %cst_11 = arith.constant dense<0.000000e+00> : vector<88x440xf32>
    %24 = tpu.matmul %23, %20, %cst_11 {dimension_numbers = #tpu.dot_dimension_numbers<[1], [0], [0], [1], [0, 0, 1, 1], [], []>} : vector<88x48xbf16>, vector<48x440xbf16>, vector<88x440xf32> -> vector<88x440xf32>
    %25 = arith.addf %6, %24 : vector<88x440xf32>
    %26 = vector.extract_strided_slice %0 {offsets = [2, 0, 0, 0], sizes = [1, 1, 88, 48], strides = [1, 1, 1, 1]} : vector<4x1x96x48xf32> to vector<1x1x88x48xf32>
    %27 = vector.shape_cast %26 : vector<1x1x88x48xf32> to vector<88x48xf32>
    %28 = arith.truncf %27 : vector<88x48xf32> to vector<88x48xbf16>
    %cst_12 = arith.constant dense<0.000000e+00> : vector<88x440xf32>
    %29 = tpu.matmul %28, %20, %cst_12 {dimension_numbers = #tpu.dot_dimension_numbers<[1], [0], [0], [1], [0, 0, 1, 1], [], []>} : vector<88x48xbf16>, vector<48x440xbf16>, vector<88x440xf32> -> vector<88x440xf32>
    %30 = arith.addf %10, %29 : vector<88x440xf32>
    %31 = vector.extract_strided_slice %0 {offsets = [3, 0, 0, 0], sizes = [1, 1, 88, 48], strides = [1, 1, 1, 1]} : vector<4x1x96x48xf32> to vector<1x1x88x48xf32>
    %32 = vector.shape_cast %31 : vector<1x1x88x48xf32> to vector<88x48xf32>
    %33 = arith.truncf %32 : vector<88x48xf32> to vector<88x48xbf16>
    %cst_13 = arith.constant dense<0.000000e+00> : vector<88x440xf32>
    %34 = tpu.matmul %33, %20, %cst_13 {dimension_numbers = #tpu.dot_dimension_numbers<[1], [0], [0], [1], [0, 0, 1, 1], [], []>} : vector<88x48xbf16>, vector<48x440xbf16>, vector<88x440xf32> -> vector<88x440xf32>
    %35 = arith.addf %14, %34 : vector<88x440xf32>
    %36 = vector.extract_strided_slice %0 {offsets = [0, 0, 8, 0], sizes = [1, 1, 88, 48], strides = [1, 1, 1, 1]} : vector<4x1x96x48xf32> to vector<1x1x88x48xf32>
    %37 = vector.shape_cast %36 : vector<1x1x88x48xf32> to vector<88x48xf32>
    %38 = arith.truncf %37 : vector<88x48xf32> to vector<88x48xbf16>
    %cst_14 = arith.constant dense<0.000000e+00> : vector<88x440xf32>
    %39 = tpu.matmul %38, %20, %cst_14 {dimension_numbers = #tpu.dot_dimension_numbers<[1], [0], [0], [1], [0, 0, 1, 1], [], []>} : vector<88x48xbf16>, vector<48x440xbf16>, vector<88x440xf32> -> vector<88x440xf32>
    %40 = arith.addf %18, %39 : vector<88x440xf32>
    %c2 = arith.constant 2 : index
    %c0_15 = arith.constant 0 : index
    %c0_16 = arith.constant 0 : index
    %41 = vector.load %arg2[%c2, %c0_15, %c0_16] : memref<5x48x440xbf16, #tpu.memory_space<vmem>>, vector<1x48x440xbf16>
    %42 = vector.shape_cast %41 : vector<1x48x440xbf16> to vector<48x440xbf16>
    %43 = vector.extract_strided_slice %0 {offsets = [2, 0, 0, 0], sizes = [1, 1, 88, 48], strides = [1, 1, 1, 1]} : vector<4x1x96x48xf32> to vector<1x1x88x48xf32>
    %44 = vector.shape_cast %43 : vector<1x1x88x48xf32> to vector<88x48xf32>
    %45 = arith.truncf %44 : vector<88x48xf32> to vector<88x48xbf16>
    %cst_17 = arith.constant dense<0.000000e+00> : vector<88x440xf32>
    %46 = tpu.matmul %45, %42, %cst_17 {dimension_numbers = #tpu.dot_dimension_numbers<[1], [0], [0], [1], [0, 0, 1, 1], [], []>} : vector<88x48xbf16>, vector<48x440xbf16>, vector<88x440xf32> -> vector<88x440xf32>
    %47 = arith.addf %25, %46 : vector<88x440xf32>
    %48 = vector.extract_strided_slice %0 {offsets = [3, 0, 0, 0], sizes = [1, 1, 88, 48], strides = [1, 1, 1, 1]} : vector<4x1x96x48xf32> to vector<1x1x88x48xf32>
    %49 = vector.shape_cast %48 : vector<1x1x88x48xf32> to vector<88x48xf32>
    %50 = arith.truncf %49 : vector<88x48xf32> to vector<88x48xbf16>
    %cst_18 = arith.constant dense<0.000000e+00> : vector<88x440xf32>
    %51 = tpu.matmul %50, %42, %cst_18 {dimension_numbers = #tpu.dot_dimension_numbers<[1], [0], [0], [1], [0, 0, 1, 1], [], []>} : vector<88x48xbf16>, vector<48x440xbf16>, vector<88x440xf32> -> vector<88x440xf32>
    %52 = arith.addf %30, %51 : vector<88x440xf32>
    %53 = vector.extract_strided_slice %0 {offsets = [0, 0, 8, 0], sizes = [1, 1, 88, 48], strides = [1, 1, 1, 1]} : vector<4x1x96x48xf32> to vector<1x1x88x48xf32>
    %54 = vector.shape_cast %53 : vector<1x1x88x48xf32> to vector<88x48xf32>
    %55 = arith.truncf %54 : vector<88x48xf32> to vector<88x48xbf16>
    %cst_19 = arith.constant dense<0.000000e+00> : vector<88x440xf32>
    %56 = tpu.matmul %55, %42, %cst_19 {dimension_numbers = #tpu.dot_dimension_numbers<[1], [0], [0], [1], [0, 0, 1, 1], [], []>} : vector<88x48xbf16>, vector<48x440xbf16>, vector<88x440xf32> -> vector<88x440xf32>
    %57 = arith.addf %35, %56 : vector<88x440xf32>
    %58 = vector.extract_strided_slice %0 {offsets = [1, 0, 8, 0], sizes = [1, 1, 88, 48], strides = [1, 1, 1, 1]} : vector<4x1x96x48xf32> to vector<1x1x88x48xf32>
    %59 = vector.shape_cast %58 : vector<1x1x88x48xf32> to vector<88x48xf32>
    %60 = arith.truncf %59 : vector<88x48xf32> to vector<88x48xbf16>
    %cst_20 = arith.constant dense<0.000000e+00> : vector<88x440xf32>
    %61 = tpu.matmul %60, %42, %cst_20 {dimension_numbers = #tpu.dot_dimension_numbers<[1], [0], [0], [1], [0, 0, 1, 1], [], []>} : vector<88x48xbf16>, vector<48x440xbf16>, vector<88x440xf32> -> vector<88x440xf32>
    %62 = arith.addf %40, %61 : vector<88x440xf32>
    %c3 = arith.constant 3 : index
    %c0_21 = arith.constant 0 : index
    %c0_22 = arith.constant 0 : index
    %63 = vector.load %arg2[%c3, %c0_21, %c0_22] : memref<5x48x440xbf16, #tpu.memory_space<vmem>>, vector<1x48x440xbf16>
    %64 = vector.shape_cast %63 : vector<1x48x440xbf16> to vector<48x440xbf16>
    %65 = vector.extract_strided_slice %0 {offsets = [3, 0, 0, 0], sizes = [1, 1, 88, 48], strides = [1, 1, 1, 1]} : vector<4x1x96x48xf32> to vector<1x1x88x48xf32>
    %66 = vector.shape_cast %65 : vector<1x1x88x48xf32> to vector<88x48xf32>
    %67 = arith.truncf %66 : vector<88x48xf32> to vector<88x48xbf16>
    %cst_23 = arith.constant dense<0.000000e+00> : vector<88x440xf32>
    %68 = tpu.matmul %67, %64, %cst_23 {dimension_numbers = #tpu.dot_dimension_numbers<[1], [0], [0], [1], [0, 0, 1, 1], [], []>} : vector<88x48xbf16>, vector<48x440xbf16>, vector<88x440xf32> -> vector<88x440xf32>
    %69 = arith.addf %47, %68 : vector<88x440xf32>
    %70 = vector.extract_strided_slice %0 {offsets = [0, 0, 8, 0], sizes = [1, 1, 88, 48], strides = [1, 1, 1, 1]} : vector<4x1x96x48xf32> to vector<1x1x88x48xf32>
    %71 = vector.shape_cast %70 : vector<1x1x88x48xf32> to vector<88x48xf32>
    %72 = arith.truncf %71 : vector<88x48xf32> to vector<88x48xbf16>
    %cst_24 = arith.constant dense<0.000000e+00> : vector<88x440xf32>
    %73 = tpu.matmul %72, %64, %cst_24 {dimension_numbers = #tpu.dot_dimension_numbers<[1], [0], [0], [1], [0, 0, 1, 1], [], []>} : vector<88x48xbf16>, vector<48x440xbf16>, vector<88x440xf32> -> vector<88x440xf32>
    %74 = arith.addf %52, %73 : vector<88x440xf32>
    %75 = vector.extract_strided_slice %0 {offsets = [1, 0, 8, 0], sizes = [1, 1, 88, 48], strides = [1, 1, 1, 1]} : vector<4x1x96x48xf32> to vector<1x1x88x48xf32>
    %76 = vector.shape_cast %75 : vector<1x1x88x48xf32> to vector<88x48xf32>
    %77 = arith.truncf %76 : vector<88x48xf32> to vector<88x48xbf16>
    %cst_25 = arith.constant dense<0.000000e+00> : vector<88x440xf32>
    %78 = tpu.matmul %77, %64, %cst_25 {dimension_numbers = #tpu.dot_dimension_numbers<[1], [0], [0], [1], [0, 0, 1, 1], [], []>} : vector<88x48xbf16>, vector<48x440xbf16>, vector<88x440xf32> -> vector<88x440xf32>
    %79 = arith.addf %57, %78 : vector<88x440xf32>
    %80 = vector.extract_strided_slice %0 {offsets = [2, 0, 8, 0], sizes = [1, 1, 88, 48], strides = [1, 1, 1, 1]} : vector<4x1x96x48xf32> to vector<1x1x88x48xf32>
    %81 = vector.shape_cast %80 : vector<1x1x88x48xf32> to vector<88x48xf32>
    %82 = arith.truncf %81 : vector<88x48xf32> to vector<88x48xbf16>
    %cst_26 = arith.constant dense<0.000000e+00> : vector<88x440xf32>
    %83 = tpu.matmul %82, %64, %cst_26 {dimension_numbers = #tpu.dot_dimension_numbers<[1], [0], [0], [1], [0, 0, 1, 1], [], []>} : vector<88x48xbf16>, vector<48x440xbf16>, vector<88x440xf32> -> vector<88x440xf32>
    %84 = arith.addf %62, %83 : vector<88x440xf32>
    %c4 = arith.constant 4 : index
    %c0_27 = arith.constant 0 : index
    %c0_28 = arith.constant 0 : index
    %85 = vector.load %arg2[%c4, %c0_27, %c0_28] : memref<5x48x440xbf16, #tpu.memory_space<vmem>>, vector<1x48x440xbf16>
    %86 = vector.shape_cast %85 : vector<1x48x440xbf16> to vector<48x440xbf16>
    %87 = vector.extract_strided_slice %0 {offsets = [0, 0, 8, 0], sizes = [1, 1, 88, 48], strides = [1, 1, 1, 1]} : vector<4x1x96x48xf32> to vector<1x1x88x48xf32>
    %88 = vector.shape_cast %87 : vector<1x1x88x48xf32> to vector<88x48xf32>
    %89 = arith.truncf %88 : vector<88x48xf32> to vector<88x48xbf16>
    %cst_29 = arith.constant dense<0.000000e+00> : vector<88x440xf32>
    %90 = tpu.matmul %89, %86, %cst_29 {dimension_numbers = #tpu.dot_dimension_numbers<[1], [0], [0], [1], [0, 0, 1, 1], [], []>} : vector<88x48xbf16>, vector<48x440xbf16>, vector<88x440xf32> -> vector<88x440xf32>
    %91 = arith.addf %69, %90 : vector<88x440xf32>
    %92 = vector.extract_strided_slice %0 {offsets = [1, 0, 8, 0], sizes = [1, 1, 88, 48], strides = [1, 1, 1, 1]} : vector<4x1x96x48xf32> to vector<1x1x88x48xf32>
    %93 = vector.shape_cast %92 : vector<1x1x88x48xf32> to vector<88x48xf32>
    %94 = arith.truncf %93 : vector<88x48xf32> to vector<88x48xbf16>
    %cst_30 = arith.constant dense<0.000000e+00> : vector<88x440xf32>
    %95 = tpu.matmul %94, %86, %cst_30 {dimension_numbers = #tpu.dot_dimension_numbers<[1], [0], [0], [1], [0, 0, 1, 1], [], []>} : vector<88x48xbf16>, vector<48x440xbf16>, vector<88x440xf32> -> vector<88x440xf32>
    %96 = arith.addf %74, %95 : vector<88x440xf32>
    %97 = vector.extract_strided_slice %0 {offsets = [2, 0, 8, 0], sizes = [1, 1, 88, 48], strides = [1, 1, 1, 1]} : vector<4x1x96x48xf32> to vector<1x1x88x48xf32>
    %98 = vector.shape_cast %97 : vector<1x1x88x48xf32> to vector<88x48xf32>
    %99 = arith.truncf %98 : vector<88x48xf32> to vector<88x48xbf16>
    %cst_31 = arith.constant dense<0.000000e+00> : vector<88x440xf32>
    %100 = tpu.matmul %99, %86, %cst_31 {dimension_numbers = #tpu.dot_dimension_numbers<[1], [0], [0], [1], [0, 0, 1, 1], [], []>} : vector<88x48xbf16>, vector<48x440xbf16>, vector<88x440xf32> -> vector<88x440xf32>
    %101 = arith.addf %79, %100 : vector<88x440xf32>
    %102 = vector.extract_strided_slice %0 {offsets = [3, 0, 8, 0], sizes = [1, 1, 88, 48], strides = [1, 1, 1, 1]} : vector<4x1x96x48xf32> to vector<1x1x88x48xf32>
    %103 = vector.shape_cast %102 : vector<1x1x88x48xf32> to vector<88x48xf32>
    %104 = arith.truncf %103 : vector<88x48xf32> to vector<88x48xbf16>
    %cst_32 = arith.constant dense<0.000000e+00> : vector<88x440xf32>
    %105 = tpu.matmul %104, %86, %cst_32 {dimension_numbers = #tpu.dot_dimension_numbers<[1], [0], [0], [1], [0, 0, 1, 1], [], []>} : vector<88x48xbf16>, vector<48x440xbf16>, vector<88x440xf32> -> vector<88x440xf32>
    %106 = arith.addf %84, %105 : vector<88x440xf32>
    %107 = vector.extract_strided_slice %91 {offsets = [0, 0], sizes = [88, 220], strides = [1, 1]} : vector<88x440xf32> to vector<88x220xf32>
    %108 = vector.extract_strided_slice %91 {offsets = [0, 220], sizes = [88, 220], strides = [1, 1]} : vector<88x440xf32> to vector<88x220xf32>
    %109 = arith.maximumf %107, %108 : vector<88x220xf32>
    %110 = vector.extract_strided_slice %96 {offsets = [0, 0], sizes = [88, 220], strides = [1, 1]} : vector<88x440xf32> to vector<88x220xf32>
    %111 = vector.extract_strided_slice %96 {offsets = [0, 220], sizes = [88, 220], strides = [1, 1]} : vector<88x440xf32> to vector<88x220xf32>
    %112 = arith.maximumf %110, %111 : vector<88x220xf32>
    %113 = arith.maximumf %109, %112 : vector<88x220xf32>
    %c0_33 = arith.constant 0 : index
    %c0_34 = arith.constant 0 : index
    %114 = vector.load %arg3[%c0_33, %c0_34] : memref<1x220xf32, #tpu.memory_space<vmem>>, vector<1x220xf32>
    %115 = vector.broadcast %114 : vector<1x220xf32> to vector<88x220xf32>
    %116 = arith.addf %113, %115 : vector<88x220xf32>
    %cst_35 = arith.constant 0.000000e+00 : f32
    %117 = vector.broadcast %cst_35 : f32 to vector<88x220xf32>
    %118 = arith.maximumf %116, %117 : vector<88x220xf32>
    %119 = vector.extract_strided_slice %101 {offsets = [0, 0], sizes = [88, 220], strides = [1, 1]} : vector<88x440xf32> to vector<88x220xf32>
    %120 = vector.extract_strided_slice %101 {offsets = [0, 220], sizes = [88, 220], strides = [1, 1]} : vector<88x440xf32> to vector<88x220xf32>
    %121 = arith.maximumf %119, %120 : vector<88x220xf32>
    %122 = vector.extract_strided_slice %106 {offsets = [0, 0], sizes = [88, 220], strides = [1, 1]} : vector<88x440xf32> to vector<88x220xf32>
    %123 = vector.extract_strided_slice %106 {offsets = [0, 220], sizes = [88, 220], strides = [1, 1]} : vector<88x440xf32> to vector<88x220xf32>
    %124 = arith.maximumf %122, %123 : vector<88x220xf32>
    %125 = arith.maximumf %121, %124 : vector<88x220xf32>
    %c0_36 = arith.constant 0 : index
    %c0_37 = arith.constant 0 : index
    %126 = vector.load %arg3[%c0_36, %c0_37] : memref<1x220xf32, #tpu.memory_space<vmem>>, vector<1x220xf32>
    %127 = vector.broadcast %126 : vector<1x220xf32> to vector<88x220xf32>
    %128 = arith.addf %125, %127 : vector<88x220xf32>
    %cst_38 = arith.constant 0.000000e+00 : f32
    %129 = vector.broadcast %cst_38 : f32 to vector<88x220xf32>
    %130 = arith.maximumf %128, %129 : vector<88x220xf32>
    %c0_39 = arith.constant 0 : index
    %c0_40 = arith.constant 0 : index
    %c0_41 = arith.constant 0 : index
    %131 = vector.load %arg4[%c0_39, %c0_40, %c0_41] : memref<5x220x360xbf16, #tpu.memory_space<vmem>>, vector<1x220x360xbf16>
    %132 = vector.shape_cast %131 : vector<1x220x360xbf16> to vector<220x360xbf16>
    %133 = vector.extract_strided_slice %118 {offsets = [0, 0], sizes = [72, 220], strides = [1, 1]} : vector<88x220xf32> to vector<72x220xf32>
    %134 = arith.truncf %133 : vector<72x220xf32> to vector<72x220xbf16>
    %cst_42 = arith.constant dense<0.000000e+00> : vector<72x360xf32>
    %135 = tpu.matmul %134, %132, %cst_42 {dimension_numbers = #tpu.dot_dimension_numbers<[1], [0], [0], [1], [0, 0, 1, 1], [], []>} : vector<72x220xbf16>, vector<220x360xbf16>, vector<72x360xf32> -> vector<72x360xf32>
    %136 = vector.extract_strided_slice %130 {offsets = [0, 0], sizes = [72, 220], strides = [1, 1]} : vector<88x220xf32> to vector<72x220xf32>
    %137 = arith.truncf %136 : vector<72x220xf32> to vector<72x220xbf16>
    %cst_43 = arith.constant dense<0.000000e+00> : vector<72x360xf32>
    %138 = tpu.matmul %137, %132, %cst_43 {dimension_numbers = #tpu.dot_dimension_numbers<[1], [0], [0], [1], [0, 0, 1, 1], [], []>} : vector<72x220xbf16>, vector<220x360xbf16>, vector<72x360xf32> -> vector<72x360xf32>
    %c1_44 = arith.constant 1 : index
    %c0_45 = arith.constant 0 : index
    %c0_46 = arith.constant 0 : index
    %139 = vector.load %arg4[%c1_44, %c0_45, %c0_46] : memref<5x220x360xbf16, #tpu.memory_space<vmem>>, vector<1x220x360xbf16>
    %140 = vector.shape_cast %139 : vector<1x220x360xbf16> to vector<220x360xbf16>
    %141 = vector.extract_strided_slice %130 {offsets = [0, 0], sizes = [72, 220], strides = [1, 1]} : vector<88x220xf32> to vector<72x220xf32>
    %142 = arith.truncf %141 : vector<72x220xf32> to vector<72x220xbf16>
    %cst_47 = arith.constant dense<0.000000e+00> : vector<72x360xf32>
    %143 = tpu.matmul %142, %140, %cst_47 {dimension_numbers = #tpu.dot_dimension_numbers<[1], [0], [0], [1], [0, 0, 1, 1], [], []>} : vector<72x220xbf16>, vector<220x360xbf16>, vector<72x360xf32> -> vector<72x360xf32>
    %144 = arith.addf %135, %143 : vector<72x360xf32>
    %145 = vector.extract_strided_slice %118 {offsets = [8, 0], sizes = [72, 220], strides = [1, 1]} : vector<88x220xf32> to vector<72x220xf32>
    %146 = arith.truncf %145 : vector<72x220xf32> to vector<72x220xbf16>
    %cst_48 = arith.constant dense<0.000000e+00> : vector<72x360xf32>
    %147 = tpu.matmul %146, %140, %cst_48 {dimension_numbers = #tpu.dot_dimension_numbers<[1], [0], [0], [1], [0, 0, 1, 1], [], []>} : vector<72x220xbf16>, vector<220x360xbf16>, vector<72x360xf32> -> vector<72x360xf32>
    %148 = arith.addf %138, %147 : vector<72x360xf32>
    %c2_49 = arith.constant 2 : index
    %c0_50 = arith.constant 0 : index
    %c0_51 = arith.constant 0 : index
    %149 = vector.load %arg4[%c2_49, %c0_50, %c0_51] : memref<5x220x360xbf16, #tpu.memory_space<vmem>>, vector<1x220x360xbf16>
    %150 = vector.shape_cast %149 : vector<1x220x360xbf16> to vector<220x360xbf16>
    %151 = vector.extract_strided_slice %118 {offsets = [8, 0], sizes = [72, 220], strides = [1, 1]} : vector<88x220xf32> to vector<72x220xf32>
    %152 = arith.truncf %151 : vector<72x220xf32> to vector<72x220xbf16>
    %cst_52 = arith.constant dense<0.000000e+00> : vector<72x360xf32>
    %153 = tpu.matmul %152, %150, %cst_52 {dimension_numbers = #tpu.dot_dimension_numbers<[1], [0], [0], [1], [0, 0, 1, 1], [], []>} : vector<72x220xbf16>, vector<220x360xbf16>, vector<72x360xf32> -> vector<72x360xf32>
    %154 = arith.addf %144, %153 : vector<72x360xf32>
    %155 = vector.extract_strided_slice %130 {offsets = [8, 0], sizes = [72, 220], strides = [1, 1]} : vector<88x220xf32> to vector<72x220xf32>
    %156 = arith.truncf %155 : vector<72x220xf32> to vector<72x220xbf16>
    %cst_53 = arith.constant dense<0.000000e+00> : vector<72x360xf32>
    %157 = tpu.matmul %156, %150, %cst_53 {dimension_numbers = #tpu.dot_dimension_numbers<[1], [0], [0], [1], [0, 0, 1, 1], [], []>} : vector<72x220xbf16>, vector<220x360xbf16>, vector<72x360xf32> -> vector<72x360xf32>
    %158 = arith.addf %148, %157 : vector<72x360xf32>
    %c3_54 = arith.constant 3 : index
    %c0_55 = arith.constant 0 : index
    %c0_56 = arith.constant 0 : index
    %159 = vector.load %arg4[%c3_54, %c0_55, %c0_56] : memref<5x220x360xbf16, #tpu.memory_space<vmem>>, vector<1x220x360xbf16>
    %160 = vector.shape_cast %159 : vector<1x220x360xbf16> to vector<220x360xbf16>
    %161 = vector.extract_strided_slice %130 {offsets = [8, 0], sizes = [72, 220], strides = [1, 1]} : vector<88x220xf32> to vector<72x220xf32>
    %162 = arith.truncf %161 : vector<72x220xf32> to vector<72x220xbf16>
    %cst_57 = arith.constant dense<0.000000e+00> : vector<72x360xf32>
    %163 = tpu.matmul %162, %160, %cst_57 {dimension_numbers = #tpu.dot_dimension_numbers<[1], [0], [0], [1], [0, 0, 1, 1], [], []>} : vector<72x220xbf16>, vector<220x360xbf16>, vector<72x360xf32> -> vector<72x360xf32>
    %164 = arith.addf %154, %163 : vector<72x360xf32>
    %165 = vector.extract_strided_slice %118 {offsets = [16, 0], sizes = [72, 220], strides = [1, 1]} : vector<88x220xf32> to vector<72x220xf32>
    %166 = arith.truncf %165 : vector<72x220xf32> to vector<72x220xbf16>
    %cst_58 = arith.constant dense<0.000000e+00> : vector<72x360xf32>
    %167 = tpu.matmul %166, %160, %cst_58 {dimension_numbers = #tpu.dot_dimension_numbers<[1], [0], [0], [1], [0, 0, 1, 1], [], []>} : vector<72x220xbf16>, vector<220x360xbf16>, vector<72x360xf32> -> vector<72x360xf32>
    %168 = arith.addf %158, %167 : vector<72x360xf32>
    %c4_59 = arith.constant 4 : index
    %c0_60 = arith.constant 0 : index
    %c0_61 = arith.constant 0 : index
    %169 = vector.load %arg4[%c4_59, %c0_60, %c0_61] : memref<5x220x360xbf16, #tpu.memory_space<vmem>>, vector<1x220x360xbf16>
    %170 = vector.shape_cast %169 : vector<1x220x360xbf16> to vector<220x360xbf16>
    %171 = vector.extract_strided_slice %118 {offsets = [16, 0], sizes = [72, 220], strides = [1, 1]} : vector<88x220xf32> to vector<72x220xf32>
    %172 = arith.truncf %171 : vector<72x220xf32> to vector<72x220xbf16>
    %cst_62 = arith.constant dense<0.000000e+00> : vector<72x360xf32>
    %173 = tpu.matmul %172, %170, %cst_62 {dimension_numbers = #tpu.dot_dimension_numbers<[1], [0], [0], [1], [0, 0, 1, 1], [], []>} : vector<72x220xbf16>, vector<220x360xbf16>, vector<72x360xf32> -> vector<72x360xf32>
    %174 = arith.addf %164, %173 : vector<72x360xf32>
    %175 = vector.extract_strided_slice %130 {offsets = [16, 0], sizes = [72, 220], strides = [1, 1]} : vector<88x220xf32> to vector<72x220xf32>
    %176 = arith.truncf %175 : vector<72x220xf32> to vector<72x220xbf16>
    %cst_63 = arith.constant dense<0.000000e+00> : vector<72x360xf32>
    %177 = tpu.matmul %176, %170, %cst_63 {dimension_numbers = #tpu.dot_dimension_numbers<[1], [0], [0], [1], [0, 0, 1, 1], [], []>} : vector<72x220xbf16>, vector<220x360xbf16>, vector<72x360xf32> -> vector<72x360xf32>
    %178 = arith.addf %168, %177 : vector<72x360xf32>
    %179 = vector.extract_strided_slice %174 {offsets = [0, 0], sizes = [72, 180], strides = [1, 1]} : vector<72x360xf32> to vector<72x180xf32>
    %180 = vector.extract_strided_slice %174 {offsets = [0, 180], sizes = [72, 180], strides = [1, 1]} : vector<72x360xf32> to vector<72x180xf32>
    %181 = arith.maximumf %179, %180 : vector<72x180xf32>
    %182 = vector.extract_strided_slice %178 {offsets = [0, 0], sizes = [72, 180], strides = [1, 1]} : vector<72x360xf32> to vector<72x180xf32>
    %183 = vector.extract_strided_slice %178 {offsets = [0, 180], sizes = [72, 180], strides = [1, 1]} : vector<72x360xf32> to vector<72x180xf32>
    %184 = arith.maximumf %182, %183 : vector<72x180xf32>
    %185 = arith.maximumf %181, %184 : vector<72x180xf32>
    %c0_64 = arith.constant 0 : index
    %c0_65 = arith.constant 0 : index
    %186 = vector.load %arg5[%c0_64, %c0_65] : memref<1x180xf32, #tpu.memory_space<vmem>>, vector<1x180xf32>
    %187 = vector.broadcast %186 : vector<1x180xf32> to vector<72x180xf32>
    %188 = arith.addf %185, %187 : vector<72x180xf32>
    %cst_66 = arith.constant 0.000000e+00 : f32
    %189 = vector.broadcast %cst_66 : f32 to vector<72x180xf32>
    %190 = arith.maximumf %188, %189 : vector<72x180xf32>
    %191 = vector.extract_strided_slice %190 {offsets = [0, 0], sizes = [8, 180], strides = [1, 1]} : vector<72x180xf32> to vector<8x180xf32>
    %192 = arith.truncf %191 : vector<8x180xf32> to vector<8x180xbf16>
    %c0_67 = arith.constant 0 : index
    %c0_68 = arith.constant 0 : index
    %c0_69 = arith.constant 0 : index
    %193 = vector.load %arg6[%c0_67, %c0_68, %c0_69] : memref<9x180x50xbf16, #tpu.memory_space<vmem>>, vector<1x180x50xbf16>
    %194 = vector.shape_cast %193 : vector<1x180x50xbf16> to vector<180x50xbf16>
    %cst_70 = arith.constant dense<0.000000e+00> : vector<8x50xf32>
    %195 = tpu.matmul %192, %194, %cst_70 {dimension_numbers = #tpu.dot_dimension_numbers<[1], [0], [0], [1], [0, 0, 1, 1], [], []>} : vector<8x180xbf16>, vector<180x50xbf16>, vector<8x50xf32> -> vector<8x50xf32>
    %196 = vector.extract_strided_slice %190 {offsets = [8, 0], sizes = [8, 180], strides = [1, 1]} : vector<72x180xf32> to vector<8x180xf32>
    %197 = arith.truncf %196 : vector<8x180xf32> to vector<8x180xbf16>
    %c1_71 = arith.constant 1 : index
    %c0_72 = arith.constant 0 : index
    %c0_73 = arith.constant 0 : index
    %198 = vector.load %arg6[%c1_71, %c0_72, %c0_73] : memref<9x180x50xbf16, #tpu.memory_space<vmem>>, vector<1x180x50xbf16>
    %199 = vector.shape_cast %198 : vector<1x180x50xbf16> to vector<180x50xbf16>
    %cst_74 = arith.constant dense<0.000000e+00> : vector<8x50xf32>
    %200 = tpu.matmul %197, %199, %cst_74 {dimension_numbers = #tpu.dot_dimension_numbers<[1], [0], [0], [1], [0, 0, 1, 1], [], []>} : vector<8x180xbf16>, vector<180x50xbf16>, vector<8x50xf32> -> vector<8x50xf32>
    %201 = arith.addf %195, %200 : vector<8x50xf32>
    %202 = vector.extract_strided_slice %190 {offsets = [16, 0], sizes = [8, 180], strides = [1, 1]} : vector<72x180xf32> to vector<8x180xf32>
    %203 = arith.truncf %202 : vector<8x180xf32> to vector<8x180xbf16>
    %c2_75 = arith.constant 2 : index
    %c0_76 = arith.constant 0 : index
    %c0_77 = arith.constant 0 : index
    %204 = vector.load %arg6[%c2_75, %c0_76, %c0_77] : memref<9x180x50xbf16, #tpu.memory_space<vmem>>, vector<1x180x50xbf16>
    %205 = vector.shape_cast %204 : vector<1x180x50xbf16> to vector<180x50xbf16>
    %cst_78 = arith.constant dense<0.000000e+00> : vector<8x50xf32>
    %206 = tpu.matmul %203, %205, %cst_78 {dimension_numbers = #tpu.dot_dimension_numbers<[1], [0], [0], [1], [0, 0, 1, 1], [], []>} : vector<8x180xbf16>, vector<180x50xbf16>, vector<8x50xf32> -> vector<8x50xf32>
    %207 = arith.addf %201, %206 : vector<8x50xf32>
    %208 = vector.extract_strided_slice %190 {offsets = [24, 0], sizes = [8, 180], strides = [1, 1]} : vector<72x180xf32> to vector<8x180xf32>
    %209 = arith.truncf %208 : vector<8x180xf32> to vector<8x180xbf16>
    %c3_79 = arith.constant 3 : index
    %c0_80 = arith.constant 0 : index
    %c0_81 = arith.constant 0 : index
    %210 = vector.load %arg6[%c3_79, %c0_80, %c0_81] : memref<9x180x50xbf16, #tpu.memory_space<vmem>>, vector<1x180x50xbf16>
    %211 = vector.shape_cast %210 : vector<1x180x50xbf16> to vector<180x50xbf16>
    %cst_82 = arith.constant dense<0.000000e+00> : vector<8x50xf32>
    %212 = tpu.matmul %209, %211, %cst_82 {dimension_numbers = #tpu.dot_dimension_numbers<[1], [0], [0], [1], [0, 0, 1, 1], [], []>} : vector<8x180xbf16>, vector<180x50xbf16>, vector<8x50xf32> -> vector<8x50xf32>
    %213 = arith.addf %207, %212 : vector<8x50xf32>
    %214 = vector.extract_strided_slice %190 {offsets = [32, 0], sizes = [8, 180], strides = [1, 1]} : vector<72x180xf32> to vector<8x180xf32>
    %215 = arith.truncf %214 : vector<8x180xf32> to vector<8x180xbf16>
    %c4_83 = arith.constant 4 : index
    %c0_84 = arith.constant 0 : index
    %c0_85 = arith.constant 0 : index
    %216 = vector.load %arg6[%c4_83, %c0_84, %c0_85] : memref<9x180x50xbf16, #tpu.memory_space<vmem>>, vector<1x180x50xbf16>
    %217 = vector.shape_cast %216 : vector<1x180x50xbf16> to vector<180x50xbf16>
    %cst_86 = arith.constant dense<0.000000e+00> : vector<8x50xf32>
    %218 = tpu.matmul %215, %217, %cst_86 {dimension_numbers = #tpu.dot_dimension_numbers<[1], [0], [0], [1], [0, 0, 1, 1], [], []>} : vector<8x180xbf16>, vector<180x50xbf16>, vector<8x50xf32> -> vector<8x50xf32>
    %219 = arith.addf %213, %218 : vector<8x50xf32>
    %220 = vector.extract_strided_slice %190 {offsets = [40, 0], sizes = [8, 180], strides = [1, 1]} : vector<72x180xf32> to vector<8x180xf32>
    %221 = arith.truncf %220 : vector<8x180xf32> to vector<8x180xbf16>
    %c5 = arith.constant 5 : index
    %c0_87 = arith.constant 0 : index
    %c0_88 = arith.constant 0 : index
    %222 = vector.load %arg6[%c5, %c0_87, %c0_88] : memref<9x180x50xbf16, #tpu.memory_space<vmem>>, vector<1x180x50xbf16>
    %223 = vector.shape_cast %222 : vector<1x180x50xbf16> to vector<180x50xbf16>
    %cst_89 = arith.constant dense<0.000000e+00> : vector<8x50xf32>
    %224 = tpu.matmul %221, %223, %cst_89 {dimension_numbers = #tpu.dot_dimension_numbers<[1], [0], [0], [1], [0, 0, 1, 1], [], []>} : vector<8x180xbf16>, vector<180x50xbf16>, vector<8x50xf32> -> vector<8x50xf32>
    %225 = arith.addf %219, %224 : vector<8x50xf32>
    %226 = vector.extract_strided_slice %190 {offsets = [48, 0], sizes = [8, 180], strides = [1, 1]} : vector<72x180xf32> to vector<8x180xf32>
    %227 = arith.truncf %226 : vector<8x180xf32> to vector<8x180xbf16>
    %c6 = arith.constant 6 : index
    %c0_90 = arith.constant 0 : index
    %c0_91 = arith.constant 0 : index
    %228 = vector.load %arg6[%c6, %c0_90, %c0_91] : memref<9x180x50xbf16, #tpu.memory_space<vmem>>, vector<1x180x50xbf16>
    %229 = vector.shape_cast %228 : vector<1x180x50xbf16> to vector<180x50xbf16>
    %cst_92 = arith.constant dense<0.000000e+00> : vector<8x50xf32>
    %230 = tpu.matmul %227, %229, %cst_92 {dimension_numbers = #tpu.dot_dimension_numbers<[1], [0], [0], [1], [0, 0, 1, 1], [], []>} : vector<8x180xbf16>, vector<180x50xbf16>, vector<8x50xf32> -> vector<8x50xf32>
    %231 = arith.addf %225, %230 : vector<8x50xf32>
    %232 = vector.extract_strided_slice %190 {offsets = [56, 0], sizes = [8, 180], strides = [1, 1]} : vector<72x180xf32> to vector<8x180xf32>
    %233 = arith.truncf %232 : vector<8x180xf32> to vector<8x180xbf16>
    %c7 = arith.constant 7 : index
    %c0_93 = arith.constant 0 : index
    %c0_94 = arith.constant 0 : index
    %234 = vector.load %arg6[%c7, %c0_93, %c0_94] : memref<9x180x50xbf16, #tpu.memory_space<vmem>>, vector<1x180x50xbf16>
    %235 = vector.shape_cast %234 : vector<1x180x50xbf16> to vector<180x50xbf16>
    %cst_95 = arith.constant dense<0.000000e+00> : vector<8x50xf32>
    %236 = tpu.matmul %233, %235, %cst_95 {dimension_numbers = #tpu.dot_dimension_numbers<[1], [0], [0], [1], [0, 0, 1, 1], [], []>} : vector<8x180xbf16>, vector<180x50xbf16>, vector<8x50xf32> -> vector<8x50xf32>
    %237 = arith.addf %231, %236 : vector<8x50xf32>
    %238 = vector.extract_strided_slice %190 {offsets = [64, 0], sizes = [8, 180], strides = [1, 1]} : vector<72x180xf32> to vector<8x180xf32>
    %239 = arith.truncf %238 : vector<8x180xf32> to vector<8x180xbf16>
    %c8 = arith.constant 8 : index
    %c0_96 = arith.constant 0 : index
    %c0_97 = arith.constant 0 : index
    %240 = vector.load %arg6[%c8, %c0_96, %c0_97] : memref<9x180x50xbf16, #tpu.memory_space<vmem>>, vector<1x180x50xbf16>
    %241 = vector.shape_cast %240 : vector<1x180x50xbf16> to vector<180x50xbf16>
    %cst_98 = arith.constant dense<0.000000e+00> : vector<8x50xf32>
    %242 = tpu.matmul %239, %241, %cst_98 {dimension_numbers = #tpu.dot_dimension_numbers<[1], [0], [0], [1], [0, 0, 1, 1], [], []>} : vector<8x180xbf16>, vector<180x50xbf16>, vector<8x50xf32> -> vector<8x50xf32>
    %243 = arith.addf %237, %242 : vector<8x50xf32>
    %c0_99 = arith.constant 0 : index
    %c0_100 = arith.constant 0 : index
    %244 = vector.load %arg7[%c0_99, %c0_100] : memref<1x50xf32, #tpu.memory_space<vmem>>, vector<1x50xf32>
    %245 = vector.broadcast %244 : vector<1x50xf32> to vector<8x50xf32>
    %246 = arith.addf %243, %245 : vector<8x50xf32>
    %cst_101 = arith.constant 0.000000e+00 : f32
    %247 = vector.broadcast %cst_101 : f32 to vector<8x50xf32>
    %248 = arith.maximumf %246, %247 : vector<8x50xf32>
    %249 = arith.truncf %248 : vector<8x50xf32> to vector<8x50xbf16>
    %c0_102 = arith.constant 0 : index
    %c0_103 = arith.constant 0 : index
    %250 = vector.load %arg8[%c0_102, %c0_103] : memref<50x7xbf16, #tpu.memory_space<vmem>>, vector<50x7xbf16>
    %cst_104 = arith.constant dense<0.000000e+00> : vector<8x7xf32>
    %251 = tpu.matmul %249, %250, %cst_104 {dimension_numbers = #tpu.dot_dimension_numbers<[1], [0], [0], [1], [0, 0, 1, 1], [], []>} : vector<8x50xbf16>, vector<50x7xbf16>, vector<8x7xf32> -> vector<8x7xf32>
    %c0_105 = arith.constant 0 : index
    %c0_106 = arith.constant 0 : index
    %252 = vector.load %arg9[%c0_105, %c0_106] : memref<1x7xf32, #tpu.memory_space<vmem>>, vector<1x7xf32>
    %253 = vector.broadcast %252 : vector<1x7xf32> to vector<8x7xf32>
    %254 = arith.addf %251, %253 : vector<8x7xf32>
    %c0_107 = arith.constant 0 : index
    %c0_108 = arith.constant 0 : index
    %255 = vector.load %arg10[%c0_107, %c0_108] : memref<8x7xf32, #tpu.memory_space<vmem>>, vector<8x7xf32>
    tpu.vector_store %arg10[%c0_107, %c0_108], %254 {strides = array<i32>} : memref<8x7xf32, #tpu.memory_space<vmem>>, vector<8x7xf32>,
    return
  }
  func.func @transform_0(%arg0: i32) -> (i32, i32, i32, i32) {
    %c0_i32 = arith.constant 0 : i32
    %c0_i32_0 = arith.constant 0 : i32
    %c0_i32_1 = arith.constant 0 : i32
    %c0_i32_2 = arith.constant 0 : i32
    return %c0_i32, %arg0, %c0_i32_0, %c0_i32_1 : i32, i32, i32, i32
  }
  func.func @transform_1(%arg0: i32) -> (i32, i32, i32) {
    %c0_i32 = arith.constant 0 : i32
    %c0_i32_0 = arith.constant 0 : i32
    %c0_i32_1 = arith.constant 0 : i32
    %c0_i32_2 = arith.constant 0 : i32
    return %c0_i32, %c0_i32_0, %c0_i32_1 : i32, i32, i32
  }
  func.func @transform_2(%arg0: i32) -> (i32, i32) {
    %c0_i32 = arith.constant 0 : i32
    %c0_i32_0 = arith.constant 0 : i32
    %c0_i32_1 = arith.constant 0 : i32
    return %c0_i32, %c0_i32_0 : i32, i32
  }
  func.func @transform_3(%arg0: i32) -> (i32, i32, i32) {
    %c0_i32 = arith.constant 0 : i32
    %c0_i32_0 = arith.constant 0 : i32
    %c0_i32_1 = arith.constant 0 : i32
    %c0_i32_2 = arith.constant 0 : i32
    return %c0_i32, %c0_i32_0, %c0_i32_1 : i32, i32, i32
  }
  func.func @transform_4(%arg0: i32) -> (i32, i32) {
    %c0_i32 = arith.constant 0 : i32
    %c0_i32_0 = arith.constant 0 : i32
    %c0_i32_1 = arith.constant 0 : i32
    return %c0_i32, %c0_i32_0 : i32, i32
  }
  func.func @transform_5(%arg0: i32) -> (i32, i32, i32) {
    %c0_i32 = arith.constant 0 : i32
    %c0_i32_0 = arith.constant 0 : i32
    %c0_i32_1 = arith.constant 0 : i32
    %c0_i32_2 = arith.constant 0 : i32
    return %c0_i32, %c0_i32_0, %c0_i32_1 : i32, i32, i32
  }
  func.func @transform_6(%arg0: i32) -> (i32, i32) {
    %c0_i32 = arith.constant 0 : i32
    %c0_i32_0 = arith.constant 0 : i32
    %c0_i32_1 = arith.constant 0 : i32
    return %c0_i32, %c0_i32_0 : i32, i32
  }
  func.func @transform_7(%arg0: i32) -> (i32, i32) {
    %c0_i32 = arith.constant 0 : i32
    %c0_i32_0 = arith.constant 0 : i32
    %c0_i32_1 = arith.constant 0 : i32
    return %c0_i32, %c0_i32_0 : i32, i32
  }
  func.func @transform_8(%arg0: i32) -> (i32, i32) {
    %c0_i32 = arith.constant 0 : i32
    %c0_i32_0 = arith.constant 0 : i32
    %c0_i32_1 = arith.constant 0 : i32
    return %c0_i32, %c0_i32_0 : i32, i32
  }
  func.func @transform_9(%arg0: i32) -> (i32, i32) {
    %c0_i32 = arith.constant 0 : i32
    %c0_i32_0 = arith.constant 0 : i32
    return %arg0, %c0_i32 : i32, i32
  }
}

</mosaic_0001>

<llo_original>
// kernel: tile.13
$region0: #{tile.13}
  #allocation0 [shape = 's32[1]{0}', space=sflag, size = 0x4, scoped, tag = 'scoped memory for tile.13']
  %s0 = inlined_call_operand.vmem [shape: f32[10], index: 0, kind: input, shape index: {}]
  %s1 = inlined_call_operand.vmem [shape: f32[22,10], index: 1, kind: output, shape index: {}]
  // Predicated region
  $region2: #{tile.13} parent=0 // pred_check
    _
  $region3: #{tile.13} parent=0 // pred_check_branch
    %3 = sbr.rel (0) target = $region5
  $region4: #{tile.13} parent=0 // pred_region
    _
  $region5: #{tile.13} parent=0 // pred_fallthru
    _
  %v4 = vld [vmem:[%s0] ss:$0 sm:$0xff]
  %5 = vst [vmem:[%s1] sm:$0xff] %v4
  %s6 = scalar_lea.vmem %s1, 8
  %7 = vst [vmem:[%s6] sm:$0xff] %v4
  %s8 = scalar_lea.vmem %s1, 16
  %9 = vst [vmem:[%s8] sm:$0xff] %v4

// kernel: tile.14
$region0: #{tile.14}
  %s0 = inlined_call_operand.vmem [shape: f32[22,10], index: 0, kind: input, shape index: {}]
  %s1 = inlined_call_operand.vmem [shape: f32[1,220], index: 1, kind: output, shape index: {}]
  $region1: #{tile.14} parent=0
    #allocation0 [shape = 'u8[8192]{0}', space=vmem, size = 0x2000, scoped, tag = 'scoped mem for output reshape']
    %v2 = vld [vmem:[%s0] sm:$0x1]
    %vm3 = vcmask 80896
    %4 = vst.msk [vmem:[#allocation0] sm:$0x1] %vm3, %v2
    %s5 = scalar_lea.vmem %s0, 12
    %v6 = vld [vmem:[%s5] sm:$0x1]
    %s7 = scalar_lea.vmem %s0, 12
    %v8 = vld [vmem:[%s7] sm:$0x1]
    %vm9 = vcmask 64512
    %v10 = vsel %vm9, %v8, %v6
    %11 = vrot.lane.b32.xlu0 %v10, 120
    %v12 = vpop.permute.xlu0 %11
    %vm13 = vcmask 15360
    %s14 = scalar_lea.vmem [#allocation0], 8
    %15 = vst.msk [vmem:[%s14] sm:$0x1] %vm13, %v12
    %vm16 = vcmask 1048512
    %17 = vst.msk [vmem:[#allocation0] sm:$0x1] %vm16, %v12
    %s18 = scalar_lea.vmem %s0, 11
    %v19 = vld [vmem:[%s18] sm:$0x1]
    %20 = vrot.lane.b32.xlu0 %v19, 110
    %v21 = vpop.permute.xlu0 %20
    %vm22 = vcmask 982896
    %23 = vst.msk [vmem:[#allocation0] sm:$0x1] %vm22, %v21
    %s24 = scalar_lea.vmem %s0, 10
    %v25 = vld [vmem:[%s24] sm:$0x1]
    %26 = vrot.lane.b32.xlu0 %v25, 100
    %v27 = vpop.permute.xlu0 %26
    %vm28 = vcmask 900896
    %29 = vst.msk [vmem:[#allocation0] sm:$0x1] %vm28, %v27
    %s30 = scalar_lea.vmem %s0, 9
    %v31 = vld [vmem:[%s30] sm:$0x1]
    %32 = vrot.lane.b32.xlu0 %v31, 90
    %v33 = vpop.permute.xlu0 %32
    %vm34 = vcmask 818896
    %35 = vst.msk [vmem:[#allocation0] sm:$0x1] %vm34, %v33
    %s36 = scalar_lea.vmem %s0, 21
    %v37 = vld [vmem:[%s36] sm:$0x1]
    %38 = vrot.lane.b32.xlu0 %v37, 82
    %v39 = vpop.permute.xlu0 %38
    %vm40 = vcmask 753296
    %s41 = scalar_lea.vmem [#allocation0], 8
    %42 = vst.msk [vmem:[%s41] sm:$0x1] %vm40, %v39
    %s43 = scalar_lea.vmem %s0, 8
    %v44 = vld [vmem:[%s43] sm:$0x1]
    %45 = vrot.lane.b32.xlu0 %v44, 80
    %v46 = vpop.permute.xlu0 %45
    %vm47 = vcmask 736896
    %48 = vst.msk [vmem:[#allocation0] sm:$0x1] %vm47, %v46
    %s49 = scalar_lea.vmem %s0, 20
    %v50 = vld [vmem:[%s49] sm:$0x1]
    %51 = vrot.lane.b32.xlu0 %v50, 72
    %v52 = vpop.permute.xlu0 %51
    %vm53 = vcmask 671296
    %s54 = scalar_lea.vmem [#allocation0], 8
    %55 = vst.msk [vmem:[%s54] sm:$0x1] %vm53, %v52
    %s56 = scalar_lea.vmem %s0, 7
    %v57 = vld [vmem:[%s56] sm:$0x1]
    %58 = vrot.lane.b32.xlu0 %v57, 70
    %v59 = vpop.permute.xlu0 %58
    %vm60 = vcmask 654896
    %61 = vst.msk [vmem:[#allocation0] sm:$0x1] %vm60, %v59
    %s62 = scalar_lea.vmem %s0, 19
    %v63 = vld [vmem:[%s62] sm:$0x1]
    %64 = vrot.lane.b32.xlu0 %v63, 62
    %v65 = vpop.permute.xlu0 %64
    %vm66 = vcmask 589296
    %s67 = scalar_lea.vmem [#allocation0], 8
    %68 = vst.msk [vmem:[%s67] sm:$0x1] %vm66, %v65
    %s69 = scalar_lea.vmem %s0, 6
    %v70 = vld [vmem:[%s69] sm:$0x1]
    %71 = vrot.lane.b32.xlu0 %v70, 60
    %v72 = vpop.permute.xlu0 %71
    %vm73 = vcmask 572896
    %74 = vst.msk [vmem:[#allocation0] sm:$0x1] %vm73, %v72
    %s75 = scalar_lea.vmem %s0, 18
    %v76 = vld [vmem:[%s75] sm:$0x1]
    %77 = vrot.lane.b32.xlu0 %v76, 52
    %v78 = vpop.permute.xlu0 %77
    %vm79 = vcmask 507296
    %s80 = scalar_lea.vmem [#allocation0], 8
    %81 = vst.msk [vmem:[%s80] sm:$0x1] %vm79, %v78
    %s82 = scalar_lea.vmem %s0, 5
    %v83 = vld [vmem:[%s82] sm:$0x1]
    %84 = vrot.lane.b32.xlu0 %v83, 50
    %v85 = vpop.permute.xlu0 %84
    %vm86 = vcmask 490896
    %87 = vst.msk [vmem:[#allocation0] sm:$0x1] %vm86, %v85
    %s88 = scalar_lea.vmem %s0, 17
    %v89 = vld [vmem:[%s88] sm:$0x1]
    %90 = vrot.lane.b32.xlu0 %v89, 42
    %v91 = vpop.permute.xlu0 %90
    %vm92 = vcmask 425296
    %s93 = scalar_lea.vmem [#allocation0], 8
    %94 = vst.msk [vmem:[%s93] sm:$0x1] %vm92, %v91
    %s95 = scalar_lea.vmem %s0, 4
    %v96 = vld [vmem:[%s95] sm:$0x1]
    %97 = vrot.lane.b32.xlu0 %v96, 40
    %v98 = vpop.permute.xlu0 %97
    %vm99 = vcmask 408896
    %100 = vst.msk [vmem:[#allocation0] sm:$0x1] %vm99, %v98
    %s101 = scalar_lea.vmem %s0, 16
    %v102 = vld [vmem:[%s101] sm:$0x1]
    %103 = vrot.lane.b32.xlu0 %v102, 32
    %v104 = vpop.permute.xlu0 %103
    %vm105 = vcmask 343296
    %s106 = scalar_lea.vmem [#allocation0], 8
    %107 = vst.msk [vmem:[%s106] sm:$0x1] %vm105, %v104
    %s108 = scalar_lea.vmem %s0, 3
    %v109 = vld [vmem:[%s108] sm:$0x1]
    %110 = vrot.lane.b32.xlu0 %v109, 30
    %v111 = vpop.permute.xlu0 %110
    %vm112 = vcmask 326896
    %113 = vst.msk [vmem:[#allocation0] sm:$0x1] %vm112, %v111
    %s114 = scalar_lea.vmem %s0, 15
    %v115 = vld [vmem:[%s114] sm:$0x1]
    %116 = vrot.lane.b32.xlu0 %v115, 22
    %v117 = vpop.permute.xlu0 %116
    %vm118 = vcmask 261296
    %s119 = scalar_lea.vmem [#allocation0], 8
    %120 = vst.msk [vmem:[%s119] sm:$0x1] %vm118, %v117
    %s121 = scalar_lea.vmem %s0, 2
    %v122 = vld [vmem:[%s121] sm:$0x1]
    %123 = vrot.lane.b32.xlu0 %v122, 20
    %v124 = vpop.permute.xlu0 %123
    %vm125 = vcmask 244896
    %126 = vst.msk [vmem:[#allocation0] sm:$0x1] %vm125, %v124
    %s127 = scalar_lea.vmem %s0, 14
    %v128 = vld [vmem:[%s127] sm:$0x1]
    %129 = vrot.lane.b32.xlu0 %v128, 12
    %v130 = vpop.permute.xlu0 %129
    %vm131 = vcmask 179296
    %s132 = scalar_lea.vmem [#allocation0], 8
    %133 = vst.msk [vmem:[%s132] sm:$0x1] %vm131, %v130
    %s134 = scalar_lea.vmem %s0, 1
    %v135 = vld [vmem:[%s134] sm:$0x1]
    %136 = vrot.lane.b32.xlu0 %v135, 10
    %v137 = vpop.permute.xlu0 %136
    %vm138 = vcmask 162896
    %139 = vst.msk [vmem:[#allocation0] sm:$0x1] %vm138, %v137
    %s140 = scalar_lea.vmem %s0, 13
    %v141 = vld [vmem:[%s140] sm:$0x1]
    %142 = vrot.lane.b32.xlu0 %v141, 2
    %v143 = vpop.permute.xlu0 %142
    %vm144 = vcmask 97296
    %s145 = scalar_lea.vmem [#allocation0], 8
    %146 = vst.msk [vmem:[%s145] sm:$0x1] %vm144, %v143
    %s148 = ssub.s32 2, 1
    %v149 = vld [vmem:[#allocation0] sm:%s148]
    %s151 = ssub.s32 2, 1
    %152 = vst [vmem:[%s1] sm:%s151] %v149
    %s153 = scalar_lea.vmem [#allocation0], 8
    %v154 = vld [vmem:[%s153] sm:%s148]
    %s156 = ssub.s32 2, 1
    %s157 = scalar_lea.vmem %s1, 1
    %158 = vst [vmem:[%s157] sm:%s156] %v154

// kernel: tile.18
$region0: #{tile.18}
  #allocation0 [shape = 's32[1]{0}', space=sflag, size = 0x4, scoped, tag = 'scoped memory for tile.18']
  %s0 = inlined_call_operand.vmem [shape: f32[20], index: 0, kind: input, shape index: {}]
  %s1 = inlined_call_operand.vmem [shape: f32[9,20], index: 1, kind: output, shape index: {}]
  // Predicated region
  $region2: #{tile.18} parent=0 // pred_check
    _
  $region3: #{tile.18} parent=0 // pred_check_branch
    %3 = sbr.rel (0) target = $region5
  $region4: #{tile.18} parent=0 // pred_region
    _
  $region5: #{tile.18} parent=0 // pred_fallthru
    _
  %v4 = vld [vmem:[%s0] ss:$0 sm:$0xff]
  %5 = vst [vmem:[%s1] sm:$0xff] %v4
  %s6 = scalar_lea.vmem %s1, 8
  %7 = vst [vmem:[%s6] sm:$0xff] %v4

// kernel: tile.19
$region0: #{tile.19}
  %s0 = inlined_call_operand.vmem [shape: f32[9,20], index: 0, kind: input, shape index: {}]
  %s1 = inlined_call_operand.vmem [shape: f32[1,180], index: 1, kind: output, shape index: {}]
  $region1: #{tile.19} parent=0
    #allocation0 [shape = 'u8[8192]{0}', space=vmem, size = 0x2000, scoped, tag = 'scoped mem for output reshape']
    %v2 = vld [vmem:[%s0] sm:$0x1]
    %vm3 = vcmask 162816
    %4 = vst.msk [vmem:[#allocation0] sm:$0x1] %vm3, %v2
    %s5 = scalar_lea.vmem %s0, 6
    %v6 = vld [vmem:[%s5] sm:$0x1]
    %s7 = scalar_lea.vmem %s0, 6
    %v8 = vld [vmem:[%s7] sm:$0x1]
    %vm9 = vcmask 64512
    %v10 = vsel %vm9, %v8, %v6
    %11 = vrot.lane.b32.xlu0 %v10, 120
    %v12 = vpop.permute.xlu0 %11
    %vm13 = vcmask 97280
    %s14 = scalar_lea.vmem [#allocation0], 8
    %15 = vst.msk [vmem:[%s14] sm:$0x1] %vm13, %v12
    %vm16 = vcmask 1048512
    %17 = vst.msk [vmem:[#allocation0] sm:$0x1] %vm16, %v12
    %s18 = scalar_lea.vmem %s0, 5
    %v19 = vld [vmem:[%s18] sm:$0x1]
    %20 = vrot.lane.b32.xlu0 %v19, 100
    %v21 = vpop.permute.xlu0 %20
    %vm22 = vcmask 982816
    %23 = vst.msk [vmem:[#allocation0] sm:$0x1] %vm22, %v21
    %s24 = scalar_lea.vmem %s0, 4
    %v25 = vld [vmem:[%s24] sm:$0x1]
    %26 = vrot.lane.b32.xlu0 %v25, 80
    %v27 = vpop.permute.xlu0 %26
    %vm28 = vcmask 818816
    %29 = vst.msk [vmem:[#allocation0] sm:$0x1] %vm28, %v27
    %s30 = scalar_lea.vmem %s0, 3
    %v31 = vld [vmem:[%s30] sm:$0x1]
    %32 = vrot.lane.b32.xlu0 %v31, 60
    %v33 = vpop.permute.xlu0 %32
    %vm34 = vcmask 654816
    %35 = vst.msk [vmem:[#allocation0] sm:$0x1] %vm34, %v33
    %s36 = scalar_lea.vmem %s0, 2
    %v37 = vld [vmem:[%s36] sm:$0x1]
    %38 = vrot.lane.b32.xlu0 %v37, 40
    %v39 = vpop.permute.xlu0 %38
    %vm40 = vcmask 490816
    %41 = vst.msk [vmem:[#allocation0] sm:$0x1] %vm40, %v39
    %s42 = scalar_lea.vmem %s0, 8
    %v43 = vld [vmem:[%s42] sm:$0x1]
    %44 = vrot.lane.b32.xlu0 %v43, 32
    %v45 = vpop.permute.xlu0 %44
    %vm46 = vcmask 425216
    %s47 = scalar_lea.vmem [#allocation0], 8
    %48 = vst.msk [vmem:[%s47] sm:$0x1] %vm46, %v45
    %s49 = scalar_lea.vmem %s0, 1
    %v50 = vld [vmem:[%s49] sm:$0x1]
    %51 = vrot.lane.b32.xlu0 %v50, 20
    %v52 = vpop.permute.xlu0 %51
    %vm53 = vcmask 326816
    %54 = vst.msk [vmem:[#allocation0] sm:$0x1] %vm53, %v52
    %s55 = scalar_lea.vmem %s0, 7
    %v56 = vld [vmem:[%s55] sm:$0x1]
    %57 = vrot.lane.b32.xlu0 %v56, 12
    %v58 = vpop.permute.xlu0 %57
    %vm59 = vcmask 261216
    %s60 = scalar_lea.vmem [#allocation0], 8
    %61 = vst.msk [vmem:[%s60] sm:$0x1] %vm59, %v58
    %s63 = ssub.s32 2, 1
    %v64 = vld [vmem:[#allocation0] sm:%s63]
    %s66 = ssub.s32 2, 1
    %67 = vst [vmem:[%s1] sm:%s66] %v64
    %s68 = scalar_lea.vmem [#allocation0], 8
    %v69 = vld [vmem:[%s68] sm:%s63]
    %s71 = ssub.s32 2, 1
    %s72 = scalar_lea.vmem %s1, 1
    %73 = vst [vmem:[%s72] sm:%s71] %v69

// kernel: net_forward.1
$region0: #{net_forward.1}
  #allocation0 [shape = 'u32[]', space=smem, size = 0x4, offset = 0x4, fixed_abs, tag = 'smem constant byte address 0x4 - core index']
  #allocation1 [shape = 'u32[72,128]{1,0:T(1,128)}', space=vmem, size = 0x9000, scoped, tag = 'internal scratch']
  %s0 = inlined_call_operand.vmem [shape: f32[4,1,96,48], index: 0, kind: input, shape index: {}]
  %s1 = inlined_call_operand.vmem [shape: bf16[5,48,440], index: 1, kind: input, shape index: {}]
  %s2 = inlined_call_operand.vmem [shape: f32[1,220], index: 2, kind: input, shape index: {}]
  %s3 = inlined_call_operand.vmem [shape: bf16[5,220,360], index: 3, kind: input, shape index: {}]
  %s4 = inlined_call_operand.vmem [shape: f32[1,180], index: 4, kind: input, shape index: {}]
  %s5 = inlined_call_operand.vmem [shape: bf16[9,180,50], index: 5, kind: input, shape index: {}]
  %s6 = inlined_call_operand.vmem [shape: f32[1,50], index: 6, kind: input, shape index: {}]
  %s7 = inlined_call_operand.vmem [shape: bf16[50,7], index: 7, kind: input, shape index: {}]
  %s8 = inlined_call_operand.vmem [shape: f32[1,7], index: 8, kind: input, shape index: {}]
  %s9 = inlined_call_operand.vmem [shape: f32[8,7], index: 9, kind: output, shape index: {}]
  %s10 = sld [smem:[#allocation0]]
  $region46: #{net_forward.1} parent=0
    _
  %s12 = ssub.s32 1, %s10
  %s13 = scalar_select 0, %s12, %s10
  // Predicated region
  $region2: #{net_forward.1} parent=0 // pred_check
    _
  $region3: #{net_forward.1} parent=0 // pred_check_branch
    %15 = sbr.rel (0) target = $region5
  $region4: #{net_forward.1} parent=0 // pred_region
    _
  $region5: #{net_forward.1} parent=0 // pred_fallthru
    _
  // Predicated region
  $region6: #{net_forward.1} parent=0 // pred_check
    _
  $region7: #{net_forward.1} parent=0 // pred_check_branch
    %17 = sbr.rel (0) target = $region9
  $region8: #{net_forward.1} parent=0 // pred_region
    _
  $region9: #{net_forward.1} parent=0 // pred_fallthru
    _
  // Predicated region
  $region10: #{net_forward.1} parent=0 // pred_check
    _
  $region11: #{net_forward.1} parent=0 // pred_check_branch
    %19 = sbr.rel (0) target = $region13
  $region12: #{net_forward.1} parent=0 // pred_region
    _
  $region13: #{net_forward.1} parent=0 // pred_fallthru
    _
  // Predicated region
  $region14: #{net_forward.1} parent=0 // pred_check
    _
  $region15: #{net_forward.1} parent=0 // pred_check_branch
    %21 = sbr.rel (0) target = $region17
  $region16: #{net_forward.1} parent=0 // pred_region
    _
  $region17: #{net_forward.1} parent=0 // pred_fallthru
    _
  // Predicated region
  $region18: #{net_forward.1} parent=0 // pred_check
    _
  $region19: #{net_forward.1} parent=0 // pred_check_branch
    %23 = sbr.rel (0) target = $region21
  $region20: #{net_forward.1} parent=0 // pred_region
    _
  $region21: #{net_forward.1} parent=0 // pred_fallthru
    _
  // Predicated region
  $region22: #{net_forward.1} parent=0 // pred_check
    _
  $region23: #{net_forward.1} parent=0 // pred_check_branch
    %25 = sbr.rel (0) target = $region25
  $region24: #{net_forward.1} parent=0 // pred_region
    _
  $region25: #{net_forward.1} parent=0 // pred_fallthru
    _
  // Predicated region
  $region26: #{net_forward.1} parent=0 // pred_check
    _
  $region27: #{net_forward.1} parent=0 // pred_check_branch
    %27 = sbr.rel (0) target = $region29
  $region28: #{net_forward.1} parent=0 // pred_region
    _
  $region29: #{net_forward.1} parent=0 // pred_fallthru
    _
  // Predicated region
  $region30: #{net_forward.1} parent=0 // pred_check
    _
  $region31: #{net_forward.1} parent=0 // pred_check_branch
    %29 = sbr.rel (0) target = $region33
  $region32: #{net_forward.1} parent=0 // pred_region
    _
  $region33: #{net_forward.1} parent=0 // pred_fallthru
    _
  // Predicated region
  $region34: #{net_forward.1} parent=0 // pred_check
    _
  $region35: #{net_forward.1} parent=0 // pred_check_branch
    %31 = sbr.rel (0) target = $region37
  $region36: #{net_forward.1} parent=0 // pred_region
    _
  $region37: #{net_forward.1} parent=0 // pred_fallthru
    _
  %v33 = vld [vmem:[%s0] sm:$0xff]
  %v34 = vld [vmem:[%s0 + $0x8] sm:$0xff]
  %v35 = vld [vmem:[%s0 + $0x10] sm:$0xff]
  %v36 = vld [vmem:[%s0 + $0x18] sm:$0xff]
  %v37 = vld [vmem:[%s0 + $0x20] sm:$0xff]
  %v38 = vld [vmem:[%s0 + $0x28] sm:$0xff]
  %v39 = vld [vmem:[%s0 + $0x30] sm:$0xff]
  %v40 = vld [vmem:[%s0 + $0x38] sm:$0xff]
  %v41 = vld [vmem:[%s0 + $0x40] sm:$0xff]
  %v42 = vld [vmem:[%s0 + $0x48] sm:$0xff]
  %v43 = vld [vmem:[%s0 + $0x50] sm:$0xff]
  %v44 = vld [vmem:[%s0 + $0x58] sm:$0xff]
  %v45 = vld [vmem:[%s0 + $0x60] sm:$0xff]
  %v46 = vld [vmem:[%s0 + $0x68] sm:$0xff]
  %v47 = vld [vmem:[%s0 + $0x70] sm:$0xff]
  %v48 = vld [vmem:[%s0 + $0x78] sm:$0xff]
  %v49 = vld [vmem:[%s0 + $0x80] sm:$0xff]
  %v50 = vld [vmem:[%s0 + $0x88] sm:$0xff]
  %v51 = vld [vmem:[%s0 + $0x90] sm:$0xff]
  %v52 = vld [vmem:[%s0 + $0x98] sm:$0xff]
  %v53 = vld [vmem:[%s0 + $0xa0] sm:$0xff]
  %v54 = vld [vmem:[%s0 + $0xa8] sm:$0xff]
  %v55 = vld [vmem:[%s0 + $0xb0] sm:$0xff]
  %v56 = vld [vmem:[%s0 + $0xb8] sm:$0xff]
  %v57 = vld [vmem:[%s0 + $0xc0] sm:$0xff]
  %v58 = vld [vmem:[%s0 + $0xc8] sm:$0xff]
  %v59 = vld [vmem:[%s0 + $0xd0] sm:$0xff]
  %v60 = vld [vmem:[%s0 + $0xd8] sm:$0xff]
  %v61 = vld [vmem:[%s0 + $0xe0] sm:$0xff]
  %v62 = vld [vmem:[%s0 + $0xe8] sm:$0xff]
  %v63 = vld [vmem:[%s0 + $0xf0] sm:$0xff]
  %v64 = vld [vmem:[%s0 + $0xf8] sm:$0xff]
  %v65 = vld [vmem:[%s0 + $0x100] sm:$0xff]
  %v66 = vld [vmem:[%s0 + $0x108] sm:$0xff]
  %v67 = vld [vmem:[%s0 + $0x110] sm:$0xff]
  %v68 = vld [vmem:[%s0 + $0x118] sm:$0xff]
  %v69 = vld [vmem:[%s0 + $0x120] sm:$0xff]
  %v70 = vld [vmem:[%s0 + $0x128] sm:$0xff]
  %v71 = vld [vmem:[%s0 + $0x130] sm:$0xff]
  %v72 = vld [vmem:[%s0 + $0x138] sm:$0xff]
  %v73 = vld [vmem:[%s0 + $0x140] sm:$0xff]
  %v74 = vld [vmem:[%s0 + $0x148] sm:$0xff]
  %v75 = vld [vmem:[%s0 + $0x150] sm:$0xff]
  %v76 = vld [vmem:[%s0 + $0x158] sm:$0xff]
  %v77 = vld [vmem:[%s0 + $0x160] sm:$0xff]
  %v78 = vld [vmem:[%s0 + $0x168] sm:$0xff]
  %v79 = vld [vmem:[%s0 + $0x170] sm:$0xff]
  %v80 = vld [vmem:[%s0 + $0x178] sm:$0xff]
  %v81 = vld [vmem:[%s1] sm:$0xff]
  %v82 = vld [vmem:[%s1 + $0x8] sm:$0xff]
  %v83 = vld [vmem:[%s1 + $0x10] sm:$0xff]
  %v84 = vld [vmem:[%s1 + $0x18] sm:$0xff]
  %v85 = vld [vmem:[%s1 + $0x20] sm:$0xff]
  %v86 = vld [vmem:[%s1 + $0x28] sm:$0xff]
  %v87 = vld [vmem:[%s1 + $0x30] sm:$0xff]
  %v88 = vld [vmem:[%s1 + $0x38] sm:$0xff]
  %v89 = vld [vmem:[%s1 + $0x40] sm:$0xff]
  %v90 = vld [vmem:[%s1 + $0x48] sm:$0xff]
  %v91 = vld [vmem:[%s1 + $0x50] sm:$0xff]
  %v92 = vld [vmem:[%s1 + $0x58] sm:$0xff]
  %v93 = vpack.c.bf16 %v34, %v33
  %v94 = vpack.c.bf16 %v36, %v35
  %v95 = vpack.c.bf16 %v38, %v37
  %v96 = vpack.c.bf16 %v40, %v39
  %v97 = vpack.c.bf16 %v42, %v41
  %v98 = vpack.c.bf16 %v43, %v43
  %v99 = vpack.c.bf16 %v46, %v45
  %v100 = vpack.c.bf16 %v48, %v47
  %v101 = vpack.c.bf16 %v50, %v49
  %v102 = vpack.c.bf16 %v52, %v51
  %v103 = vpack.c.bf16 %v54, %v53
  %v104 = vpack.c.bf16 %v55, %v55
  %v105 = vpack.c.bf16 %v58, %v57
  %v106 = vpack.c.bf16 %v60, %v59
  %v107 = vpack.c.bf16 %v62, %v61
  %v108 = vpack.c.bf16 %v64, %v63
  %v109 = vpack.c.bf16 %v66, %v65
  %v110 = vpack.c.bf16 %v67, %v67
  %v111 = vpack.c.bf16 %v70, %v69
  %v112 = vpack.c.bf16 %v72, %v71
  %v113 = vpack.c.bf16 %v74, %v73
  %v114 = vpack.c.bf16 %v76, %v75
  %v115 = vpack.c.bf16 %v78, %v77
  %v116 = vpack.c.bf16 %v79, %v79
  %s117 = scalar_lea.vmem %s1, 96
  %v118 = vld [vmem:[%s117] sm:$0xff]
  %v119 = vld [vmem:[%s117 + $0x8] sm:$0xff]
  %v120 = vld [vmem:[%s117 + $0x10] sm:$0xff]
  %v121 = vld [vmem:[%s117 + $0x18] sm:$0xff]
  %v122 = vld [vmem:[%s117 + $0x20] sm:$0xff]
  %v123 = vld [vmem:[%s117 + $0x28] sm:$0xff]
  %v124 = vld [vmem:[%s117 + $0x30] sm:$0xff]
  %v125 = vld [vmem:[%s117 + $0x38] sm:$0xff]
  %v126 = vld [vmem:[%s117 + $0x40] sm:$0xff]
  %v127 = vld [vmem:[%s117 + $0x48] sm:$0xff]
  %v128 = vld [vmem:[%s117 + $0x50] sm:$0xff]
  %v129 = vld [vmem:[%s117 + $0x58] sm:$0xff]
  %v142 = vunpack.c.l.b16 %v118
  %v143 = vunpack.c.h.b16 %v118
  %v144 = vunpack.c.l.b16 %v119
  %v145 = vunpack.c.h.b16 %v119
  %v146 = vunpack.c.l.b16 %v120
  %v147 = vunpack.c.h.b16 %v120
  %v148 = vunpack.c.l.b16 %v121
  %v149 = vunpack.c.h.b16 %v121
  %v150 = vunpack.c.l.b16 %v122
  %v151 = vunpack.c.h.b16 %v122
  %v152 = vunpack.c.l.b16 %v123
  %v153 = vunpack.c.h.b16 %v123
  %v154 = vunpack.c.l.b16 %v124
  %v155 = vunpack.c.h.b16 %v124
  %v156 = vunpack.c.l.b16 %v125
  %v157 = vunpack.c.h.b16 %v125
  %v158 = vunpack.c.l.b16 %v126
  %v159 = vunpack.c.h.b16 %v126
  %v160 = vunpack.c.l.b16 %v127
  %v161 = vunpack.c.h.b16 %v127
  %v162 = vunpack.c.l.b16 %v128
  %v163 = vunpack.c.h.b16 %v128
  %v164 = vunpack.c.l.b16 %v129
  %v165 = vunpack.c.h.b16 %v129
  %v166 = vpack.c.b16 %v146, %v142
  %v167 = vpack.c.b16 %v147, %v143
  %v168 = vpack.c.b16 %v148, %v144
  %v169 = vpack.c.b16 %v149, %v145
  %v170 = vpack.c.b16 %v154, %v150
  %v171 = vpack.c.b16 %v155, %v151
  %v172 = vpack.c.b16 %v156, %v152
  %v173 = vpack.c.b16 %v157, %v153
  %v174 = vpack.c.b16 %v162, %v158
  %v175 = vpack.c.b16 %v163, %v159
  %v176 = vpack.c.b16 %v164, %v160
  %v177 = vpack.c.b16 %v165, %v161
  %vm190 = vcmask 392192
  %v192 = vsel %vm190, %v99, 0
  %v195 = vsel %vm190, %v100, 0
  %v198 = vsel %vm190, %v101, 0
  %v201 = vsel %vm190, %v102, 0
  %v204 = vsel %vm190, %v103, 0
  %v207 = vsel %vm190, %v104, 0
  %209 = vmatpush.bf16.msra.mxu0 0
  %210 = vmatpush.bf16.msra.mxu0 0
  %211 = vmatpush.bf16.msra.mxu0 0
  %212 = vmatpush.bf16.msra.mxu0 0
  %213 = vmatpush.bf16.msra.mxu0 0
  %214 = vmatpush.bf16.msra.mxu0 %v174
  %215 = vmatpush.bf16.msra.mxu0 %v170
  %216 = vmatpush.bf16.msra.mxu0 %v166
  %217 = vmatmul.bf16.gmra.mxu0 %v192
  %v218 = vpop.f32.mrf.mxu0
  %v219 = vadd.f32 0.0, %v218
  %v220 = vpop.f32.mrf.mxu0
  %v221 = vadd.f32 0.0, %v220
  %222 = vmatmul.bf16.gmra.mxu0 %v195
  %v223 = vpop.f32.mrf.mxu0
  %v224 = vadd.f32 0.0, %v223
  %v225 = vpop.f32.mrf.mxu0
  %v226 = vadd.f32 0.0, %v225
  %227 = vmatmul.bf16.gmra.mxu0 %v198
  %v228 = vpop.f32.mrf.mxu0
  %v229 = vadd.f32 0.0, %v228
  %v230 = vpop.f32.mrf.mxu0
  %v231 = vadd.f32 0.0, %v230
  %232 = vmatmul.bf16.gmra.mxu0 %v201
  %v233 = vpop.f32.mrf.mxu0
  %v234 = vadd.f32 0.0, %v233
  %v235 = vpop.f32.mrf.mxu0
  %v236 = vadd.f32 0.0, %v235
  %237 = vmatmul.bf16.gmra.mxu0 %v204
  %v238 = vpop.f32.mrf.mxu0
  %v239 = vadd.f32 0.0, %v238
  %v240 = vpop.f32.mrf.mxu0
  %v241 = vadd.f32 0.0, %v240
  %242 = vmatmul.bf16.gmra.mxu0 %v207
  %v243 = vpop.f32.mrf.mxu0
  %v244 = vadd.f32 0.0, %v243
  %v245 = vpop.f32.mrf.mxu0
  %246 = vdwg.mxu0
  %247 = vmatpush.bf16.msra.mxu0 0
  %248 = vmatpush.bf16.msra.mxu0 0
  %249 = vmatpush.bf16.msra.mxu0 0
  %250 = vmatpush.bf16.msra.mxu0 0
  %251 = vmatpush.bf16.msra.mxu0 0
  %252 = vmatpush.bf16.msra.mxu0 %v175
  %253 = vmatpush.bf16.msra.mxu0 %v171
  %254 = vmatpush.bf16.msra.mxu0 %v167
  %255 = vmatmul.bf16.gmra.mxu0 %v192
  %v256 = vpop.f32.mrf.mxu0
  %v257 = vadd.f32 0.0, %v256
  %v258 = vpop.f32.mrf.mxu0
  %v259 = vadd.f32 0.0, %v258
  %260 = vmatmul.bf16.gmra.mxu0 %v195
  %v261 = vpop.f32.mrf.mxu0
  %v262 = vadd.f32 0.0, %v261
  %v263 = vpop.f32.mrf.mxu0
  %v264 = vadd.f32 0.0, %v263
  %265 = vmatmul.bf16.gmra.mxu0 %v198
  %v266 = vpop.f32.mrf.mxu0
  %v267 = vadd.f32 0.0, %v266
  %v268 = vpop.f32.mrf.mxu0
  %v269 = vadd.f32 0.0, %v268
  %270 = vmatmul.bf16.gmra.mxu0 %v201
  %v271 = vpop.f32.mrf.mxu0
  %v272 = vadd.f32 0.0, %v271
  %v273 = vpop.f32.mrf.mxu0
  %v274 = vadd.f32 0.0, %v273
  %275 = vmatmul.bf16.gmra.mxu0 %v204
  %v276 = vpop.f32.mrf.mxu0
  %v277 = vadd.f32 0.0, %v276
  %v278 = vpop.f32.mrf.mxu0
  %v279 = vadd.f32 0.0, %v278
  %280 = vmatmul.bf16.gmra.mxu0 %v207
  %v281 = vpop.f32.mrf.mxu0
  %v282 = vadd.f32 0.0, %v281
  %v283 = vpop.f32.mrf.mxu0
  %284 = vdwg.mxu0
  %285 = vmatpush.bf16.msra.mxu0 0
  %286 = vmatpush.bf16.msra.mxu0 0
  %287 = vmatpush.bf16.msra.mxu0 0
  %288 = vmatpush.bf16.msra.mxu0 0
  %289 = vmatpush.bf16.msra.mxu0 0
  %290 = vmatpush.bf16.msra.mxu0 %v176
  %291 = vmatpush.bf16.msra.mxu0 %v172
  %292 = vmatpush.bf16.msra.mxu0 %v168
  %293 = vmatmul.bf16.gmra.mxu0 %v192
  %v294 = vpop.f32.mrf.mxu0
  %v295 = vadd.f32 0.0, %v294
  %v296 = vpop.f32.mrf.mxu0
  %v297 = vadd.f32 0.0, %v296
  %298 = vmatmul.bf16.gmra.mxu0 %v195
  %v299 = vpop.f32.mrf.mxu0
  %v300 = vadd.f32 0.0, %v299
  %v301 = vpop.f32.mrf.mxu0
  %v302 = vadd.f32 0.0, %v301
  %303 = vmatmul.bf16.gmra.mxu0 %v198
  %v304 = vpop.f32.mrf.mxu0
  %v305 = vadd.f32 0.0, %v304
  %v306 = vpop.f32.mrf.mxu0
  %v307 = vadd.f32 0.0, %v306
  %308 = vmatmul.bf16.gmra.mxu0 %v201
  %v309 = vpop.f32.mrf.mxu0
  %v310 = vadd.f32 0.0, %v309
  %v311 = vpop.f32.mrf.mxu0
  %v312 = vadd.f32 0.0, %v311
  %313 = vmatmul.bf16.gmra.mxu0 %v204
  %v314 = vpop.f32.mrf.mxu0
  %v315 = vadd.f32 0.0, %v314
  %v316 = vpop.f32.mrf.mxu0
  %v317 = vadd.f32 0.0, %v316
  %318 = vmatmul.bf16.gmra.mxu0 %v207
  %v319 = vpop.f32.mrf.mxu0
  %v320 = vadd.f32 0.0, %v319
  %v321 = vpop.f32.mrf.mxu0
  %322 = vdwg.mxu0
  %323 = vmatpush.bf16.msra.mxu0 0
  %324 = vmatpush.bf16.msra.mxu0 0
  %325 = vmatpush.bf16.msra.mxu0 0
  %326 = vmatpush.bf16.msra.mxu0 0
  %327 = vmatpush.bf16.msra.mxu0 0
  %328 = vmatpush.bf16.msra.mxu0 %v177
  %329 = vmatpush.bf16.msra.mxu0 %v173
  %330 = vmatpush.bf16.msra.mxu0 %v169
  %331 = vmatmul.bf16.gmra.mxu0 %v192
  %v332 = vpop.f32.mrf.mxu0
  %v333 = vadd.f32 0.0, %v332
  %v334 = vpop.f32.mrf.mxu0
  %v335 = vadd.f32 0.0, %v334
  %336 = vmatmul.bf16.gmra.mxu0 %v195
  %v337 = vpop.f32.mrf.mxu0
  %v338 = vadd.f32 0.0, %v337
  %v339 = vpop.f32.mrf.mxu0
  %v340 = vadd.f32 0.0, %v339
  %341 = vmatmul.bf16.gmra.mxu0 %v198
  %v342 = vpop.f32.mrf.mxu0
  %v343 = vadd.f32 0.0, %v342
  %v344 = vpop.f32.mrf.mxu0
  %v345 = vadd.f32 0.0, %v344
  %346 = vmatmul.bf16.gmra.mxu0 %v201
  %v347 = vpop.f32.mrf.mxu0
  %v348 = vadd.f32 0.0, %v347
  %v349 = vpop.f32.mrf.mxu0
  %v350 = vadd.f32 0.0, %v349
  %351 = vmatmul.bf16.gmra.mxu0 %v204
  %v352 = vpop.f32.mrf.mxu0
  %v353 = vadd.f32 0.0, %v352
  %v354 = vpop.f32.mrf.mxu0
  %v355 = vadd.f32 0.0, %v354
  %356 = vmatmul.bf16.gmra.mxu0 %v207
  %v357 = vpop.f32.mrf.mxu0
  %v358 = vadd.f32 0.0, %v357
  %v359 = vpop.f32.mrf.mxu0
  %360 = vdwg.mxu0
  %v373 = vunpack.c.l.b16 %v81
  %v374 = vunpack.c.h.b16 %v81
  %v375 = vunpack.c.l.b16 %v82
  %v376 = vunpack.c.h.b16 %v82
  %v377 = vunpack.c.l.b16 %v83
  %v378 = vunpack.c.h.b16 %v83
  %v379 = vunpack.c.l.b16 %v84
  %v380 = vunpack.c.h.b16 %v84
  %v381 = vunpack.c.l.b16 %v85
  %v382 = vunpack.c.h.b16 %v85
  %v383 = vunpack.c.l.b16 %v86
  %v384 = vunpack.c.h.b16 %v86
  %v385 = vunpack.c.l.b16 %v87
  %v386 = vunpack.c.h.b16 %v87
  %v387 = vunpack.c.l.b16 %v88
  %v388 = vunpack.c.h.b16 %v88
  %v389 = vunpack.c.l.b16 %v89
  %v390 = vunpack.c.h.b16 %v89
  %v391 = vunpack.c.l.b16 %v90
  %v392 = vunpack.c.h.b16 %v90
  %v393 = vunpack.c.l.b16 %v91
  %v394 = vunpack.c.h.b16 %v91
  %v395 = vunpack.c.l.b16 %v92
  %v396 = vunpack.c.h.b16 %v92
  %v397 = vpack.c.b16 %v377, %v373
  %v398 = vpack.c.b16 %v378, %v374
  %v399 = vpack.c.b16 %v379, %v375
  %v400 = vpack.c.b16 %v380, %v376
  %v401 = vpack.c.b16 %v385, %v381
  %v402 = vpack.c.b16 %v386, %v382
  %v403 = vpack.c.b16 %v387, %v383
  %v404 = vpack.c.b16 %v388, %v384
  %v405 = vpack.c.b16 %v393, %v389
  %v406 = vpack.c.b16 %v394, %v390
  %v407 = vpack.c.b16 %v395, %v391
  %v408 = vpack.c.b16 %v396, %v392
  %v422 = vsel %vm190, %v93, 0
  %v425 = vsel %vm190, %v94, 0
  %v428 = vsel %vm190, %v95, 0
  %v431 = vsel %vm190, %v96, 0
  %v434 = vsel %vm190, %v97, 0
  %v437 = vsel %vm190, %v98, 0
  %439 = vmatpush.bf16.msra.mxu0 0
  %440 = vmatpush.bf16.msra.mxu0 0
  %441 = vmatpush.bf16.msra.mxu0 0
  %442 = vmatpush.bf16.msra.mxu0 0
  %443 = vmatpush.bf16.msra.mxu0 0
  %444 = vmatpush.bf16.msra.mxu0 %v405
  %445 = vmatpush.bf16.msra.mxu0 %v401
  %446 = vmatpush.bf16.msra.mxu0 %v397
  %447 = vmatmul.bf16.gmra.mxu0 %v422
  %v448 = vpop.f32.mrf.mxu0
  %v449 = vadd.f32 %v219, %v448
  %v450 = vpop.f32.mrf.mxu0
  %v451 = vadd.f32 %v221, %v450
  %452 = vmatmul.bf16.gmra.mxu0 %v425
  %v453 = vpop.f32.mrf.mxu0
  %v454 = vadd.f32 %v224, %v453
  %v455 = vpop.f32.mrf.mxu0
  %v456 = vadd.f32 %v226, %v455
  %457 = vmatmul.bf16.gmra.mxu0 %v428
  %v458 = vpop.f32.mrf.mxu0
  %v459 = vadd.f32 %v229, %v458
  %v460 = vpop.f32.mrf.mxu0
  %v461 = vadd.f32 %v231, %v460
  %462 = vmatmul.bf16.gmra.mxu0 %v431
  %v463 = vpop.f32.mrf.mxu0
  %v464 = vadd.f32 %v234, %v463
  %v465 = vpop.f32.mrf.mxu0
  %v466 = vadd.f32 %v236, %v465
  %467 = vmatmul.bf16.gmra.mxu0 %v434
  %v468 = vpop.f32.mrf.mxu0
  %v469 = vadd.f32 %v239, %v468
  %v470 = vpop.f32.mrf.mxu0
  %v471 = vadd.f32 %v241, %v470
  %472 = vmatmul.bf16.gmra.mxu0 %v437
  %v473 = vpop.f32.mrf.mxu0
  %v474 = vadd.f32 %v244, %v473
  %v475 = vpop.f32.mrf.mxu0
  %476 = vdwg.mxu0
  %477 = vmatpush.bf16.msra.mxu0 0
  %478 = vmatpush.bf16.msra.mxu0 0
  %479 = vmatpush.bf16.msra.mxu0 0
  %480 = vmatpush.bf16.msra.mxu0 0
  %481 = vmatpush.bf16.msra.mxu0 0
  %482 = vmatpush.bf16.msra.mxu0 %v406
  %483 = vmatpush.bf16.msra.mxu0 %v402
  %484 = vmatpush.bf16.msra.mxu0 %v398
  %485 = vmatmul.bf16.gmra.mxu0 %v422
  %v486 = vpop.f32.mrf.mxu0
  %v487 = vadd.f32 %v257, %v486
  %v488 = vpop.f32.mrf.mxu0
  %v489 = vadd.f32 %v259, %v488
  %490 = vmatmul.bf16.gmra.mxu0 %v425
  %v491 = vpop.f32.mrf.mxu0
  %v492 = vadd.f32 %v262, %v491
  %v493 = vpop.f32.mrf.mxu0
  %v494 = vadd.f32 %v264, %v493
  %495 = vmatmul.bf16.gmra.mxu0 %v428
  %v496 = vpop.f32.mrf.mxu0
  %v497 = vadd.f32 %v267, %v496
  %v498 = vpop.f32.mrf.mxu0
  %v499 = vadd.f32 %v269, %v498
  %500 = vmatmul.bf16.gmra.mxu0 %v431
  %v501 = vpop.f32.mrf.mxu0
  %v502 = vadd.f32 %v272, %v501
  %v503 = vpop.f32.mrf.mxu0
  %v504 = vadd.f32 %v274, %v503
  %505 = vmatmul.bf16.gmra.mxu0 %v434
  %v506 = vpop.f32.mrf.mxu0
  %v507 = vadd.f32 %v277, %v506
  %v508 = vpop.f32.mrf.mxu0
  %v509 = vadd.f32 %v279, %v508
  %510 = vmatmul.bf16.gmra.mxu0 %v437
  %v511 = vpop.f32.mrf.mxu0
  %v512 = vadd.f32 %v282, %v511
  %v513 = vpop.f32.mrf.mxu0
  %514 = vdwg.mxu0
  %515 = vmatpush.bf16.msra.mxu0 0
  %516 = vmatpush.bf16.msra.mxu0 0
  %517 = vmatpush.bf16.msra.mxu0 0
  %518 = vmatpush.bf16.msra.mxu0 0
  %519 = vmatpush.bf16.msra.mxu0 0
  %520 = vmatpush.bf16.msra.mxu0 %v407
  %521 = vmatpush.bf16.msra.mxu0 %v403
  %522 = vmatpush.bf16.msra.mxu0 %v399
  %523 = vmatmul.bf16.gmra.mxu0 %v422
  %v524 = vpop.f32.mrf.mxu0
  %v525 = vadd.f32 %v295, %v524
  %v526 = vpop.f32.mrf.mxu0
  %v527 = vadd.f32 %v297, %v526
  %528 = vmatmul.bf16.gmra.mxu0 %v425
  %v529 = vpop.f32.mrf.mxu0
  %v530 = vadd.f32 %v300, %v529
  %v531 = vpop.f32.mrf.mxu0
  %v532 = vadd.f32 %v302, %v531
  %533 = vmatmul.bf16.gmra.mxu0 %v428
  %v534 = vpop.f32.mrf.mxu0
  %v535 = vadd.f32 %v305, %v534
  %v536 = vpop.f32.mrf.mxu0
  %v537 = vadd.f32 %v307, %v536
  %538 = vmatmul.bf16.gmra.mxu0 %v431
  %v539 = vpop.f32.mrf.mxu0
  %v540 = vadd.f32 %v310, %v539
  %v541 = vpop.f32.mrf.mxu0
  %v542 = vadd.f32 %v312, %v541
  %543 = vmatmul.bf16.gmra.mxu0 %v434
  %v544 = vpop.f32.mrf.mxu0
  %v545 = vadd.f32 %v315, %v544
  %v546 = vpop.f32.mrf.mxu0
  %v547 = vadd.f32 %v317, %v546
  %548 = vmatmul.bf16.gmra.mxu0 %v437
  %v549 = vpop.f32.mrf.mxu0
  %v550 = vadd.f32 %v320, %v549
  %v551 = vpop.f32.mrf.mxu0
  %552 = vdwg.mxu0
  %553 = vmatpush.bf16.msra.mxu0 0
  %554 = vmatpush.bf16.msra.mxu0 0
  %555 = vmatpush.bf16.msra.mxu0 0
  %556 = vmatpush.bf16.msra.mxu0 0
  %557 = vmatpush.bf16.msra.mxu0 0
  %558 = vmatpush.bf16.msra.mxu0 %v408
  %559 = vmatpush.bf16.msra.mxu0 %v404
  %560 = vmatpush.bf16.msra.mxu0 %v400
  %561 = vmatmul.bf16.gmra.mxu0 %v422
  %v562 = vpop.f32.mrf.mxu0
  %v563 = vadd.f32 %v333, %v562
  %v564 = vpop.f32.mrf.mxu0
  %v565 = vadd.f32 %v335, %v564
  %566 = vmatmul.bf16.gmra.mxu0 %v425
  %v567 = vpop.f32.mrf.mxu0
  %v568 = vadd.f32 %v338, %v567
  %v569 = vpop.f32.mrf.mxu0
  %v570 = vadd.f32 %v340, %v569
  %571 = vmatmul.bf16.gmra.mxu0 %v428
  %v572 = vpop.f32.mrf.mxu0
  %v573 = vadd.f32 %v343, %v572
  %v574 = vpop.f32.mrf.mxu0
  %v575 = vadd.f32 %v345, %v574
  %576 = vmatmul.bf16.gmra.mxu0 %v431
  %v577 = vpop.f32.mrf.mxu0
  %v578 = vadd.f32 %v348, %v577
  %v579 = vpop.f32.mrf.mxu0
  %v580 = vadd.f32 %v350, %v579
  %581 = vmatmul.bf16.gmra.mxu0 %v434
  %v582 = vpop.f32.mrf.mxu0
  %v583 = vadd.f32 %v353, %v582
  %v584 = vpop.f32.mrf.mxu0
  %v585 = vadd.f32 %v355, %v584
  %586 = vmatmul.bf16.gmra.mxu0 %v437
  %v587 = vpop.f32.mrf.mxu0
  %v588 = vadd.f32 %v358, %v587
  %v589 = vpop.f32.mrf.mxu0
  %590 = vdwg.mxu0
  %v592 = vsel %vm190, %v105, 0
  %v595 = vsel %vm190, %v106, 0
  %v598 = vsel %vm190, %v107, 0
  %v601 = vsel %vm190, %v108, 0
  %v604 = vsel %vm190, %v109, 0
  %v607 = vsel %vm190, %v110, 0
  %609 = vmatpush.bf16.msra.mxu0 0
  %610 = vmatpush.bf16.msra.mxu0 0
  %611 = vmatpush.bf16.msra.mxu0 0
  %612 = vmatpush.bf16.msra.mxu0 0
  %613 = vmatpush.bf16.msra.mxu0 0
  %614 = vmatpush.bf16.msra.mxu0 %v174
  %615 = vmatpush.bf16.msra.mxu0 %v170
  %616 = vmatpush.bf16.msra.mxu0 %v166
  %617 = vmatmul.bf16.gmra.mxu0 %v592
  %v618 = vpop.f32.mrf.mxu0
  %v619 = vadd.f32 0.0, %v618
  %v620 = vpop.f32.mrf.mxu0
  %v621 = vadd.f32 0.0, %v620
  %622 = vmatmul.bf16.gmra.mxu0 %v595
  %v623 = vpop.f32.mrf.mxu0
  %v624 = vadd.f32 0.0, %v623
  %v625 = vpop.f32.mrf.mxu0
  %v626 = vadd.f32 0.0, %v625
  %627 = vmatmul.bf16.gmra.mxu0 %v598
  %v628 = vpop.f32.mrf.mxu0
  %v629 = vadd.f32 0.0, %v628
  %v630 = vpop.f32.mrf.mxu0
  %v631 = vadd.f32 0.0, %v630
  %632 = vmatmul.bf16.gmra.mxu0 %v601
  %v633 = vpop.f32.mrf.mxu0
  %v634 = vadd.f32 0.0, %v633
  %v635 = vpop.f32.mrf.mxu0
  %v636 = vadd.f32 0.0, %v635
  %637 = vmatmul.bf16.gmra.mxu0 %v604
  %v638 = vpop.f32.mrf.mxu0
  %v639 = vadd.f32 0.0, %v638
  %v640 = vpop.f32.mrf.mxu0
  %v641 = vadd.f32 0.0, %v640
  %642 = vmatmul.bf16.gmra.mxu0 %v607
  %v643 = vpop.f32.mrf.mxu0
  %v644 = vadd.f32 0.0, %v643
  %v645 = vpop.f32.mrf.mxu0
  %646 = vdwg.mxu0
  %647 = vmatpush.bf16.msra.mxu0 0
  %648 = vmatpush.bf16.msra.mxu0 0
  %649 = vmatpush.bf16.msra.mxu0 0
  %650 = vmatpush.bf16.msra.mxu0 0
  %651 = vmatpush.bf16.msra.mxu0 0
  %652 = vmatpush.bf16.msra.mxu0 %v175
  %653 = vmatpush.bf16.msra.mxu0 %v171
  %654 = vmatpush.bf16.msra.mxu0 %v167
  %655 = vmatmul.bf16.gmra.mxu0 %v592
  %v656 = vpop.f32.mrf.mxu0
  %v657 = vadd.f32 0.0, %v656
  %v658 = vpop.f32.mrf.mxu0
  %v659 = vadd.f32 0.0, %v658
  %660 = vmatmul.bf16.gmra.mxu0 %v595
  %v661 = vpop.f32.mrf.mxu0
  %v662 = vadd.f32 0.0, %v661
  %v663 = vpop.f32.mrf.mxu0
  %v664 = vadd.f32 0.0, %v663
  %665 = vmatmul.bf16.gmra.mxu0 %v598
  %v666 = vpop.f32.mrf.mxu0
  %v667 = vadd.f32 0.0, %v666
  %v668 = vpop.f32.mrf.mxu0
  %v669 = vadd.f32 0.0, %v668
  %670 = vmatmul.bf16.gmra.mxu0 %v601
  %v671 = vpop.f32.mrf.mxu0
  %v672 = vadd.f32 0.0, %v671
  %v673 = vpop.f32.mrf.mxu0
  %v674 = vadd.f32 0.0, %v673
  %675 = vmatmul.bf16.gmra.mxu0 %v604
  %v676 = vpop.f32.mrf.mxu0
  %v677 = vadd.f32 0.0, %v676
  %v678 = vpop.f32.mrf.mxu0
  %v679 = vadd.f32 0.0, %v678
  %680 = vmatmul.bf16.gmra.mxu0 %v607
  %v681 = vpop.f32.mrf.mxu0
  %v682 = vadd.f32 0.0, %v681
  %v683 = vpop.f32.mrf.mxu0
  %684 = vdwg.mxu0
  %685 = vmatpush.bf16.msra.mxu0 0
  %686 = vmatpush.bf16.msra.mxu0 0
  %687 = vmatpush.bf16.msra.mxu0 0
  %688 = vmatpush.bf16.msra.mxu0 0
  %689 = vmatpush.bf16.msra.mxu0 0
  %690 = vmatpush.bf16.msra.mxu0 %v176
  %691 = vmatpush.bf16.msra.mxu0 %v172
  %692 = vmatpush.bf16.msra.mxu0 %v168
  %693 = vmatmul.bf16.gmra.mxu0 %v592
  %v694 = vpop.f32.mrf.mxu0
  %v695 = vadd.f32 0.0, %v694
  %v696 = vpop.f32.mrf.mxu0
  %v697 = vadd.f32 0.0, %v696
  %698 = vmatmul.bf16.gmra.mxu0 %v595
  %v699 = vpop.f32.mrf.mxu0
  %v700 = vadd.f32 0.0, %v699
  %v701 = vpop.f32.mrf.mxu0
  %v702 = vadd.f32 0.0, %v701
  %703 = vmatmul.bf16.gmra.mxu0 %v598
  %v704 = vpop.f32.mrf.mxu0
  %v705 = vadd.f32 0.0, %v704
  %v706 = vpop.f32.mrf.mxu0
  %v707 = vadd.f32 0.0, %v706
  %708 = vmatmul.bf16.gmra.mxu0 %v601
  %v709 = vpop.f32.mrf.mxu0
  %v710 = vadd.f32 0.0, %v709
  %v711 = vpop.f32.mrf.mxu0
  %v712 = vadd.f32 0.0, %v711
  %713 = vmatmul.bf16.gmra.mxu0 %v604
  %v714 = vpop.f32.mrf.mxu0
  %v715 = vadd.f32 0.0, %v714
  %v716 = vpop.f32.mrf.mxu0
  %v717 = vadd.f32 0.0, %v716
  %718 = vmatmul.bf16.gmra.mxu0 %v607
  %v719 = vpop.f32.mrf.mxu0
  %v720 = vadd.f32 0.0, %v719
  %v721 = vpop.f32.mrf.mxu0
  %722 = vdwg.mxu0
  %723 = vmatpush.bf16.msra.mxu0 0
  %724 = vmatpush.bf16.msra.mxu0 0
  %725 = vmatpush.bf16.msra.mxu0 0
  %726 = vmatpush.bf16.msra.mxu0 0
  %727 = vmatpush.bf16.msra.mxu0 0
  %728 = vmatpush.bf16.msra.mxu0 %v177
  %729 = vmatpush.bf16.msra.mxu0 %v173
  %730 = vmatpush.bf16.msra.mxu0 %v169
  %731 = vmatmul.bf16.gmra.mxu0 %v592
  %v732 = vpop.f32.mrf.mxu0
  %v733 = vadd.f32 0.0, %v732
  %v734 = vpop.f32.mrf.mxu0
  %v735 = vadd.f32 0.0, %v734
  %736 = vmatmul.bf16.gmra.mxu0 %v595
  %v737 = vpop.f32.mrf.mxu0
  %v738 = vadd.f32 0.0, %v737
  %v739 = vpop.f32.mrf.mxu0
  %v740 = vadd.f32 0.0, %v739
  %741 = vmatmul.bf16.gmra.mxu0 %v598
  %v742 = vpop.f32.mrf.mxu0
  %v743 = vadd.f32 0.0, %v742
  %v744 = vpop.f32.mrf.mxu0
  %v745 = vadd.f32 0.0, %v744
  %746 = vmatmul.bf16.gmra.mxu0 %v601
  %v747 = vpop.f32.mrf.mxu0
  %v748 = vadd.f32 0.0, %v747
  %v749 = vpop.f32.mrf.mxu0
  %v750 = vadd.f32 0.0, %v749
  %751 = vmatmul.bf16.gmra.mxu0 %v604
  %v752 = vpop.f32.mrf.mxu0
  %v753 = vadd.f32 0.0, %v752
  %v754 = vpop.f32.mrf.mxu0
  %v755 = vadd.f32 0.0, %v754
  %756 = vmatmul.bf16.gmra.mxu0 %v607
  %v757 = vpop.f32.mrf.mxu0
  %v758 = vadd.f32 0.0, %v757
  %v759 = vpop.f32.mrf.mxu0
  %760 = vdwg.mxu0
  %761 = vmatpush.bf16.msra.mxu0 0
  %762 = vmatpush.bf16.msra.mxu0 0
  %763 = vmatpush.bf16.msra.mxu0 0
  %764 = vmatpush.bf16.msra.mxu0 0
  %765 = vmatpush.bf16.msra.mxu0 0
  %766 = vmatpush.bf16.msra.mxu0 %v405
  %767 = vmatpush.bf16.msra.mxu0 %v401
  %768 = vmatpush.bf16.msra.mxu0 %v397
  %769 = vmatmul.bf16.gmra.mxu0 %v192
  %v770 = vpop.f32.mrf.mxu0
  %v771 = vadd.f32 %v619, %v770
  %v772 = vpop.f32.mrf.mxu0
  %v773 = vadd.f32 %v621, %v772
  %774 = vmatmul.bf16.gmra.mxu0 %v195
  %v775 = vpop.f32.mrf.mxu0
  %v776 = vadd.f32 %v624, %v775
  %v777 = vpop.f32.mrf.mxu0
  %v778 = vadd.f32 %v626, %v777
  %779 = vmatmul.bf16.gmra.mxu0 %v198
  %v780 = vpop.f32.mrf.mxu0
  %v781 = vadd.f32 %v629, %v780
  %v782 = vpop.f32.mrf.mxu0
  %v783 = vadd.f32 %v631, %v782
  %784 = vmatmul.bf16.gmra.mxu0 %v201
  %v785 = vpop.f32.mrf.mxu0
  %v786 = vadd.f32 %v634, %v785
  %v787 = vpop.f32.mrf.mxu0
  %v788 = vadd.f32 %v636, %v787
  %789 = vmatmul.bf16.gmra.mxu0 %v204
  %v790 = vpop.f32.mrf.mxu0
  %v791 = vadd.f32 %v639, %v790
  %v792 = vpop.f32.mrf.mxu0
  %v793 = vadd.f32 %v641, %v792
  %794 = vmatmul.bf16.gmra.mxu0 %v207
  %v795 = vpop.f32.mrf.mxu0
  %v796 = vadd.f32 %v644, %v795
  %v797 = vpop.f32.mrf.mxu0
  %798 = vdwg.mxu0
  %799 = vmatpush.bf16.msra.mxu0 0
  %800 = vmatpush.bf16.msra.mxu0 0
  %801 = vmatpush.bf16.msra.mxu0 0
  %802 = vmatpush.bf16.msra.mxu0 0
  %803 = vmatpush.bf16.msra.mxu0 0
  %804 = vmatpush.bf16.msra.mxu0 %v406
  %805 = vmatpush.bf16.msra.mxu0 %v402
  %806 = vmatpush.bf16.msra.mxu0 %v398
  %807 = vmatmul.bf16.gmra.mxu0 %v192
  %v808 = vpop.f32.mrf.mxu0
  %v809 = vadd.f32 %v657, %v808
  %v810 = vpop.f32.mrf.mxu0
  %v811 = vadd.f32 %v659, %v810
  %812 = vmatmul.bf16.gmra.mxu0 %v195
  %v813 = vpop.f32.mrf.mxu0
  %v814 = vadd.f32 %v662, %v813
  %v815 = vpop.f32.mrf.mxu0
  %v816 = vadd.f32 %v664, %v815
  %817 = vmatmul.bf16.gmra.mxu0 %v198
  %v818 = vpop.f32.mrf.mxu0
  %v819 = vadd.f32 %v667, %v818
  %v820 = vpop.f32.mrf.mxu0
  %v821 = vadd.f32 %v669, %v820
  %822 = vmatmul.bf16.gmra.mxu0 %v201
  %v823 = vpop.f32.mrf.mxu0
  %v824 = vadd.f32 %v672, %v823
  %v825 = vpop.f32.mrf.mxu0
  %v826 = vadd.f32 %v674, %v825
  %827 = vmatmul.bf16.gmra.mxu0 %v204
  %v828 = vpop.f32.mrf.mxu0
  %v829 = vadd.f32 %v677, %v828
  %v830 = vpop.f32.mrf.mxu0
  %v831 = vadd.f32 %v679, %v830
  %832 = vmatmul.bf16.gmra.mxu0 %v207
  %v833 = vpop.f32.mrf.mxu0
  %v834 = vadd.f32 %v682, %v833
  %v835 = vpop.f32.mrf.mxu0
  %836 = vdwg.mxu0
  %837 = vmatpush.bf16.msra.mxu0 0
  %838 = vmatpush.bf16.msra.mxu0 0
  %839 = vmatpush.bf16.msra.mxu0 0
  %840 = vmatpush.bf16.msra.mxu0 0
  %841 = vmatpush.bf16.msra.mxu0 0
  %842 = vmatpush.bf16.msra.mxu0 %v407
  %843 = vmatpush.bf16.msra.mxu0 %v403
  %844 = vmatpush.bf16.msra.mxu0 %v399
  %845 = vmatmul.bf16.gmra.mxu0 %v192
  %v846 = vpop.f32.mrf.mxu0
  %v847 = vadd.f32 %v695, %v846
  %v848 = vpop.f32.mrf.mxu0
  %v849 = vadd.f32 %v697, %v848
  %850 = vmatmul.bf16.gmra.mxu0 %v195
  %v851 = vpop.f32.mrf.mxu0
  %v852 = vadd.f32 %v700, %v851
  %v853 = vpop.f32.mrf.mxu0
  %v854 = vadd.f32 %v702, %v853
  %855 = vmatmul.bf16.gmra.mxu0 %v198
  %v856 = vpop.f32.mrf.mxu0
  %v857 = vadd.f32 %v705, %v856
  %v858 = vpop.f32.mrf.mxu0
  %v859 = vadd.f32 %v707, %v858
  %860 = vmatmul.bf16.gmra.mxu0 %v201
  %v861 = vpop.f32.mrf.mxu0
  %v862 = vadd.f32 %v710, %v861
  %v863 = vpop.f32.mrf.mxu0
  %v864 = vadd.f32 %v712, %v863
  %865 = vmatmul.bf16.gmra.mxu0 %v204
  %v866 = vpop.f32.mrf.mxu0
  %v867 = vadd.f32 %v715, %v866
  %v868 = vpop.f32.mrf.mxu0
  %v869 = vadd.f32 %v717, %v868
  %870 = vmatmul.bf16.gmra.mxu0 %v207
  %v871 = vpop.f32.mrf.mxu0
  %v872 = vadd.f32 %v720, %v871
  %v873 = vpop.f32.mrf.mxu0
  %874 = vdwg.mxu0
  %875 = vmatpush.bf16.msra.mxu0 0
  %876 = vmatpush.bf16.msra.mxu0 0
  %877 = vmatpush.bf16.msra.mxu0 0
  %878 = vmatpush.bf16.msra.mxu0 0
  %879 = vmatpush.bf16.msra.mxu0 0
  %880 = vmatpush.bf16.msra.mxu0 %v408
  %881 = vmatpush.bf16.msra.mxu0 %v404
  %882 = vmatpush.bf16.msra.mxu0 %v400
  %883 = vmatmul.bf16.gmra.mxu0 %v192
  %v884 = vpop.f32.mrf.mxu0
  %v885 = vadd.f32 %v733, %v884
  %v886 = vpop.f32.mrf.mxu0
  %v887 = vadd.f32 %v735, %v886
  %888 = vmatmul.bf16.gmra.mxu0 %v195
  %v889 = vpop.f32.mrf.mxu0
  %v890 = vadd.f32 %v738, %v889
  %v891 = vpop.f32.mrf.mxu0
  %v892 = vadd.f32 %v740, %v891
  %893 = vmatmul.bf16.gmra.mxu0 %v198
  %v894 = vpop.f32.mrf.mxu0
  %v895 = vadd.f32 %v743, %v894
  %v896 = vpop.f32.mrf.mxu0
  %v897 = vadd.f32 %v745, %v896
  %898 = vmatmul.bf16.gmra.mxu0 %v201
  %v899 = vpop.f32.mrf.mxu0
  %v900 = vadd.f32 %v748, %v899
  %v901 = vpop.f32.mrf.mxu0
  %v902 = vadd.f32 %v750, %v901
  %903 = vmatmul.bf16.gmra.mxu0 %v204
  %v904 = vpop.f32.mrf.mxu0
  %v905 = vadd.f32 %v753, %v904
  %v906 = vpop.f32.mrf.mxu0
  %v907 = vadd.f32 %v755, %v906
  %908 = vmatmul.bf16.gmra.mxu0 %v207
  %v909 = vpop.f32.mrf.mxu0
  %v910 = vadd.f32 %v758, %v909
  %v911 = vpop.f32.mrf.mxu0
  %912 = vdwg.mxu0
  %v914 = vsel %vm190, %v111, 0
  %v917 = vsel %vm190, %v112, 0
  %v920 = vsel %vm190, %v113, 0
  %v923 = vsel %vm190, %v114, 0
  %v926 = vsel %vm190, %v115, 0
  %v929 = vsel %vm190, %v116, 0
  %931 = vmatpush.bf16.msra.mxu0 0
  %932 = vmatpush.bf16.msra.mxu0 0
  %933 = vmatpush.bf16.msra.mxu0 0
  %934 = vmatpush.bf16.msra.mxu0 0
  %935 = vmatpush.bf16.msra.mxu0 0
  %936 = vmatpush.bf16.msra.mxu0 %v174
  %937 = vmatpush.bf16.msra.mxu0 %v170
  %938 = vmatpush.bf16.msra.mxu0 %v166
  %939 = vmatmul.bf16.gmra.mxu0 %v914
  %v940 = vpop.f32.mrf.mxu0
  %v941 = vadd.f32 0.0, %v940
  %v942 = vpop.f32.mrf.mxu0
  %v943 = vadd.f32 0.0, %v942
  %944 = vmatmul.bf16.gmra.mxu0 %v917
  %v945 = vpop.f32.mrf.mxu0
  %v946 = vadd.f32 0.0, %v945
  %v947 = vpop.f32.mrf.mxu0
  %v948 = vadd.f32 0.0, %v947
  %949 = vmatmul.bf16.gmra.mxu0 %v920
  %v950 = vpop.f32.mrf.mxu0
  %v951 = vadd.f32 0.0, %v950
  %v952 = vpop.f32.mrf.mxu0
  %v953 = vadd.f32 0.0, %v952
  %954 = vmatmul.bf16.gmra.mxu0 %v923
  %v955 = vpop.f32.mrf.mxu0
  %v956 = vadd.f32 0.0, %v955
  %v957 = vpop.f32.mrf.mxu0
  %v958 = vadd.f32 0.0, %v957
  %959 = vmatmul.bf16.gmra.mxu0 %v926
  %v960 = vpop.f32.mrf.mxu0
  %v961 = vadd.f32 0.0, %v960
  %v962 = vpop.f32.mrf.mxu0
  %v963 = vadd.f32 0.0, %v962
  %964 = vmatmul.bf16.gmra.mxu0 %v929
  %v965 = vpop.f32.mrf.mxu0
  %v966 = vadd.f32 0.0, %v965
  %v967 = vpop.f32.mrf.mxu0
  %968 = vdwg.mxu0
  %969 = vmatpush.bf16.msra.mxu0 0
  %970 = vmatpush.bf16.msra.mxu0 0
  %971 = vmatpush.bf16.msra.mxu0 0
  %972 = vmatpush.bf16.msra.mxu0 0
  %973 = vmatpush.bf16.msra.mxu0 0
  %974 = vmatpush.bf16.msra.mxu0 %v175
  %975 = vmatpush.bf16.msra.mxu0 %v171
  %976 = vmatpush.bf16.msra.mxu0 %v167
  %977 = vmatmul.bf16.gmra.mxu0 %v914
  %v978 = vpop.f32.mrf.mxu0
  %v979 = vadd.f32 0.0, %v978
  %v980 = vpop.f32.mrf.mxu0
  %v981 = vadd.f32 0.0, %v980
  %982 = vmatmul.bf16.gmra.mxu0 %v917
  %v983 = vpop.f32.mrf.mxu0
  %v984 = vadd.f32 0.0, %v983
  %v985 = vpop.f32.mrf.mxu0
  %v986 = vadd.f32 0.0, %v985
  %987 = vmatmul.bf16.gmra.mxu0 %v920
  %v988 = vpop.f32.mrf.mxu0
  %v989 = vadd.f32 0.0, %v988
  %v990 = vpop.f32.mrf.mxu0
  %v991 = vadd.f32 0.0, %v990
  %992 = vmatmul.bf16.gmra.mxu0 %v923
  %v993 = vpop.f32.mrf.mxu0
  %v994 = vadd.f32 0.0, %v993
  %v995 = vpop.f32.mrf.mxu0
  %v996 = vadd.f32 0.0, %v995
  %997 = vmatmul.bf16.gmra.mxu0 %v926
  %v998 = vpop.f32.mrf.mxu0
  %v999 = vadd.f32 0.0, %v998
  %v1000 = vpop.f32.mrf.mxu0
  %v1001 = vadd.f32 0.0, %v1000
  %1002 = vmatmul.bf16.gmra.mxu0 %v929
  %v1003 = vpop.f32.mrf.mxu0
  %v1004 = vadd.f32 0.0, %v1003
  %v1005 = vpop.f32.mrf.mxu0
  %1006 = vdwg.mxu0
  %1007 = vmatpush.bf16.msra.mxu0 0
  %1008 = vmatpush.bf16.msra.mxu0 0
  %1009 = vmatpush.bf16.msra.mxu0 0
  %1010 = vmatpush.bf16.msra.mxu0 0
  %1011 = vmatpush.bf16.msra.mxu0 0
  %1012 = vmatpush.bf16.msra.mxu0 %v176
  %1013 = vmatpush.bf16.msra.mxu0 %v172
  %1014 = vmatpush.bf16.msra.mxu0 %v168
  %1015 = vmatmul.bf16.gmra.mxu0 %v914
  %v1016 = vpop.f32.mrf.mxu0
  %v1017 = vadd.f32 0.0, %v1016
  %v1018 = vpop.f32.mrf.mxu0
  %v1019 = vadd.f32 0.0, %v1018
  %1020 = vmatmul.bf16.gmra.mxu0 %v917
  %v1021 = vpop.f32.mrf.mxu0
  %v1022 = vadd.f32 0.0, %v1021
  %v1023 = vpop.f32.mrf.mxu0
  %v1024 = vadd.f32 0.0, %v1023
  %1025 = vmatmul.bf16.gmra.mxu0 %v920
  %v1026 = vpop.f32.mrf.mxu0
  %v1027 = vadd.f32 0.0, %v1026
  %v1028 = vpop.f32.mrf.mxu0
  %v1029 = vadd.f32 0.0, %v1028
  %1030 = vmatmul.bf16.gmra.mxu0 %v923
  %v1031 = vpop.f32.mrf.mxu0
  %v1032 = vadd.f32 0.0, %v1031
  %v1033 = vpop.f32.mrf.mxu0
  %v1034 = vadd.f32 0.0, %v1033
  %1035 = vmatmul.bf16.gmra.mxu0 %v926
  %v1036 = vpop.f32.mrf.mxu0
  %v1037 = vadd.f32 0.0, %v1036
  %v1038 = vpop.f32.mrf.mxu0
  %v1039 = vadd.f32 0.0, %v1038
  %1040 = vmatmul.bf16.gmra.mxu0 %v929
  %v1041 = vpop.f32.mrf.mxu0
  %v1042 = vadd.f32 0.0, %v1041
  %v1043 = vpop.f32.mrf.mxu0
  %1044 = vdwg.mxu0
  %1045 = vmatpush.bf16.msra.mxu0 0
  %1046 = vmatpush.bf16.msra.mxu0 0
  %1047 = vmatpush.bf16.msra.mxu0 0
  %1048 = vmatpush.bf16.msra.mxu0 0
  %1049 = vmatpush.bf16.msra.mxu0 0
  %1050 = vmatpush.bf16.msra.mxu0 %v177
  %1051 = vmatpush.bf16.msra.mxu0 %v173
  %1052 = vmatpush.bf16.msra.mxu0 %v169
  %1053 = vmatmul.bf16.gmra.mxu0 %v914
  %v1054 = vpop.f32.mrf.mxu0
  %v1055 = vadd.f32 0.0, %v1054
  %v1056 = vpop.f32.mrf.mxu0
  %v1057 = vadd.f32 0.0, %v1056
  %1058 = vmatmul.bf16.gmra.mxu0 %v917
  %v1059 = vpop.f32.mrf.mxu0
  %v1060 = vadd.f32 0.0, %v1059
  %v1061 = vpop.f32.mrf.mxu0
  %v1062 = vadd.f32 0.0, %v1061
  %1063 = vmatmul.bf16.gmra.mxu0 %v920
  %v1064 = vpop.f32.mrf.mxu0
  %v1065 = vadd.f32 0.0, %v1064
  %v1066 = vpop.f32.mrf.mxu0
  %v1067 = vadd.f32 0.0, %v1066
  %1068 = vmatmul.bf16.gmra.mxu0 %v923
  %v1069 = vpop.f32.mrf.mxu0
  %v1070 = vadd.f32 0.0, %v1069
  %v1071 = vpop.f32.mrf.mxu0
  %v1072 = vadd.f32 0.0, %v1071
  %1073 = vmatmul.bf16.gmra.mxu0 %v926
  %v1074 = vpop.f32.mrf.mxu0
  %v1075 = vadd.f32 0.0, %v1074
  %v1076 = vpop.f32.mrf.mxu0
  %v1077 = vadd.f32 0.0, %v1076
  %1078 = vmatmul.bf16.gmra.mxu0 %v929
  %v1079 = vpop.f32.mrf.mxu0
  %v1080 = vadd.f32 0.0, %v1079
  %v1081 = vpop.f32.mrf.mxu0
  %1082 = vdwg.mxu0
  %1083 = vmatpush.bf16.msra.mxu0 0
  %1084 = vmatpush.bf16.msra.mxu0 0
  %1085 = vmatpush.bf16.msra.mxu0 0
  %1086 = vmatpush.bf16.msra.mxu0 0
  %1087 = vmatpush.bf16.msra.mxu0 0
  %1088 = vmatpush.bf16.msra.mxu0 %v405
  %1089 = vmatpush.bf16.msra.mxu0 %v401
  %1090 = vmatpush.bf16.msra.mxu0 %v397
  %1091 = vmatmul.bf16.gmra.mxu0 %v592
  %v1092 = vpop.f32.mrf.mxu0
  %v1093 = vadd.f32 %v941, %v1092
  %v1094 = vpop.f32.mrf.mxu0
  %v1095 = vadd.f32 %v943, %v1094
  %1096 = vmatmul.bf16.gmra.mxu0 %v595
  %v1097 = vpop.f32.mrf.mxu0
  %v1098 = vadd.f32 %v946, %v1097
  %v1099 = vpop.f32.mrf.mxu0
  %v1100 = vadd.f32 %v948, %v1099
  %1101 = vmatmul.bf16.gmra.mxu0 %v598
  %v1102 = vpop.f32.mrf.mxu0
  %v1103 = vadd.f32 %v951, %v1102
  %v1104 = vpop.f32.mrf.mxu0
  %v1105 = vadd.f32 %v953, %v1104
  %1106 = vmatmul.bf16.gmra.mxu0 %v601
  %v1107 = vpop.f32.mrf.mxu0
  %v1108 = vadd.f32 %v956, %v1107
  %v1109 = vpop.f32.mrf.mxu0
  %v1110 = vadd.f32 %v958, %v1109
  %1111 = vmatmul.bf16.gmra.mxu0 %v604
  %v1112 = vpop.f32.mrf.mxu0
  %v1113 = vadd.f32 %v961, %v1112
  %v1114 = vpop.f32.mrf.mxu0
  %v1115 = vadd.f32 %v963, %v1114
  %1116 = vmatmul.bf16.gmra.mxu0 %v607
  %v1117 = vpop.f32.mrf.mxu0
  %v1118 = vadd.f32 %v966, %v1117
  %v1119 = vpop.f32.mrf.mxu0
  %1120 = vdwg.mxu0
  %1121 = vmatpush.bf16.msra.mxu0 0
  %1122 = vmatpush.bf16.msra.mxu0 0
  %1123 = vmatpush.bf16.msra.mxu0 0
  %1124 = vmatpush.bf16.msra.mxu0 0
  %1125 = vmatpush.bf16.msra.mxu0 0
  %1126 = vmatpush.bf16.msra.mxu0 %v406
  %1127 = vmatpush.bf16.msra.mxu0 %v402
  %1128 = vmatpush.bf16.msra.mxu0 %v398
  %1129 = vmatmul.bf16.gmra.mxu0 %v592
  %v1130 = vpop.f32.mrf.mxu0
  %v1131 = vadd.f32 %v979, %v1130
  %v1132 = vpop.f32.mrf.mxu0
  %v1133 = vadd.f32 %v981, %v1132
  %1134 = vmatmul.bf16.gmra.mxu0 %v595
  %v1135 = vpop.f32.mrf.mxu0
  %v1136 = vadd.f32 %v984, %v1135
  %v1137 = vpop.f32.mrf.mxu0
  %v1138 = vadd.f32 %v986, %v1137
  %1139 = vmatmul.bf16.gmra.mxu0 %v598
  %v1140 = vpop.f32.mrf.mxu0
  %v1141 = vadd.f32 %v989, %v1140
  %v1142 = vpop.f32.mrf.mxu0
  %v1143 = vadd.f32 %v991, %v1142
  %1144 = vmatmul.bf16.gmra.mxu0 %v601
  %v1145 = vpop.f32.mrf.mxu0
  %v1146 = vadd.f32 %v994, %v1145
  %v1147 = vpop.f32.mrf.mxu0
  %v1148 = vadd.f32 %v996, %v1147
  %1149 = vmatmul.bf16.gmra.mxu0 %v604
  %v1150 = vpop.f32.mrf.mxu0
  %v1151 = vadd.f32 %v999, %v1150
  %v1152 = vpop.f32.mrf.mxu0
  %v1153 = vadd.f32 %v1001, %v1152
  %1154 = vmatmul.bf16.gmra.mxu0 %v607
  %v1155 = vpop.f32.mrf.mxu0
  %v1156 = vadd.f32 %v1004, %v1155
  %v1157 = vpop.f32.mrf.mxu0
  %1158 = vdwg.mxu0
  %1159 = vmatpush.bf16.msra.mxu0 0
  %1160 = vmatpush.bf16.msra.mxu0 0
  %1161 = vmatpush.bf16.msra.mxu0 0
  %1162 = vmatpush.bf16.msra.mxu0 0
  %1163 = vmatpush.bf16.msra.mxu0 0
  %1164 = vmatpush.bf16.msra.mxu0 %v407
  %1165 = vmatpush.bf16.msra.mxu0 %v403
  %1166 = vmatpush.bf16.msra.mxu0 %v399
  %1167 = vmatmul.bf16.gmra.mxu0 %v592
  %v1168 = vpop.f32.mrf.mxu0
  %v1169 = vadd.f32 %v1017, %v1168
  %v1170 = vpop.f32.mrf.mxu0
  %v1171 = vadd.f32 %v1019, %v1170
  %1172 = vmatmul.bf16.gmra.mxu0 %v595
  %v1173 = vpop.f32.mrf.mxu0
  %v1174 = vadd.f32 %v1022, %v1173
  %v1175 = vpop.f32.mrf.mxu0
  %v1176 = vadd.f32 %v1024, %v1175
  %1177 = vmatmul.bf16.gmra.mxu0 %v598
  %v1178 = vpop.f32.mrf.mxu0
  %v1179 = vadd.f32 %v1027, %v1178
  %v1180 = vpop.f32.mrf.mxu0
  %v1181 = vadd.f32 %v1029, %v1180
  %1182 = vmatmul.bf16.gmra.mxu0 %v601
  %v1183 = vpop.f32.mrf.mxu0
  %v1184 = vadd.f32 %v1032, %v1183
  %v1185 = vpop.f32.mrf.mxu0
  %v1186 = vadd.f32 %v1034, %v1185
  %1187 = vmatmul.bf16.gmra.mxu0 %v604
  %v1188 = vpop.f32.mrf.mxu0
  %v1189 = vadd.f32 %v1037, %v1188
  %v1190 = vpop.f32.mrf.mxu0
  %v1191 = vadd.f32 %v1039, %v1190
  %1192 = vmatmul.bf16.gmra.mxu0 %v607
  %v1193 = vpop.f32.mrf.mxu0
  %v1194 = vadd.f32 %v1042, %v1193
  %v1195 = vpop.f32.mrf.mxu0
  %1196 = vdwg.mxu0
  %1197 = vmatpush.bf16.msra.mxu0 0
  %1198 = vmatpush.bf16.msra.mxu0 0
  %1199 = vmatpush.bf16.msra.mxu0 0
  %1200 = vmatpush.bf16.msra.mxu0 0
  %1201 = vmatpush.bf16.msra.mxu0 0
  %1202 = vmatpush.bf16.msra.mxu0 %v408
  %1203 = vmatpush.bf16.msra.mxu0 %v404
  %1204 = vmatpush.bf16.msra.mxu0 %v400
  %1205 = vmatmul.bf16.gmra.mxu0 %v592
  %v1206 = vpop.f32.mrf.mxu0
  %v1207 = vadd.f32 %v1055, %v1206
  %v1208 = vpop.f32.mrf.mxu0
  %v1209 = vadd.f32 %v1057, %v1208
  %1210 = vmatmul.bf16.gmra.mxu0 %v595
  %v1211 = vpop.f32.mrf.mxu0
  %v1212 = vadd.f32 %v1060, %v1211
  %v1213 = vpop.f32.mrf.mxu0
  %v1214 = vadd.f32 %v1062, %v1213
  %1215 = vmatmul.bf16.gmra.mxu0 %v598
  %v1216 = vpop.f32.mrf.mxu0
  %v1217 = vadd.f32 %v1065, %v1216
  %v1218 = vpop.f32.mrf.mxu0
  %v1219 = vadd.f32 %v1067, %v1218
  %1220 = vmatmul.bf16.gmra.mxu0 %v601
  %v1221 = vpop.f32.mrf.mxu0
  %v1222 = vadd.f32 %v1070, %v1221
  %v1223 = vpop.f32.mrf.mxu0
  %v1224 = vadd.f32 %v1072, %v1223
  %1225 = vmatmul.bf16.gmra.mxu0 %v604
  %v1226 = vpop.f32.mrf.mxu0
  %v1227 = vadd.f32 %v1075, %v1226
  %v1228 = vpop.f32.mrf.mxu0
  %v1229 = vadd.f32 %v1077, %v1228
  %1230 = vmatmul.bf16.gmra.mxu0 %v607
  %v1231 = vpop.f32.mrf.mxu0
  %v1232 = vadd.f32 %v1080, %v1231
  %v1233 = vpop.f32.mrf.mxu0
  %1234 = vdwg.mxu0
  %v1235 = vpack.c.bf16 %v35, %v34
  %v1236 = vpack.c.bf16 %v37, %v36
  %v1237 = vpack.c.bf16 %v39, %v38
  %v1238 = vpack.c.bf16 %v41, %v40
  %v1239 = vpack.c.bf16 %v43, %v42
  %v1240 = vpack.c.bf16 %v44, %v44
  %v1242 = vsel %vm190, %v1235, 0
  %v1245 = vsel %vm190, %v1236, 0
  %v1248 = vsel %vm190, %v1237, 0
  %v1251 = vsel %vm190, %v1238, 0
  %v1254 = vsel %vm190, %v1239, 0
  %v1257 = vsel %vm190, %v1240, 0
  %1259 = vmatpush.bf16.msra.mxu0 0
  %1260 = vmatpush.bf16.msra.mxu0 0
  %1261 = vmatpush.bf16.msra.mxu0 0
  %1262 = vmatpush.bf16.msra.mxu0 0
  %1263 = vmatpush.bf16.msra.mxu0 0
  %1264 = vmatpush.bf16.msra.mxu0 %v174
  %1265 = vmatpush.bf16.msra.mxu0 %v170
  %1266 = vmatpush.bf16.msra.mxu0 %v166
  %1267 = vmatmul.bf16.gmra.mxu0 %v1242
  %v1268 = vpop.f32.mrf.mxu0
  %v1269 = vadd.f32 0.0, %v1268
  %v1270 = vpop.f32.mrf.mxu0
  %v1271 = vadd.f32 0.0, %v1270
  %1272 = vmatmul.bf16.gmra.mxu0 %v1245
  %v1273 = vpop.f32.mrf.mxu0
  %v1274 = vadd.f32 0.0, %v1273
  %v1275 = vpop.f32.mrf.mxu0
  %v1276 = vadd.f32 0.0, %v1275
  %1277 = vmatmul.bf16.gmra.mxu0 %v1248
  %v1278 = vpop.f32.mrf.mxu0
  %v1279 = vadd.f32 0.0, %v1278
  %v1280 = vpop.f32.mrf.mxu0
  %v1281 = vadd.f32 0.0, %v1280
  %1282 = vmatmul.bf16.gmra.mxu0 %v1251
  %v1283 = vpop.f32.mrf.mxu0
  %v1284 = vadd.f32 0.0, %v1283
  %v1285 = vpop.f32.mrf.mxu0
  %v1286 = vadd.f32 0.0, %v1285
  %1287 = vmatmul.bf16.gmra.mxu0 %v1254
  %v1288 = vpop.f32.mrf.mxu0
  %v1289 = vadd.f32 0.0, %v1288
  %v1290 = vpop.f32.mrf.mxu0
  %v1291 = vadd.f32 0.0, %v1290
  %1292 = vmatmul.bf16.gmra.mxu0 %v1257
  %v1293 = vpop.f32.mrf.mxu0
  %v1294 = vadd.f32 0.0, %v1293
  %v1295 = vpop.f32.mrf.mxu0
  %1296 = vdwg.mxu0
  %1297 = vmatpush.bf16.msra.mxu0 0
  %1298 = vmatpush.bf16.msra.mxu0 0
  %1299 = vmatpush.bf16.msra.mxu0 0
  %1300 = vmatpush.bf16.msra.mxu0 0
  %1301 = vmatpush.bf16.msra.mxu0 0
  %1302 = vmatpush.bf16.msra.mxu0 %v175
  %1303 = vmatpush.bf16.msra.mxu0 %v171
  %1304 = vmatpush.bf16.msra.mxu0 %v167
  %1305 = vmatmul.bf16.gmra.mxu0 %v1242
  %v1306 = vpop.f32.mrf.mxu0
  %v1307 = vadd.f32 0.0, %v1306
  %v1308 = vpop.f32.mrf.mxu0
  %v1309 = vadd.f32 0.0, %v1308
  %1310 = vmatmul.bf16.gmra.mxu0 %v1245
  %v1311 = vpop.f32.mrf.mxu0
  %v1312 = vadd.f32 0.0, %v1311
  %v1313 = vpop.f32.mrf.mxu0
  %v1314 = vadd.f32 0.0, %v1313
  %1315 = vmatmul.bf16.gmra.mxu0 %v1248
  %v1316 = vpop.f32.mrf.mxu0
  %v1317 = vadd.f32 0.0, %v1316
  %v1318 = vpop.f32.mrf.mxu0
  %v1319 = vadd.f32 0.0, %v1318
  %1320 = vmatmul.bf16.gmra.mxu0 %v1251
  %v1321 = vpop.f32.mrf.mxu0
  %v1322 = vadd.f32 0.0, %v1321
  %v1323 = vpop.f32.mrf.mxu0
  %v1324 = vadd.f32 0.0, %v1323
  %1325 = vmatmul.bf16.gmra.mxu0 %v1254
  %v1326 = vpop.f32.mrf.mxu0
  %v1327 = vadd.f32 0.0, %v1326
  %v1328 = vpop.f32.mrf.mxu0
  %v1329 = vadd.f32 0.0, %v1328
  %1330 = vmatmul.bf16.gmra.mxu0 %v1257
  %v1331 = vpop.f32.mrf.mxu0
  %v1332 = vadd.f32 0.0, %v1331
  %v1333 = vpop.f32.mrf.mxu0
  %1334 = vdwg.mxu0
  %1335 = vmatpush.bf16.msra.mxu0 0
  %1336 = vmatpush.bf16.msra.mxu0 0
  %1337 = vmatpush.bf16.msra.mxu0 0
  %1338 = vmatpush.bf16.msra.mxu0 0
  %1339 = vmatpush.bf16.msra.mxu0 0
  %1340 = vmatpush.bf16.msra.mxu0 %v176
  %1341 = vmatpush.bf16.msra.mxu0 %v172
  %1342 = vmatpush.bf16.msra.mxu0 %v168
  %1343 = vmatmul.bf16.gmra.mxu0 %v1242
  %v1344 = vpop.f32.mrf.mxu0
  %v1345 = vadd.f32 0.0, %v1344
  %v1346 = vpop.f32.mrf.mxu0
  %v1347 = vadd.f32 0.0, %v1346
  %1348 = vmatmul.bf16.gmra.mxu0 %v1245
  %v1349 = vpop.f32.mrf.mxu0
  %v1350 = vadd.f32 0.0, %v1349
  %v1351 = vpop.f32.mrf.mxu0
  %v1352 = vadd.f32 0.0, %v1351
  %1353 = vmatmul.bf16.gmra.mxu0 %v1248
  %v1354 = vpop.f32.mrf.mxu0
  %v1355 = vadd.f32 0.0, %v1354
  %v1356 = vpop.f32.mrf.mxu0
  %v1357 = vadd.f32 0.0, %v1356
  %1358 = vmatmul.bf16.gmra.mxu0 %v1251
  %v1359 = vpop.f32.mrf.mxu0
  %v1360 = vadd.f32 0.0, %v1359
  %v1361 = vpop.f32.mrf.mxu0
  %v1362 = vadd.f32 0.0, %v1361
  %1363 = vmatmul.bf16.gmra.mxu0 %v1254
  %v1364 = vpop.f32.mrf.mxu0
  %v1365 = vadd.f32 0.0, %v1364
  %v1366 = vpop.f32.mrf.mxu0
  %v1367 = vadd.f32 0.0, %v1366
  %1368 = vmatmul.bf16.gmra.mxu0 %v1257
  %v1369 = vpop.f32.mrf.mxu0
  %v1370 = vadd.f32 0.0, %v1369
  %v1371 = vpop.f32.mrf.mxu0
  %1372 = vdwg.mxu0
  %1373 = vmatpush.bf16.msra.mxu0 0
  %1374 = vmatpush.bf16.msra.mxu0 0
  %1375 = vmatpush.bf16.msra.mxu0 0
  %1376 = vmatpush.bf16.msra.mxu0 0
  %1377 = vmatpush.bf16.msra.mxu0 0
  %1378 = vmatpush.bf16.msra.mxu0 %v177
  %1379 = vmatpush.bf16.msra.mxu0 %v173
  %1380 = vmatpush.bf16.msra.mxu0 %v169
  %1381 = vmatmul.bf16.gmra.mxu0 %v1242
  %v1382 = vpop.f32.mrf.mxu0
  %v1383 = vadd.f32 0.0, %v1382
  %v1384 = vpop.f32.mrf.mxu0
  %v1385 = vadd.f32 0.0, %v1384
  %1386 = vmatmul.bf16.gmra.mxu0 %v1245
  %v1387 = vpop.f32.mrf.mxu0
  %v1388 = vadd.f32 0.0, %v1387
  %v1389 = vpop.f32.mrf.mxu0
  %v1390 = vadd.f32 0.0, %v1389
  %1391 = vmatmul.bf16.gmra.mxu0 %v1248
  %v1392 = vpop.f32.mrf.mxu0
  %v1393 = vadd.f32 0.0, %v1392
  %v1394 = vpop.f32.mrf.mxu0
  %v1395 = vadd.f32 0.0, %v1394
  %1396 = vmatmul.bf16.gmra.mxu0 %v1251
  %v1397 = vpop.f32.mrf.mxu0
  %v1398 = vadd.f32 0.0, %v1397
  %v1399 = vpop.f32.mrf.mxu0
  %v1400 = vadd.f32 0.0, %v1399
  %1401 = vmatmul.bf16.gmra.mxu0 %v1254
  %v1402 = vpop.f32.mrf.mxu0
  %v1403 = vadd.f32 0.0, %v1402
  %v1404 = vpop.f32.mrf.mxu0
  %v1405 = vadd.f32 0.0, %v1404
  %1406 = vmatmul.bf16.gmra.mxu0 %v1257
  %v1407 = vpop.f32.mrf.mxu0
  %v1408 = vadd.f32 0.0, %v1407
  %v1409 = vpop.f32.mrf.mxu0
  %1410 = vdwg.mxu0
  %1411 = vmatpush.bf16.msra.mxu0 0
  %1412 = vmatpush.bf16.msra.mxu0 0
  %1413 = vmatpush.bf16.msra.mxu0 0
  %1414 = vmatpush.bf16.msra.mxu0 0
  %1415 = vmatpush.bf16.msra.mxu0 0
  %1416 = vmatpush.bf16.msra.mxu0 %v405
  %1417 = vmatpush.bf16.msra.mxu0 %v401
  %1418 = vmatpush.bf16.msra.mxu0 %v397
  %1419 = vmatmul.bf16.gmra.mxu0 %v914
  %v1420 = vpop.f32.mrf.mxu0
  %v1421 = vadd.f32 %v1269, %v1420
  %v1422 = vpop.f32.mrf.mxu0
  %v1423 = vadd.f32 %v1271, %v1422
  %1424 = vmatmul.bf16.gmra.mxu0 %v917
  %v1425 = vpop.f32.mrf.mxu0
  %v1426 = vadd.f32 %v1274, %v1425
  %v1427 = vpop.f32.mrf.mxu0
  %v1428 = vadd.f32 %v1276, %v1427
  %1429 = vmatmul.bf16.gmra.mxu0 %v920
  %v1430 = vpop.f32.mrf.mxu0
  %v1431 = vadd.f32 %v1279, %v1430
  %v1432 = vpop.f32.mrf.mxu0
  %v1433 = vadd.f32 %v1281, %v1432
  %1434 = vmatmul.bf16.gmra.mxu0 %v923
  %v1435 = vpop.f32.mrf.mxu0
  %v1436 = vadd.f32 %v1284, %v1435
  %v1437 = vpop.f32.mrf.mxu0
  %v1438 = vadd.f32 %v1286, %v1437
  %1439 = vmatmul.bf16.gmra.mxu0 %v926
  %v1440 = vpop.f32.mrf.mxu0
  %v1441 = vadd.f32 %v1289, %v1440
  %v1442 = vpop.f32.mrf.mxu0
  %v1443 = vadd.f32 %v1291, %v1442
  %1444 = vmatmul.bf16.gmra.mxu0 %v929
  %v1445 = vpop.f32.mrf.mxu0
  %v1446 = vadd.f32 %v1294, %v1445
  %v1447 = vpop.f32.mrf.mxu0
  %1448 = vdwg.mxu0
  %1449 = vmatpush.bf16.msra.mxu0 0
  %1450 = vmatpush.bf16.msra.mxu0 0
  %1451 = vmatpush.bf16.msra.mxu0 0
  %1452 = vmatpush.bf16.msra.mxu0 0
  %1453 = vmatpush.bf16.msra.mxu0 0
  %1454 = vmatpush.bf16.msra.mxu0 %v406
  %1455 = vmatpush.bf16.msra.mxu0 %v402
  %1456 = vmatpush.bf16.msra.mxu0 %v398
  %1457 = vmatmul.bf16.gmra.mxu0 %v914
  %v1458 = vpop.f32.mrf.mxu0
  %v1459 = vadd.f32 %v1307, %v1458
  %v1460 = vpop.f32.mrf.mxu0
  %v1461 = vadd.f32 %v1309, %v1460
  %1462 = vmatmul.bf16.gmra.mxu0 %v917
  %v1463 = vpop.f32.mrf.mxu0
  %v1464 = vadd.f32 %v1312, %v1463
  %v1465 = vpop.f32.mrf.mxu0
  %v1466 = vadd.f32 %v1314, %v1465
  %1467 = vmatmul.bf16.gmra.mxu0 %v920
  %v1468 = vpop.f32.mrf.mxu0
  %v1469 = vadd.f32 %v1317, %v1468
  %v1470 = vpop.f32.mrf.mxu0
  %v1471 = vadd.f32 %v1319, %v1470
  %1472 = vmatmul.bf16.gmra.mxu0 %v923
  %v1473 = vpop.f32.mrf.mxu0
  %v1474 = vadd.f32 %v1322, %v1473
  %v1475 = vpop.f32.mrf.mxu0
  %v1476 = vadd.f32 %v1324, %v1475
  %1477 = vmatmul.bf16.gmra.mxu0 %v926
  %v1478 = vpop.f32.mrf.mxu0
  %v1479 = vadd.f32 %v1327, %v1478
  %v1480 = vpop.f32.mrf.mxu0
  %v1481 = vadd.f32 %v1329, %v1480
  %1482 = vmatmul.bf16.gmra.mxu0 %v929
  %v1483 = vpop.f32.mrf.mxu0
  %v1484 = vadd.f32 %v1332, %v1483
  %v1485 = vpop.f32.mrf.mxu0
  %1486 = vdwg.mxu0
  %1487 = vmatpush.bf16.msra.mxu0 0
  %1488 = vmatpush.bf16.msra.mxu0 0
  %1489 = vmatpush.bf16.msra.mxu0 0
  %1490 = vmatpush.bf16.msra.mxu0 0
  %1491 = vmatpush.bf16.msra.mxu0 0
  %1492 = vmatpush.bf16.msra.mxu0 %v407
  %1493 = vmatpush.bf16.msra.mxu0 %v403
  %1494 = vmatpush.bf16.msra.mxu0 %v399
  %1495 = vmatmul.bf16.gmra.mxu0 %v914
  %v1496 = vpop.f32.mrf.mxu0
  %v1497 = vadd.f32 %v1345, %v1496
  %v1498 = vpop.f32.mrf.mxu0
  %v1499 = vadd.f32 %v1347, %v1498
  %1500 = vmatmul.bf16.gmra.mxu0 %v917
  %v1501 = vpop.f32.mrf.mxu0
  %v1502 = vadd.f32 %v1350, %v1501
  %v1503 = vpop.f32.mrf.mxu0
  %v1504 = vadd.f32 %v1352, %v1503
  %1505 = vmatmul.bf16.gmra.mxu0 %v920
  %v1506 = vpop.f32.mrf.mxu0
  %v1507 = vadd.f32 %v1355, %v1506
  %v1508 = vpop.f32.mrf.mxu0
  %v1509 = vadd.f32 %v1357, %v1508
  %1510 = vmatmul.bf16.gmra.mxu0 %v923
  %v1511 = vpop.f32.mrf.mxu0
  %v1512 = vadd.f32 %v1360, %v1511
  %v1513 = vpop.f32.mrf.mxu0
  %v1514 = vadd.f32 %v1362, %v1513
  %1515 = vmatmul.bf16.gmra.mxu0 %v926
  %v1516 = vpop.f32.mrf.mxu0
  %v1517 = vadd.f32 %v1365, %v1516
  %v1518 = vpop.f32.mrf.mxu0
  %v1519 = vadd.f32 %v1367, %v1518
  %1520 = vmatmul.bf16.gmra.mxu0 %v929
  %v1521 = vpop.f32.mrf.mxu0
  %v1522 = vadd.f32 %v1370, %v1521
  %v1523 = vpop.f32.mrf.mxu0
  %1524 = vdwg.mxu0
  %1525 = vmatpush.bf16.msra.mxu0 0
  %1526 = vmatpush.bf16.msra.mxu0 0
  %1527 = vmatpush.bf16.msra.mxu0 0
  %1528 = vmatpush.bf16.msra.mxu0 0
  %1529 = vmatpush.bf16.msra.mxu0 0
  %1530 = vmatpush.bf16.msra.mxu0 %v408
  %1531 = vmatpush.bf16.msra.mxu0 %v404
  %1532 = vmatpush.bf16.msra.mxu0 %v400
  %1533 = vmatmul.bf16.gmra.mxu0 %v914
  %v1534 = vpop.f32.mrf.mxu0
  %v1535 = vadd.f32 %v1383, %v1534
  %v1536 = vpop.f32.mrf.mxu0
  %v1537 = vadd.f32 %v1385, %v1536
  %1538 = vmatmul.bf16.gmra.mxu0 %v917
  %v1539 = vpop.f32.mrf.mxu0
  %v1540 = vadd.f32 %v1388, %v1539
  %v1541 = vpop.f32.mrf.mxu0
  %v1542 = vadd.f32 %v1390, %v1541
  %1543 = vmatmul.bf16.gmra.mxu0 %v920
  %v1544 = vpop.f32.mrf.mxu0
  %v1545 = vadd.f32 %v1393, %v1544
  %v1546 = vpop.f32.mrf.mxu0
  %v1547 = vadd.f32 %v1395, %v1546
  %1548 = vmatmul.bf16.gmra.mxu0 %v923
  %v1549 = vpop.f32.mrf.mxu0
  %v1550 = vadd.f32 %v1398, %v1549
  %v1551 = vpop.f32.mrf.mxu0
  %v1552 = vadd.f32 %v1400, %v1551
  %1553 = vmatmul.bf16.gmra.mxu0 %v926
  %v1554 = vpop.f32.mrf.mxu0
  %v1555 = vadd.f32 %v1403, %v1554
  %v1556 = vpop.f32.mrf.mxu0
  %v1557 = vadd.f32 %v1405, %v1556
  %1558 = vmatmul.bf16.gmra.mxu0 %v929
  %v1559 = vpop.f32.mrf.mxu0
  %v1560 = vadd.f32 %v1408, %v1559
  %v1561 = vpop.f32.mrf.mxu0
  %1562 = vdwg.mxu0
  %s1563 = scalar_lea.vmem %s1, 192
  %v1564 = vld [vmem:[%s1563] sm:$0xff]
  %v1565 = vld [vmem:[%s1563 + $0x8] sm:$0xff]
  %v1566 = vld [vmem:[%s1563 + $0x10] sm:$0xff]
  %v1567 = vld [vmem:[%s1563 + $0x18] sm:$0xff]
  %v1568 = vld [vmem:[%s1563 + $0x20] sm:$0xff]
  %v1569 = vld [vmem:[%s1563 + $0x28] sm:$0xff]
  %v1570 = vld [vmem:[%s1563 + $0x30] sm:$0xff]
  %v1571 = vld [vmem:[%s1563 + $0x38] sm:$0xff]
  %v1572 = vld [vmem:[%s1563 + $0x40] sm:$0xff]
  %v1573 = vld [vmem:[%s1563 + $0x48] sm:$0xff]
  %v1574 = vld [vmem:[%s1563 + $0x50] sm:$0xff]
  %v1575 = vld [vmem:[%s1563 + $0x58] sm:$0xff]
  %v1588 = vunpack.c.l.b16 %v1564
  %v1589 = vunpack.c.h.b16 %v1564
  %v1590 = vunpack.c.l.b16 %v1565
  %v1591 = vunpack.c.h.b16 %v1565
  %v1592 = vunpack.c.l.b16 %v1566
  %v1593 = vunpack.c.h.b16 %v1566
  %v1594 = vunpack.c.l.b16 %v1567
  %v1595 = vunpack.c.h.b16 %v1567
  %v1596 = vunpack.c.l.b16 %v1568
  %v1597 = vunpack.c.h.b16 %v1568
  %v1598 = vunpack.c.l.b16 %v1569
  %v1599 = vunpack.c.h.b16 %v1569
  %v1600 = vunpack.c.l.b16 %v1570
  %v1601 = vunpack.c.h.b16 %v1570
  %v1602 = vunpack.c.l.b16 %v1571
  %v1603 = vunpack.c.h.b16 %v1571
  %v1604 = vunpack.c.l.b16 %v1572
  %v1605 = vunpack.c.h.b16 %v1572
  %v1606 = vunpack.c.l.b16 %v1573
  %v1607 = vunpack.c.h.b16 %v1573
  %v1608 = vunpack.c.l.b16 %v1574
  %v1609 = vunpack.c.h.b16 %v1574
  %v1610 = vunpack.c.l.b16 %v1575
  %v1611 = vunpack.c.h.b16 %v1575
  %v1612 = vpack.c.b16 %v1592, %v1588
  %v1613 = vpack.c.b16 %v1593, %v1589
  %v1614 = vpack.c.b16 %v1594, %v1590
  %v1615 = vpack.c.b16 %v1595, %v1591
  %v1616 = vpack.c.b16 %v1600, %v1596
  %v1617 = vpack.c.b16 %v1601, %v1597
  %v1618 = vpack.c.b16 %v1602, %v1598
  %v1619 = vpack.c.b16 %v1603, %v1599
  %v1620 = vpack.c.b16 %v1608, %v1604
  %v1621 = vpack.c.b16 %v1609, %v1605
  %v1622 = vpack.c.b16 %v1610, %v1606
  %v1623 = vpack.c.b16 %v1611, %v1607
  %1636 = vmatpush.bf16.msra.mxu0 0
  %1637 = vmatpush.bf16.msra.mxu0 0
  %1638 = vmatpush.bf16.msra.mxu0 0
  %1639 = vmatpush.bf16.msra.mxu0 0
  %1640 = vmatpush.bf16.msra.mxu0 0
  %1641 = vmatpush.bf16.msra.mxu0 %v1620
  %1642 = vmatpush.bf16.msra.mxu0 %v1616
  %1643 = vmatpush.bf16.msra.mxu0 %v1612
  %1644 = vmatmul.bf16.gmra.mxu0 %v592
  %v1645 = vpop.f32.mrf.mxu0
  %v1646 = vadd.f32 0.0, %v1645
  %v1647 = vpop.f32.mrf.mxu0
  %v1648 = vadd.f32 0.0, %v1647
  %1649 = vmatmul.bf16.gmra.mxu0 %v595
  %v1650 = vpop.f32.mrf.mxu0
  %v1651 = vadd.f32 0.0, %v1650
  %v1652 = vpop.f32.mrf.mxu0
  %v1653 = vadd.f32 0.0, %v1652
  %1654 = vmatmul.bf16.gmra.mxu0 %v598
  %v1655 = vpop.f32.mrf.mxu0
  %v1656 = vadd.f32 0.0, %v1655
  %v1657 = vpop.f32.mrf.mxu0
  %v1658 = vadd.f32 0.0, %v1657
  %1659 = vmatmul.bf16.gmra.mxu0 %v601
  %v1660 = vpop.f32.mrf.mxu0
  %v1661 = vadd.f32 0.0, %v1660
  %v1662 = vpop.f32.mrf.mxu0
  %v1663 = vadd.f32 0.0, %v1662
  %1664 = vmatmul.bf16.gmra.mxu0 %v604
  %v1665 = vpop.f32.mrf.mxu0
  %v1666 = vadd.f32 0.0, %v1665
  %v1667 = vpop.f32.mrf.mxu0
  %v1668 = vadd.f32 0.0, %v1667
  %1669 = vmatmul.bf16.gmra.mxu0 %v607
  %v1670 = vpop.f32.mrf.mxu0
  %v1671 = vadd.f32 0.0, %v1670
  %v1672 = vpop.f32.mrf.mxu0
  %1673 = vdwg.mxu0
  %1674 = vmatpush.bf16.msra.mxu0 0
  %1675 = vmatpush.bf16.msra.mxu0 0
  %1676 = vmatpush.bf16.msra.mxu0 0
  %1677 = vmatpush.bf16.msra.mxu0 0
  %1678 = vmatpush.bf16.msra.mxu0 0
  %1679 = vmatpush.bf16.msra.mxu0 %v1621
  %1680 = vmatpush.bf16.msra.mxu0 %v1617
  %1681 = vmatpush.bf16.msra.mxu0 %v1613
  %1682 = vmatmul.bf16.gmra.mxu0 %v592
  %v1683 = vpop.f32.mrf.mxu0
  %v1684 = vadd.f32 0.0, %v1683
  %v1685 = vpop.f32.mrf.mxu0
  %v1686 = vadd.f32 0.0, %v1685
  %1687 = vmatmul.bf16.gmra.mxu0 %v595
  %v1688 = vpop.f32.mrf.mxu0
  %v1689 = vadd.f32 0.0, %v1688
  %v1690 = vpop.f32.mrf.mxu0
  %v1691 = vadd.f32 0.0, %v1690
  %1692 = vmatmul.bf16.gmra.mxu0 %v598
  %v1693 = vpop.f32.mrf.mxu0
  %v1694 = vadd.f32 0.0, %v1693
  %v1695 = vpop.f32.mrf.mxu0
  %v1696 = vadd.f32 0.0, %v1695
  %1697 = vmatmul.bf16.gmra.mxu0 %v601
  %v1698 = vpop.f32.mrf.mxu0
  %v1699 = vadd.f32 0.0, %v1698
  %v1700 = vpop.f32.mrf.mxu0
  %v1701 = vadd.f32 0.0, %v1700
  %1702 = vmatmul.bf16.gmra.mxu0 %v604
  %v1703 = vpop.f32.mrf.mxu0
  %v1704 = vadd.f32 0.0, %v1703
  %v1705 = vpop.f32.mrf.mxu0
  %v1706 = vadd.f32 0.0, %v1705
  %1707 = vmatmul.bf16.gmra.mxu0 %v607
  %v1708 = vpop.f32.mrf.mxu0
  %v1709 = vadd.f32 0.0, %v1708
  %v1710 = vpop.f32.mrf.mxu0
  %1711 = vdwg.mxu0
  %1712 = vmatpush.bf16.msra.mxu0 0
  %1713 = vmatpush.bf16.msra.mxu0 0
  %1714 = vmatpush.bf16.msra.mxu0 0
  %1715 = vmatpush.bf16.msra.mxu0 0
  %1716 = vmatpush.bf16.msra.mxu0 0
  %1717 = vmatpush.bf16.msra.mxu0 %v1622
  %1718 = vmatpush.bf16.msra.mxu0 %v1618
  %1719 = vmatpush.bf16.msra.mxu0 %v1614
  %1720 = vmatmul.bf16.gmra.mxu0 %v592
  %v1721 = vpop.f32.mrf.mxu0
  %v1722 = vadd.f32 0.0, %v1721
  %v1723 = vpop.f32.mrf.mxu0
  %v1724 = vadd.f32 0.0, %v1723
  %1725 = vmatmul.bf16.gmra.mxu0 %v595
  %v1726 = vpop.f32.mrf.mxu0
  %v1727 = vadd.f32 0.0, %v1726
  %v1728 = vpop.f32.mrf.mxu0
  %v1729 = vadd.f32 0.0, %v1728
  %1730 = vmatmul.bf16.gmra.mxu0 %v598
  %v1731 = vpop.f32.mrf.mxu0
  %v1732 = vadd.f32 0.0, %v1731
  %v1733 = vpop.f32.mrf.mxu0
  %v1734 = vadd.f32 0.0, %v1733
  %1735 = vmatmul.bf16.gmra.mxu0 %v601
  %v1736 = vpop.f32.mrf.mxu0
  %v1737 = vadd.f32 0.0, %v1736
  %v1738 = vpop.f32.mrf.mxu0
  %v1739 = vadd.f32 0.0, %v1738
  %1740 = vmatmul.bf16.gmra.mxu0 %v604
  %v1741 = vpop.f32.mrf.mxu0
  %v1742 = vadd.f32 0.0, %v1741
  %v1743 = vpop.f32.mrf.mxu0
  %v1744 = vadd.f32 0.0, %v1743
  %1745 = vmatmul.bf16.gmra.mxu0 %v607
  %v1746 = vpop.f32.mrf.mxu0
  %v1747 = vadd.f32 0.0, %v1746
  %v1748 = vpop.f32.mrf.mxu0
  %1749 = vdwg.mxu0
  %1750 = vmatpush.bf16.msra.mxu0 0
  %1751 = vmatpush.bf16.msra.mxu0 0
  %1752 = vmatpush.bf16.msra.mxu0 0
  %1753 = vmatpush.bf16.msra.mxu0 0
  %1754 = vmatpush.bf16.msra.mxu0 0
  %1755 = vmatpush.bf16.msra.mxu0 %v1623
  %1756 = vmatpush.bf16.msra.mxu0 %v1619
  %1757 = vmatpush.bf16.msra.mxu0 %v1615
  %1758 = vmatmul.bf16.gmra.mxu0 %v592
  %v1759 = vpop.f32.mrf.mxu0
  %v1760 = vadd.f32 0.0, %v1759
  %v1761 = vpop.f32.mrf.mxu0
  %v1762 = vadd.f32 0.0, %v1761
  %1763 = vmatmul.bf16.gmra.mxu0 %v595
  %v1764 = vpop.f32.mrf.mxu0
  %v1765 = vadd.f32 0.0, %v1764
  %v1766 = vpop.f32.mrf.mxu0
  %v1767 = vadd.f32 0.0, %v1766
  %1768 = vmatmul.bf16.gmra.mxu0 %v598
  %v1769 = vpop.f32.mrf.mxu0
  %v1770 = vadd.f32 0.0, %v1769
  %v1771 = vpop.f32.mrf.mxu0
  %v1772 = vadd.f32 0.0, %v1771
  %1773 = vmatmul.bf16.gmra.mxu0 %v601
  %v1774 = vpop.f32.mrf.mxu0
  %v1775 = vadd.f32 0.0, %v1774
  %v1776 = vpop.f32.mrf.mxu0
  %v1777 = vadd.f32 0.0, %v1776
  %1778 = vmatmul.bf16.gmra.mxu0 %v604
  %v1779 = vpop.f32.mrf.mxu0
  %v1780 = vadd.f32 0.0, %v1779
  %v1781 = vpop.f32.mrf.mxu0
  %v1782 = vadd.f32 0.0, %v1781
  %1783 = vmatmul.bf16.gmra.mxu0 %v607
  %v1784 = vpop.f32.mrf.mxu0
  %v1785 = vadd.f32 0.0, %v1784
  %v1786 = vpop.f32.mrf.mxu0
  %1787 = vdwg.mxu0
  %v1788 = vadd.f32 %v449, %v1646
  %v1789 = vadd.f32 %v487, %v1684
  %v1790 = vadd.f32 %v525, %v1722
  %v1791 = vadd.f32 %v563, %v1760
  %v1792 = vadd.f32 %v451, %v1648
  %v1793 = vadd.f32 %v489, %v1686
  %v1794 = vadd.f32 %v527, %v1724
  %v1795 = vadd.f32 %v565, %v1762
  %v1796 = vadd.f32 %v454, %v1651
  %v1797 = vadd.f32 %v492, %v1689
  %v1798 = vadd.f32 %v530, %v1727
  %v1799 = vadd.f32 %v568, %v1765
  %v1800 = vadd.f32 %v456, %v1653
  %v1801 = vadd.f32 %v494, %v1691
  %v1802 = vadd.f32 %v532, %v1729
  %v1803 = vadd.f32 %v570, %v1767
  %v1804 = vadd.f32 %v459, %v1656
  %v1805 = vadd.f32 %v497, %v1694
  %v1806 = vadd.f32 %v535, %v1732
  %v1807 = vadd.f32 %v573, %v1770
  %v1808 = vadd.f32 %v461, %v1658
  %v1809 = vadd.f32 %v499, %v1696
  %v1810 = vadd.f32 %v537, %v1734
  %v1811 = vadd.f32 %v575, %v1772
  %v1812 = vadd.f32 %v464, %v1661
  %v1813 = vadd.f32 %v502, %v1699
  %v1814 = vadd.f32 %v540, %v1737
  %v1815 = vadd.f32 %v578, %v1775
  %v1816 = vadd.f32 %v466, %v1663
  %v1817 = vadd.f32 %v504, %v1701
  %v1818 = vadd.f32 %v542, %v1739
  %v1819 = vadd.f32 %v580, %v1777
  %v1820 = vadd.f32 %v469, %v1666
  %v1821 = vadd.f32 %v507, %v1704
  %v1822 = vadd.f32 %v545, %v1742
  %v1823 = vadd.f32 %v583, %v1780
  %v1824 = vadd.f32 %v471, %v1668
  %v1825 = vadd.f32 %v509, %v1706
  %v1826 = vadd.f32 %v547, %v1744
  %v1827 = vadd.f32 %v585, %v1782
  %v1828 = vadd.f32 %v474, %v1671
  %v1829 = vadd.f32 %v512, %v1709
  %v1830 = vadd.f32 %v550, %v1747
  %v1831 = vadd.f32 %v588, %v1785
  %1832 = vmatpush.bf16.msra.mxu0 0
  %1833 = vmatpush.bf16.msra.mxu0 0
  %1834 = vmatpush.bf16.msra.mxu0 0
  %1835 = vmatpush.bf16.msra.mxu0 0
  %1836 = vmatpush.bf16.msra.mxu0 0
  %1837 = vmatpush.bf16.msra.mxu0 %v1620
  %1838 = vmatpush.bf16.msra.mxu0 %v1616
  %1839 = vmatpush.bf16.msra.mxu0 %v1612
  %1840 = vmatmul.bf16.gmra.mxu0 %v914
  %v1841 = vpop.f32.mrf.mxu0
  %v1842 = vadd.f32 0.0, %v1841
  %v1843 = vpop.f32.mrf.mxu0
  %v1844 = vadd.f32 0.0, %v1843
  %1845 = vmatmul.bf16.gmra.mxu0 %v917
  %v1846 = vpop.f32.mrf.mxu0
  %v1847 = vadd.f32 0.0, %v1846
  %v1848 = vpop.f32.mrf.mxu0
  %v1849 = vadd.f32 0.0, %v1848
  %1850 = vmatmul.bf16.gmra.mxu0 %v920
  %v1851 = vpop.f32.mrf.mxu0
  %v1852 = vadd.f32 0.0, %v1851
  %v1853 = vpop.f32.mrf.mxu0
  %v1854 = vadd.f32 0.0, %v1853
  %1855 = vmatmul.bf16.gmra.mxu0 %v923
  %v1856 = vpop.f32.mrf.mxu0
  %v1857 = vadd.f32 0.0, %v1856
  %v1858 = vpop.f32.mrf.mxu0
  %v1859 = vadd.f32 0.0, %v1858
  %1860 = vmatmul.bf16.gmra.mxu0 %v926
  %v1861 = vpop.f32.mrf.mxu0
  %v1862 = vadd.f32 0.0, %v1861
  %v1863 = vpop.f32.mrf.mxu0
  %v1864 = vadd.f32 0.0, %v1863
  %1865 = vmatmul.bf16.gmra.mxu0 %v929
  %v1866 = vpop.f32.mrf.mxu0
  %v1867 = vadd.f32 0.0, %v1866
  %v1868 = vpop.f32.mrf.mxu0
  %1869 = vdwg.mxu0
  %1870 = vmatpush.bf16.msra.mxu0 0
  %1871 = vmatpush.bf16.msra.mxu0 0
  %1872 = vmatpush.bf16.msra.mxu0 0
  %1873 = vmatpush.bf16.msra.mxu0 0
  %1874 = vmatpush.bf16.msra.mxu0 0
  %1875 = vmatpush.bf16.msra.mxu0 %v1621
  %1876 = vmatpush.bf16.msra.mxu0 %v1617
  %1877 = vmatpush.bf16.msra.mxu0 %v1613
  %1878 = vmatmul.bf16.gmra.mxu0 %v914
  %v1879 = vpop.f32.mrf.mxu0
  %v1880 = vadd.f32 0.0, %v1879
  %v1881 = vpop.f32.mrf.mxu0
  %v1882 = vadd.f32 0.0, %v1881
  %1883 = vmatmul.bf16.gmra.mxu0 %v917
  %v1884 = vpop.f32.mrf.mxu0
  %v1885 = vadd.f32 0.0, %v1884
  %v1886 = vpop.f32.mrf.mxu0
  %v1887 = vadd.f32 0.0, %v1886
  %1888 = vmatmul.bf16.gmra.mxu0 %v920
  %v1889 = vpop.f32.mrf.mxu0
  %v1890 = vadd.f32 0.0, %v1889
  %v1891 = vpop.f32.mrf.mxu0
  %v1892 = vadd.f32 0.0, %v1891
  %1893 = vmatmul.bf16.gmra.mxu0 %v923
  %v1894 = vpop.f32.mrf.mxu0
  %v1895 = vadd.f32 0.0, %v1894
  %v1896 = vpop.f32.mrf.mxu0
  %v1897 = vadd.f32 0.0, %v1896
  %1898 = vmatmul.bf16.gmra.mxu0 %v926
  %v1899 = vpop.f32.mrf.mxu0
  %v1900 = vadd.f32 0.0, %v1899
  %v1901 = vpop.f32.mrf.mxu0
  %v1902 = vadd.f32 0.0, %v1901
  %1903 = vmatmul.bf16.gmra.mxu0 %v929
  %v1904 = vpop.f32.mrf.mxu0
  %v1905 = vadd.f32 0.0, %v1904
  %v1906 = vpop.f32.mrf.mxu0
  %1907 = vdwg.mxu0
  %1908 = vmatpush.bf16.msra.mxu0 0
  %1909 = vmatpush.bf16.msra.mxu0 0
  %1910 = vmatpush.bf16.msra.mxu0 0
  %1911 = vmatpush.bf16.msra.mxu0 0
  %1912 = vmatpush.bf16.msra.mxu0 0
  %1913 = vmatpush.bf16.msra.mxu0 %v1622
  %1914 = vmatpush.bf16.msra.mxu0 %v1618
  %1915 = vmatpush.bf16.msra.mxu0 %v1614
  %1916 = vmatmul.bf16.gmra.mxu0 %v914
  %v1917 = vpop.f32.mrf.mxu0
  %v1918 = vadd.f32 0.0, %v1917
  %v1919 = vpop.f32.mrf.mxu0
  %v1920 = vadd.f32 0.0, %v1919
  %1921 = vmatmul.bf16.gmra.mxu0 %v917
  %v1922 = vpop.f32.mrf.mxu0
  %v1923 = vadd.f32 0.0, %v1922
  %v1924 = vpop.f32.mrf.mxu0
  %v1925 = vadd.f32 0.0, %v1924
  %1926 = vmatmul.bf16.gmra.mxu0 %v920
  %v1927 = vpop.f32.mrf.mxu0
  %v1928 = vadd.f32 0.0, %v1927
  %v1929 = vpop.f32.mrf.mxu0
  %v1930 = vadd.f32 0.0, %v1929
  %1931 = vmatmul.bf16.gmra.mxu0 %v923
  %v1932 = vpop.f32.mrf.mxu0
  %v1933 = vadd.f32 0.0, %v1932
  %v1934 = vpop.f32.mrf.mxu0
  %v1935 = vadd.f32 0.0, %v1934
  %1936 = vmatmul.bf16.gmra.mxu0 %v926
  %v1937 = vpop.f32.mrf.mxu0
  %v1938 = vadd.f32 0.0, %v1937
  %v1939 = vpop.f32.mrf.mxu0
  %v1940 = vadd.f32 0.0, %v1939
  %1941 = vmatmul.bf16.gmra.mxu0 %v929
  %v1942 = vpop.f32.mrf.mxu0
  %v1943 = vadd.f32 0.0, %v1942
  %v1944 = vpop.f32.mrf.mxu0
  %1945 = vdwg.mxu0
  %1946 = vmatpush.bf16.msra.mxu0 0
  %1947 = vmatpush.bf16.msra.mxu0 0
  %1948 = vmatpush.bf16.msra.mxu0 0
  %1949 = vmatpush.bf16.msra.mxu0 0
  %1950 = vmatpush.bf16.msra.mxu0 0
  %1951 = vmatpush.bf16.msra.mxu0 %v1623
  %1952 = vmatpush.bf16.msra.mxu0 %v1619
  %1953 = vmatpush.bf16.msra.mxu0 %v1615
  %1954 = vmatmul.bf16.gmra.mxu0 %v914
  %v1955 = vpop.f32.mrf.mxu0
  %v1956 = vadd.f32 0.0, %v1955
  %v1957 = vpop.f32.mrf.mxu0
  %v1958 = vadd.f32 0.0, %v1957
  %1959 = vmatmul.bf16.gmra.mxu0 %v917
  %v1960 = vpop.f32.mrf.mxu0
  %v1961 = vadd.f32 0.0, %v1960
  %v1962 = vpop.f32.mrf.mxu0
  %v1963 = vadd.f32 0.0, %v1962
  %1964 = vmatmul.bf16.gmra.mxu0 %v920
  %v1965 = vpop.f32.mrf.mxu0
  %v1966 = vadd.f32 0.0, %v1965
  %v1967 = vpop.f32.mrf.mxu0
  %v1968 = vadd.f32 0.0, %v1967
  %1969 = vmatmul.bf16.gmra.mxu0 %v923
  %v1970 = vpop.f32.mrf.mxu0
  %v1971 = vadd.f32 0.0, %v1970
  %v1972 = vpop.f32.mrf.mxu0
  %v1973 = vadd.f32 0.0, %v1972
  %1974 = vmatmul.bf16.gmra.mxu0 %v926
  %v1975 = vpop.f32.mrf.mxu0
  %v1976 = vadd.f32 0.0, %v1975
  %v1977 = vpop.f32.mrf.mxu0
  %v1978 = vadd.f32 0.0, %v1977
  %1979 = vmatmul.bf16.gmra.mxu0 %v929
  %v1980 = vpop.f32.mrf.mxu0
  %v1981 = vadd.f32 0.0, %v1980
  %v1982 = vpop.f32.mrf.mxu0
  %1983 = vdwg.mxu0
  %v1984 = vadd.f32 %v771, %v1842
  %v1985 = vadd.f32 %v809, %v1880
  %v1986 = vadd.f32 %v847, %v1918
  %v1987 = vadd.f32 %v885, %v1956
  %v1988 = vadd.f32 %v773, %v1844
  %v1989 = vadd.f32 %v811, %v1882
  %v1990 = vadd.f32 %v849, %v1920
  %v1991 = vadd.f32 %v887, %v1958
  %v1992 = vadd.f32 %v776, %v1847
  %v1993 = vadd.f32 %v814, %v1885
  %v1994 = vadd.f32 %v852, %v1923
  %v1995 = vadd.f32 %v890, %v1961
  %v1996 = vadd.f32 %v778, %v1849
  %v1997 = vadd.f32 %v816, %v1887
  %v1998 = vadd.f32 %v854, %v1925
  %v1999 = vadd.f32 %v892, %v1963
  %v2000 = vadd.f32 %v781, %v1852
  %v2001 = vadd.f32 %v819, %v1890
  %v2002 = vadd.f32 %v857, %v1928
  %v2003 = vadd.f32 %v895, %v1966
  %v2004 = vadd.f32 %v783, %v1854
  %v2005 = vadd.f32 %v821, %v1892
  %v2006 = vadd.f32 %v859, %v1930
  %v2007 = vadd.f32 %v897, %v1968
  %v2008 = vadd.f32 %v786, %v1857
  %v2009 = vadd.f32 %v824, %v1895
  %v2010 = vadd.f32 %v862, %v1933
  %v2011 = vadd.f32 %v900, %v1971
  %v2012 = vadd.f32 %v788, %v1859
  %v2013 = vadd.f32 %v826, %v1897
  %v2014 = vadd.f32 %v864, %v1935
  %v2015 = vadd.f32 %v902, %v1973
  %v2016 = vadd.f32 %v791, %v1862
  %v2017 = vadd.f32 %v829, %v1900
  %v2018 = vadd.f32 %v867, %v1938
  %v2019 = vadd.f32 %v905, %v1976
  %v2020 = vadd.f32 %v793, %v1864
  %v2021 = vadd.f32 %v831, %v1902
  %v2022 = vadd.f32 %v869, %v1940
  %v2023 = vadd.f32 %v907, %v1978
  %v2024 = vadd.f32 %v796, %v1867
  %v2025 = vadd.f32 %v834, %v1905
  %v2026 = vadd.f32 %v872, %v1943
  %v2027 = vadd.f32 %v910, %v1981
  %2028 = vmatpush.bf16.msra.mxu0 0
  %2029 = vmatpush.bf16.msra.mxu0 0
  %2030 = vmatpush.bf16.msra.mxu0 0
  %2031 = vmatpush.bf16.msra.mxu0 0
  %2032 = vmatpush.bf16.msra.mxu0 0
  %2033 = vmatpush.bf16.msra.mxu0 %v1620
  %2034 = vmatpush.bf16.msra.mxu0 %v1616
  %2035 = vmatpush.bf16.msra.mxu0 %v1612
  %2036 = vmatmul.bf16.gmra.mxu0 %v1242
  %v2037 = vpop.f32.mrf.mxu0
  %v2038 = vadd.f32 0.0, %v2037
  %v2039 = vpop.f32.mrf.mxu0
  %v2040 = vadd.f32 0.0, %v2039
  %2041 = vmatmul.bf16.gmra.mxu0 %v1245
  %v2042 = vpop.f32.mrf.mxu0
  %v2043 = vadd.f32 0.0, %v2042
  %v2044 = vpop.f32.mrf.mxu0
  %v2045 = vadd.f32 0.0, %v2044
  %2046 = vmatmul.bf16.gmra.mxu0 %v1248
  %v2047 = vpop.f32.mrf.mxu0
  %v2048 = vadd.f32 0.0, %v2047
  %v2049 = vpop.f32.mrf.mxu0
  %v2050 = vadd.f32 0.0, %v2049
  %2051 = vmatmul.bf16.gmra.mxu0 %v1251
  %v2052 = vpop.f32.mrf.mxu0
  %v2053 = vadd.f32 0.0, %v2052
  %v2054 = vpop.f32.mrf.mxu0
  %v2055 = vadd.f32 0.0, %v2054
  %2056 = vmatmul.bf16.gmra.mxu0 %v1254
  %v2057 = vpop.f32.mrf.mxu0
  %v2058 = vadd.f32 0.0, %v2057
  %v2059 = vpop.f32.mrf.mxu0
  %v2060 = vadd.f32 0.0, %v2059
  %2061 = vmatmul.bf16.gmra.mxu0 %v1257
  %v2062 = vpop.f32.mrf.mxu0
  %v2063 = vadd.f32 0.0, %v2062
  %v2064 = vpop.f32.mrf.mxu0
  %2065 = vdwg.mxu0
  %2066 = vmatpush.bf16.msra.mxu0 0
  %2067 = vmatpush.bf16.msra.mxu0 0
  %2068 = vmatpush.bf16.msra.mxu0 0
  %2069 = vmatpush.bf16.msra.mxu0 0
  %2070 = vmatpush.bf16.msra.mxu0 0
  %2071 = vmatpush.bf16.msra.mxu0 %v1621
  %2072 = vmatpush.bf16.msra.mxu0 %v1617
  %2073 = vmatpush.bf16.msra.mxu0 %v1613
  %2074 = vmatmul.bf16.gmra.mxu0 %v1242
  %v2075 = vpop.f32.mrf.mxu0
  %v2076 = vadd.f32 0.0, %v2075
  %v2077 = vpop.f32.mrf.mxu0
  %v2078 = vadd.f32 0.0, %v2077
  %2079 = vmatmul.bf16.gmra.mxu0 %v1245
  %v2080 = vpop.f32.mrf.mxu0
  %v2081 = vadd.f32 0.0, %v2080
  %v2082 = vpop.f32.mrf.mxu0
  %v2083 = vadd.f32 0.0, %v2082
  %2084 = vmatmul.bf16.gmra.mxu0 %v1248
  %v2085 = vpop.f32.mrf.mxu0
  %v2086 = vadd.f32 0.0, %v2085
  %v2087 = vpop.f32.mrf.mxu0
  %v2088 = vadd.f32 0.0, %v2087
  %2089 = vmatmul.bf16.gmra.mxu0 %v1251
  %v2090 = vpop.f32.mrf.mxu0
  %v2091 = vadd.f32 0.0, %v2090
  %v2092 = vpop.f32.mrf.mxu0
  %v2093 = vadd.f32 0.0, %v2092
  %2094 = vmatmul.bf16.gmra.mxu0 %v1254
  %v2095 = vpop.f32.mrf.mxu0
  %v2096 = vadd.f32 0.0, %v2095
  %v2097 = vpop.f32.mrf.mxu0
  %v2098 = vadd.f32 0.0, %v2097
  %2099 = vmatmul.bf16.gmra.mxu0 %v1257
  %v2100 = vpop.f32.mrf.mxu0
  %v2101 = vadd.f32 0.0, %v2100
  %v2102 = vpop.f32.mrf.mxu0
  %2103 = vdwg.mxu0
  %2104 = vmatpush.bf16.msra.mxu0 0
  %2105 = vmatpush.bf16.msra.mxu0 0
  %2106 = vmatpush.bf16.msra.mxu0 0
  %2107 = vmatpush.bf16.msra.mxu0 0
  %2108 = vmatpush.bf16.msra.mxu0 0
  %2109 = vmatpush.bf16.msra.mxu0 %v1622
  %2110 = vmatpush.bf16.msra.mxu0 %v1618
  %2111 = vmatpush.bf16.msra.mxu0 %v1614
  %2112 = vmatmul.bf16.gmra.mxu0 %v1242
  %v2113 = vpop.f32.mrf.mxu0
  %v2114 = vadd.f32 0.0, %v2113
  %v2115 = vpop.f32.mrf.mxu0
  %v2116 = vadd.f32 0.0, %v2115
  %2117 = vmatmul.bf16.gmra.mxu0 %v1245
  %v2118 = vpop.f32.mrf.mxu0
  %v2119 = vadd.f32 0.0, %v2118
  %v2120 = vpop.f32.mrf.mxu0
  %v2121 = vadd.f32 0.0, %v2120
  %2122 = vmatmul.bf16.gmra.mxu0 %v1248
  %v2123 = vpop.f32.mrf.mxu0
  %v2124 = vadd.f32 0.0, %v2123
  %v2125 = vpop.f32.mrf.mxu0
  %v2126 = vadd.f32 0.0, %v2125
  %2127 = vmatmul.bf16.gmra.mxu0 %v1251
  %v2128 = vpop.f32.mrf.mxu0
  %v2129 = vadd.f32 0.0, %v2128
  %v2130 = vpop.f32.mrf.mxu0
  %v2131 = vadd.f32 0.0, %v2130
  %2132 = vmatmul.bf16.gmra.mxu0 %v1254
  %v2133 = vpop.f32.mrf.mxu0
  %v2134 = vadd.f32 0.0, %v2133
  %v2135 = vpop.f32.mrf.mxu0
  %v2136 = vadd.f32 0.0, %v2135
  %2137 = vmatmul.bf16.gmra.mxu0 %v1257
  %v2138 = vpop.f32.mrf.mxu0
  %v2139 = vadd.f32 0.0, %v2138
  %v2140 = vpop.f32.mrf.mxu0
  %2141 = vdwg.mxu0
  %2142 = vmatpush.bf16.msra.mxu0 0
  %2143 = vmatpush.bf16.msra.mxu0 0
  %2144 = vmatpush.bf16.msra.mxu0 0
  %2145 = vmatpush.bf16.msra.mxu0 0
  %2146 = vmatpush.bf16.msra.mxu0 0
  %2147 = vmatpush.bf16.msra.mxu0 %v1623
  %2148 = vmatpush.bf16.msra.mxu0 %v1619
  %2149 = vmatpush.bf16.msra.mxu0 %v1615
  %2150 = vmatmul.bf16.gmra.mxu0 %v1242
  %v2151 = vpop.f32.mrf.mxu0
  %v2152 = vadd.f32 0.0, %v2151
  %v2153 = vpop.f32.mrf.mxu0
  %v2154 = vadd.f32 0.0, %v2153
  %2155 = vmatmul.bf16.gmra.mxu0 %v1245
  %v2156 = vpop.f32.mrf.mxu0
  %v2157 = vadd.f32 0.0, %v2156
  %v2158 = vpop.f32.mrf.mxu0
  %v2159 = vadd.f32 0.0, %v2158
  %2160 = vmatmul.bf16.gmra.mxu0 %v1248
  %v2161 = vpop.f32.mrf.mxu0
  %v2162 = vadd.f32 0.0, %v2161
  %v2163 = vpop.f32.mrf.mxu0
  %v2164 = vadd.f32 0.0, %v2163
  %2165 = vmatmul.bf16.gmra.mxu0 %v1251
  %v2166 = vpop.f32.mrf.mxu0
  %v2167 = vadd.f32 0.0, %v2166
  %v2168 = vpop.f32.mrf.mxu0
  %v2169 = vadd.f32 0.0, %v2168
  %2170 = vmatmul.bf16.gmra.mxu0 %v1254
  %v2171 = vpop.f32.mrf.mxu0
  %v2172 = vadd.f32 0.0, %v2171
  %v2173 = vpop.f32.mrf.mxu0
  %v2174 = vadd.f32 0.0, %v2173
  %2175 = vmatmul.bf16.gmra.mxu0 %v1257
  %v2176 = vpop.f32.mrf.mxu0
  %v2177 = vadd.f32 0.0, %v2176
  %v2178 = vpop.f32.mrf.mxu0
  %2179 = vdwg.mxu0
  %v2180 = vadd.f32 %v1093, %v2038
  %v2181 = vadd.f32 %v1131, %v2076
  %v2182 = vadd.f32 %v1169, %v2114
  %v2183 = vadd.f32 %v1207, %v2152
  %v2184 = vadd.f32 %v1095, %v2040
  %v2185 = vadd.f32 %v1133, %v2078
  %v2186 = vadd.f32 %v1171, %v2116
  %v2187 = vadd.f32 %v1209, %v2154
  %v2188 = vadd.f32 %v1098, %v2043
  %v2189 = vadd.f32 %v1136, %v2081
  %v2190 = vadd.f32 %v1174, %v2119
  %v2191 = vadd.f32 %v1212, %v2157
  %v2192 = vadd.f32 %v1100, %v2045
  %v2193 = vadd.f32 %v1138, %v2083
  %v2194 = vadd.f32 %v1176, %v2121
  %v2195 = vadd.f32 %v1214, %v2159
  %v2196 = vadd.f32 %v1103, %v2048
  %v2197 = vadd.f32 %v1141, %v2086
  %v2198 = vadd.f32 %v1179, %v2124
  %v2199 = vadd.f32 %v1217, %v2162
  %v2200 = vadd.f32 %v1105, %v2050
  %v2201 = vadd.f32 %v1143, %v2088
  %v2202 = vadd.f32 %v1181, %v2126
  %v2203 = vadd.f32 %v1219, %v2164
  %v2204 = vadd.f32 %v1108, %v2053
  %v2205 = vadd.f32 %v1146, %v2091
  %v2206 = vadd.f32 %v1184, %v2129
  %v2207 = vadd.f32 %v1222, %v2167
  %v2208 = vadd.f32 %v1110, %v2055
  %v2209 = vadd.f32 %v1148, %v2093
  %v2210 = vadd.f32 %v1186, %v2131
  %v2211 = vadd.f32 %v1224, %v2169
  %v2212 = vadd.f32 %v1113, %v2058
  %v2213 = vadd.f32 %v1151, %v2096
  %v2214 = vadd.f32 %v1189, %v2134
  %v2215 = vadd.f32 %v1227, %v2172
  %v2216 = vadd.f32 %v1115, %v2060
  %v2217 = vadd.f32 %v1153, %v2098
  %v2218 = vadd.f32 %v1191, %v2136
  %v2219 = vadd.f32 %v1229, %v2174
  %v2220 = vadd.f32 %v1118, %v2063
  %v2221 = vadd.f32 %v1156, %v2101
  %v2222 = vadd.f32 %v1194, %v2139
  %v2223 = vadd.f32 %v1232, %v2177
  %v2224 = vpack.c.bf16 %v47, %v46
  %v2225 = vpack.c.bf16 %v49, %v48
  %v2226 = vpack.c.bf16 %v51, %v50
  %v2227 = vpack.c.bf16 %v53, %v52
  %v2228 = vpack.c.bf16 %v55, %v54
  %v2229 = vpack.c.bf16 %v56, %v56
  %v2231 = vsel %vm190, %v2224, 0
  %v2234 = vsel %vm190, %v2225, 0
  %v2237 = vsel %vm190, %v2226, 0
  %v2240 = vsel %vm190, %v2227, 0
  %v2243 = vsel %vm190, %v2228, 0
  %v2246 = vsel %vm190, %v2229, 0
  %2248 = vmatpush.bf16.msra.mxu0 0
  %2249 = vmatpush.bf16.msra.mxu0 0
  %2250 = vmatpush.bf16.msra.mxu0 0
  %2251 = vmatpush.bf16.msra.mxu0 0
  %2252 = vmatpush.bf16.msra.mxu0 0
  %2253 = vmatpush.bf16.msra.mxu0 %v1620
  %2254 = vmatpush.bf16.msra.mxu0 %v1616
  %2255 = vmatpush.bf16.msra.mxu0 %v1612
  %2256 = vmatmul.bf16.gmra.mxu0 %v2231
  %v2257 = vpop.f32.mrf.mxu0
  %v2258 = vadd.f32 0.0, %v2257
  %v2259 = vpop.f32.mrf.mxu0
  %v2260 = vadd.f32 0.0, %v2259
  %2261 = vmatmul.bf16.gmra.mxu0 %v2234
  %v2262 = vpop.f32.mrf.mxu0
  %v2263 = vadd.f32 0.0, %v2262
  %v2264 = vpop.f32.mrf.mxu0
  %v2265 = vadd.f32 0.0, %v2264
  %2266 = vmatmul.bf16.gmra.mxu0 %v2237
  %v2267 = vpop.f32.mrf.mxu0
  %v2268 = vadd.f32 0.0, %v2267
  %v2269 = vpop.f32.mrf.mxu0
  %v2270 = vadd.f32 0.0, %v2269
  %2271 = vmatmul.bf16.gmra.mxu0 %v2240
  %v2272 = vpop.f32.mrf.mxu0
  %v2273 = vadd.f32 0.0, %v2272
  %v2274 = vpop.f32.mrf.mxu0
  %v2275 = vadd.f32 0.0, %v2274
  %2276 = vmatmul.bf16.gmra.mxu0 %v2243
  %v2277 = vpop.f32.mrf.mxu0
  %v2278 = vadd.f32 0.0, %v2277
  %v2279 = vpop.f32.mrf.mxu0
  %v2280 = vadd.f32 0.0, %v2279
  %2281 = vmatmul.bf16.gmra.mxu0 %v2246
  %v2282 = vpop.f32.mrf.mxu0
  %v2283 = vadd.f32 0.0, %v2282
  %v2284 = vpop.f32.mrf.mxu0
  %2285 = vdwg.mxu0
  %2286 = vmatpush.bf16.msra.mxu0 0
  %2287 = vmatpush.bf16.msra.mxu0 0
  %2288 = vmatpush.bf16.msra.mxu0 0
  %2289 = vmatpush.bf16.msra.mxu0 0
  %2290 = vmatpush.bf16.msra.mxu0 0
  %2291 = vmatpush.bf16.msra.mxu0 %v1621
  %2292 = vmatpush.bf16.msra.mxu0 %v1617
  %2293 = vmatpush.bf16.msra.mxu0 %v1613
  %2294 = vmatmul.bf16.gmra.mxu0 %v2231
  %v2295 = vpop.f32.mrf.mxu0
  %v2296 = vadd.f32 0.0, %v2295
  %v2297 = vpop.f32.mrf.mxu0
  %v2298 = vadd.f32 0.0, %v2297
  %2299 = vmatmul.bf16.gmra.mxu0 %v2234
  %v2300 = vpop.f32.mrf.mxu0
  %v2301 = vadd.f32 0.0, %v2300
  %v2302 = vpop.f32.mrf.mxu0
  %v2303 = vadd.f32 0.0, %v2302
  %2304 = vmatmul.bf16.gmra.mxu0 %v2237
  %v2305 = vpop.f32.mrf.mxu0
  %v2306 = vadd.f32 0.0, %v2305
  %v2307 = vpop.f32.mrf.mxu0
  %v2308 = vadd.f32 0.0, %v2307
  %2309 = vmatmul.bf16.gmra.mxu0 %v2240
  %v2310 = vpop.f32.mrf.mxu0
  %v2311 = vadd.f32 0.0, %v2310
  %v2312 = vpop.f32.mrf.mxu0
  %v2313 = vadd.f32 0.0, %v2312
  %2314 = vmatmul.bf16.gmra.mxu0 %v2243
  %v2315 = vpop.f32.mrf.mxu0
  %v2316 = vadd.f32 0.0, %v2315
  %v2317 = vpop.f32.mrf.mxu0
  %v2318 = vadd.f32 0.0, %v2317
  %2319 = vmatmul.bf16.gmra.mxu0 %v2246
  %v2320 = vpop.f32.mrf.mxu0
  %v2321 = vadd.f32 0.0, %v2320
  %v2322 = vpop.f32.mrf.mxu0
  %2323 = vdwg.mxu0
  %2324 = vmatpush.bf16.msra.mxu0 0
  %2325 = vmatpush.bf16.msra.mxu0 0
  %2326 = vmatpush.bf16.msra.mxu0 0
  %2327 = vmatpush.bf16.msra.mxu0 0
  %2328 = vmatpush.bf16.msra.mxu0 0
  %2329 = vmatpush.bf16.msra.mxu0 %v1622
  %2330 = vmatpush.bf16.msra.mxu0 %v1618
  %2331 = vmatpush.bf16.msra.mxu0 %v1614
  %2332 = vmatmul.bf16.gmra.mxu0 %v2231
  %v2333 = vpop.f32.mrf.mxu0
  %v2334 = vadd.f32 0.0, %v2333
  %v2335 = vpop.f32.mrf.mxu0
  %v2336 = vadd.f32 0.0, %v2335
  %2337 = vmatmul.bf16.gmra.mxu0 %v2234
  %v2338 = vpop.f32.mrf.mxu0
  %v2339 = vadd.f32 0.0, %v2338
  %v2340 = vpop.f32.mrf.mxu0
  %v2341 = vadd.f32 0.0, %v2340
  %2342 = vmatmul.bf16.gmra.mxu0 %v2237
  %v2343 = vpop.f32.mrf.mxu0
  %v2344 = vadd.f32 0.0, %v2343
  %v2345 = vpop.f32.mrf.mxu0
  %v2346 = vadd.f32 0.0, %v2345
  %2347 = vmatmul.bf16.gmra.mxu0 %v2240
  %v2348 = vpop.f32.mrf.mxu0
  %v2349 = vadd.f32 0.0, %v2348
  %v2350 = vpop.f32.mrf.mxu0
  %v2351 = vadd.f32 0.0, %v2350
  %2352 = vmatmul.bf16.gmra.mxu0 %v2243
  %v2353 = vpop.f32.mrf.mxu0
  %v2354 = vadd.f32 0.0, %v2353
  %v2355 = vpop.f32.mrf.mxu0
  %v2356 = vadd.f32 0.0, %v2355
  %2357 = vmatmul.bf16.gmra.mxu0 %v2246
  %v2358 = vpop.f32.mrf.mxu0
  %v2359 = vadd.f32 0.0, %v2358
  %v2360 = vpop.f32.mrf.mxu0
  %2361 = vdwg.mxu0
  %2362 = vmatpush.bf16.msra.mxu0 0
  %2363 = vmatpush.bf16.msra.mxu0 0
  %2364 = vmatpush.bf16.msra.mxu0 0
  %2365 = vmatpush.bf16.msra.mxu0 0
  %2366 = vmatpush.bf16.msra.mxu0 0
  %2367 = vmatpush.bf16.msra.mxu0 %v1623
  %2368 = vmatpush.bf16.msra.mxu0 %v1619
  %2369 = vmatpush.bf16.msra.mxu0 %v1615
  %2370 = vmatmul.bf16.gmra.mxu0 %v2231
  %v2371 = vpop.f32.mrf.mxu0
  %v2372 = vadd.f32 0.0, %v2371
  %v2373 = vpop.f32.mrf.mxu0
  %v2374 = vadd.f32 0.0, %v2373
  %2375 = vmatmul.bf16.gmra.mxu0 %v2234
  %v2376 = vpop.f32.mrf.mxu0
  %v2377 = vadd.f32 0.0, %v2376
  %v2378 = vpop.f32.mrf.mxu0
  %v2379 = vadd.f32 0.0, %v2378
  %2380 = vmatmul.bf16.gmra.mxu0 %v2237
  %v2381 = vpop.f32.mrf.mxu0
  %v2382 = vadd.f32 0.0, %v2381
  %v2383 = vpop.f32.mrf.mxu0
  %v2384 = vadd.f32 0.0, %v2383
  %2385 = vmatmul.bf16.gmra.mxu0 %v2240
  %v2386 = vpop.f32.mrf.mxu0
  %v2387 = vadd.f32 0.0, %v2386
  %v2388 = vpop.f32.mrf.mxu0
  %v2389 = vadd.f32 0.0, %v2388
  %2390 = vmatmul.bf16.gmra.mxu0 %v2243
  %v2391 = vpop.f32.mrf.mxu0
  %v2392 = vadd.f32 0.0, %v2391
  %v2393 = vpop.f32.mrf.mxu0
  %v2394 = vadd.f32 0.0, %v2393
  %2395 = vmatmul.bf16.gmra.mxu0 %v2246
  %v2396 = vpop.f32.mrf.mxu0
  %v2397 = vadd.f32 0.0, %v2396
  %v2398 = vpop.f32.mrf.mxu0
  %2399 = vdwg.mxu0
  %v2400 = vadd.f32 %v1421, %v2258
  %v2401 = vadd.f32 %v1459, %v2296
  %v2402 = vadd.f32 %v1497, %v2334
  %v2403 = vadd.f32 %v1535, %v2372
  %v2404 = vadd.f32 %v1423, %v2260
  %v2405 = vadd.f32 %v1461, %v2298
  %v2406 = vadd.f32 %v1499, %v2336
  %v2407 = vadd.f32 %v1537, %v2374
  %v2408 = vadd.f32 %v1426, %v2263
  %v2409 = vadd.f32 %v1464, %v2301
  %v2410 = vadd.f32 %v1502, %v2339
  %v2411 = vadd.f32 %v1540, %v2377
  %v2412 = vadd.f32 %v1428, %v2265
  %v2413 = vadd.f32 %v1466, %v2303
  %v2414 = vadd.f32 %v1504, %v2341
  %v2415 = vadd.f32 %v1542, %v2379
  %v2416 = vadd.f32 %v1431, %v2268
  %v2417 = vadd.f32 %v1469, %v2306
  %v2418 = vadd.f32 %v1507, %v2344
  %v2419 = vadd.f32 %v1545, %v2382
  %v2420 = vadd.f32 %v1433, %v2270
  %v2421 = vadd.f32 %v1471, %v2308
  %v2422 = vadd.f32 %v1509, %v2346
  %v2423 = vadd.f32 %v1547, %v2384
  %v2424 = vadd.f32 %v1436, %v2273
  %v2425 = vadd.f32 %v1474, %v2311
  %v2426 = vadd.f32 %v1512, %v2349
  %v2427 = vadd.f32 %v1550, %v2387
  %v2428 = vadd.f32 %v1438, %v2275
  %v2429 = vadd.f32 %v1476, %v2313
  %v2430 = vadd.f32 %v1514, %v2351
  %v2431 = vadd.f32 %v1552, %v2389
  %v2432 = vadd.f32 %v1441, %v2278
  %v2433 = vadd.f32 %v1479, %v2316
  %v2434 = vadd.f32 %v1517, %v2354
  %v2435 = vadd.f32 %v1555, %v2392
  %v2436 = vadd.f32 %v1443, %v2280
  %v2437 = vadd.f32 %v1481, %v2318
  %v2438 = vadd.f32 %v1519, %v2356
  %v2439 = vadd.f32 %v1557, %v2394
  %v2440 = vadd.f32 %v1446, %v2283
  %v2441 = vadd.f32 %v1484, %v2321
  %v2442 = vadd.f32 %v1522, %v2359
  %v2443 = vadd.f32 %v1560, %v2397
  %s2444 = scalar_lea.vmem %s1, 288
  %v2445 = vld [vmem:[%s2444] sm:$0xff]
  %v2446 = vld [vmem:[%s2444 + $0x8] sm:$0xff]
  %v2447 = vld [vmem:[%s2444 + $0x10] sm:$0xff]
  %v2448 = vld [vmem:[%s2444 + $0x18] sm:$0xff]
  %v2449 = vld [vmem:[%s2444 + $0x20] sm:$0xff]
  %v2450 = vld [vmem:[%s2444 + $0x28] sm:$0xff]
  %v2451 = vld [vmem:[%s2444 + $0x30] sm:$0xff]
  %v2452 = vld [vmem:[%s2444 + $0x38] sm:$0xff]
  %v2453 = vld [vmem:[%s2444 + $0x40] sm:$0xff]
  %v2454 = vld [vmem:[%s2444 + $0x48] sm:$0xff]
  %v2455 = vld [vmem:[%s2444 + $0x50] sm:$0xff]
  %v2456 = vld [vmem:[%s2444 + $0x58] sm:$0xff]
  %v2469 = vunpack.c.l.b16 %v2445
  %v2470 = vunpack.c.h.b16 %v2445
  %v2471 = vunpack.c.l.b16 %v2446
  %v2472 = vunpack.c.h.b16 %v2446
  %v2473 = vunpack.c.l.b16 %v2447
  %v2474 = vunpack.c.h.b16 %v2447
  %v2475 = vunpack.c.l.b16 %v2448
  %v2476 = vunpack.c.h.b16 %v2448
  %v2477 = vunpack.c.l.b16 %v2449
  %v2478 = vunpack.c.h.b16 %v2449
  %v2479 = vunpack.c.l.b16 %v2450
  %v2480 = vunpack.c.h.b16 %v2450
  %v2481 = vunpack.c.l.b16 %v2451
  %v2482 = vunpack.c.h.b16 %v2451
  %v2483 = vunpack.c.l.b16 %v2452
  %v2484 = vunpack.c.h.b16 %v2452
  %v2485 = vunpack.c.l.b16 %v2453
  %v2486 = vunpack.c.h.b16 %v2453
  %v2487 = vunpack.c.l.b16 %v2454
  %v2488 = vunpack.c.h.b16 %v2454
  %v2489 = vunpack.c.l.b16 %v2455
  %v2490 = vunpack.c.h.b16 %v2455
  %v2491 = vunpack.c.l.b16 %v2456
  %v2492 = vunpack.c.h.b16 %v2456
  %v2493 = vpack.c.b16 %v2473, %v2469
  %v2494 = vpack.c.b16 %v2474, %v2470
  %v2495 = vpack.c.b16 %v2475, %v2471
  %v2496 = vpack.c.b16 %v2476, %v2472
  %v2497 = vpack.c.b16 %v2481, %v2477
  %v2498 = vpack.c.b16 %v2482, %v2478
  %v2499 = vpack.c.b16 %v2483, %v2479
  %v2500 = vpack.c.b16 %v2484, %v2480
  %v2501 = vpack.c.b16 %v2489, %v2485
  %v2502 = vpack.c.b16 %v2490, %v2486
  %v2503 = vpack.c.b16 %v2491, %v2487
  %v2504 = vpack.c.b16 %v2492, %v2488
  %2517 = vmatpush.bf16.msra.mxu0 0
  %2518 = vmatpush.bf16.msra.mxu0 0
  %2519 = vmatpush.bf16.msra.mxu0 0
  %2520 = vmatpush.bf16.msra.mxu0 0
  %2521 = vmatpush.bf16.msra.mxu0 0
  %2522 = vmatpush.bf16.msra.mxu0 %v2501
  %2523 = vmatpush.bf16.msra.mxu0 %v2497
  %2524 = vmatpush.bf16.msra.mxu0 %v2493
  %2525 = vmatmul.bf16.gmra.mxu0 %v914
  %v2526 = vpop.f32.mrf.mxu0
  %v2527 = vadd.f32 0.0, %v2526
  %v2528 = vpop.f32.mrf.mxu0
  %v2529 = vadd.f32 0.0, %v2528
  %2530 = vmatmul.bf16.gmra.mxu0 %v917
  %v2531 = vpop.f32.mrf.mxu0
  %v2532 = vadd.f32 0.0, %v2531
  %v2533 = vpop.f32.mrf.mxu0
  %v2534 = vadd.f32 0.0, %v2533
  %2535 = vmatmul.bf16.gmra.mxu0 %v920
  %v2536 = vpop.f32.mrf.mxu0
  %v2537 = vadd.f32 0.0, %v2536
  %v2538 = vpop.f32.mrf.mxu0
  %v2539 = vadd.f32 0.0, %v2538
  %2540 = vmatmul.bf16.gmra.mxu0 %v923
  %v2541 = vpop.f32.mrf.mxu0
  %v2542 = vadd.f32 0.0, %v2541
  %v2543 = vpop.f32.mrf.mxu0
  %v2544 = vadd.f32 0.0, %v2543
  %2545 = vmatmul.bf16.gmra.mxu0 %v926
  %v2546 = vpop.f32.mrf.mxu0
  %v2547 = vadd.f32 0.0, %v2546
  %v2548 = vpop.f32.mrf.mxu0
  %v2549 = vadd.f32 0.0, %v2548
  %2550 = vmatmul.bf16.gmra.mxu0 %v929
  %v2551 = vpop.f32.mrf.mxu0
  %v2552 = vadd.f32 0.0, %v2551
  %v2553 = vpop.f32.mrf.mxu0
  %2554 = vdwg.mxu0
  %2555 = vmatpush.bf16.msra.mxu0 0
  %2556 = vmatpush.bf16.msra.mxu0 0
  %2557 = vmatpush.bf16.msra.mxu0 0
  %2558 = vmatpush.bf16.msra.mxu0 0
  %2559 = vmatpush.bf16.msra.mxu0 0
  %2560 = vmatpush.bf16.msra.mxu0 %v2502
  %2561 = vmatpush.bf16.msra.mxu0 %v2498
  %2562 = vmatpush.bf16.msra.mxu0 %v2494
  %2563 = vmatmul.bf16.gmra.mxu0 %v914
  %v2564 = vpop.f32.mrf.mxu0
  %v2565 = vadd.f32 0.0, %v2564
  %v2566 = vpop.f32.mrf.mxu0
  %v2567 = vadd.f32 0.0, %v2566
  %2568 = vmatmul.bf16.gmra.mxu0 %v917
  %v2569 = vpop.f32.mrf.mxu0
  %v2570 = vadd.f32 0.0, %v2569
  %v2571 = vpop.f32.mrf.mxu0
  %v2572 = vadd.f32 0.0, %v2571
  %2573 = vmatmul.bf16.gmra.mxu0 %v920
  %v2574 = vpop.f32.mrf.mxu0
  %v2575 = vadd.f32 0.0, %v2574
  %v2576 = vpop.f32.mrf.mxu0
  %v2577 = vadd.f32 0.0, %v2576
  %2578 = vmatmul.bf16.gmra.mxu0 %v923
  %v2579 = vpop.f32.mrf.mxu0
  %v2580 = vadd.f32 0.0, %v2579
  %v2581 = vpop.f32.mrf.mxu0
  %v2582 = vadd.f32 0.0, %v2581
  %2583 = vmatmul.bf16.gmra.mxu0 %v926
  %v2584 = vpop.f32.mrf.mxu0
  %v2585 = vadd.f32 0.0, %v2584
  %v2586 = vpop.f32.mrf.mxu0
  %v2587 = vadd.f32 0.0, %v2586
  %2588 = vmatmul.bf16.gmra.mxu0 %v929
  %v2589 = vpop.f32.mrf.mxu0
  %v2590 = vadd.f32 0.0, %v2589
  %v2591 = vpop.f32.mrf.mxu0
  %2592 = vdwg.mxu0
  %2593 = vmatpush.bf16.msra.mxu0 0
  %2594 = vmatpush.bf16.msra.mxu0 0
  %2595 = vmatpush.bf16.msra.mxu0 0
  %2596 = vmatpush.bf16.msra.mxu0 0
  %2597 = vmatpush.bf16.msra.mxu0 0
  %2598 = vmatpush.bf16.msra.mxu0 %v2503
  %2599 = vmatpush.bf16.msra.mxu0 %v2499
  %2600 = vmatpush.bf16.msra.mxu0 %v2495
  %2601 = vmatmul.bf16.gmra.mxu0 %v914
  %v2602 = vpop.f32.mrf.mxu0
  %v2603 = vadd.f32 0.0, %v2602
  %v2604 = vpop.f32.mrf.mxu0
  %v2605 = vadd.f32 0.0, %v2604
  %2606 = vmatmul.bf16.gmra.mxu0 %v917
  %v2607 = vpop.f32.mrf.mxu0
  %v2608 = vadd.f32 0.0, %v2607
  %v2609 = vpop.f32.mrf.mxu0
  %v2610 = vadd.f32 0.0, %v2609
  %2611 = vmatmul.bf16.gmra.mxu0 %v920
  %v2612 = vpop.f32.mrf.mxu0
  %v2613 = vadd.f32 0.0, %v2612
  %v2614 = vpop.f32.mrf.mxu0
  %v2615 = vadd.f32 0.0, %v2614
  %2616 = vmatmul.bf16.gmra.mxu0 %v923
  %v2617 = vpop.f32.mrf.mxu0
  %v2618 = vadd.f32 0.0, %v2617
  %v2619 = vpop.f32.mrf.mxu0
  %v2620 = vadd.f32 0.0, %v2619
  %2621 = vmatmul.bf16.gmra.mxu0 %v926
  %v2622 = vpop.f32.mrf.mxu0
  %v2623 = vadd.f32 0.0, %v2622
  %v2624 = vpop.f32.mrf.mxu0
  %v2625 = vadd.f32 0.0, %v2624
  %2626 = vmatmul.bf16.gmra.mxu0 %v929
  %v2627 = vpop.f32.mrf.mxu0
  %v2628 = vadd.f32 0.0, %v2627
  %v2629 = vpop.f32.mrf.mxu0
  %2630 = vdwg.mxu0
  %2631 = vmatpush.bf16.msra.mxu0 0
  %2632 = vmatpush.bf16.msra.mxu0 0
  %2633 = vmatpush.bf16.msra.mxu0 0
  %2634 = vmatpush.bf16.msra.mxu0 0
  %2635 = vmatpush.bf16.msra.mxu0 0
  %2636 = vmatpush.bf16.msra.mxu0 %v2504
  %2637 = vmatpush.bf16.msra.mxu0 %v2500
  %2638 = vmatpush.bf16.msra.mxu0 %v2496
  %2639 = vmatmul.bf16.gmra.mxu0 %v914
  %v2640 = vpop.f32.mrf.mxu0
  %v2641 = vadd.f32 0.0, %v2640
  %v2642 = vpop.f32.mrf.mxu0
  %v2643 = vadd.f32 0.0, %v2642
  %2644 = vmatmul.bf16.gmra.mxu0 %v917
  %v2645 = vpop.f32.mrf.mxu0
  %v2646 = vadd.f32 0.0, %v2645
  %v2647 = vpop.f32.mrf.mxu0
  %v2648 = vadd.f32 0.0, %v2647
  %2649 = vmatmul.bf16.gmra.mxu0 %v920
  %v2650 = vpop.f32.mrf.mxu0
  %v2651 = vadd.f32 0.0, %v2650
  %v2652 = vpop.f32.mrf.mxu0
  %v2653 = vadd.f32 0.0, %v2652
  %2654 = vmatmul.bf16.gmra.mxu0 %v923
  %v2655 = vpop.f32.mrf.mxu0
  %v2656 = vadd.f32 0.0, %v2655
  %v2657 = vpop.f32.mrf.mxu0
  %v2658 = vadd.f32 0.0, %v2657
  %2659 = vmatmul.bf16.gmra.mxu0 %v926
  %v2660 = vpop.f32.mrf.mxu0
  %v2661 = vadd.f32 0.0, %v2660
  %v2662 = vpop.f32.mrf.mxu0
  %v2663 = vadd.f32 0.0, %v2662
  %2664 = vmatmul.bf16.gmra.mxu0 %v929
  %v2665 = vpop.f32.mrf.mxu0
  %v2666 = vadd.f32 0.0, %v2665
  %v2667 = vpop.f32.mrf.mxu0
  %2668 = vdwg.mxu0
  %v2669 = vadd.f32 %v1788, %v2527
  %v2670 = vadd.f32 %v1789, %v2565
  %v2671 = vadd.f32 %v1790, %v2603
  %v2672 = vadd.f32 %v1791, %v2641
  %v2673 = vadd.f32 %v1792, %v2529
  %v2674 = vadd.f32 %v1793, %v2567
  %v2675 = vadd.f32 %v1794, %v2605
  %v2676 = vadd.f32 %v1795, %v2643
  %v2677 = vadd.f32 %v1796, %v2532
  %v2678 = vadd.f32 %v1797, %v2570
  %v2679 = vadd.f32 %v1798, %v2608
  %v2680 = vadd.f32 %v1799, %v2646
  %v2681 = vadd.f32 %v1800, %v2534
  %v2682 = vadd.f32 %v1801, %v2572
  %v2683 = vadd.f32 %v1802, %v2610
  %v2684 = vadd.f32 %v1803, %v2648
  %v2685 = vadd.f32 %v1804, %v2537
  %v2686 = vadd.f32 %v1805, %v2575
  %v2687 = vadd.f32 %v1806, %v2613
  %v2688 = vadd.f32 %v1807, %v2651
  %v2689 = vadd.f32 %v1808, %v2539
  %v2690 = vadd.f32 %v1809, %v2577
  %v2691 = vadd.f32 %v1810, %v2615
  %v2692 = vadd.f32 %v1811, %v2653
  %v2693 = vadd.f32 %v1812, %v2542
  %v2694 = vadd.f32 %v1813, %v2580
  %v2695 = vadd.f32 %v1814, %v2618
  %v2696 = vadd.f32 %v1815, %v2656
  %v2697 = vadd.f32 %v1816, %v2544
  %v2698 = vadd.f32 %v1817, %v2582
  %v2699 = vadd.f32 %v1818, %v2620
  %v2700 = vadd.f32 %v1819, %v2658
  %v2701 = vadd.f32 %v1820, %v2547
  %v2702 = vadd.f32 %v1821, %v2585
  %v2703 = vadd.f32 %v1822, %v2623
  %v2704 = vadd.f32 %v1823, %v2661
  %v2705 = vadd.f32 %v1824, %v2549
  %v2706 = vadd.f32 %v1825, %v2587
  %v2707 = vadd.f32 %v1826, %v2625
  %v2708 = vadd.f32 %v1827, %v2663
  %v2709 = vadd.f32 %v1828, %v2552
  %v2710 = vadd.f32 %v1829, %v2590
  %v2711 = vadd.f32 %v1830, %v2628
  %v2712 = vadd.f32 %v1831, %v2666
  %2713 = vmatpush.bf16.msra.mxu0 0
  %2714 = vmatpush.bf16.msra.mxu0 0
  %2715 = vmatpush.bf16.msra.mxu0 0
  %2716 = vmatpush.bf16.msra.mxu0 0
  %2717 = vmatpush.bf16.msra.mxu0 0
  %2718 = vmatpush.bf16.msra.mxu0 %v2501
  %2719 = vmatpush.bf16.msra.mxu0 %v2497
  %2720 = vmatpush.bf16.msra.mxu0 %v2493
  %2721 = vmatmul.bf16.gmra.mxu0 %v1242
  %v2722 = vpop.f32.mrf.mxu0
  %v2723 = vadd.f32 0.0, %v2722
  %v2724 = vpop.f32.mrf.mxu0
  %v2725 = vadd.f32 0.0, %v2724
  %2726 = vmatmul.bf16.gmra.mxu0 %v1245
  %v2727 = vpop.f32.mrf.mxu0
  %v2728 = vadd.f32 0.0, %v2727
  %v2729 = vpop.f32.mrf.mxu0
  %v2730 = vadd.f32 0.0, %v2729
  %2731 = vmatmul.bf16.gmra.mxu0 %v1248
  %v2732 = vpop.f32.mrf.mxu0
  %v2733 = vadd.f32 0.0, %v2732
  %v2734 = vpop.f32.mrf.mxu0
  %v2735 = vadd.f32 0.0, %v2734
  %2736 = vmatmul.bf16.gmra.mxu0 %v1251
  %v2737 = vpop.f32.mrf.mxu0
  %v2738 = vadd.f32 0.0, %v2737
  %v2739 = vpop.f32.mrf.mxu0
  %v2740 = vadd.f32 0.0, %v2739
  %2741 = vmatmul.bf16.gmra.mxu0 %v1254
  %v2742 = vpop.f32.mrf.mxu0
  %v2743 = vadd.f32 0.0, %v2742
  %v2744 = vpop.f32.mrf.mxu0
  %v2745 = vadd.f32 0.0, %v2744
  %2746 = vmatmul.bf16.gmra.mxu0 %v1257
  %v2747 = vpop.f32.mrf.mxu0
  %v2748 = vadd.f32 0.0, %v2747
  %v2749 = vpop.f32.mrf.mxu0
  %2750 = vdwg.mxu0
  %2751 = vmatpush.bf16.msra.mxu0 0
  %2752 = vmatpush.bf16.msra.mxu0 0
  %2753 = vmatpush.bf16.msra.mxu0 0
  %2754 = vmatpush.bf16.msra.mxu0 0
  %2755 = vmatpush.bf16.msra.mxu0 0
  %2756 = vmatpush.bf16.msra.mxu0 %v2502
  %2757 = vmatpush.bf16.msra.mxu0 %v2498
  %2758 = vmatpush.bf16.msra.mxu0 %v2494
  %2759 = vmatmul.bf16.gmra.mxu0 %v1242
  %v2760 = vpop.f32.mrf.mxu0
  %v2761 = vadd.f32 0.0, %v2760
  %v2762 = vpop.f32.mrf.mxu0
  %v2763 = vadd.f32 0.0, %v2762
  %2764 = vmatmul.bf16.gmra.mxu0 %v1245
  %v2765 = vpop.f32.mrf.mxu0
  %v2766 = vadd.f32 0.0, %v2765
  %v2767 = vpop.f32.mrf.mxu0
  %v2768 = vadd.f32 0.0, %v2767
  %2769 = vmatmul.bf16.gmra.mxu0 %v1248
  %v2770 = vpop.f32.mrf.mxu0
  %v2771 = vadd.f32 0.0, %v2770
  %v2772 = vpop.f32.mrf.mxu0
  %v2773 = vadd.f32 0.0, %v2772
  %2774 = vmatmul.bf16.gmra.mxu0 %v1251
  %v2775 = vpop.f32.mrf.mxu0
  %v2776 = vadd.f32 0.0, %v2775
  %v2777 = vpop.f32.mrf.mxu0
  %v2778 = vadd.f32 0.0, %v2777
  %2779 = vmatmul.bf16.gmra.mxu0 %v1254
  %v2780 = vpop.f32.mrf.mxu0
  %v2781 = vadd.f32 0.0, %v2780
  %v2782 = vpop.f32.mrf.mxu0
  %v2783 = vadd.f32 0.0, %v2782
  %2784 = vmatmul.bf16.gmra.mxu0 %v1257
  %v2785 = vpop.f32.mrf.mxu0
  %v2786 = vadd.f32 0.0, %v2785
  %v2787 = vpop.f32.mrf.mxu0
  %2788 = vdwg.mxu0
  %2789 = vmatpush.bf16.msra.mxu0 0
  %2790 = vmatpush.bf16.msra.mxu0 0
  %2791 = vmatpush.bf16.msra.mxu0 0
  %2792 = vmatpush.bf16.msra.mxu0 0
  %2793 = vmatpush.bf16.msra.mxu0 0
  %2794 = vmatpush.bf16.msra.mxu0 %v2503
  %2795 = vmatpush.bf16.msra.mxu0 %v2499
  %2796 = vmatpush.bf16.msra.mxu0 %v2495
  %2797 = vmatmul.bf16.gmra.mxu0 %v1242
  %v2798 = vpop.f32.mrf.mxu0
  %v2799 = vadd.f32 0.0, %v2798
  %v2800 = vpop.f32.mrf.mxu0
  %v2801 = vadd.f32 0.0, %v2800
  %2802 = vmatmul.bf16.gmra.mxu0 %v1245
  %v2803 = vpop.f32.mrf.mxu0
  %v2804 = vadd.f32 0.0, %v2803
  %v2805 = vpop.f32.mrf.mxu0
  %v2806 = vadd.f32 0.0, %v2805
  %2807 = vmatmul.bf16.gmra.mxu0 %v1248
  %v2808 = vpop.f32.mrf.mxu0
  %v2809 = vadd.f32 0.0, %v2808
  %v2810 = vpop.f32.mrf.mxu0
  %v2811 = vadd.f32 0.0, %v2810
  %2812 = vmatmul.bf16.gmra.mxu0 %v1251
  %v2813 = vpop.f32.mrf.mxu0
  %v2814 = vadd.f32 0.0, %v2813
  %v2815 = vpop.f32.mrf.mxu0
  %v2816 = vadd.f32 0.0, %v2815
  %2817 = vmatmul.bf16.gmra.mxu0 %v1254
  %v2818 = vpop.f32.mrf.mxu0
  %v2819 = vadd.f32 0.0, %v2818
  %v2820 = vpop.f32.mrf.mxu0
  %v2821 = vadd.f32 0.0, %v2820
  %2822 = vmatmul.bf16.gmra.mxu0 %v1257
  %v2823 = vpop.f32.mrf.mxu0
  %v2824 = vadd.f32 0.0, %v2823
  %v2825 = vpop.f32.mrf.mxu0
  %2826 = vdwg.mxu0
  %2827 = vmatpush.bf16.msra.mxu0 0
  %2828 = vmatpush.bf16.msra.mxu0 0
  %2829 = vmatpush.bf16.msra.mxu0 0
  %2830 = vmatpush.bf16.msra.mxu0 0
  %2831 = vmatpush.bf16.msra.mxu0 0
  %2832 = vmatpush.bf16.msra.mxu0 %v2504
  %2833 = vmatpush.bf16.msra.mxu0 %v2500
  %2834 = vmatpush.bf16.msra.mxu0 %v2496
  %2835 = vmatmul.bf16.gmra.mxu0 %v1242
  %v2836 = vpop.f32.mrf.mxu0
  %v2837 = vadd.f32 0.0, %v2836
  %v2838 = vpop.f32.mrf.mxu0
  %v2839 = vadd.f32 0.0, %v2838
  %2840 = vmatmul.bf16.gmra.mxu0 %v1245
  %v2841 = vpop.f32.mrf.mxu0
  %v2842 = vadd.f32 0.0, %v2841
  %v2843 = vpop.f32.mrf.mxu0
  %v2844 = vadd.f32 0.0, %v2843
  %2845 = vmatmul.bf16.gmra.mxu0 %v1248
  %v2846 = vpop.f32.mrf.mxu0
  %v2847 = vadd.f32 0.0, %v2846
  %v2848 = vpop.f32.mrf.mxu0
  %v2849 = vadd.f32 0.0, %v2848
  %2850 = vmatmul.bf16.gmra.mxu0 %v1251
  %v2851 = vpop.f32.mrf.mxu0
  %v2852 = vadd.f32 0.0, %v2851
  %v2853 = vpop.f32.mrf.mxu0
  %v2854 = vadd.f32 0.0, %v2853
  %2855 = vmatmul.bf16.gmra.mxu0 %v1254
  %v2856 = vpop.f32.mrf.mxu0
  %v2857 = vadd.f32 0.0, %v2856
  %v2858 = vpop.f32.mrf.mxu0
  %v2859 = vadd.f32 0.0, %v2858
  %2860 = vmatmul.bf16.gmra.mxu0 %v1257
  %v2861 = vpop.f32.mrf.mxu0
  %v2862 = vadd.f32 0.0, %v2861
  %v2863 = vpop.f32.mrf.mxu0
  %2864 = vdwg.mxu0
  %v2865 = vadd.f32 %v1984, %v2723
  %v2866 = vadd.f32 %v1985, %v2761
  %v2867 = vadd.f32 %v1986, %v2799
  %v2868 = vadd.f32 %v1987, %v2837
  %v2869 = vadd.f32 %v1988, %v2725
  %v2870 = vadd.f32 %v1989, %v2763
  %v2871 = vadd.f32 %v1990, %v2801
  %v2872 = vadd.f32 %v1991, %v2839
  %v2873 = vadd.f32 %v1992, %v2728
  %v2874 = vadd.f32 %v1993, %v2766
  %v2875 = vadd.f32 %v1994, %v2804
  %v2876 = vadd.f32 %v1995, %v2842
  %v2877 = vadd.f32 %v1996, %v2730
  %v2878 = vadd.f32 %v1997, %v2768
  %v2879 = vadd.f32 %v1998, %v2806
  %v2880 = vadd.f32 %v1999, %v2844
  %v2881 = vadd.f32 %v2000, %v2733
  %v2882 = vadd.f32 %v2001, %v2771
  %v2883 = vadd.f32 %v2002, %v2809
  %v2884 = vadd.f32 %v2003, %v2847
  %v2885 = vadd.f32 %v2004, %v2735
  %v2886 = vadd.f32 %v2005, %v2773
  %v2887 = vadd.f32 %v2006, %v2811
  %v2888 = vadd.f32 %v2007, %v2849
  %v2889 = vadd.f32 %v2008, %v2738
  %v2890 = vadd.f32 %v2009, %v2776
  %v2891 = vadd.f32 %v2010, %v2814
  %v2892 = vadd.f32 %v2011, %v2852
  %v2893 = vadd.f32 %v2012, %v2740
  %v2894 = vadd.f32 %v2013, %v2778
  %v2895 = vadd.f32 %v2014, %v2816
  %v2896 = vadd.f32 %v2015, %v2854
  %v2897 = vadd.f32 %v2016, %v2743
  %v2898 = vadd.f32 %v2017, %v2781
  %v2899 = vadd.f32 %v2018, %v2819
  %v2900 = vadd.f32 %v2019, %v2857
  %v2901 = vadd.f32 %v2020, %v2745
  %v2902 = vadd.f32 %v2021, %v2783
  %v2903 = vadd.f32 %v2022, %v2821
  %v2904 = vadd.f32 %v2023, %v2859
  %v2905 = vadd.f32 %v2024, %v2748
  %v2906 = vadd.f32 %v2025, %v2786
  %v2907 = vadd.f32 %v2026, %v2824
  %v2908 = vadd.f32 %v2027, %v2862
  %2909 = vmatpush.bf16.msra.mxu0 0
  %2910 = vmatpush.bf16.msra.mxu0 0
  %2911 = vmatpush.bf16.msra.mxu0 0
  %2912 = vmatpush.bf16.msra.mxu0 0
  %2913 = vmatpush.bf16.msra.mxu0 0
  %2914 = vmatpush.bf16.msra.mxu0 %v2501
  %2915 = vmatpush.bf16.msra.mxu0 %v2497
  %2916 = vmatpush.bf16.msra.mxu0 %v2493
  %2917 = vmatmul.bf16.gmra.mxu0 %v2231
  %v2918 = vpop.f32.mrf.mxu0
  %v2919 = vadd.f32 0.0, %v2918
  %v2920 = vpop.f32.mrf.mxu0
  %v2921 = vadd.f32 0.0, %v2920
  %2922 = vmatmul.bf16.gmra.mxu0 %v2234
  %v2923 = vpop.f32.mrf.mxu0
  %v2924 = vadd.f32 0.0, %v2923
  %v2925 = vpop.f32.mrf.mxu0
  %v2926 = vadd.f32 0.0, %v2925
  %2927 = vmatmul.bf16.gmra.mxu0 %v2237
  %v2928 = vpop.f32.mrf.mxu0
  %v2929 = vadd.f32 0.0, %v2928
  %v2930 = vpop.f32.mrf.mxu0
  %v2931 = vadd.f32 0.0, %v2930
  %2932 = vmatmul.bf16.gmra.mxu0 %v2240
  %v2933 = vpop.f32.mrf.mxu0
  %v2934 = vadd.f32 0.0, %v2933
  %v2935 = vpop.f32.mrf.mxu0
  %v2936 = vadd.f32 0.0, %v2935
  %2937 = vmatmul.bf16.gmra.mxu0 %v2243
  %v2938 = vpop.f32.mrf.mxu0
  %v2939 = vadd.f32 0.0, %v2938
  %v2940 = vpop.f32.mrf.mxu0
  %v2941 = vadd.f32 0.0, %v2940
  %2942 = vmatmul.bf16.gmra.mxu0 %v2246
  %v2943 = vpop.f32.mrf.mxu0
  %v2944 = vadd.f32 0.0, %v2943
  %v2945 = vpop.f32.mrf.mxu0
  %2946 = vdwg.mxu0
  %2947 = vmatpush.bf16.msra.mxu0 0
  %2948 = vmatpush.bf16.msra.mxu0 0
  %2949 = vmatpush.bf16.msra.mxu0 0
  %2950 = vmatpush.bf16.msra.mxu0 0
  %2951 = vmatpush.bf16.msra.mxu0 0
  %2952 = vmatpush.bf16.msra.mxu0 %v2502
  %2953 = vmatpush.bf16.msra.mxu0 %v2498
  %2954 = vmatpush.bf16.msra.mxu0 %v2494
  %2955 = vmatmul.bf16.gmra.mxu0 %v2231
  %v2956 = vpop.f32.mrf.mxu0
  %v2957 = vadd.f32 0.0, %v2956
  %v2958 = vpop.f32.mrf.mxu0
  %v2959 = vadd.f32 0.0, %v2958
  %2960 = vmatmul.bf16.gmra.mxu0 %v2234
  %v2961 = vpop.f32.mrf.mxu0
  %v2962 = vadd.f32 0.0, %v2961
  %v2963 = vpop.f32.mrf.mxu0
  %v2964 = vadd.f32 0.0, %v2963
  %2965 = vmatmul.bf16.gmra.mxu0 %v2237
  %v2966 = vpop.f32.mrf.mxu0
  %v2967 = vadd.f32 0.0, %v2966
  %v2968 = vpop.f32.mrf.mxu0
  %v2969 = vadd.f32 0.0, %v2968
  %2970 = vmatmul.bf16.gmra.mxu0 %v2240
  %v2971 = vpop.f32.mrf.mxu0
  %v2972 = vadd.f32 0.0, %v2971
  %v2973 = vpop.f32.mrf.mxu0
  %v2974 = vadd.f32 0.0, %v2973
  %2975 = vmatmul.bf16.gmra.mxu0 %v2243
  %v2976 = vpop.f32.mrf.mxu0
  %v2977 = vadd.f32 0.0, %v2976
  %v2978 = vpop.f32.mrf.mxu0
  %v2979 = vadd.f32 0.0, %v2978
  %2980 = vmatmul.bf16.gmra.mxu0 %v2246
  %v2981 = vpop.f32.mrf.mxu0
  %v2982 = vadd.f32 0.0, %v2981
  %v2983 = vpop.f32.mrf.mxu0
  %2984 = vdwg.mxu0
  %2985 = vmatpush.bf16.msra.mxu0 0
  %2986 = vmatpush.bf16.msra.mxu0 0
  %2987 = vmatpush.bf16.msra.mxu0 0
  %2988 = vmatpush.bf16.msra.mxu0 0
  %2989 = vmatpush.bf16.msra.mxu0 0
  %2990 = vmatpush.bf16.msra.mxu0 %v2503
  %2991 = vmatpush.bf16.msra.mxu0 %v2499
  %2992 = vmatpush.bf16.msra.mxu0 %v2495
  %2993 = vmatmul.bf16.gmra.mxu0 %v2231
  %v2994 = vpop.f32.mrf.mxu0
  %v2995 = vadd.f32 0.0, %v2994
  %v2996 = vpop.f32.mrf.mxu0
  %v2997 = vadd.f32 0.0, %v2996
  %2998 = vmatmul.bf16.gmra.mxu0 %v2234
  %v2999 = vpop.f32.mrf.mxu0
  %v3000 = vadd.f32 0.0, %v2999
  %v3001 = vpop.f32.mrf.mxu0
  %v3002 = vadd.f32 0.0, %v3001
  %3003 = vmatmul.bf16.gmra.mxu0 %v2237
  %v3004 = vpop.f32.mrf.mxu0
  %v3005 = vadd.f32 0.0, %v3004
  %v3006 = vpop.f32.mrf.mxu0
  %v3007 = vadd.f32 0.0, %v3006
  %3008 = vmatmul.bf16.gmra.mxu0 %v2240
  %v3009 = vpop.f32.mrf.mxu0
  %v3010 = vadd.f32 0.0, %v3009
  %v3011 = vpop.f32.mrf.mxu0
  %v3012 = vadd.f32 0.0, %v3011
  %3013 = vmatmul.bf16.gmra.mxu0 %v2243
  %v3014 = vpop.f32.mrf.mxu0
  %v3015 = vadd.f32 0.0, %v3014
  %v3016 = vpop.f32.mrf.mxu0
  %v3017 = vadd.f32 0.0, %v3016
  %3018 = vmatmul.bf16.gmra.mxu0 %v2246
  %v3019 = vpop.f32.mrf.mxu0
  %v3020 = vadd.f32 0.0, %v3019
  %v3021 = vpop.f32.mrf.mxu0
  %3022 = vdwg.mxu0
  %3023 = vmatpush.bf16.msra.mxu0 0
  %3024 = vmatpush.bf16.msra.mxu0 0
  %3025 = vmatpush.bf16.msra.mxu0 0
  %3026 = vmatpush.bf16.msra.mxu0 0
  %3027 = vmatpush.bf16.msra.mxu0 0
  %3028 = vmatpush.bf16.msra.mxu0 %v2504
  %3029 = vmatpush.bf16.msra.mxu0 %v2500
  %3030 = vmatpush.bf16.msra.mxu0 %v2496
  %3031 = vmatmul.bf16.gmra.mxu0 %v2231
  %v3032 = vpop.f32.mrf.mxu0
  %v3033 = vadd.f32 0.0, %v3032
  %v3034 = vpop.f32.mrf.mxu0
  %v3035 = vadd.f32 0.0, %v3034
  %3036 = vmatmul.bf16.gmra.mxu0 %v2234
  %v3037 = vpop.f32.mrf.mxu0
  %v3038 = vadd.f32 0.0, %v3037
  %v3039 = vpop.f32.mrf.mxu0
  %v3040 = vadd.f32 0.0, %v3039
  %3041 = vmatmul.bf16.gmra.mxu0 %v2237
  %v3042 = vpop.f32.mrf.mxu0
  %v3043 = vadd.f32 0.0, %v3042
  %v3044 = vpop.f32.mrf.mxu0
  %v3045 = vadd.f32 0.0, %v3044
  %3046 = vmatmul.bf16.gmra.mxu0 %v2240
  %v3047 = vpop.f32.mrf.mxu0
  %v3048 = vadd.f32 0.0, %v3047
  %v3049 = vpop.f32.mrf.mxu0
  %v3050 = vadd.f32 0.0, %v3049
  %3051 = vmatmul.bf16.gmra.mxu0 %v2243
  %v3052 = vpop.f32.mrf.mxu0
  %v3053 = vadd.f32 0.0, %v3052
  %v3054 = vpop.f32.mrf.mxu0
  %v3055 = vadd.f32 0.0, %v3054
  %3056 = vmatmul.bf16.gmra.mxu0 %v2246
  %v3057 = vpop.f32.mrf.mxu0
  %v3058 = vadd.f32 0.0, %v3057
  %v3059 = vpop.f32.mrf.mxu0
  %3060 = vdwg.mxu0
  %v3061 = vadd.f32 %v2180, %v2919
  %v3062 = vadd.f32 %v2181, %v2957
  %v3063 = vadd.f32 %v2182, %v2995
  %v3064 = vadd.f32 %v2183, %v3033
  %v3065 = vadd.f32 %v2184, %v2921
  %v3066 = vadd.f32 %v2185, %v2959
  %v3067 = vadd.f32 %v2186, %v2997
  %v3068 = vadd.f32 %v2187, %v3035
  %v3069 = vadd.f32 %v2188, %v2924
  %v3070 = vadd.f32 %v2189, %v2962
  %v3071 = vadd.f32 %v2190, %v3000
  %v3072 = vadd.f32 %v2191, %v3038
  %v3073 = vadd.f32 %v2192, %v2926
  %v3074 = vadd.f32 %v2193, %v2964
  %v3075 = vadd.f32 %v2194, %v3002
  %v3076 = vadd.f32 %v2195, %v3040
  %v3077 = vadd.f32 %v2196, %v2929
  %v3078 = vadd.f32 %v2197, %v2967
  %v3079 = vadd.f32 %v2198, %v3005
  %v3080 = vadd.f32 %v2199, %v3043
  %v3081 = vadd.f32 %v2200, %v2931
  %v3082 = vadd.f32 %v2201, %v2969
  %v3083 = vadd.f32 %v2202, %v3007
  %v3084 = vadd.f32 %v2203, %v3045
  %v3085 = vadd.f32 %v2204, %v2934
  %v3086 = vadd.f32 %v2205, %v2972
  %v3087 = vadd.f32 %v2206, %v3010
  %v3088 = vadd.f32 %v2207, %v3048
  %v3089 = vadd.f32 %v2208, %v2936
  %v3090 = vadd.f32 %v2209, %v2974
  %v3091 = vadd.f32 %v2210, %v3012
  %v3092 = vadd.f32 %v2211, %v3050
  %v3093 = vadd.f32 %v2212, %v2939
  %v3094 = vadd.f32 %v2213, %v2977
  %v3095 = vadd.f32 %v2214, %v3015
  %v3096 = vadd.f32 %v2215, %v3053
  %v3097 = vadd.f32 %v2216, %v2941
  %v3098 = vadd.f32 %v2217, %v2979
  %v3099 = vadd.f32 %v2218, %v3017
  %v3100 = vadd.f32 %v2219, %v3055
  %v3101 = vadd.f32 %v2220, %v2944
  %v3102 = vadd.f32 %v2221, %v2982
  %v3103 = vadd.f32 %v2222, %v3020
  %v3104 = vadd.f32 %v2223, %v3058
  %v3105 = vpack.c.bf16 %v59, %v58
  %v3106 = vpack.c.bf16 %v61, %v60
  %v3107 = vpack.c.bf16 %v63, %v62
  %v3108 = vpack.c.bf16 %v65, %v64
  %v3109 = vpack.c.bf16 %v67, %v66
  %v3110 = vpack.c.bf16 %v68, %v68
  %v3112 = vsel %vm190, %v3105, 0
  %v3115 = vsel %vm190, %v3106, 0
  %v3118 = vsel %vm190, %v3107, 0
  %v3121 = vsel %vm190, %v3108, 0
  %v3124 = vsel %vm190, %v3109, 0
  %v3127 = vsel %vm190, %v3110, 0
  %3129 = vmatpush.bf16.msra.mxu0 0
  %3130 = vmatpush.bf16.msra.mxu0 0
  %3131 = vmatpush.bf16.msra.mxu0 0
  %3132 = vmatpush.bf16.msra.mxu0 0
  %3133 = vmatpush.bf16.msra.mxu0 0
  %3134 = vmatpush.bf16.msra.mxu0 %v2501
  %3135 = vmatpush.bf16.msra.mxu0 %v2497
  %3136 = vmatpush.bf16.msra.mxu0 %v2493
  %3137 = vmatmul.bf16.gmra.mxu0 %v3112
  %v3138 = vpop.f32.mrf.mxu0
  %v3139 = vadd.f32 0.0, %v3138
  %v3140 = vpop.f32.mrf.mxu0
  %v3141 = vadd.f32 0.0, %v3140
  %3142 = vmatmul.bf16.gmra.mxu0 %v3115
  %v3143 = vpop.f32.mrf.mxu0
  %v3144 = vadd.f32 0.0, %v3143
  %v3145 = vpop.f32.mrf.mxu0
  %v3146 = vadd.f32 0.0, %v3145
  %3147 = vmatmul.bf16.gmra.mxu0 %v3118
  %v3148 = vpop.f32.mrf.mxu0
  %v3149 = vadd.f32 0.0, %v3148
  %v3150 = vpop.f32.mrf.mxu0
  %v3151 = vadd.f32 0.0, %v3150
  %3152 = vmatmul.bf16.gmra.mxu0 %v3121
  %v3153 = vpop.f32.mrf.mxu0
  %v3154 = vadd.f32 0.0, %v3153
  %v3155 = vpop.f32.mrf.mxu0
  %v3156 = vadd.f32 0.0, %v3155
  %3157 = vmatmul.bf16.gmra.mxu0 %v3124
  %v3158 = vpop.f32.mrf.mxu0
  %v3159 = vadd.f32 0.0, %v3158
  %v3160 = vpop.f32.mrf.mxu0
  %v3161 = vadd.f32 0.0, %v3160
  %3162 = vmatmul.bf16.gmra.mxu0 %v3127
  %v3163 = vpop.f32.mrf.mxu0
  %v3164 = vadd.f32 0.0, %v3163
  %v3165 = vpop.f32.mrf.mxu0
  %3166 = vdwg.mxu0
  %3167 = vmatpush.bf16.msra.mxu0 0
  %3168 = vmatpush.bf16.msra.mxu0 0
  %3169 = vmatpush.bf16.msra.mxu0 0
  %3170 = vmatpush.bf16.msra.mxu0 0
  %3171 = vmatpush.bf16.msra.mxu0 0
  %3172 = vmatpush.bf16.msra.mxu0 %v2502
  %3173 = vmatpush.bf16.msra.mxu0 %v2498
  %3174 = vmatpush.bf16.msra.mxu0 %v2494
  %3175 = vmatmul.bf16.gmra.mxu0 %v3112
  %v3176 = vpop.f32.mrf.mxu0
  %v3177 = vadd.f32 0.0, %v3176
  %v3178 = vpop.f32.mrf.mxu0
  %v3179 = vadd.f32 0.0, %v3178
  %3180 = vmatmul.bf16.gmra.mxu0 %v3115
  %v3181 = vpop.f32.mrf.mxu0
  %v3182 = vadd.f32 0.0, %v3181
  %v3183 = vpop.f32.mrf.mxu0
  %v3184 = vadd.f32 0.0, %v3183
  %3185 = vmatmul.bf16.gmra.mxu0 %v3118
  %v3186 = vpop.f32.mrf.mxu0
  %v3187 = vadd.f32 0.0, %v3186
  %v3188 = vpop.f32.mrf.mxu0
  %v3189 = vadd.f32 0.0, %v3188
  %3190 = vmatmul.bf16.gmra.mxu0 %v3121
  %v3191 = vpop.f32.mrf.mxu0
  %v3192 = vadd.f32 0.0, %v3191
  %v3193 = vpop.f32.mrf.mxu0
  %v3194 = vadd.f32 0.0, %v3193
  %3195 = vmatmul.bf16.gmra.mxu0 %v3124
  %v3196 = vpop.f32.mrf.mxu0
  %v3197 = vadd.f32 0.0, %v3196
  %v3198 = vpop.f32.mrf.mxu0
  %v3199 = vadd.f32 0.0, %v3198
  %3200 = vmatmul.bf16.gmra.mxu0 %v3127
  %v3201 = vpop.f32.mrf.mxu0
  %v3202 = vadd.f32 0.0, %v3201
  %v3203 = vpop.f32.mrf.mxu0
  %3204 = vdwg.mxu0
  %3205 = vmatpush.bf16.msra.mxu0 0
  %3206 = vmatpush.bf16.msra.mxu0 0
  %3207 = vmatpush.bf16.msra.mxu0 0
  %3208 = vmatpush.bf16.msra.mxu0 0
  %3209 = vmatpush.bf16.msra.mxu0 0
  %3210 = vmatpush.bf16.msra.mxu0 %v2503
  %3211 = vmatpush.bf16.msra.mxu0 %v2499
  %3212 = vmatpush.bf16.msra.mxu0 %v2495
  %3213 = vmatmul.bf16.gmra.mxu0 %v3112
  %v3214 = vpop.f32.mrf.mxu0
  %v3215 = vadd.f32 0.0, %v3214
  %v3216 = vpop.f32.mrf.mxu0
  %v3217 = vadd.f32 0.0, %v3216
  %3218 = vmatmul.bf16.gmra.mxu0 %v3115
  %v3219 = vpop.f32.mrf.mxu0
  %v3220 = vadd.f32 0.0, %v3219
  %v3221 = vpop.f32.mrf.mxu0
  %v3222 = vadd.f32 0.0, %v3221
  %3223 = vmatmul.bf16.gmra.mxu0 %v3118
  %v3224 = vpop.f32.mrf.mxu0
  %v3225 = vadd.f32 0.0, %v3224
  %v3226 = vpop.f32.mrf.mxu0
  %v3227 = vadd.f32 0.0, %v3226
  %3228 = vmatmul.bf16.gmra.mxu0 %v3121
  %v3229 = vpop.f32.mrf.mxu0
  %v3230 = vadd.f32 0.0, %v3229
  %v3231 = vpop.f32.mrf.mxu0
  %v3232 = vadd.f32 0.0, %v3231
  %3233 = vmatmul.bf16.gmra.mxu0 %v3124
  %v3234 = vpop.f32.mrf.mxu0
  %v3235 = vadd.f32 0.0, %v3234
  %v3236 = vpop.f32.mrf.mxu0
  %v3237 = vadd.f32 0.0, %v3236
  %3238 = vmatmul.bf16.gmra.mxu0 %v3127
  %v3239 = vpop.f32.mrf.mxu0
  %v3240 = vadd.f32 0.0, %v3239
  %v3241 = vpop.f32.mrf.mxu0
  %3242 = vdwg.mxu0
  %3243 = vmatpush.bf16.msra.mxu0 0
  %3244 = vmatpush.bf16.msra.mxu0 0
  %3245 = vmatpush.bf16.msra.mxu0 0
  %3246 = vmatpush.bf16.msra.mxu0 0
  %3247 = vmatpush.bf16.msra.mxu0 0
  %3248 = vmatpush.bf16.msra.mxu0 %v2504
  %3249 = vmatpush.bf16.msra.mxu0 %v2500
  %3250 = vmatpush.bf16.msra.mxu0 %v2496
  %3251 = vmatmul.bf16.gmra.mxu0 %v3112
  %v3252 = vpop.f32.mrf.mxu0
  %v3253 = vadd.f32 0.0, %v3252
  %v3254 = vpop.f32.mrf.mxu0
  %v3255 = vadd.f32 0.0, %v3254
  %3256 = vmatmul.bf16.gmra.mxu0 %v3115
  %v3257 = vpop.f32.mrf.mxu0
  %v3258 = vadd.f32 0.0, %v3257
  %v3259 = vpop.f32.mrf.mxu0
  %v3260 = vadd.f32 0.0, %v3259
  %3261 = vmatmul.bf16.gmra.mxu0 %v3118
  %v3262 = vpop.f32.mrf.mxu0
  %v3263 = vadd.f32 0.0, %v3262
  %v3264 = vpop.f32.mrf.mxu0
  %v3265 = vadd.f32 0.0, %v3264
  %3266 = vmatmul.bf16.gmra.mxu0 %v3121
  %v3267 = vpop.f32.mrf.mxu0
  %v3268 = vadd.f32 0.0, %v3267
  %v3269 = vpop.f32.mrf.mxu0
  %v3270 = vadd.f32 0.0, %v3269
  %3271 = vmatmul.bf16.gmra.mxu0 %v3124
  %v3272 = vpop.f32.mrf.mxu0
  %v3273 = vadd.f32 0.0, %v3272
  %v3274 = vpop.f32.mrf.mxu0
  %v3275 = vadd.f32 0.0, %v3274
  %3276 = vmatmul.bf16.gmra.mxu0 %v3127
  %v3277 = vpop.f32.mrf.mxu0
  %v3278 = vadd.f32 0.0, %v3277
  %v3279 = vpop.f32.mrf.mxu0
  %3280 = vdwg.mxu0
  %v3281 = vadd.f32 %v2400, %v3139
  %v3282 = vadd.f32 %v2401, %v3177
  %v3283 = vadd.f32 %v2402, %v3215
  %v3284 = vadd.f32 %v2403, %v3253
  %v3285 = vadd.f32 %v2404, %v3141
  %v3286 = vadd.f32 %v2405, %v3179
  %v3287 = vadd.f32 %v2406, %v3217
  %v3288 = vadd.f32 %v2407, %v3255
  %v3289 = vadd.f32 %v2408, %v3144
  %v3290 = vadd.f32 %v2409, %v3182
  %v3291 = vadd.f32 %v2410, %v3220
  %v3292 = vadd.f32 %v2411, %v3258
  %v3293 = vadd.f32 %v2412, %v3146
  %v3294 = vadd.f32 %v2413, %v3184
  %v3295 = vadd.f32 %v2414, %v3222
  %v3296 = vadd.f32 %v2415, %v3260
  %v3297 = vadd.f32 %v2416, %v3149
  %v3298 = vadd.f32 %v2417, %v3187
  %v3299 = vadd.f32 %v2418, %v3225
  %v3300 = vadd.f32 %v2419, %v3263
  %v3301 = vadd.f32 %v2420, %v3151
  %v3302 = vadd.f32 %v2421, %v3189
  %v3303 = vadd.f32 %v2422, %v3227
  %v3304 = vadd.f32 %v2423, %v3265
  %v3305 = vadd.f32 %v2424, %v3154
  %v3306 = vadd.f32 %v2425, %v3192
  %v3307 = vadd.f32 %v2426, %v3230
  %v3308 = vadd.f32 %v2427, %v3268
  %v3309 = vadd.f32 %v2428, %v3156
  %v3310 = vadd.f32 %v2429, %v3194
  %v3311 = vadd.f32 %v2430, %v3232
  %v3312 = vadd.f32 %v2431, %v3270
  %v3313 = vadd.f32 %v2432, %v3159
  %v3314 = vadd.f32 %v2433, %v3197
  %v3315 = vadd.f32 %v2434, %v3235
  %v3316 = vadd.f32 %v2435, %v3273
  %v3317 = vadd.f32 %v2436, %v3161
  %v3318 = vadd.f32 %v2437, %v3199
  %v3319 = vadd.f32 %v2438, %v3237
  %v3320 = vadd.f32 %v2439, %v3275
  %v3321 = vadd.f32 %v2440, %v3164
  %v3322 = vadd.f32 %v2441, %v3202
  %v3323 = vadd.f32 %v2442, %v3240
  %v3324 = vadd.f32 %v2443, %v3278
  %s3325 = scalar_lea.vmem %s1, 384
  %v3326 = vld [vmem:[%s3325] sm:$0xff]
  %v3327 = vld [vmem:[%s3325 + $0x8] sm:$0xff]
  %v3328 = vld [vmem:[%s3325 + $0x10] sm:$0xff]
  %v3329 = vld [vmem:[%s3325 + $0x18] sm:$0xff]
  %v3330 = vld [vmem:[%s3325 + $0x20] sm:$0xff]
  %v3331 = vld [vmem:[%s3325 + $0x28] sm:$0xff]
  %v3332 = vld [vmem:[%s3325 + $0x30] sm:$0xff]
  %v3333 = vld [vmem:[%s3325 + $0x38] sm:$0xff]
  %v3334 = vld [vmem:[%s3325 + $0x40] sm:$0xff]
  %v3335 = vld [vmem:[%s3325 + $0x48] sm:$0xff]
  %v3336 = vld [vmem:[%s3325 + $0x50] sm:$0xff]
  %v3337 = vld [vmem:[%s3325 + $0x58] sm:$0xff]
  %v3350 = vunpack.c.l.b16 %v3326
  %v3351 = vunpack.c.h.b16 %v3326
  %v3352 = vunpack.c.l.b16 %v3327
  %v3353 = vunpack.c.h.b16 %v3327
  %v3354 = vunpack.c.l.b16 %v3328
  %v3355 = vunpack.c.h.b16 %v3328
  %v3356 = vunpack.c.l.b16 %v3329
  %v3357 = vunpack.c.h.b16 %v3329
  %v3358 = vunpack.c.l.b16 %v3330
  %v3359 = vunpack.c.h.b16 %v3330
  %v3360 = vunpack.c.l.b16 %v3331
  %v3361 = vunpack.c.h.b16 %v3331
  %v3362 = vunpack.c.l.b16 %v3332
  %v3363 = vunpack.c.h.b16 %v3332
  %v3364 = vunpack.c.l.b16 %v3333
  %v3365 = vunpack.c.h.b16 %v3333
  %v3366 = vunpack.c.l.b16 %v3334
  %v3367 = vunpack.c.h.b16 %v3334
  %v3368 = vunpack.c.l.b16 %v3335
  %v3369 = vunpack.c.h.b16 %v3335
  %v3370 = vunpack.c.l.b16 %v3336
  %v3371 = vunpack.c.h.b16 %v3336
  %v3372 = vunpack.c.l.b16 %v3337
  %v3373 = vunpack.c.h.b16 %v3337
  %v3374 = vpack.c.b16 %v3354, %v3350
  %v3375 = vpack.c.b16 %v3355, %v3351
  %v3376 = vpack.c.b16 %v3356, %v3352
  %v3377 = vpack.c.b16 %v3357, %v3353
  %v3378 = vpack.c.b16 %v3362, %v3358
  %v3379 = vpack.c.b16 %v3363, %v3359
  %v3380 = vpack.c.b16 %v3364, %v3360
  %v3381 = vpack.c.b16 %v3365, %v3361
  %v3382 = vpack.c.b16 %v3370, %v3366
  %v3383 = vpack.c.b16 %v3371, %v3367
  %v3384 = vpack.c.b16 %v3372, %v3368
  %v3385 = vpack.c.b16 %v3373, %v3369
  %3398 = vmatpush.bf16.msra.mxu0 0
  %3399 = vmatpush.bf16.msra.mxu0 0
  %3400 = vmatpush.bf16.msra.mxu0 0
  %3401 = vmatpush.bf16.msra.mxu0 0
  %3402 = vmatpush.bf16.msra.mxu0 0
  %3403 = vmatpush.bf16.msra.mxu0 %v3382
  %3404 = vmatpush.bf16.msra.mxu0 %v3378
  %3405 = vmatpush.bf16.msra.mxu0 %v3374
  %3406 = vmatmul.bf16.gmra.mxu0 %v1242
  %v3407 = vpop.f32.mrf.mxu0
  %v3408 = vadd.f32 0.0, %v3407
  %v3409 = vpop.f32.mrf.mxu0
  %v3410 = vadd.f32 0.0, %v3409
  %3411 = vmatmul.bf16.gmra.mxu0 %v1245
  %v3412 = vpop.f32.mrf.mxu0
  %v3413 = vadd.f32 0.0, %v3412
  %v3414 = vpop.f32.mrf.mxu0
  %v3415 = vadd.f32 0.0, %v3414
  %3416 = vmatmul.bf16.gmra.mxu0 %v1248
  %v3417 = vpop.f32.mrf.mxu0
  %v3418 = vadd.f32 0.0, %v3417
  %v3419 = vpop.f32.mrf.mxu0
  %v3420 = vadd.f32 0.0, %v3419
  %3421 = vmatmul.bf16.gmra.mxu0 %v1251
  %v3422 = vpop.f32.mrf.mxu0
  %v3423 = vadd.f32 0.0, %v3422
  %v3424 = vpop.f32.mrf.mxu0
  %v3425 = vadd.f32 0.0, %v3424
  %3426 = vmatmul.bf16.gmra.mxu0 %v1254
  %v3427 = vpop.f32.mrf.mxu0
  %v3428 = vadd.f32 0.0, %v3427
  %v3429 = vpop.f32.mrf.mxu0
  %v3430 = vadd.f32 0.0, %v3429
  %3431 = vmatmul.bf16.gmra.mxu0 %v1257
  %v3432 = vpop.f32.mrf.mxu0
  %v3433 = vadd.f32 0.0, %v3432
  %v3434 = vpop.f32.mrf.mxu0
  %3435 = vdwg.mxu0
  %3436 = vmatpush.bf16.msra.mxu0 0
  %3437 = vmatpush.bf16.msra.mxu0 0
  %3438 = vmatpush.bf16.msra.mxu0 0
  %3439 = vmatpush.bf16.msra.mxu0 0
  %3440 = vmatpush.bf16.msra.mxu0 0
  %3441 = vmatpush.bf16.msra.mxu0 %v3383
  %3442 = vmatpush.bf16.msra.mxu0 %v3379
  %3443 = vmatpush.bf16.msra.mxu0 %v3375
  %3444 = vmatmul.bf16.gmra.mxu0 %v1242
  %v3445 = vpop.f32.mrf.mxu0
  %v3446 = vadd.f32 0.0, %v3445
  %v3447 = vpop.f32.mrf.mxu0
  %v3448 = vadd.f32 0.0, %v3447
  %3449 = vmatmul.bf16.gmra.mxu0 %v1245
  %v3450 = vpop.f32.mrf.mxu0
  %v3451 = vadd.f32 0.0, %v3450
  %v3452 = vpop.f32.mrf.mxu0
  %v3453 = vadd.f32 0.0, %v3452
  %3454 = vmatmul.bf16.gmra.mxu0 %v1248
  %v3455 = vpop.f32.mrf.mxu0
  %v3456 = vadd.f32 0.0, %v3455
  %v3457 = vpop.f32.mrf.mxu0
  %v3458 = vadd.f32 0.0, %v3457
  %3459 = vmatmul.bf16.gmra.mxu0 %v1251
  %v3460 = vpop.f32.mrf.mxu0
  %v3461 = vadd.f32 0.0, %v3460
  %v3462 = vpop.f32.mrf.mxu0
  %v3463 = vadd.f32 0.0, %v3462
  %3464 = vmatmul.bf16.gmra.mxu0 %v1254
  %v3465 = vpop.f32.mrf.mxu0
  %v3466 = vadd.f32 0.0, %v3465
  %v3467 = vpop.f32.mrf.mxu0
  %v3468 = vadd.f32 0.0, %v3467
  %3469 = vmatmul.bf16.gmra.mxu0 %v1257
  %v3470 = vpop.f32.mrf.mxu0
  %v3471 = vadd.f32 0.0, %v3470
  %v3472 = vpop.f32.mrf.mxu0
  %3473 = vdwg.mxu0
  %3474 = vmatpush.bf16.msra.mxu0 0
  %3475 = vmatpush.bf16.msra.mxu0 0
  %3476 = vmatpush.bf16.msra.mxu0 0
  %3477 = vmatpush.bf16.msra.mxu0 0
  %3478 = vmatpush.bf16.msra.mxu0 0
  %3479 = vmatpush.bf16.msra.mxu0 %v3384
  %3480 = vmatpush.bf16.msra.mxu0 %v3380
  %3481 = vmatpush.bf16.msra.mxu0 %v3376
  %3482 = vmatmul.bf16.gmra.mxu0 %v1242
  %v3483 = vpop.f32.mrf.mxu0
  %v3484 = vadd.f32 0.0, %v3483
  %v3485 = vpop.f32.mrf.mxu0
  %v3486 = vadd.f32 0.0, %v3485
  %3487 = vmatmul.bf16.gmra.mxu0 %v1245
  %v3488 = vpop.f32.mrf.mxu0
  %v3489 = vadd.f32 0.0, %v3488
  %v3490 = vpop.f32.mrf.mxu0
  %v3491 = vadd.f32 0.0, %v3490
  %3492 = vmatmul.bf16.gmra.mxu0 %v1248
  %v3493 = vpop.f32.mrf.mxu0
  %v3494 = vadd.f32 0.0, %v3493
  %v3495 = vpop.f32.mrf.mxu0
  %v3496 = vadd.f32 0.0, %v3495
  %3497 = vmatmul.bf16.gmra.mxu0 %v1251
  %v3498 = vpop.f32.mrf.mxu0
  %v3499 = vadd.f32 0.0, %v3498
  %v3500 = vpop.f32.mrf.mxu0
  %v3501 = vadd.f32 0.0, %v3500
  %3502 = vmatmul.bf16.gmra.mxu0 %v1254
  %v3503 = vpop.f32.mrf.mxu0
  %v3504 = vadd.f32 0.0, %v3503
  %v3505 = vpop.f32.mrf.mxu0
  %v3506 = vadd.f32 0.0, %v3505
  %3507 = vmatmul.bf16.gmra.mxu0 %v1257
  %v3508 = vpop.f32.mrf.mxu0
  %v3509 = vadd.f32 0.0, %v3508
  %v3510 = vpop.f32.mrf.mxu0
  %3511 = vdwg.mxu0
  %3512 = vmatpush.bf16.msra.mxu0 0
  %3513 = vmatpush.bf16.msra.mxu0 0
  %3514 = vmatpush.bf16.msra.mxu0 0
  %3515 = vmatpush.bf16.msra.mxu0 0
  %3516 = vmatpush.bf16.msra.mxu0 0
  %3517 = vmatpush.bf16.msra.mxu0 %v3385
  %3518 = vmatpush.bf16.msra.mxu0 %v3381
  %3519 = vmatpush.bf16.msra.mxu0 %v3377
  %3520 = vmatmul.bf16.gmra.mxu0 %v1242
  %v3521 = vpop.f32.mrf.mxu0
  %v3522 = vadd.f32 0.0, %v3521
  %v3523 = vpop.f32.mrf.mxu0
  %v3524 = vadd.f32 0.0, %v3523
  %3525 = vmatmul.bf16.gmra.mxu0 %v1245
  %v3526 = vpop.f32.mrf.mxu0
  %v3527 = vadd.f32 0.0, %v3526
  %v3528 = vpop.f32.mrf.mxu0
  %v3529 = vadd.f32 0.0, %v3528
  %3530 = vmatmul.bf16.gmra.mxu0 %v1248
  %v3531 = vpop.f32.mrf.mxu0
  %v3532 = vadd.f32 0.0, %v3531
  %v3533 = vpop.f32.mrf.mxu0
  %v3534 = vadd.f32 0.0, %v3533
  %3535 = vmatmul.bf16.gmra.mxu0 %v1251
  %v3536 = vpop.f32.mrf.mxu0
  %v3537 = vadd.f32 0.0, %v3536
  %v3538 = vpop.f32.mrf.mxu0
  %v3539 = vadd.f32 0.0, %v3538
  %3540 = vmatmul.bf16.gmra.mxu0 %v1254
  %v3541 = vpop.f32.mrf.mxu0
  %v3542 = vadd.f32 0.0, %v3541
  %v3543 = vpop.f32.mrf.mxu0
  %v3544 = vadd.f32 0.0, %v3543
  %3545 = vmatmul.bf16.gmra.mxu0 %v1257
  %v3546 = vpop.f32.mrf.mxu0
  %v3547 = vadd.f32 0.0, %v3546
  %v3548 = vpop.f32.mrf.mxu0
  %3549 = vdwg.mxu0
  %v3550 = vadd.f32 %v2669, %v3408
  %v3551 = vadd.f32 %v2670, %v3446
  %v3552 = vadd.f32 %v2671, %v3484
  %v3553 = vadd.f32 %v2672, %v3522
  %v3554 = vadd.f32 %v2673, %v3410
  %v3555 = vadd.f32 %v2674, %v3448
  %v3556 = vadd.f32 %v2675, %v3486
  %v3557 = vadd.f32 %v2676, %v3524
  %v3558 = vadd.f32 %v2677, %v3413
  %v3559 = vadd.f32 %v2678, %v3451
  %v3560 = vadd.f32 %v2679, %v3489
  %v3561 = vadd.f32 %v2680, %v3527
  %v3562 = vadd.f32 %v2681, %v3415
  %v3563 = vadd.f32 %v2682, %v3453
  %v3564 = vadd.f32 %v2683, %v3491
  %v3565 = vadd.f32 %v2684, %v3529
  %v3566 = vadd.f32 %v2685, %v3418
  %v3567 = vadd.f32 %v2686, %v3456
  %v3568 = vadd.f32 %v2687, %v3494
  %v3569 = vadd.f32 %v2688, %v3532
  %v3570 = vadd.f32 %v2689, %v3420
  %v3571 = vadd.f32 %v2690, %v3458
  %v3572 = vadd.f32 %v2691, %v3496
  %v3573 = vadd.f32 %v2692, %v3534
  %v3574 = vadd.f32 %v2693, %v3423
  %v3575 = vadd.f32 %v2694, %v3461
  %v3576 = vadd.f32 %v2695, %v3499
  %v3577 = vadd.f32 %v2696, %v3537
  %v3578 = vadd.f32 %v2697, %v3425
  %v3579 = vadd.f32 %v2698, %v3463
  %v3580 = vadd.f32 %v2699, %v3501
  %v3581 = vadd.f32 %v2700, %v3539
  %v3582 = vadd.f32 %v2701, %v3428
  %v3583 = vadd.f32 %v2702, %v3466
  %v3584 = vadd.f32 %v2703, %v3504
  %v3585 = vadd.f32 %v2704, %v3542
  %v3586 = vadd.f32 %v2705, %v3430
  %v3587 = vadd.f32 %v2706, %v3468
  %v3588 = vadd.f32 %v2707, %v3506
  %v3589 = vadd.f32 %v2708, %v3544
  %v3590 = vadd.f32 %v2709, %v3433
  %v3591 = vadd.f32 %v2710, %v3471
  %v3592 = vadd.f32 %v2711, %v3509
  %v3593 = vadd.f32 %v2712, %v3547
  %3594 = vmatpush.bf16.msra.mxu0 0
  %3595 = vmatpush.bf16.msra.mxu0 0
  %3596 = vmatpush.bf16.msra.mxu0 0
  %3597 = vmatpush.bf16.msra.mxu0 0
  %3598 = vmatpush.bf16.msra.mxu0 0
  %3599 = vmatpush.bf16.msra.mxu0 %v3382
  %3600 = vmatpush.bf16.msra.mxu0 %v3378
  %3601 = vmatpush.bf16.msra.mxu0 %v3374
  %3602 = vmatmul.bf16.gmra.mxu0 %v2231
  %v3603 = vpop.f32.mrf.mxu0
  %v3604 = vadd.f32 0.0, %v3603
  %v3605 = vpop.f32.mrf.mxu0
  %v3606 = vadd.f32 0.0, %v3605
  %3607 = vmatmul.bf16.gmra.mxu0 %v2234
  %v3608 = vpop.f32.mrf.mxu0
  %v3609 = vadd.f32 0.0, %v3608
  %v3610 = vpop.f32.mrf.mxu0
  %v3611 = vadd.f32 0.0, %v3610
  %3612 = vmatmul.bf16.gmra.mxu0 %v2237
  %v3613 = vpop.f32.mrf.mxu0
  %v3614 = vadd.f32 0.0, %v3613
  %v3615 = vpop.f32.mrf.mxu0
  %v3616 = vadd.f32 0.0, %v3615
  %3617 = vmatmul.bf16.gmra.mxu0 %v2240
  %v3618 = vpop.f32.mrf.mxu0
  %v3619 = vadd.f32 0.0, %v3618
  %v3620 = vpop.f32.mrf.mxu0
  %v3621 = vadd.f32 0.0, %v3620
  %3622 = vmatmul.bf16.gmra.mxu0 %v2243
  %v3623 = vpop.f32.mrf.mxu0
  %v3624 = vadd.f32 0.0, %v3623
  %v3625 = vpop.f32.mrf.mxu0
  %v3626 = vadd.f32 0.0, %v3625
  %3627 = vmatmul.bf16.gmra.mxu0 %v2246
  %v3628 = vpop.f32.mrf.mxu0
  %v3629 = vadd.f32 0.0, %v3628
  %v3630 = vpop.f32.mrf.mxu0
  %3631 = vdwg.mxu0
  %3632 = vmatpush.bf16.msra.mxu0 0
  %3633 = vmatpush.bf16.msra.mxu0 0
  %3634 = vmatpush.bf16.msra.mxu0 0
  %3635 = vmatpush.bf16.msra.mxu0 0
  %3636 = vmatpush.bf16.msra.mxu0 0
  %3637 = vmatpush.bf16.msra.mxu0 %v3383
  %3638 = vmatpush.bf16.msra.mxu0 %v3379
  %3639 = vmatpush.bf16.msra.mxu0 %v3375
  %3640 = vmatmul.bf16.gmra.mxu0 %v2231
  %v3641 = vpop.f32.mrf.mxu0
  %v3642 = vadd.f32 0.0, %v3641
  %v3643 = vpop.f32.mrf.mxu0
  %v3644 = vadd.f32 0.0, %v3643
  %3645 = vmatmul.bf16.gmra.mxu0 %v2234
  %v3646 = vpop.f32.mrf.mxu0
  %v3647 = vadd.f32 0.0, %v3646
  %v3648 = vpop.f32.mrf.mxu0
  %v3649 = vadd.f32 0.0, %v3648
  %3650 = vmatmul.bf16.gmra.mxu0 %v2237
  %v3651 = vpop.f32.mrf.mxu0
  %v3652 = vadd.f32 0.0, %v3651
  %v3653 = vpop.f32.mrf.mxu0
  %v3654 = vadd.f32 0.0, %v3653
  %3655 = vmatmul.bf16.gmra.mxu0 %v2240
  %v3656 = vpop.f32.mrf.mxu0
  %v3657 = vadd.f32 0.0, %v3656
  %v3658 = vpop.f32.mrf.mxu0
  %v3659 = vadd.f32 0.0, %v3658
  %3660 = vmatmul.bf16.gmra.mxu0 %v2243
  %v3661 = vpop.f32.mrf.mxu0
  %v3662 = vadd.f32 0.0, %v3661
  %v3663 = vpop.f32.mrf.mxu0
  %v3664 = vadd.f32 0.0, %v3663
  %3665 = vmatmul.bf16.gmra.mxu0 %v2246
  %v3666 = vpop.f32.mrf.mxu0
  %v3667 = vadd.f32 0.0, %v3666
  %v3668 = vpop.f32.mrf.mxu0
  %3669 = vdwg.mxu0
  %3670 = vmatpush.bf16.msra.mxu0 0
  %3671 = vmatpush.bf16.msra.mxu0 0
  %3672 = vmatpush.bf16.msra.mxu0 0
  %3673 = vmatpush.bf16.msra.mxu0 0
  %3674 = vmatpush.bf16.msra.mxu0 0
  %3675 = vmatpush.bf16.msra.mxu0 %v3384
  %3676 = vmatpush.bf16.msra.mxu0 %v3380
  %3677 = vmatpush.bf16.msra.mxu0 %v3376
  %3678 = vmatmul.bf16.gmra.mxu0 %v2231
  %v3679 = vpop.f32.mrf.mxu0
  %v3680 = vadd.f32 0.0, %v3679
  %v3681 = vpop.f32.mrf.mxu0
  %v3682 = vadd.f32 0.0, %v3681
  %3683 = vmatmul.bf16.gmra.mxu0 %v2234
  %v3684 = vpop.f32.mrf.mxu0
  %v3685 = vadd.f32 0.0, %v3684
  %v3686 = vpop.f32.mrf.mxu0
  %v3687 = vadd.f32 0.0, %v3686
  %3688 = vmatmul.bf16.gmra.mxu0 %v2237
  %v3689 = vpop.f32.mrf.mxu0
  %v3690 = vadd.f32 0.0, %v3689
  %v3691 = vpop.f32.mrf.mxu0
  %v3692 = vadd.f32 0.0, %v3691
  %3693 = vmatmul.bf16.gmra.mxu0 %v2240
  %v3694 = vpop.f32.mrf.mxu0
  %v3695 = vadd.f32 0.0, %v3694
  %v3696 = vpop.f32.mrf.mxu0
  %v3697 = vadd.f32 0.0, %v3696
  %3698 = vmatmul.bf16.gmra.mxu0 %v2243
  %v3699 = vpop.f32.mrf.mxu0
  %v3700 = vadd.f32 0.0, %v3699
  %v3701 = vpop.f32.mrf.mxu0
  %v3702 = vadd.f32 0.0, %v3701
  %3703 = vmatmul.bf16.gmra.mxu0 %v2246
  %v3704 = vpop.f32.mrf.mxu0
  %v3705 = vadd.f32 0.0, %v3704
  %v3706 = vpop.f32.mrf.mxu0
  %3707 = vdwg.mxu0
  %3708 = vmatpush.bf16.msra.mxu0 0
  %3709 = vmatpush.bf16.msra.mxu0 0
  %3710 = vmatpush.bf16.msra.mxu0 0
  %3711 = vmatpush.bf16.msra.mxu0 0
  %3712 = vmatpush.bf16.msra.mxu0 0
  %3713 = vmatpush.bf16.msra.mxu0 %v3385
  %3714 = vmatpush.bf16.msra.mxu0 %v3381
  %3715 = vmatpush.bf16.msra.mxu0 %v3377
  %3716 = vmatmul.bf16.gmra.mxu0 %v2231
  %v3717 = vpop.f32.mrf.mxu0
  %v3718 = vadd.f32 0.0, %v3717
  %v3719 = vpop.f32.mrf.mxu0
  %v3720 = vadd.f32 0.0, %v3719
  %3721 = vmatmul.bf16.gmra.mxu0 %v2234
  %v3722 = vpop.f32.mrf.mxu0
  %v3723 = vadd.f32 0.0, %v3722
  %v3724 = vpop.f32.mrf.mxu0
  %v3725 = vadd.f32 0.0, %v3724
  %3726 = vmatmul.bf16.gmra.mxu0 %v2237
  %v3727 = vpop.f32.mrf.mxu0
  %v3728 = vadd.f32 0.0, %v3727
  %v3729 = vpop.f32.mrf.mxu0
  %v3730 = vadd.f32 0.0, %v3729
  %3731 = vmatmul.bf16.gmra.mxu0 %v2240
  %v3732 = vpop.f32.mrf.mxu0
  %v3733 = vadd.f32 0.0, %v3732
  %v3734 = vpop.f32.mrf.mxu0
  %v3735 = vadd.f32 0.0, %v3734
  %3736 = vmatmul.bf16.gmra.mxu0 %v2243
  %v3737 = vpop.f32.mrf.mxu0
  %v3738 = vadd.f32 0.0, %v3737
  %v3739 = vpop.f32.mrf.mxu0
  %v3740 = vadd.f32 0.0, %v3739
  %3741 = vmatmul.bf16.gmra.mxu0 %v2246
  %v3742 = vpop.f32.mrf.mxu0
  %v3743 = vadd.f32 0.0, %v3742
  %v3744 = vpop.f32.mrf.mxu0
  %3745 = vdwg.mxu0
  %v3746 = vadd.f32 %v2865, %v3604
  %v3747 = vadd.f32 %v2866, %v3642
  %v3748 = vadd.f32 %v2867, %v3680
  %v3749 = vadd.f32 %v2868, %v3718
  %v3750 = vadd.f32 %v2869, %v3606
  %v3751 = vadd.f32 %v2870, %v3644
  %v3752 = vadd.f32 %v2871, %v3682
  %v3753 = vadd.f32 %v2872, %v3720
  %v3754 = vadd.f32 %v2873, %v3609
  %v3755 = vadd.f32 %v2874, %v3647
  %v3756 = vadd.f32 %v2875, %v3685
  %v3757 = vadd.f32 %v2876, %v3723
  %v3758 = vadd.f32 %v2877, %v3611
  %v3759 = vadd.f32 %v2878, %v3649
  %v3760 = vadd.f32 %v2879, %v3687
  %v3761 = vadd.f32 %v2880, %v3725
  %v3762 = vadd.f32 %v2881, %v3614
  %v3763 = vadd.f32 %v2882, %v3652
  %v3764 = vadd.f32 %v2883, %v3690
  %v3765 = vadd.f32 %v2884, %v3728
  %v3766 = vadd.f32 %v2885, %v3616
  %v3767 = vadd.f32 %v2886, %v3654
  %v3768 = vadd.f32 %v2887, %v3692
  %v3769 = vadd.f32 %v2888, %v3730
  %v3770 = vadd.f32 %v2889, %v3619
  %v3771 = vadd.f32 %v2890, %v3657
  %v3772 = vadd.f32 %v2891, %v3695
  %v3773 = vadd.f32 %v2892, %v3733
  %v3774 = vadd.f32 %v2893, %v3621
  %v3775 = vadd.f32 %v2894, %v3659
  %v3776 = vadd.f32 %v2895, %v3697
  %v3777 = vadd.f32 %v2896, %v3735
  %v3778 = vadd.f32 %v2897, %v3624
  %v3779 = vadd.f32 %v2898, %v3662
  %v3780 = vadd.f32 %v2899, %v3700
  %v3781 = vadd.f32 %v2900, %v3738
  %v3782 = vadd.f32 %v2901, %v3626
  %v3783 = vadd.f32 %v2902, %v3664
  %v3784 = vadd.f32 %v2903, %v3702
  %v3785 = vadd.f32 %v2904, %v3740
  %v3786 = vadd.f32 %v2905, %v3629
  %v3787 = vadd.f32 %v2906, %v3667
  %v3788 = vadd.f32 %v2907, %v3705
  %v3789 = vadd.f32 %v2908, %v3743
  %3790 = vmatpush.bf16.msra.mxu0 0
  %3791 = vmatpush.bf16.msra.mxu0 0
  %3792 = vmatpush.bf16.msra.mxu0 0
  %3793 = vmatpush.bf16.msra.mxu0 0
  %3794 = vmatpush.bf16.msra.mxu0 0
  %3795 = vmatpush.bf16.msra.mxu0 %v3382
  %3796 = vmatpush.bf16.msra.mxu0 %v3378
  %3797 = vmatpush.bf16.msra.mxu0 %v3374
  %3798 = vmatmul.bf16.gmra.mxu0 %v3112
  %v3799 = vpop.f32.mrf.mxu0
  %v3800 = vadd.f32 0.0, %v3799
  %v3801 = vpop.f32.mrf.mxu0
  %v3802 = vadd.f32 0.0, %v3801
  %3803 = vmatmul.bf16.gmra.mxu0 %v3115
  %v3804 = vpop.f32.mrf.mxu0
  %v3805 = vadd.f32 0.0, %v3804
  %v3806 = vpop.f32.mrf.mxu0
  %v3807 = vadd.f32 0.0, %v3806
  %3808 = vmatmul.bf16.gmra.mxu0 %v3118
  %v3809 = vpop.f32.mrf.mxu0
  %v3810 = vadd.f32 0.0, %v3809
  %v3811 = vpop.f32.mrf.mxu0
  %v3812 = vadd.f32 0.0, %v3811
  %3813 = vmatmul.bf16.gmra.mxu0 %v3121
  %v3814 = vpop.f32.mrf.mxu0
  %v3815 = vadd.f32 0.0, %v3814
  %v3816 = vpop.f32.mrf.mxu0
  %v3817 = vadd.f32 0.0, %v3816
  %3818 = vmatmul.bf16.gmra.mxu0 %v3124
  %v3819 = vpop.f32.mrf.mxu0
  %v3820 = vadd.f32 0.0, %v3819
  %v3821 = vpop.f32.mrf.mxu0
  %v3822 = vadd.f32 0.0, %v3821
  %3823 = vmatmul.bf16.gmra.mxu0 %v3127
  %v3824 = vpop.f32.mrf.mxu0
  %v3825 = vadd.f32 0.0, %v3824
  %v3826 = vpop.f32.mrf.mxu0
  %3827 = vdwg.mxu0
  %3828 = vmatpush.bf16.msra.mxu0 0
  %3829 = vmatpush.bf16.msra.mxu0 0
  %3830 = vmatpush.bf16.msra.mxu0 0
  %3831 = vmatpush.bf16.msra.mxu0 0
  %3832 = vmatpush.bf16.msra.mxu0 0
  %3833 = vmatpush.bf16.msra.mxu0 %v3383
  %3834 = vmatpush.bf16.msra.mxu0 %v3379
  %3835 = vmatpush.bf16.msra.mxu0 %v3375
  %3836 = vmatmul.bf16.gmra.mxu0 %v3112
  %v3837 = vpop.f32.mrf.mxu0
  %v3838 = vadd.f32 0.0, %v3837
  %v3839 = vpop.f32.mrf.mxu0
  %v3840 = vadd.f32 0.0, %v3839
  %3841 = vmatmul.bf16.gmra.mxu0 %v3115
  %v3842 = vpop.f32.mrf.mxu0
  %v3843 = vadd.f32 0.0, %v3842
  %v3844 = vpop.f32.mrf.mxu0
  %v3845 = vadd.f32 0.0, %v3844
  %3846 = vmatmul.bf16.gmra.mxu0 %v3118
  %v3847 = vpop.f32.mrf.mxu0
  %v3848 = vadd.f32 0.0, %v3847
  %v3849 = vpop.f32.mrf.mxu0
  %v3850 = vadd.f32 0.0, %v3849
  %3851 = vmatmul.bf16.gmra.mxu0 %v3121
  %v3852 = vpop.f32.mrf.mxu0
  %v3853 = vadd.f32 0.0, %v3852
  %v3854 = vpop.f32.mrf.mxu0
  %v3855 = vadd.f32 0.0, %v3854
  %3856 = vmatmul.bf16.gmra.mxu0 %v3124
  %v3857 = vpop.f32.mrf.mxu0
  %v3858 = vadd.f32 0.0, %v3857
  %v3859 = vpop.f32.mrf.mxu0
  %v3860 = vadd.f32 0.0, %v3859
  %3861 = vmatmul.bf16.gmra.mxu0 %v3127
  %v3862 = vpop.f32.mrf.mxu0
  %v3863 = vadd.f32 0.0, %v3862
  %v3864 = vpop.f32.mrf.mxu0
  %3865 = vdwg.mxu0
  %3866 = vmatpush.bf16.msra.mxu0 0
  %3867 = vmatpush.bf16.msra.mxu0 0
  %3868 = vmatpush.bf16.msra.mxu0 0
  %3869 = vmatpush.bf16.msra.mxu0 0
  %3870 = vmatpush.bf16.msra.mxu0 0
  %3871 = vmatpush.bf16.msra.mxu0 %v3384
  %3872 = vmatpush.bf16.msra.mxu0 %v3380
  %3873 = vmatpush.bf16.msra.mxu0 %v3376
  %3874 = vmatmul.bf16.gmra.mxu0 %v3112
  %v3875 = vpop.f32.mrf.mxu0
  %v3876 = vadd.f32 0.0, %v3875
  %v3877 = vpop.f32.mrf.mxu0
  %v3878 = vadd.f32 0.0, %v3877
  %3879 = vmatmul.bf16.gmra.mxu0 %v3115
  %v3880 = vpop.f32.mrf.mxu0
  %v3881 = vadd.f32 0.0, %v3880
  %v3882 = vpop.f32.mrf.mxu0
  %v3883 = vadd.f32 0.0, %v3882
  %3884 = vmatmul.bf16.gmra.mxu0 %v3118
  %v3885 = vpop.f32.mrf.mxu0
  %v3886 = vadd.f32 0.0, %v3885
  %v3887 = vpop.f32.mrf.mxu0
  %v3888 = vadd.f32 0.0, %v3887
  %3889 = vmatmul.bf16.gmra.mxu0 %v3121
  %v3890 = vpop.f32.mrf.mxu0
  %v3891 = vadd.f32 0.0, %v3890
  %v3892 = vpop.f32.mrf.mxu0
  %v3893 = vadd.f32 0.0, %v3892
  %3894 = vmatmul.bf16.gmra.mxu0 %v3124
  %v3895 = vpop.f32.mrf.mxu0
  %v3896 = vadd.f32 0.0, %v3895
  %v3897 = vpop.f32.mrf.mxu0
  %v3898 = vadd.f32 0.0, %v3897
  %3899 = vmatmul.bf16.gmra.mxu0 %v3127
  %v3900 = vpop.f32.mrf.mxu0
  %v3901 = vadd.f32 0.0, %v3900
  %v3902 = vpop.f32.mrf.mxu0
  %3903 = vdwg.mxu0
  %3904 = vmatpush.bf16.msra.mxu0 0
  %3905 = vmatpush.bf16.msra.mxu0 0
  %3906 = vmatpush.bf16.msra.mxu0 0
  %3907 = vmatpush.bf16.msra.mxu0 0
  %3908 = vmatpush.bf16.msra.mxu0 0
  %3909 = vmatpush.bf16.msra.mxu0 %v3385
  %3910 = vmatpush.bf16.msra.mxu0 %v3381
  %3911 = vmatpush.bf16.msra.mxu0 %v3377
  %3912 = vmatmul.bf16.gmra.mxu0 %v3112
  %v3913 = vpop.f32.mrf.mxu0
  %v3914 = vadd.f32 0.0, %v3913
  %v3915 = vpop.f32.mrf.mxu0
  %v3916 = vadd.f32 0.0, %v3915
  %3917 = vmatmul.bf16.gmra.mxu0 %v3115
  %v3918 = vpop.f32.mrf.mxu0
  %v3919 = vadd.f32 0.0, %v3918
  %v3920 = vpop.f32.mrf.mxu0
  %v3921 = vadd.f32 0.0, %v3920
  %3922 = vmatmul.bf16.gmra.mxu0 %v3118
  %v3923 = vpop.f32.mrf.mxu0
  %v3924 = vadd.f32 0.0, %v3923
  %v3925 = vpop.f32.mrf.mxu0
  %v3926 = vadd.f32 0.0, %v3925
  %3927 = vmatmul.bf16.gmra.mxu0 %v3121
  %v3928 = vpop.f32.mrf.mxu0
  %v3929 = vadd.f32 0.0, %v3928
  %v3930 = vpop.f32.mrf.mxu0
  %v3931 = vadd.f32 0.0, %v3930
  %3932 = vmatmul.bf16.gmra.mxu0 %v3124
  %v3933 = vpop.f32.mrf.mxu0
  %v3934 = vadd.f32 0.0, %v3933
  %v3935 = vpop.f32.mrf.mxu0
  %v3936 = vadd.f32 0.0, %v3935
  %3937 = vmatmul.bf16.gmra.mxu0 %v3127
  %v3938 = vpop.f32.mrf.mxu0
  %v3939 = vadd.f32 0.0, %v3938
  %v3940 = vpop.f32.mrf.mxu0
  %3941 = vdwg.mxu0
  %v3942 = vadd.f32 %v3061, %v3800
  %v3943 = vadd.f32 %v3062, %v3838
  %v3944 = vadd.f32 %v3063, %v3876
  %v3945 = vadd.f32 %v3064, %v3914
  %v3946 = vadd.f32 %v3065, %v3802
  %v3947 = vadd.f32 %v3066, %v3840
  %v3948 = vadd.f32 %v3067, %v3878
  %v3949 = vadd.f32 %v3068, %v3916
  %v3950 = vadd.f32 %v3069, %v3805
  %v3951 = vadd.f32 %v3070, %v3843
  %v3952 = vadd.f32 %v3071, %v3881
  %v3953 = vadd.f32 %v3072, %v3919
  %v3954 = vadd.f32 %v3073, %v3807
  %v3955 = vadd.f32 %v3074, %v3845
  %v3956 = vadd.f32 %v3075, %v3883
  %v3957 = vadd.f32 %v3076, %v3921
  %v3958 = vadd.f32 %v3077, %v3810
  %v3959 = vadd.f32 %v3078, %v3848
  %v3960 = vadd.f32 %v3079, %v3886
  %v3961 = vadd.f32 %v3080, %v3924
  %v3962 = vadd.f32 %v3081, %v3812
  %v3963 = vadd.f32 %v3082, %v3850
  %v3964 = vadd.f32 %v3083, %v3888
  %v3965 = vadd.f32 %v3084, %v3926
  %v3966 = vadd.f32 %v3085, %v3815
  %v3967 = vadd.f32 %v3086, %v3853
  %v3968 = vadd.f32 %v3087, %v3891
  %v3969 = vadd.f32 %v3088, %v3929
  %v3970 = vadd.f32 %v3089, %v3817
  %v3971 = vadd.f32 %v3090, %v3855
  %v3972 = vadd.f32 %v3091, %v3893
  %v3973 = vadd.f32 %v3092, %v3931
  %v3974 = vadd.f32 %v3093, %v3820
  %v3975 = vadd.f32 %v3094, %v3858
  %v3976 = vadd.f32 %v3095, %v3896
  %v3977 = vadd.f32 %v3096, %v3934
  %v3978 = vadd.f32 %v3097, %v3822
  %v3979 = vadd.f32 %v3098, %v3860
  %v3980 = vadd.f32 %v3099, %v3898
  %v3981 = vadd.f32 %v3100, %v3936
  %v3982 = vadd.f32 %v3101, %v3825
  %v3983 = vadd.f32 %v3102, %v3863
  %v3984 = vadd.f32 %v3103, %v3901
  %v3985 = vadd.f32 %v3104, %v3939
  %v3986 = vpack.c.bf16 %v71, %v70
  %v3987 = vpack.c.bf16 %v73, %v72
  %v3988 = vpack.c.bf16 %v75, %v74
  %v3989 = vpack.c.bf16 %v77, %v76
  %v3990 = vpack.c.bf16 %v79, %v78
  %v3991 = vpack.c.bf16 %v80, %v80
  %v3993 = vsel %vm190, %v3986, 0
  %v3996 = vsel %vm190, %v3987, 0
  %v3999 = vsel %vm190, %v3988, 0
  %v4002 = vsel %vm190, %v3989, 0
  %v4005 = vsel %vm190, %v3990, 0
  %v4008 = vsel %vm190, %v3991, 0
  %4010 = vmatpush.bf16.msra.mxu0 0
  %4011 = vmatpush.bf16.msra.mxu0 0
  %4012 = vmatpush.bf16.msra.mxu0 0
  %4013 = vmatpush.bf16.msra.mxu0 0
  %4014 = vmatpush.bf16.msra.mxu0 0
  %4015 = vmatpush.bf16.msra.mxu0 %v3382
  %4016 = vmatpush.bf16.msra.mxu0 %v3378
  %4017 = vmatpush.bf16.msra.mxu0 %v3374
  %4018 = vmatmul.bf16.gmra.mxu0 %v3993
  %v4019 = vpop.f32.mrf.mxu0
  %v4020 = vadd.f32 0.0, %v4019
  %v4021 = vpop.f32.mrf.mxu0
  %v4022 = vadd.f32 0.0, %v4021
  %4023 = vmatmul.bf16.gmra.mxu0 %v3996
  %v4024 = vpop.f32.mrf.mxu0
  %v4025 = vadd.f32 0.0, %v4024
  %v4026 = vpop.f32.mrf.mxu0
  %v4027 = vadd.f32 0.0, %v4026
  %4028 = vmatmul.bf16.gmra.mxu0 %v3999
  %v4029 = vpop.f32.mrf.mxu0
  %v4030 = vadd.f32 0.0, %v4029
  %v4031 = vpop.f32.mrf.mxu0
  %v4032 = vadd.f32 0.0, %v4031
  %4033 = vmatmul.bf16.gmra.mxu0 %v4002
  %v4034 = vpop.f32.mrf.mxu0
  %v4035 = vadd.f32 0.0, %v4034
  %v4036 = vpop.f32.mrf.mxu0
  %v4037 = vadd.f32 0.0, %v4036
  %4038 = vmatmul.bf16.gmra.mxu0 %v4005
  %v4039 = vpop.f32.mrf.mxu0
  %v4040 = vadd.f32 0.0, %v4039
  %v4041 = vpop.f32.mrf.mxu0
  %v4042 = vadd.f32 0.0, %v4041
  %4043 = vmatmul.bf16.gmra.mxu0 %v4008
  %v4044 = vpop.f32.mrf.mxu0
  %v4045 = vadd.f32 0.0, %v4044
  %v4046 = vpop.f32.mrf.mxu0
  %4047 = vdwg.mxu0
  %4048 = vmatpush.bf16.msra.mxu0 0
  %4049 = vmatpush.bf16.msra.mxu0 0
  %4050 = vmatpush.bf16.msra.mxu0 0
  %4051 = vmatpush.bf16.msra.mxu0 0
  %4052 = vmatpush.bf16.msra.mxu0 0
  %4053 = vmatpush.bf16.msra.mxu0 %v3383
  %4054 = vmatpush.bf16.msra.mxu0 %v3379
  %4055 = vmatpush.bf16.msra.mxu0 %v3375
  %4056 = vmatmul.bf16.gmra.mxu0 %v3993
  %v4057 = vpop.f32.mrf.mxu0
  %v4058 = vadd.f32 0.0, %v4057
  %v4059 = vpop.f32.mrf.mxu0
  %v4060 = vadd.f32 0.0, %v4059
  %4061 = vmatmul.bf16.gmra.mxu0 %v3996
  %v4062 = vpop.f32.mrf.mxu0
  %v4063 = vadd.f32 0.0, %v4062
  %v4064 = vpop.f32.mrf.mxu0
  %v4065 = vadd.f32 0.0, %v4064
  %4066 = vmatmul.bf16.gmra.mxu0 %v3999
  %v4067 = vpop.f32.mrf.mxu0
  %v4068 = vadd.f32 0.0, %v4067
  %v4069 = vpop.f32.mrf.mxu0
  %v4070 = vadd.f32 0.0, %v4069
  %4071 = vmatmul.bf16.gmra.mxu0 %v4002
  %v4072 = vpop.f32.mrf.mxu0
  %v4073 = vadd.f32 0.0, %v4072
  %v4074 = vpop.f32.mrf.mxu0
  %v4075 = vadd.f32 0.0, %v4074
  %4076 = vmatmul.bf16.gmra.mxu0 %v4005
  %v4077 = vpop.f32.mrf.mxu0
  %v4078 = vadd.f32 0.0, %v4077
  %v4079 = vpop.f32.mrf.mxu0
  %v4080 = vadd.f32 0.0, %v4079
  %4081 = vmatmul.bf16.gmra.mxu0 %v4008
  %v4082 = vpop.f32.mrf.mxu0
  %v4083 = vadd.f32 0.0, %v4082
  %v4084 = vpop.f32.mrf.mxu0
  %4085 = vdwg.mxu0
  %4086 = vmatpush.bf16.msra.mxu0 0
  %4087 = vmatpush.bf16.msra.mxu0 0
  %4088 = vmatpush.bf16.msra.mxu0 0
  %4089 = vmatpush.bf16.msra.mxu0 0
  %4090 = vmatpush.bf16.msra.mxu0 0
  %4091 = vmatpush.bf16.msra.mxu0 %v3384
  %4092 = vmatpush.bf16.msra.mxu0 %v3380
  %4093 = vmatpush.bf16.msra.mxu0 %v3376
  %4094 = vmatmul.bf16.gmra.mxu0 %v3993
  %v4095 = vpop.f32.mrf.mxu0
  %v4096 = vadd.f32 0.0, %v4095
  %v4097 = vpop.f32.mrf.mxu0
  %v4098 = vadd.f32 0.0, %v4097
  %4099 = vmatmul.bf16.gmra.mxu0 %v3996
  %v4100 = vpop.f32.mrf.mxu0
  %v4101 = vadd.f32 0.0, %v4100
  %v4102 = vpop.f32.mrf.mxu0
  %v4103 = vadd.f32 0.0, %v4102
  %4104 = vmatmul.bf16.gmra.mxu0 %v3999
  %v4105 = vpop.f32.mrf.mxu0
  %v4106 = vadd.f32 0.0, %v4105
  %v4107 = vpop.f32.mrf.mxu0
  %v4108 = vadd.f32 0.0, %v4107
  %4109 = vmatmul.bf16.gmra.mxu0 %v4002
  %v4110 = vpop.f32.mrf.mxu0
  %v4111 = vadd.f32 0.0, %v4110
  %v4112 = vpop.f32.mrf.mxu0
  %v4113 = vadd.f32 0.0, %v4112
  %4114 = vmatmul.bf16.gmra.mxu0 %v4005
  %v4115 = vpop.f32.mrf.mxu0
  %v4116 = vadd.f32 0.0, %v4115
  %v4117 = vpop.f32.mrf.mxu0
  %v4118 = vadd.f32 0.0, %v4117
  %4119 = vmatmul.bf16.gmra.mxu0 %v4008
  %v4120 = vpop.f32.mrf.mxu0
  %v4121 = vadd.f32 0.0, %v4120
  %v4122 = vpop.f32.mrf.mxu0
  %4123 = vdwg.mxu0
  %4124 = vmatpush.bf16.msra.mxu0 0
  %4125 = vmatpush.bf16.msra.mxu0 0
  %4126 = vmatpush.bf16.msra.mxu0 0
  %4127 = vmatpush.bf16.msra.mxu0 0
  %4128 = vmatpush.bf16.msra.mxu0 0
  %4129 = vmatpush.bf16.msra.mxu0 %v3385
  %4130 = vmatpush.bf16.msra.mxu0 %v3381
  %4131 = vmatpush.bf16.msra.mxu0 %v3377
  %4132 = vmatmul.bf16.gmra.mxu0 %v3993
  %v4133 = vpop.f32.mrf.mxu0
  %v4134 = vadd.f32 0.0, %v4133
  %v4135 = vpop.f32.mrf.mxu0
  %v4136 = vadd.f32 0.0, %v4135
  %4137 = vmatmul.bf16.gmra.mxu0 %v3996
  %v4138 = vpop.f32.mrf.mxu0
  %v4139 = vadd.f32 0.0, %v4138
  %v4140 = vpop.f32.mrf.mxu0
  %v4141 = vadd.f32 0.0, %v4140
  %4142 = vmatmul.bf16.gmra.mxu0 %v3999
  %v4143 = vpop.f32.mrf.mxu0
  %v4144 = vadd.f32 0.0, %v4143
  %v4145 = vpop.f32.mrf.mxu0
  %v4146 = vadd.f32 0.0, %v4145
  %4147 = vmatmul.bf16.gmra.mxu0 %v4002
  %v4148 = vpop.f32.mrf.mxu0
  %v4149 = vadd.f32 0.0, %v4148
  %v4150 = vpop.f32.mrf.mxu0
  %v4151 = vadd.f32 0.0, %v4150
  %4152 = vmatmul.bf16.gmra.mxu0 %v4005
  %v4153 = vpop.f32.mrf.mxu0
  %v4154 = vadd.f32 0.0, %v4153
  %v4155 = vpop.f32.mrf.mxu0
  %v4156 = vadd.f32 0.0, %v4155
  %4157 = vmatmul.bf16.gmra.mxu0 %v4008
  %v4158 = vpop.f32.mrf.mxu0
  %v4159 = vadd.f32 0.0, %v4158
  %v4160 = vpop.f32.mrf.mxu0
  %4161 = vdwg.mxu0
  %v4162 = vadd.f32 %v3281, %v4020
  %v4163 = vadd.f32 %v3282, %v4058
  %v4164 = vadd.f32 %v3283, %v4096
  %v4165 = vadd.f32 %v3284, %v4134
  %v4166 = vadd.f32 %v3285, %v4022
  %v4167 = vadd.f32 %v3286, %v4060
  %v4168 = vadd.f32 %v3287, %v4098
  %v4169 = vadd.f32 %v3288, %v4136
  %v4170 = vadd.f32 %v3289, %v4025
  %v4171 = vadd.f32 %v3290, %v4063
  %v4172 = vadd.f32 %v3291, %v4101
  %v4173 = vadd.f32 %v3292, %v4139
  %v4174 = vadd.f32 %v3293, %v4027
  %v4175 = vadd.f32 %v3294, %v4065
  %v4176 = vadd.f32 %v3295, %v4103
  %v4177 = vadd.f32 %v3296, %v4141
  %v4178 = vadd.f32 %v3297, %v4030
  %v4179 = vadd.f32 %v3298, %v4068
  %v4180 = vadd.f32 %v3299, %v4106
  %v4181 = vadd.f32 %v3300, %v4144
  %v4182 = vadd.f32 %v3301, %v4032
  %v4183 = vadd.f32 %v3302, %v4070
  %v4184 = vadd.f32 %v3303, %v4108
  %v4185 = vadd.f32 %v3304, %v4146
  %v4186 = vadd.f32 %v3305, %v4035
  %v4187 = vadd.f32 %v3306, %v4073
  %v4188 = vadd.f32 %v3307, %v4111
  %v4189 = vadd.f32 %v3308, %v4149
  %v4190 = vadd.f32 %v3309, %v4037
  %v4191 = vadd.f32 %v3310, %v4075
  %v4192 = vadd.f32 %v3311, %v4113
  %v4193 = vadd.f32 %v3312, %v4151
  %v4194 = vadd.f32 %v3313, %v4040
  %v4195 = vadd.f32 %v3314, %v4078
  %v4196 = vadd.f32 %v3315, %v4116
  %v4197 = vadd.f32 %v3316, %v4154
  %v4198 = vadd.f32 %v3317, %v4042
  %v4199 = vadd.f32 %v3318, %v4080
  %v4200 = vadd.f32 %v3319, %v4118
  %v4201 = vadd.f32 %v3320, %v4156
  %v4202 = vadd.f32 %v3321, %v4045
  %v4203 = vadd.f32 %v3322, %v4083
  %v4204 = vadd.f32 %v3323, %v4121
  %v4205 = vadd.f32 %v3324, %v4159
  %4239 = vrot.lane.b32.xlu0 %v3551, 36
  %v4240 = vpop.permute.xlu0 %4239
  %4241 = vrot.lane.b32.xlu0 %v3552, 36
  %v4242 = vpop.permute.xlu0 %4241
  %4243 = vrot.lane.b32.xlu0 %v3553, 36
  %v4244 = vpop.permute.xlu0 %4243
  %4245 = vrot.lane.b32.xlu0 %v3555, 36
  %v4246 = vpop.permute.xlu0 %4245
  %4247 = vrot.lane.b32.xlu0 %v3556, 36
  %v4248 = vpop.permute.xlu0 %4247
  %4249 = vrot.lane.b32.xlu0 %v3557, 36
  %v4250 = vpop.permute.xlu0 %4249
  %4251 = vrot.lane.b32.xlu0 %v3559, 36
  %v4252 = vpop.permute.xlu0 %4251
  %4253 = vrot.lane.b32.xlu0 %v3560, 36
  %v4254 = vpop.permute.xlu0 %4253
  %4255 = vrot.lane.b32.xlu0 %v3561, 36
  %v4256 = vpop.permute.xlu0 %4255
  %4257 = vrot.lane.b32.xlu0 %v3563, 36
  %v4258 = vpop.permute.xlu0 %4257
  %4259 = vrot.lane.b32.xlu0 %v3564, 36
  %v4260 = vpop.permute.xlu0 %4259
  %4261 = vrot.lane.b32.xlu0 %v3565, 36
  %v4262 = vpop.permute.xlu0 %4261
  %4263 = vrot.lane.b32.xlu0 %v3567, 36
  %v4264 = vpop.permute.xlu0 %4263
  %4265 = vrot.lane.b32.xlu0 %v3568, 36
  %v4266 = vpop.permute.xlu0 %4265
  %4267 = vrot.lane.b32.xlu0 %v3569, 36
  %v4268 = vpop.permute.xlu0 %4267
  %4269 = vrot.lane.b32.xlu0 %v3571, 36
  %v4270 = vpop.permute.xlu0 %4269
  %4271 = vrot.lane.b32.xlu0 %v3572, 36
  %v4272 = vpop.permute.xlu0 %4271
  %4273 = vrot.lane.b32.xlu0 %v3573, 36
  %v4274 = vpop.permute.xlu0 %4273
  %4275 = vrot.lane.b32.xlu0 %v3575, 36
  %v4276 = vpop.permute.xlu0 %4275
  %4277 = vrot.lane.b32.xlu0 %v3576, 36
  %v4278 = vpop.permute.xlu0 %4277
  %4279 = vrot.lane.b32.xlu0 %v3577, 36
  %v4280 = vpop.permute.xlu0 %4279
  %4281 = vrot.lane.b32.xlu0 %v3579, 36
  %v4282 = vpop.permute.xlu0 %4281
  %4283 = vrot.lane.b32.xlu0 %v3580, 36
  %v4284 = vpop.permute.xlu0 %4283
  %4285 = vrot.lane.b32.xlu0 %v3581, 36
  %v4286 = vpop.permute.xlu0 %4285
  %4287 = vrot.lane.b32.xlu0 %v3583, 36
  %v4288 = vpop.permute.xlu0 %4287
  %4289 = vrot.lane.b32.xlu0 %v3584, 36
  %v4290 = vpop.permute.xlu0 %4289
  %4291 = vrot.lane.b32.xlu0 %v3585, 36
  %v4292 = vpop.permute.xlu0 %4291
  %4293 = vrot.lane.b32.xlu0 %v3587, 36
  %v4294 = vpop.permute.xlu0 %4293
  %4295 = vrot.lane.b32.xlu0 %v3588, 36
  %v4296 = vpop.permute.xlu0 %4295
  %4297 = vrot.lane.b32.xlu0 %v3589, 36
  %v4298 = vpop.permute.xlu0 %4297
  %4299 = vrot.lane.b32.xlu0 %v3591, 36
  %v4300 = vpop.permute.xlu0 %4299
  %4301 = vrot.lane.b32.xlu0 %v3592, 36
  %v4302 = vpop.permute.xlu0 %4301
  %4303 = vrot.lane.b32.xlu0 %v3593, 36
  %v4304 = vpop.permute.xlu0 %4303
  %vm4305 = vcmask 293888
  %v4306 = vsel %vm4305, %v4240, %v4242
  %v4307 = vsel %vm4305, %v4242, %v4244
  %v4308 = vsel %vm4305, %v4246, %v4248
  %v4309 = vsel %vm4305, %v4248, %v4250
  %v4310 = vsel %vm4305, %v4252, %v4254
  %v4311 = vsel %vm4305, %v4254, %v4256
  %v4312 = vsel %vm4305, %v4258, %v4260
  %v4313 = vsel %vm4305, %v4260, %v4262
  %v4314 = vsel %vm4305, %v4264, %v4266
  %v4315 = vsel %vm4305, %v4266, %v4268
  %v4316 = vsel %vm4305, %v4270, %v4272
  %v4317 = vsel %vm4305, %v4272, %v4274
  %v4318 = vsel %vm4305, %v4276, %v4278
  %v4319 = vsel %vm4305, %v4278, %v4280
  %v4320 = vsel %vm4305, %v4282, %v4284
  %v4321 = vsel %vm4305, %v4284, %v4286
  %v4322 = vsel %vm4305, %v4288, %v4290
  %v4323 = vsel %vm4305, %v4290, %v4292
  %v4324 = vsel %vm4305, %v4294, %v4296
  %v4325 = vsel %vm4305, %v4296, %v4298
  %v4326 = vsel %vm4305, %v4300, %v4302
  %v4327 = vsel %vm4305, %v4302, %v4304
  %v4350 = vmax.f32 %v3550, %v4306
  %v4351 = vmax.f32 %v3551, %v4307
  %v4352 = vmax.f32 %v3554, %v4308
  %v4353 = vmax.f32 %v3555, %v4309
  %v4354 = vmax.f32 %v3558, %v4310
  %v4355 = vmax.f32 %v3559, %v4311
  %v4356 = vmax.f32 %v3562, %v4312
  %v4357 = vmax.f32 %v3563, %v4313
  %v4358 = vmax.f32 %v3566, %v4314
  %v4359 = vmax.f32 %v3567, %v4315
  %v4360 = vmax.f32 %v3570, %v4316
  %v4361 = vmax.f32 %v3571, %v4317
  %v4362 = vmax.f32 %v3574, %v4318
  %v4363 = vmax.f32 %v3575, %v4319
  %v4364 = vmax.f32 %v3578, %v4320
  %v4365 = vmax.f32 %v3579, %v4321
  %v4366 = vmax.f32 %v3582, %v4322
  %v4367 = vmax.f32 %v3583, %v4323
  %v4368 = vmax.f32 %v3586, %v4324
  %v4369 = vmax.f32 %v3587, %v4325
  %v4370 = vmax.f32 %v3590, %v4326
  %v4371 = vmax.f32 %v3591, %v4327
  %4405 = vrot.lane.b32.xlu0 %v3747, 36
  %v4406 = vpop.permute.xlu0 %4405
  %4407 = vrot.lane.b32.xlu0 %v3748, 36
  %v4408 = vpop.permute.xlu0 %4407
  %4409 = vrot.lane.b32.xlu0 %v3749, 36
  %v4410 = vpop.permute.xlu0 %4409
  %4411 = vrot.lane.b32.xlu0 %v3751, 36
  %v4412 = vpop.permute.xlu0 %4411
  %4413 = vrot.lane.b32.xlu0 %v3752, 36
  %v4414 = vpop.permute.xlu0 %4413
  %4415 = vrot.lane.b32.xlu0 %v3753, 36
  %v4416 = vpop.permute.xlu0 %4415
  %4417 = vrot.lane.b32.xlu0 %v3755, 36
  %v4418 = vpop.permute.xlu0 %4417
  %4419 = vrot.lane.b32.xlu0 %v3756, 36
  %v4420 = vpop.permute.xlu0 %4419
  %4421 = vrot.lane.b32.xlu0 %v3757, 36
  %v4422 = vpop.permute.xlu0 %4421
  %4423 = vrot.lane.b32.xlu0 %v3759, 36
  %v4424 = vpop.permute.xlu0 %4423
  %4425 = vrot.lane.b32.xlu0 %v3760, 36
  %v4426 = vpop.permute.xlu0 %4425
  %4427 = vrot.lane.b32.xlu0 %v3761, 36
  %v4428 = vpop.permute.xlu0 %4427
  %4429 = vrot.lane.b32.xlu0 %v3763, 36
  %v4430 = vpop.permute.xlu0 %4429
  %4431 = vrot.lane.b32.xlu0 %v3764, 36
  %v4432 = vpop.permute.xlu0 %4431
  %4433 = vrot.lane.b32.xlu0 %v3765, 36
  %v4434 = vpop.permute.xlu0 %4433
  %4435 = vrot.lane.b32.xlu0 %v3767, 36
  %v4436 = vpop.permute.xlu0 %4435
  %4437 = vrot.lane.b32.xlu0 %v3768, 36
  %v4438 = vpop.permute.xlu0 %4437
  %4439 = vrot.lane.b32.xlu0 %v3769, 36
  %v4440 = vpop.permute.xlu0 %4439
  %4441 = vrot.lane.b32.xlu0 %v3771, 36
  %v4442 = vpop.permute.xlu0 %4441
  %4443 = vrot.lane.b32.xlu0 %v3772, 36
  %v4444 = vpop.permute.xlu0 %4443
  %4445 = vrot.lane.b32.xlu0 %v3773, 36
  %v4446 = vpop.permute.xlu0 %4445
  %4447 = vrot.lane.b32.xlu0 %v3775, 36
  %v4448 = vpop.permute.xlu0 %4447
  %4449 = vrot.lane.b32.xlu0 %v3776, 36
  %v4450 = vpop.permute.xlu0 %4449
  %4451 = vrot.lane.b32.xlu0 %v3777, 36
  %v4452 = vpop.permute.xlu0 %4451
  %4453 = vrot.lane.b32.xlu0 %v3779, 36
  %v4454 = vpop.permute.xlu0 %4453
  %4455 = vrot.lane.b32.xlu0 %v3780, 36
  %v4456 = vpop.permute.xlu0 %4455
  %4457 = vrot.lane.b32.xlu0 %v3781, 36
  %v4458 = vpop.permute.xlu0 %4457
  %4459 = vrot.lane.b32.xlu0 %v3783, 36
  %v4460 = vpop.permute.xlu0 %4459
  %4461 = vrot.lane.b32.xlu0 %v3784, 36
  %v4462 = vpop.permute.xlu0 %4461
  %4463 = vrot.lane.b32.xlu0 %v3785, 36
  %v4464 = vpop.permute.xlu0 %4463
  %4465 = vrot.lane.b32.xlu0 %v3787, 36
  %v4466 = vpop.permute.xlu0 %4465
  %4467 = vrot.lane.b32.xlu0 %v3788, 36
  %v4468 = vpop.permute.xlu0 %4467
  %4469 = vrot.lane.b32.xlu0 %v3789, 36
  %v4470 = vpop.permute.xlu0 %4469
  %v4471 = vsel %vm4305, %v4406, %v4408
  %v4472 = vsel %vm4305, %v4408, %v4410
  %v4473 = vsel %vm4305, %v4412, %v4414
  %v4474 = vsel %vm4305, %v4414, %v4416
  %v4475 = vsel %vm4305, %v4418, %v4420
  %v4476 = vsel %vm4305, %v4420, %v4422
  %v4477 = vsel %vm4305, %v4424, %v4426
  %v4478 = vsel %vm4305, %v4426, %v4428
  %v4479 = vsel %vm4305, %v4430, %v4432
  %v4480 = vsel %vm4305, %v4432, %v4434
  %v4481 = vsel %vm4305, %v4436, %v4438
  %v4482 = vsel %vm4305, %v4438, %v4440
  %v4483 = vsel %vm4305, %v4442, %v4444
  %v4484 = vsel %vm4305, %v4444, %v4446
  %v4485 = vsel %vm4305, %v4448, %v4450
  %v4486 = vsel %vm4305, %v4450, %v4452
  %v4487 = vsel %vm4305, %v4454, %v4456
  %v4488 = vsel %vm4305, %v4456, %v4458
  %v4489 = vsel %vm4305, %v4460, %v4462
  %v4490 = vsel %vm4305, %v4462, %v4464
  %v4491 = vsel %vm4305, %v4466, %v4468
  %v4492 = vsel %vm4305, %v4468, %v4470
  %v4515 = vmax.f32 %v3746, %v4471
  %v4516 = vmax.f32 %v3747, %v4472
  %v4517 = vmax.f32 %v3750, %v4473
  %v4518 = vmax.f32 %v3751, %v4474
  %v4519 = vmax.f32 %v3754, %v4475
  %v4520 = vmax.f32 %v3755, %v4476
  %v4521 = vmax.f32 %v3758, %v4477
  %v4522 = vmax.f32 %v3759, %v4478
  %v4523 = vmax.f32 %v3762, %v4479
  %v4524 = vmax.f32 %v3763, %v4480
  %v4525 = vmax.f32 %v3766, %v4481
  %v4526 = vmax.f32 %v3767, %v4482
  %v4527 = vmax.f32 %v3770, %v4483
  %v4528 = vmax.f32 %v3771, %v4484
  %v4529 = vmax.f32 %v3774, %v4485
  %v4530 = vmax.f32 %v3775, %v4486
  %v4531 = vmax.f32 %v3778, %v4487
  %v4532 = vmax.f32 %v3779, %v4488
  %v4533 = vmax.f32 %v3782, %v4489
  %v4534 = vmax.f32 %v3783, %v4490
  %v4535 = vmax.f32 %v3786, %v4491
  %v4536 = vmax.f32 %v3787, %v4492
  %v4537 = vmax.f32 %v4350, %v4515
  %v4538 = vmax.f32 %v4351, %v4516
  %v4539 = vmax.f32 %v4352, %v4517
  %v4540 = vmax.f32 %v4353, %v4518
  %v4541 = vmax.f32 %v4354, %v4519
  %v4542 = vmax.f32 %v4355, %v4520
  %v4543 = vmax.f32 %v4356, %v4521
  %v4544 = vmax.f32 %v4357, %v4522
  %v4545 = vmax.f32 %v4358, %v4523
  %v4546 = vmax.f32 %v4359, %v4524
  %v4547 = vmax.f32 %v4360, %v4525
  %v4548 = vmax.f32 %v4361, %v4526
  %v4549 = vmax.f32 %v4362, %v4527
  %v4550 = vmax.f32 %v4363, %v4528
  %v4551 = vmax.f32 %v4364, %v4529
  %v4552 = vmax.f32 %v4365, %v4530
  %v4553 = vmax.f32 %v4366, %v4531
  %v4554 = vmax.f32 %v4367, %v4532
  %v4555 = vmax.f32 %v4368, %v4533
  %v4556 = vmax.f32 %v4369, %v4534
  %v4557 = vmax.f32 %v4370, %v4535
  %v4558 = vmax.f32 %v4371, %v4536
  %v4559 = vld [vmem:[%s2] sm:$0x3]
  %v4561 = vperm.slane %v4559, 0
  %v4562 = vperm.slane %v4559, 1
  %v4565 = vadd.f32 %v4537, %v4561
  %v4566 = vadd.f32 %v4538, %v4562
  %v4567 = vadd.f32 %v4539, %v4561
  %v4568 = vadd.f32 %v4540, %v4562
  %v4569 = vadd.f32 %v4541, %v4561
  %v4570 = vadd.f32 %v4542, %v4562
  %v4571 = vadd.f32 %v4543, %v4561
  %v4572 = vadd.f32 %v4544, %v4562
  %v4573 = vadd.f32 %v4545, %v4561
  %v4574 = vadd.f32 %v4546, %v4562
  %v4575 = vadd.f32 %v4547, %v4561
  %v4576 = vadd.f32 %v4548, %v4562
  %v4577 = vadd.f32 %v4549, %v4561
  %v4578 = vadd.f32 %v4550, %v4562
  %v4579 = vadd.f32 %v4551, %v4561
  %v4580 = vadd.f32 %v4552, %v4562
  %v4581 = vadd.f32 %v4553, %v4561
  %v4582 = vadd.f32 %v4554, %v4562
  %v4583 = vadd.f32 %v4555, %v4561
  %v4584 = vadd.f32 %v4556, %v4562
  %v4585 = vadd.f32 %v4557, %v4561
  %v4586 = vadd.f32 %v4558, %v4562
  %v4587 = vmax.f32 %v4565, 0.0
  %v4588 = vmax.f32 %v4566, 0.0
  %v4589 = vmax.f32 %v4567, 0.0
  %v4590 = vmax.f32 %v4568, 0.0
  %v4591 = vmax.f32 %v4569, 0.0
  %v4592 = vmax.f32 %v4570, 0.0
  %v4593 = vmax.f32 %v4571, 0.0
  %v4594 = vmax.f32 %v4572, 0.0
  %v4595 = vmax.f32 %v4573, 0.0
  %v4596 = vmax.f32 %v4574, 0.0
  %v4597 = vmax.f32 %v4575, 0.0
  %v4598 = vmax.f32 %v4576, 0.0
  %v4599 = vmax.f32 %v4577, 0.0
  %v4600 = vmax.f32 %v4578, 0.0
  %v4601 = vmax.f32 %v4579, 0.0
  %v4602 = vmax.f32 %v4580, 0.0
  %v4603 = vmax.f32 %v4581, 0.0
  %v4604 = vmax.f32 %v4582, 0.0
  %v4605 = vmax.f32 %v4583, 0.0
  %v4606 = vmax.f32 %v4584, 0.0
  %v4607 = vmax.f32 %v4585, 0.0
  %v4608 = vmax.f32 %v4586, 0.0
  %4642 = vrot.lane.b32.xlu0 %v3943, 36
  %v4643 = vpop.permute.xlu0 %4642
  %4644 = vrot.lane.b32.xlu0 %v3944, 36
  %v4645 = vpop.permute.xlu0 %4644
  %4646 = vrot.lane.b32.xlu0 %v3945, 36
  %v4647 = vpop.permute.xlu0 %4646
  %4648 = vrot.lane.b32.xlu0 %v3947, 36
  %v4649 = vpop.permute.xlu0 %4648
  %4650 = vrot.lane.b32.xlu0 %v3948, 36
  %v4651 = vpop.permute.xlu0 %4650
  %4652 = vrot.lane.b32.xlu0 %v3949, 36
  %v4653 = vpop.permute.xlu0 %4652
  %4654 = vrot.lane.b32.xlu0 %v3951, 36
  %v4655 = vpop.permute.xlu0 %4654
  %4656 = vrot.lane.b32.xlu0 %v3952, 36
  %v4657 = vpop.permute.xlu0 %4656
  %4658 = vrot.lane.b32.xlu0 %v3953, 36
  %v4659 = vpop.permute.xlu0 %4658
  %4660 = vrot.lane.b32.xlu0 %v3955, 36
  %v4661 = vpop.permute.xlu0 %4660
  %4662 = vrot.lane.b32.xlu0 %v3956, 36
  %v4663 = vpop.permute.xlu0 %4662
  %4664 = vrot.lane.b32.xlu0 %v3957, 36
  %v4665 = vpop.permute.xlu0 %4664
  %4666 = vrot.lane.b32.xlu0 %v3959, 36
  %v4667 = vpop.permute.xlu0 %4666
  %4668 = vrot.lane.b32.xlu0 %v3960, 36
  %v4669 = vpop.permute.xlu0 %4668
  %4670 = vrot.lane.b32.xlu0 %v3961, 36
  %v4671 = vpop.permute.xlu0 %4670
  %4672 = vrot.lane.b32.xlu0 %v3963, 36
  %v4673 = vpop.permute.xlu0 %4672
  %4674 = vrot.lane.b32.xlu0 %v3964, 36
  %v4675 = vpop.permute.xlu0 %4674
  %4676 = vrot.lane.b32.xlu0 %v3965, 36
  %v4677 = vpop.permute.xlu0 %4676
  %4678 = vrot.lane.b32.xlu0 %v3967, 36
  %v4679 = vpop.permute.xlu0 %4678
  %4680 = vrot.lane.b32.xlu0 %v3968, 36
  %v4681 = vpop.permute.xlu0 %4680
  %4682 = vrot.lane.b32.xlu0 %v3969, 36
  %v4683 = vpop.permute.xlu0 %4682
  %4684 = vrot.lane.b32.xlu0 %v3971, 36
  %v4685 = vpop.permute.xlu0 %4684
  %4686 = vrot.lane.b32.xlu0 %v3972, 36
  %v4687 = vpop.permute.xlu0 %4686
  %4688 = vrot.lane.b32.xlu0 %v3973, 36
  %v4689 = vpop.permute.xlu0 %4688
  %4690 = vrot.lane.b32.xlu0 %v3975, 36
  %v4691 = vpop.permute.xlu0 %4690
  %4692 = vrot.lane.b32.xlu0 %v3976, 36
  %v4693 = vpop.permute.xlu0 %4692
  %4694 = vrot.lane.b32.xlu0 %v3977, 36
  %v4695 = vpop.permute.xlu0 %4694
  %4696 = vrot.lane.b32.xlu0 %v3979, 36
  %v4697 = vpop.permute.xlu0 %4696
  %4698 = vrot.lane.b32.xlu0 %v3980, 36
  %v4699 = vpop.permute.xlu0 %4698
  %4700 = vrot.lane.b32.xlu0 %v3981, 36
  %v4701 = vpop.permute.xlu0 %4700
  %4702 = vrot.lane.b32.xlu0 %v3983, 36
  %v4703 = vpop.permute.xlu0 %4702
  %4704 = vrot.lane.b32.xlu0 %v3984, 36
  %v4705 = vpop.permute.xlu0 %4704
  %4706 = vrot.lane.b32.xlu0 %v3985, 36
  %v4707 = vpop.permute.xlu0 %4706
  %v4708 = vsel %vm4305, %v4643, %v4645
  %v4709 = vsel %vm4305, %v4645, %v4647
  %v4710 = vsel %vm4305, %v4649, %v4651
  %v4711 = vsel %vm4305, %v4651, %v4653
  %v4712 = vsel %vm4305, %v4655, %v4657
  %v4713 = vsel %vm4305, %v4657, %v4659
  %v4714 = vsel %vm4305, %v4661, %v4663
  %v4715 = vsel %vm4305, %v4663, %v4665
  %v4716 = vsel %vm4305, %v4667, %v4669
  %v4717 = vsel %vm4305, %v4669, %v4671
  %v4718 = vsel %vm4305, %v4673, %v4675
  %v4719 = vsel %vm4305, %v4675, %v4677
  %v4720 = vsel %vm4305, %v4679, %v4681
  %v4721 = vsel %vm4305, %v4681, %v4683
  %v4722 = vsel %vm4305, %v4685, %v4687
  %v4723 = vsel %vm4305, %v4687, %v4689
  %v4724 = vsel %vm4305, %v4691, %v4693
  %v4725 = vsel %vm4305, %v4693, %v4695
  %v4726 = vsel %vm4305, %v4697, %v4699
  %v4727 = vsel %vm4305, %v4699, %v4701
  %v4728 = vsel %vm4305, %v4703, %v4705
  %v4729 = vsel %vm4305, %v4705, %v4707
  %v4752 = vmax.f32 %v3942, %v4708
  %v4753 = vmax.f32 %v3943, %v4709
  %v4754 = vmax.f32 %v3946, %v4710
  %v4755 = vmax.f32 %v3947, %v4711
  %v4756 = vmax.f32 %v3950, %v4712
  %v4757 = vmax.f32 %v3951, %v4713
  %v4758 = vmax.f32 %v3954, %v4714
  %v4759 = vmax.f32 %v3955, %v4715
  %v4760 = vmax.f32 %v3958, %v4716
  %v4761 = vmax.f32 %v3959, %v4717
  %v4762 = vmax.f32 %v3962, %v4718
  %v4763 = vmax.f32 %v3963, %v4719
  %v4764 = vmax.f32 %v3966, %v4720
  %v4765 = vmax.f32 %v3967, %v4721
  %v4766 = vmax.f32 %v3970, %v4722
  %v4767 = vmax.f32 %v3971, %v4723
  %v4768 = vmax.f32 %v3974, %v4724
  %v4769 = vmax.f32 %v3975, %v4725
  %v4770 = vmax.f32 %v3978, %v4726
  %v4771 = vmax.f32 %v3979, %v4727
  %v4772 = vmax.f32 %v3982, %v4728
  %v4773 = vmax.f32 %v3983, %v4729
  %4807 = vrot.lane.b32.xlu0 %v4163, 36
  %v4808 = vpop.permute.xlu0 %4807
  %4809 = vrot.lane.b32.xlu0 %v4164, 36
  %v4810 = vpop.permute.xlu0 %4809
  %4811 = vrot.lane.b32.xlu0 %v4165, 36
  %v4812 = vpop.permute.xlu0 %4811
  %4813 = vrot.lane.b32.xlu0 %v4167, 36
  %v4814 = vpop.permute.xlu0 %4813
  %4815 = vrot.lane.b32.xlu0 %v4168, 36
  %v4816 = vpop.permute.xlu0 %4815
  %4817 = vrot.lane.b32.xlu0 %v4169, 36
  %v4818 = vpop.permute.xlu0 %4817
  %4819 = vrot.lane.b32.xlu0 %v4171, 36
  %v4820 = vpop.permute.xlu0 %4819
  %4821 = vrot.lane.b32.xlu0 %v4172, 36
  %v4822 = vpop.permute.xlu0 %4821
  %4823 = vrot.lane.b32.xlu0 %v4173, 36
  %v4824 = vpop.permute.xlu0 %4823
  %4825 = vrot.lane.b32.xlu0 %v4175, 36
  %v4826 = vpop.permute.xlu0 %4825
  %4827 = vrot.lane.b32.xlu0 %v4176, 36
  %v4828 = vpop.permute.xlu0 %4827
  %4829 = vrot.lane.b32.xlu0 %v4177, 36
  %v4830 = vpop.permute.xlu0 %4829
  %4831 = vrot.lane.b32.xlu0 %v4179, 36
  %v4832 = vpop.permute.xlu0 %4831
  %4833 = vrot.lane.b32.xlu0 %v4180, 36
  %v4834 = vpop.permute.xlu0 %4833
  %4835 = vrot.lane.b32.xlu0 %v4181, 36
  %v4836 = vpop.permute.xlu0 %4835
  %4837 = vrot.lane.b32.xlu0 %v4183, 36
  %v4838 = vpop.permute.xlu0 %4837
  %4839 = vrot.lane.b32.xlu0 %v4184, 36
  %v4840 = vpop.permute.xlu0 %4839
  %4841 = vrot.lane.b32.xlu0 %v4185, 36
  %v4842 = vpop.permute.xlu0 %4841
  %4843 = vrot.lane.b32.xlu0 %v4187, 36
  %v4844 = vpop.permute.xlu0 %4843
  %4845 = vrot.lane.b32.xlu0 %v4188, 36
  %v4846 = vpop.permute.xlu0 %4845
  %4847 = vrot.lane.b32.xlu0 %v4189, 36
  %v4848 = vpop.permute.xlu0 %4847
  %4849 = vrot.lane.b32.xlu0 %v4191, 36
  %v4850 = vpop.permute.xlu0 %4849
  %4851 = vrot.lane.b32.xlu0 %v4192, 36
  %v4852 = vpop.permute.xlu0 %4851
  %4853 = vrot.lane.b32.xlu0 %v4193, 36
  %v4854 = vpop.permute.xlu0 %4853
  %4855 = vrot.lane.b32.xlu0 %v4195, 36
  %v4856 = vpop.permute.xlu0 %4855
  %4857 = vrot.lane.b32.xlu0 %v4196, 36
  %v4858 = vpop.permute.xlu0 %4857
  %4859 = vrot.lane.b32.xlu0 %v4197, 36
  %v4860 = vpop.permute.xlu0 %4859
  %4861 = vrot.lane.b32.xlu0 %v4199, 36
  %v4862 = vpop.permute.xlu0 %4861
  %4863 = vrot.lane.b32.xlu0 %v4200, 36
  %v4864 = vpop.permute.xlu0 %4863
  %4865 = vrot.lane.b32.xlu0 %v4201, 36
  %v4866 = vpop.permute.xlu0 %4865
  %4867 = vrot.lane.b32.xlu0 %v4203, 36
  %v4868 = vpop.permute.xlu0 %4867
  %4869 = vrot.lane.b32.xlu0 %v4204, 36
  %v4870 = vpop.permute.xlu0 %4869
  %4871 = vrot.lane.b32.xlu0 %v4205, 36
  %v4872 = vpop.permute.xlu0 %4871
  %v4873 = vsel %vm4305, %v4808, %v4810
  %v4874 = vsel %vm4305, %v4810, %v4812
  %v4875 = vsel %vm4305, %v4814, %v4816
  %v4876 = vsel %vm4305, %v4816, %v4818
  %v4877 = vsel %vm4305, %v4820, %v4822
  %v4878 = vsel %vm4305, %v4822, %v4824
  %v4879 = vsel %vm4305, %v4826, %v4828
  %v4880 = vsel %vm4305, %v4828, %v4830
  %v4881 = vsel %vm4305, %v4832, %v4834
  %v4882 = vsel %vm4305, %v4834, %v4836
  %v4883 = vsel %vm4305, %v4838, %v4840
  %v4884 = vsel %vm4305, %v4840, %v4842
  %v4885 = vsel %vm4305, %v4844, %v4846
  %v4886 = vsel %vm4305, %v4846, %v4848
  %v4887 = vsel %vm4305, %v4850, %v4852
  %v4888 = vsel %vm4305, %v4852, %v4854
  %v4889 = vsel %vm4305, %v4856, %v4858
  %v4890 = vsel %vm4305, %v4858, %v4860
  %v4891 = vsel %vm4305, %v4862, %v4864
  %v4892 = vsel %vm4305, %v4864, %v4866
  %v4893 = vsel %vm4305, %v4868, %v4870
  %v4894 = vsel %vm4305, %v4870, %v4872
  %v4917 = vmax.f32 %v4162, %v4873
  %v4918 = vmax.f32 %v4163, %v4874
  %v4919 = vmax.f32 %v4166, %v4875
  %v4920 = vmax.f32 %v4167, %v4876
  %v4921 = vmax.f32 %v4170, %v4877
  %v4922 = vmax.f32 %v4171, %v4878
  %v4923 = vmax.f32 %v4174, %v4879
  %v4924 = vmax.f32 %v4175, %v4880
  %v4925 = vmax.f32 %v4178, %v4881
  %v4926 = vmax.f32 %v4179, %v4882
  %v4927 = vmax.f32 %v4182, %v4883
  %v4928 = vmax.f32 %v4183, %v4884
  %v4929 = vmax.f32 %v4186, %v4885
  %v4930 = vmax.f32 %v4187, %v4886
  %v4931 = vmax.f32 %v4190, %v4887
  %v4932 = vmax.f32 %v4191, %v4888
  %v4933 = vmax.f32 %v4194, %v4889
  %v4934 = vmax.f32 %v4195, %v4890
  %v4935 = vmax.f32 %v4198, %v4891
  %v4936 = vmax.f32 %v4199, %v4892
  %v4937 = vmax.f32 %v4202, %v4893
  %v4938 = vmax.f32 %v4203, %v4894
  %v4939 = vmax.f32 %v4752, %v4917
  %v4940 = vmax.f32 %v4753, %v4918
  %v4941 = vmax.f32 %v4754, %v4919
  %v4942 = vmax.f32 %v4755, %v4920
  %v4943 = vmax.f32 %v4756, %v4921
  %v4944 = vmax.f32 %v4757, %v4922
  %v4945 = vmax.f32 %v4758, %v4923
  %v4946 = vmax.f32 %v4759, %v4924
  %v4947 = vmax.f32 %v4760, %v4925
  %v4948 = vmax.f32 %v4761, %v4926
  %v4949 = vmax.f32 %v4762, %v4927
  %v4950 = vmax.f32 %v4763, %v4928
  %v4951 = vmax.f32 %v4764, %v4929
  %v4952 = vmax.f32 %v4765, %v4930
  %v4953 = vmax.f32 %v4766, %v4931
  %v4954 = vmax.f32 %v4767, %v4932
  %v4955 = vmax.f32 %v4768, %v4933
  %v4956 = vmax.f32 %v4769, %v4934
  %v4957 = vmax.f32 %v4770, %v4935
  %v4958 = vmax.f32 %v4771, %v4936
  %v4959 = vmax.f32 %v4772, %v4937
  %v4960 = vmax.f32 %v4773, %v4938
  %v4961 = vadd.f32 %v4939, %v4561
  %v4962 = vadd.f32 %v4940, %v4562
  %v4963 = vadd.f32 %v4941, %v4561
  %v4964 = vadd.f32 %v4942, %v4562
  %v4965 = vadd.f32 %v4943, %v4561
  %v4966 = vadd.f32 %v4944, %v4562
  %v4967 = vadd.f32 %v4945, %v4561
  %v4968 = vadd.f32 %v4946, %v4562
  %v4969 = vadd.f32 %v4947, %v4561
  %v4970 = vadd.f32 %v4948, %v4562
  %v4971 = vadd.f32 %v4949, %v4561
  %v4972 = vadd.f32 %v4950, %v4562
  %v4973 = vadd.f32 %v4951, %v4561
  %v4974 = vadd.f32 %v4952, %v4562
  %v4975 = vadd.f32 %v4953, %v4561
  %v4976 = vadd.f32 %v4954, %v4562
  %v4977 = vadd.f32 %v4955, %v4561
  %v4978 = vadd.f32 %v4956, %v4562
  %v4979 = vadd.f32 %v4957, %v4561
  %v4980 = vadd.f32 %v4958, %v4562
  %v4981 = vadd.f32 %v4959, %v4561
  %v4982 = vadd.f32 %v4960, %v4562
  %v4983 = vmax.f32 %v4961, 0.0
  %v4984 = vmax.f32 %v4962, 0.0
  %v4985 = vmax.f32 %v4963, 0.0
  %v4986 = vmax.f32 %v4964, 0.0
  %v4987 = vmax.f32 %v4965, 0.0
  %v4988 = vmax.f32 %v4966, 0.0
  %v4989 = vmax.f32 %v4967, 0.0
  %v4990 = vmax.f32 %v4968, 0.0
  %v4991 = vmax.f32 %v4969, 0.0
  %v4992 = vmax.f32 %v4970, 0.0
  %v4993 = vmax.f32 %v4971, 0.0
  %v4994 = vmax.f32 %v4972, 0.0
  %v4995 = vmax.f32 %v4973, 0.0
  %v4996 = vmax.f32 %v4974, 0.0
  %v4997 = vmax.f32 %v4975, 0.0
  %v4998 = vmax.f32 %v4976, 0.0
  %v4999 = vmax.f32 %v4977, 0.0
  %v5000 = vmax.f32 %v4978, 0.0
  %v5001 = vmax.f32 %v4979, 0.0
  %v5002 = vmax.f32 %v4980, 0.0
  %v5003 = vmax.f32 %v4981, 0.0
  %v5004 = vmax.f32 %v4982, 0.0
  %v5005 = vld [vmem:[%s3] sm:$0xff]
  %v5006 = vld [vmem:[%s3 + $0x8] sm:$0xf]
  %v5007 = vld [vmem:[%s3 + $0xc] sm:$0xff]
  %v5008 = vld [vmem:[%s3 + $0x14] sm:$0xf]
  %v5009 = vld [vmem:[%s3 + $0x18] sm:$0xff]
  %v5010 = vld [vmem:[%s3 + $0x20] sm:$0xf]
  %v5011 = vld [vmem:[%s3 + $0x24] sm:$0xff]
  %v5012 = vld [vmem:[%s3 + $0x2c] sm:$0xf]
  %v5013 = vld [vmem:[%s3 + $0x30] sm:$0xff]
  %v5014 = vld [vmem:[%s3 + $0x38] sm:$0xf]
  %v5015 = vld [vmem:[%s3 + $0x3c] sm:$0xff]
  %v5016 = vld [vmem:[%s3 + $0x44] sm:$0xf]
  %v5017 = vld [vmem:[%s3 + $0x48] sm:$0xff]
  %v5018 = vld [vmem:[%s3 + $0x50] sm:$0xf]
  %v5019 = vld [vmem:[%s3 + $0x54] sm:$0xff]
  %v5020 = vld [vmem:[%s3 + $0x5c] sm:$0xf]
  %v5021 = vld [vmem:[%s3 + $0x60] sm:$0xff]
  %v5022 = vld [vmem:[%s3 + $0x68] sm:$0xf]
  %v5023 = vld [vmem:[%s3 + $0x6c] sm:$0xff]
  %v5024 = vld [vmem:[%s3 + $0x74] sm:$0xf]
  %v5025 = vld [vmem:[%s3 + $0x78] sm:$0xff]
  %v5026 = vld [vmem:[%s3 + $0x80] sm:$0xf]
  %v5027 = vld [vmem:[%s3 + $0x84] sm:$0xff]
  %v5028 = vld [vmem:[%s3 + $0x8c] sm:$0xf]
  %v5029 = vld [vmem:[%s3 + $0x90] sm:$0xff]
  %v5030 = vld [vmem:[%s3 + $0x98] sm:$0xf]
  %v5031 = vld [vmem:[%s3 + $0x9c] sm:$0xff]
  %v5032 = vld [vmem:[%s3 + $0xa4] sm:$0xf]
  %v5033 = vld [vmem:[%s3 + $0xa8] sm:$0xff]
  %v5034 = vld [vmem:[%s3 + $0xb0] sm:$0xf]
  %v5035 = vld [vmem:[%s3 + $0xb4] sm:$0xff]
  %v5036 = vld [vmem:[%s3 + $0xbc] sm:$0xf]
  %v5037 = vld [vmem:[%s3 + $0xc0] sm:$0xff]
  %v5038 = vld [vmem:[%s3 + $0xc8] sm:$0xf]
  %v5039 = vld [vmem:[%s3 + $0xcc] sm:$0xff]
  %v5040 = vld [vmem:[%s3 + $0xd4] sm:$0xf]
  %v5041 = vld [vmem:[%s3 + $0xd8] sm:$0xff]
  %v5042 = vld [vmem:[%s3 + $0xe0] sm:$0xf]
  %v5043 = vld [vmem:[%s3 + $0xe4] sm:$0xff]
  %v5044 = vld [vmem:[%s3 + $0xec] sm:$0xf]
  %v5045 = vld [vmem:[%s3 + $0xf0] sm:$0xff]
  %v5046 = vld [vmem:[%s3 + $0xf8] sm:$0xf]
  %v5047 = vld [vmem:[%s3 + $0xfc] sm:$0xff]
  %v5048 = vld [vmem:[%s3 + $0x104] sm:$0xf]
  %v5049 = vld [vmem:[%s3 + $0x108] sm:$0xff]
  %v5050 = vld [vmem:[%s3 + $0x110] sm:$0xf]
  %v5051 = vld [vmem:[%s3 + $0x114] sm:$0xff]
  %v5052 = vld [vmem:[%s3 + $0x11c] sm:$0xf]
  %v5053 = vld [vmem:[%s3 + $0x120] sm:$0xff]
  %v5054 = vld [vmem:[%s3 + $0x128] sm:$0xf]
  %v5055 = vld [vmem:[%s3 + $0x12c] sm:$0xff]
  %v5056 = vld [vmem:[%s3 + $0x134] sm:$0xf]
  %v5057 = vld [vmem:[%s3 + $0x138] sm:$0xff]
  %v5058 = vld [vmem:[%s3 + $0x140] sm:$0xf]
  %v5059 = vld [vmem:[%s3 + $0x144] sm:$0x33]
  %v5060 = vld [vmem:[%s3 + $0x14c] sm:$0x3]
  %v5061 = vpack.c.bf16 %v4589, %v4587
  %v5062 = vpack.c.bf16 %v4590, %v4588
  %v5063 = vpack.c.bf16 %v4593, %v4591
  %v5064 = vpack.c.bf16 %v4594, %v4592
  %v5065 = vpack.c.bf16 %v4597, %v4595
  %v5066 = vpack.c.bf16 %v4598, %v4596
  %v5067 = vpack.c.bf16 %v4601, %v4599
  %v5068 = vpack.c.bf16 %v4602, %v4600
  %v5069 = vpack.c.bf16 %v4603, %v4603
  %v5070 = vpack.c.bf16 %v4604, %v4604
  %v5071 = vpack.c.bf16 %v4985, %v4983
  %v5072 = vpack.c.bf16 %v4986, %v4984
  %v5073 = vpack.c.bf16 %v4989, %v4987
  %v5074 = vpack.c.bf16 %v4990, %v4988
  %v5075 = vpack.c.bf16 %v4993, %v4991
  %v5076 = vpack.c.bf16 %v4994, %v4992
  %v5077 = vpack.c.bf16 %v4997, %v4995
  %v5078 = vpack.c.bf16 %v4998, %v4996
  %v5079 = vpack.c.bf16 %v4999, %v4999
  %v5080 = vpack.c.bf16 %v5000, %v5000
  %s5081 = scalar_lea.vmem %s3, 336
  %v5082 = vld [vmem:[%s5081] sm:$0xff]
  %v5083 = vld [vmem:[%s5081 + $0x8] sm:$0xf]
  %v5084 = vld [vmem:[%s5081 + $0xc] sm:$0xff]
  %v5085 = vld [vmem:[%s5081 + $0x14] sm:$0xf]
  %v5086 = vld [vmem:[%s5081 + $0x18] sm:$0xff]
  %v5087 = vld [vmem:[%s5081 + $0x20] sm:$0xf]
  %v5088 = vld [vmem:[%s5081 + $0x24] sm:$0xff]
  %v5089 = vld [vmem:[%s5081 + $0x2c] sm:$0xf]
  %v5090 = vld [vmem:[%s5081 + $0x30] sm:$0xff]
  %v5091 = vld [vmem:[%s5081 + $0x38] sm:$0xf]
  %v5092 = vld [vmem:[%s5081 + $0x3c] sm:$0xff]
  %v5093 = vld [vmem:[%s5081 + $0x44] sm:$0xf]
  %v5094 = vld [vmem:[%s5081 + $0x48] sm:$0xff]
  %v5095 = vld [vmem:[%s5081 + $0x50] sm:$0xf]
  %v5096 = vld [vmem:[%s5081 + $0x54] sm:$0xff]
  %v5097 = vld [vmem:[%s5081 + $0x5c] sm:$0xf]
  %v5098 = vld [vmem:[%s5081 + $0x60] sm:$0xff]
  %v5099 = vld [vmem:[%s5081 + $0x68] sm:$0xf]
  %v5100 = vld [vmem:[%s5081 + $0x6c] sm:$0xff]
  %v5101 = vld [vmem:[%s5081 + $0x74] sm:$0xf]
  %v5102 = vld [vmem:[%s5081 + $0x78] sm:$0xff]
  %v5103 = vld [vmem:[%s5081 + $0x80] sm:$0xf]
  %v5104 = vld [vmem:[%s5081 + $0x84] sm:$0xff]
  %v5105 = vld [vmem:[%s5081 + $0x8c] sm:$0xf]
  %v5106 = vld [vmem:[%s5081 + $0x90] sm:$0xff]
  %v5107 = vld [vmem:[%s5081 + $0x98] sm:$0xf]
  %v5108 = vld [vmem:[%s5081 + $0x9c] sm:$0xff]
  %v5109 = vld [vmem:[%s5081 + $0xa4] sm:$0xf]
  %v5110 = vld [vmem:[%s5081 + $0xa8] sm:$0xff]
  %v5111 = vld [vmem:[%s5081 + $0xb0] sm:$0xf]
  %v5112 = vld [vmem:[%s5081 + $0xb4] sm:$0xff]
  %v5113 = vld [vmem:[%s5081 + $0xbc] sm:$0xf]
  %v5114 = vld [vmem:[%s5081 + $0xc0] sm:$0xff]
  %v5115 = vld [vmem:[%s5081 + $0xc8] sm:$0xf]
  %v5116 = vld [vmem:[%s5081 + $0xcc] sm:$0xff]
  %v5117 = vld [vmem:[%s5081 + $0xd4] sm:$0xf]
  %v5118 = vld [vmem:[%s5081 + $0xd8] sm:$0xff]
  %v5119 = vld [vmem:[%s5081 + $0xe0] sm:$0xf]
  %v5120 = vld [vmem:[%s5081 + $0xe4] sm:$0xff]
  %v5121 = vld [vmem:[%s5081 + $0xec] sm:$0xf]
  %v5122 = vld [vmem:[%s5081 + $0xf0] sm:$0xff]
  %v5123 = vld [vmem:[%s5081 + $0xf8] sm:$0xf]
  %v5124 = vld [vmem:[%s5081 + $0xfc] sm:$0xff]
  %v5125 = vld [vmem:[%s5081 + $0x104] sm:$0xf]
  %v5126 = vld [vmem:[%s5081 + $0x108] sm:$0xff]
  %v5127 = vld [vmem:[%s5081 + $0x110] sm:$0xf]
  %v5128 = vld [vmem:[%s5081 + $0x114] sm:$0xff]
  %v5129 = vld [vmem:[%s5081 + $0x11c] sm:$0xf]
  %v5130 = vld [vmem:[%s5081 + $0x120] sm:$0xff]
  %v5131 = vld [vmem:[%s5081 + $0x128] sm:$0xf]
  %v5132 = vld [vmem:[%s5081 + $0x12c] sm:$0xff]
  %v5133 = vld [vmem:[%s5081 + $0x134] sm:$0xf]
  %v5134 = vld [vmem:[%s5081 + $0x138] sm:$0xff]
  %v5135 = vld [vmem:[%s5081 + $0x140] sm:$0xf]
  %v5136 = vld [vmem:[%s5081 + $0x144] sm:$0x33]
  %v5137 = vld [vmem:[%s5081 + $0x14c] sm:$0x3]
  %v5194 = vunpack.c.l.b16 %v5082
  %v5195 = vunpack.c.h.b16 %v5082
  %v5196 = vunpack.c.l.b16 %v5083
  %v5197 = vunpack.c.l.b16 %v5084
  %v5198 = vunpack.c.h.b16 %v5084
  %v5199 = vunpack.c.l.b16 %v5085
  %v5200 = vunpack.c.l.b16 %v5086
  %v5201 = vunpack.c.h.b16 %v5086
  %v5202 = vunpack.c.l.b16 %v5087
  %v5203 = vunpack.c.l.b16 %v5088
  %v5204 = vunpack.c.h.b16 %v5088
  %v5205 = vunpack.c.l.b16 %v5089
  %v5206 = vunpack.c.l.b16 %v5090
  %v5207 = vunpack.c.h.b16 %v5090
  %v5208 = vunpack.c.l.b16 %v5091
  %v5209 = vunpack.c.l.b16 %v5092
  %v5210 = vunpack.c.h.b16 %v5092
  %v5211 = vunpack.c.l.b16 %v5093
  %v5212 = vunpack.c.l.b16 %v5094
  %v5213 = vunpack.c.h.b16 %v5094
  %v5214 = vunpack.c.l.b16 %v5095
  %v5215 = vunpack.c.l.b16 %v5096
  %v5216 = vunpack.c.h.b16 %v5096
  %v5217 = vunpack.c.l.b16 %v5097
  %v5218 = vunpack.c.l.b16 %v5098
  %v5219 = vunpack.c.h.b16 %v5098
  %v5220 = vunpack.c.l.b16 %v5099
  %v5221 = vunpack.c.l.b16 %v5100
  %v5222 = vunpack.c.h.b16 %v5100
  %v5223 = vunpack.c.l.b16 %v5101
  %v5224 = vunpack.c.l.b16 %v5102
  %v5225 = vunpack.c.h.b16 %v5102
  %v5226 = vunpack.c.l.b16 %v5103
  %v5227 = vunpack.c.l.b16 %v5104
  %v5228 = vunpack.c.h.b16 %v5104
  %v5229 = vunpack.c.l.b16 %v5105
  %v5230 = vunpack.c.l.b16 %v5106
  %v5231 = vunpack.c.h.b16 %v5106
  %v5232 = vunpack.c.l.b16 %v5107
  %v5233 = vunpack.c.l.b16 %v5108
  %v5234 = vunpack.c.h.b16 %v5108
  %v5235 = vunpack.c.l.b16 %v5109
  %v5236 = vunpack.c.l.b16 %v5110
  %v5237 = vunpack.c.h.b16 %v5110
  %v5238 = vunpack.c.l.b16 %v5111
  %v5239 = vunpack.c.l.b16 %v5112
  %v5240 = vunpack.c.h.b16 %v5112
  %v5241 = vunpack.c.l.b16 %v5113
  %v5242 = vunpack.c.l.b16 %v5114
  %v5243 = vunpack.c.h.b16 %v5114
  %v5244 = vunpack.c.l.b16 %v5115
  %v5245 = vunpack.c.l.b16 %v5116
  %v5246 = vunpack.c.h.b16 %v5116
  %v5247 = vunpack.c.l.b16 %v5117
  %v5248 = vunpack.c.l.b16 %v5118
  %v5249 = vunpack.c.h.b16 %v5118
  %v5250 = vunpack.c.l.b16 %v5119
  %v5251 = vunpack.c.l.b16 %v5120
  %v5252 = vunpack.c.h.b16 %v5120
  %v5253 = vunpack.c.l.b16 %v5121
  %v5254 = vunpack.c.l.b16 %v5122
  %v5255 = vunpack.c.h.b16 %v5122
  %v5256 = vunpack.c.l.b16 %v5123
  %v5257 = vunpack.c.l.b16 %v5124
  %v5258 = vunpack.c.h.b16 %v5124
  %v5259 = vunpack.c.l.b16 %v5125
  %v5260 = vunpack.c.l.b16 %v5126
  %v5261 = vunpack.c.h.b16 %v5126
  %v5262 = vunpack.c.l.b16 %v5127
  %v5263 = vunpack.c.l.b16 %v5128
  %v5264 = vunpack.c.h.b16 %v5128
  %v5265 = vunpack.c.l.b16 %v5129
  %v5266 = vunpack.c.l.b16 %v5130
  %v5267 = vunpack.c.h.b16 %v5130
  %v5268 = vunpack.c.l.b16 %v5131
  %v5269 = vunpack.c.l.b16 %v5132
  %v5270 = vunpack.c.h.b16 %v5132
  %v5271 = vunpack.c.l.b16 %v5133
  %v5272 = vunpack.c.l.b16 %v5134
  %v5273 = vunpack.c.h.b16 %v5134
  %v5274 = vunpack.c.l.b16 %v5135
  %v5275 = vunpack.c.l.b16 %v5136
  %v5276 = vunpack.c.h.b16 %v5136
  %v5277 = vunpack.c.l.b16 %v5137
  %v5278 = vpack.c.b16 %v5197, %v5194
  %v5279 = vpack.c.b16 %v5198, %v5195
  %v5280 = vpack.c.b16 %v5199, %v5196
  %v5281 = vpack.c.b16 %v5203, %v5200
  %v5282 = vpack.c.b16 %v5204, %v5201
  %v5283 = vpack.c.b16 %v5205, %v5202
  %v5284 = vpack.c.b16 %v5209, %v5206
  %v5285 = vpack.c.b16 %v5210, %v5207
  %v5286 = vpack.c.b16 %v5211, %v5208
  %v5287 = vpack.c.b16 %v5215, %v5212
  %v5288 = vpack.c.b16 %v5216, %v5213
  %v5289 = vpack.c.b16 %v5217, %v5214
  %v5290 = vpack.c.b16 %v5221, %v5218
  %v5291 = vpack.c.b16 %v5222, %v5219
  %v5292 = vpack.c.b16 %v5223, %v5220
  %v5293 = vpack.c.b16 %v5227, %v5224
  %v5294 = vpack.c.b16 %v5228, %v5225
  %v5295 = vpack.c.b16 %v5229, %v5226
  %v5296 = vpack.c.b16 %v5233, %v5230
  %v5297 = vpack.c.b16 %v5234, %v5231
  %v5298 = vpack.c.b16 %v5235, %v5232
  %v5299 = vpack.c.b16 %v5239, %v5236
  %v5300 = vpack.c.b16 %v5240, %v5237
  %v5301 = vpack.c.b16 %v5241, %v5238
  %v5302 = vpack.c.b16 %v5245, %v5242
  %v5303 = vpack.c.b16 %v5246, %v5243
  %v5304 = vpack.c.b16 %v5247, %v5244
  %v5305 = vpack.c.b16 %v5251, %v5248
  %v5306 = vpack.c.b16 %v5252, %v5249
  %v5307 = vpack.c.b16 %v5253, %v5250
  %v5308 = vpack.c.b16 %v5257, %v5254
  %v5309 = vpack.c.b16 %v5258, %v5255
  %v5310 = vpack.c.b16 %v5259, %v5256
  %v5311 = vpack.c.b16 %v5263, %v5260
  %v5312 = vpack.c.b16 %v5264, %v5261
  %v5313 = vpack.c.b16 %v5265, %v5262
  %v5314 = vpack.c.b16 %v5269, %v5266
  %v5315 = vpack.c.b16 %v5270, %v5267
  %v5316 = vpack.c.b16 %v5271, %v5268
  %v5317 = vpack.c.b16 %v5275, %v5272
  %v5318 = vpack.c.b16 %v5276, %v5273
  %v5319 = vpack.c.b16 %v5277, %v5274
  %vm5359 = vcmask 752640
  %v5361 = vsel %vm5359, %v5072, 0
  %v5364 = vsel %vm5359, %v5074, 0
  %v5367 = vsel %vm5359, %v5076, 0
  %v5370 = vsel %vm5359, %v5078, 0
  %v5373 = vsel %vm5359, %v5080, 0
  %vm5375 = vcmask 1045504
  %v5377 = vsel %vm5375, %v5317, 0
  %v5380 = vsel %vm5375, %v5318, 0
  %v5383 = vsel %vm5375, %v5319, 0
  %5385 = vmatpush.bf16.msra.mxu0 %v5299
  %5386 = vmatpush.bf16.msra.mxu0 %v5296
  %5387 = vmatpush.bf16.msra.mxu0 %v5293
  %5388 = vmatpush.bf16.msra.mxu0 %v5290
  %5389 = vmatpush.bf16.msra.mxu0 %v5287
  %5390 = vmatpush.bf16.msra.mxu0 %v5284
  %5391 = vmatpush.bf16.msra.mxu0 %v5281
  %5392 = vmatpush.bf16.msra.mxu0 %v5278
  %5393 = vmatmul.bf16.gmra.mxu0 %v5071
  %v5394 = vpop.f32.mrf.mxu0
  %v5395 = vadd.f32 0.0, %v5394
  %v5396 = vpop.f32.mrf.mxu0
  %v5397 = vadd.f32 0.0, %v5396
  %5398 = vmatmul.bf16.gmra.mxu0 %v5073
  %v5399 = vpop.f32.mrf.mxu0
  %v5400 = vadd.f32 0.0, %v5399
  %v5401 = vpop.f32.mrf.mxu0
  %v5402 = vadd.f32 0.0, %v5401
  %5403 = vmatmul.bf16.gmra.mxu0 %v5075
  %v5404 = vpop.f32.mrf.mxu0
  %v5405 = vadd.f32 0.0, %v5404
  %v5406 = vpop.f32.mrf.mxu0
  %v5407 = vadd.f32 0.0, %v5406
  %5408 = vmatmul.bf16.gmra.mxu0 %v5077
  %v5409 = vpop.f32.mrf.mxu0
  %v5410 = vadd.f32 0.0, %v5409
  %v5411 = vpop.f32.mrf.mxu0
  %v5412 = vadd.f32 0.0, %v5411
  %5413 = vmatmul.bf16.gmra.mxu0 %v5079
  %v5414 = vpop.f32.mrf.mxu0
  %v5415 = vadd.f32 0.0, %v5414
  %v5416 = vpop.f32.mrf.mxu0
  %5417 = vdwg.mxu0
  %5418 = vmatpush.bf16.msra.mxu0 0
  %5419 = vmatpush.bf16.msra.mxu0 0
  %5420 = vmatpush.bf16.msra.mxu0 %v5377
  %5421 = vmatpush.bf16.msra.mxu0 %v5314
  %5422 = vmatpush.bf16.msra.mxu0 %v5311
  %5423 = vmatpush.bf16.msra.mxu0 %v5308
  %5424 = vmatpush.bf16.msra.mxu0 %v5305
  %5425 = vmatpush.bf16.msra.mxu0 %v5302
  %5426 = vmatmul.bf16.gmra.mxu0 %v5361
  %v5427 = vpop.f32.mrf.mxu0
  %v5428 = vadd.f32 %v5395, %v5427
  %v5429 = vpop.f32.mrf.mxu0
  %v5430 = vadd.f32 %v5397, %v5429
  %5431 = vmatmul.bf16.gmra.mxu0 %v5364
  %v5432 = vpop.f32.mrf.mxu0
  %v5433 = vadd.f32 %v5400, %v5432
  %v5434 = vpop.f32.mrf.mxu0
  %v5435 = vadd.f32 %v5402, %v5434
  %5436 = vmatmul.bf16.gmra.mxu0 %v5367
  %v5437 = vpop.f32.mrf.mxu0
  %v5438 = vadd.f32 %v5405, %v5437
  %v5439 = vpop.f32.mrf.mxu0
  %v5440 = vadd.f32 %v5407, %v5439
  %5441 = vmatmul.bf16.gmra.mxu0 %v5370
  %v5442 = vpop.f32.mrf.mxu0
  %v5443 = vadd.f32 %v5410, %v5442
  %v5444 = vpop.f32.mrf.mxu0
  %v5445 = vadd.f32 %v5412, %v5444
  %5446 = vmatmul.bf16.gmra.mxu0 %v5373
  %v5447 = vpop.f32.mrf.mxu0
  %v5448 = vadd.f32 %v5415, %v5447
  %v5449 = vpop.f32.mrf.mxu0
  %5450 = vdwg.mxu0
  %5451 = vmatpush.bf16.msra.mxu0 %v5300
  %5452 = vmatpush.bf16.msra.mxu0 %v5297
  %5453 = vmatpush.bf16.msra.mxu0 %v5294
  %5454 = vmatpush.bf16.msra.mxu0 %v5291
  %5455 = vmatpush.bf16.msra.mxu0 %v5288
  %5456 = vmatpush.bf16.msra.mxu0 %v5285
  %5457 = vmatpush.bf16.msra.mxu0 %v5282
  %5458 = vmatpush.bf16.msra.mxu0 %v5279
  %5459 = vmatmul.bf16.gmra.mxu0 %v5071
  %v5460 = vpop.f32.mrf.mxu0
  %v5461 = vadd.f32 0.0, %v5460
  %v5462 = vpop.f32.mrf.mxu0
  %v5463 = vadd.f32 0.0, %v5462
  %5464 = vmatmul.bf16.gmra.mxu0 %v5073
  %v5465 = vpop.f32.mrf.mxu0
  %v5466 = vadd.f32 0.0, %v5465
  %v5467 = vpop.f32.mrf.mxu0
  %v5468 = vadd.f32 0.0, %v5467
  %5469 = vmatmul.bf16.gmra.mxu0 %v5075
  %v5470 = vpop.f32.mrf.mxu0
  %v5471 = vadd.f32 0.0, %v5470
  %v5472 = vpop.f32.mrf.mxu0
  %v5473 = vadd.f32 0.0, %v5472
  %5474 = vmatmul.bf16.gmra.mxu0 %v5077
  %v5475 = vpop.f32.mrf.mxu0
  %v5476 = vadd.f32 0.0, %v5475
  %v5477 = vpop.f32.mrf.mxu0
  %v5478 = vadd.f32 0.0, %v5477
  %5479 = vmatmul.bf16.gmra.mxu0 %v5079
  %v5480 = vpop.f32.mrf.mxu0
  %v5481 = vadd.f32 0.0, %v5480
  %v5482 = vpop.f32.mrf.mxu0
  %5483 = vdwg.mxu0
  %5484 = vmatpush.bf16.msra.mxu0 0
  %5485 = vmatpush.bf16.msra.mxu0 0
  %5486 = vmatpush.bf16.msra.mxu0 %v5380
  %5487 = vmatpush.bf16.msra.mxu0 %v5315
  %5488 = vmatpush.bf16.msra.mxu0 %v5312
  %5489 = vmatpush.bf16.msra.mxu0 %v5309
  %5490 = vmatpush.bf16.msra.mxu0 %v5306
  %5491 = vmatpush.bf16.msra.mxu0 %v5303
  %5492 = vmatmul.bf16.gmra.mxu0 %v5361
  %v5493 = vpop.f32.mrf.mxu0
  %v5494 = vadd.f32 %v5461, %v5493
  %v5495 = vpop.f32.mrf.mxu0
  %v5496 = vadd.f32 %v5463, %v5495
  %5497 = vmatmul.bf16.gmra.mxu0 %v5364
  %v5498 = vpop.f32.mrf.mxu0
  %v5499 = vadd.f32 %v5466, %v5498
  %v5500 = vpop.f32.mrf.mxu0
  %v5501 = vadd.f32 %v5468, %v5500
  %5502 = vmatmul.bf16.gmra.mxu0 %v5367
  %v5503 = vpop.f32.mrf.mxu0
  %v5504 = vadd.f32 %v5471, %v5503
  %v5505 = vpop.f32.mrf.mxu0
  %v5506 = vadd.f32 %v5473, %v5505
  %5507 = vmatmul.bf16.gmra.mxu0 %v5370
  %v5508 = vpop.f32.mrf.mxu0
  %v5509 = vadd.f32 %v5476, %v5508
  %v5510 = vpop.f32.mrf.mxu0
  %v5511 = vadd.f32 %v5478, %v5510
  %5512 = vmatmul.bf16.gmra.mxu0 %v5373
  %v5513 = vpop.f32.mrf.mxu0
  %v5514 = vadd.f32 %v5481, %v5513
  %v5515 = vpop.f32.mrf.mxu0
  %5516 = vdwg.mxu0
  %5517 = vmatpush.bf16.msra.mxu0 %v5301
  %5518 = vmatpush.bf16.msra.mxu0 %v5298
  %5519 = vmatpush.bf16.msra.mxu0 %v5295
  %5520 = vmatpush.bf16.msra.mxu0 %v5292
  %5521 = vmatpush.bf16.msra.mxu0 %v5289
  %5522 = vmatpush.bf16.msra.mxu0 %v5286
  %5523 = vmatpush.bf16.msra.mxu0 %v5283
  %5524 = vmatpush.bf16.msra.mxu0 %v5280
  %5525 = vmatmul.bf16.gmra.mxu0 %v5071
  %v5526 = vpop.f32.mrf.mxu0
  %v5527 = vadd.f32 0.0, %v5526
  %v5528 = vpop.f32.mrf.mxu0
  %v5529 = vadd.f32 0.0, %v5528
  %5530 = vmatmul.bf16.gmra.mxu0 %v5073
  %v5531 = vpop.f32.mrf.mxu0
  %v5532 = vadd.f32 0.0, %v5531
  %v5533 = vpop.f32.mrf.mxu0
  %v5534 = vadd.f32 0.0, %v5533
  %5535 = vmatmul.bf16.gmra.mxu0 %v5075
  %v5536 = vpop.f32.mrf.mxu0
  %v5537 = vadd.f32 0.0, %v5536
  %v5538 = vpop.f32.mrf.mxu0
  %v5539 = vadd.f32 0.0, %v5538
  %5540 = vmatmul.bf16.gmra.mxu0 %v5077
  %v5541 = vpop.f32.mrf.mxu0
  %v5542 = vadd.f32 0.0, %v5541
  %v5543 = vpop.f32.mrf.mxu0
  %v5544 = vadd.f32 0.0, %v5543
  %5545 = vmatmul.bf16.gmra.mxu0 %v5079
  %v5546 = vpop.f32.mrf.mxu0
  %v5547 = vadd.f32 0.0, %v5546
  %v5548 = vpop.f32.mrf.mxu0
  %5549 = vdwg.mxu0
  %5550 = vmatpush.bf16.msra.mxu0 0
  %5551 = vmatpush.bf16.msra.mxu0 0
  %5552 = vmatpush.bf16.msra.mxu0 %v5383
  %5553 = vmatpush.bf16.msra.mxu0 %v5316
  %5554 = vmatpush.bf16.msra.mxu0 %v5313
  %5555 = vmatpush.bf16.msra.mxu0 %v5310
  %5556 = vmatpush.bf16.msra.mxu0 %v5307
  %5557 = vmatpush.bf16.msra.mxu0 %v5304
  %5558 = vmatmul.bf16.gmra.mxu0 %v5361
  %v5559 = vpop.f32.mrf.mxu0
  %v5560 = vadd.f32 %v5527, %v5559
  %v5561 = vpop.f32.mrf.mxu0
  %v5562 = vadd.f32 %v5529, %v5561
  %5563 = vmatmul.bf16.gmra.mxu0 %v5364
  %v5564 = vpop.f32.mrf.mxu0
  %v5565 = vadd.f32 %v5532, %v5564
  %v5566 = vpop.f32.mrf.mxu0
  %v5567 = vadd.f32 %v5534, %v5566
  %5568 = vmatmul.bf16.gmra.mxu0 %v5367
  %v5569 = vpop.f32.mrf.mxu0
  %v5570 = vadd.f32 %v5537, %v5569
  %v5571 = vpop.f32.mrf.mxu0
  %v5572 = vadd.f32 %v5539, %v5571
  %5573 = vmatmul.bf16.gmra.mxu0 %v5370
  %v5574 = vpop.f32.mrf.mxu0
  %v5575 = vadd.f32 %v5542, %v5574
  %v5576 = vpop.f32.mrf.mxu0
  %v5577 = vadd.f32 %v5544, %v5576
  %5578 = vmatmul.bf16.gmra.mxu0 %v5373
  %v5579 = vpop.f32.mrf.mxu0
  %v5580 = vadd.f32 %v5547, %v5579
  %v5581 = vpop.f32.mrf.mxu0
  %5582 = vdwg.mxu0
  %v5639 = vunpack.c.l.b16 %v5005
  %v5640 = vunpack.c.h.b16 %v5005
  %v5641 = vunpack.c.l.b16 %v5006
  %v5642 = vunpack.c.l.b16 %v5007
  %v5643 = vunpack.c.h.b16 %v5007
  %v5644 = vunpack.c.l.b16 %v5008
  %v5645 = vunpack.c.l.b16 %v5009
  %v5646 = vunpack.c.h.b16 %v5009
  %v5647 = vunpack.c.l.b16 %v5010
  %v5648 = vunpack.c.l.b16 %v5011
  %v5649 = vunpack.c.h.b16 %v5011
  %v5650 = vunpack.c.l.b16 %v5012
  %v5651 = vunpack.c.l.b16 %v5013
  %v5652 = vunpack.c.h.b16 %v5013
  %v5653 = vunpack.c.l.b16 %v5014
  %v5654 = vunpack.c.l.b16 %v5015
  %v5655 = vunpack.c.h.b16 %v5015
  %v5656 = vunpack.c.l.b16 %v5016
  %v5657 = vunpack.c.l.b16 %v5017
  %v5658 = vunpack.c.h.b16 %v5017
  %v5659 = vunpack.c.l.b16 %v5018
  %v5660 = vunpack.c.l.b16 %v5019
  %v5661 = vunpack.c.h.b16 %v5019
  %v5662 = vunpack.c.l.b16 %v5020
  %v5663 = vunpack.c.l.b16 %v5021
  %v5664 = vunpack.c.h.b16 %v5021
  %v5665 = vunpack.c.l.b16 %v5022
  %v5666 = vunpack.c.l.b16 %v5023
  %v5667 = vunpack.c.h.b16 %v5023
  %v5668 = vunpack.c.l.b16 %v5024
  %v5669 = vunpack.c.l.b16 %v5025
  %v5670 = vunpack.c.h.b16 %v5025
  %v5671 = vunpack.c.l.b16 %v5026
  %v5672 = vunpack.c.l.b16 %v5027
  %v5673 = vunpack.c.h.b16 %v5027
  %v5674 = vunpack.c.l.b16 %v5028
  %v5675 = vunpack.c.l.b16 %v5029
  %v5676 = vunpack.c.h.b16 %v5029
  %v5677 = vunpack.c.l.b16 %v5030
  %v5678 = vunpack.c.l.b16 %v5031
  %v5679 = vunpack.c.h.b16 %v5031
  %v5680 = vunpack.c.l.b16 %v5032
  %v5681 = vunpack.c.l.b16 %v5033
  %v5682 = vunpack.c.h.b16 %v5033
  %v5683 = vunpack.c.l.b16 %v5034
  %v5684 = vunpack.c.l.b16 %v5035
  %v5685 = vunpack.c.h.b16 %v5035
  %v5686 = vunpack.c.l.b16 %v5036
  %v5687 = vunpack.c.l.b16 %v5037
  %v5688 = vunpack.c.h.b16 %v5037
  %v5689 = vunpack.c.l.b16 %v5038
  %v5690 = vunpack.c.l.b16 %v5039
  %v5691 = vunpack.c.h.b16 %v5039
  %v5692 = vunpack.c.l.b16 %v5040
  %v5693 = vunpack.c.l.b16 %v5041
  %v5694 = vunpack.c.h.b16 %v5041
  %v5695 = vunpack.c.l.b16 %v5042
  %v5696 = vunpack.c.l.b16 %v5043
  %v5697 = vunpack.c.h.b16 %v5043
  %v5698 = vunpack.c.l.b16 %v5044
  %v5699 = vunpack.c.l.b16 %v5045
  %v5700 = vunpack.c.h.b16 %v5045
  %v5701 = vunpack.c.l.b16 %v5046
  %v5702 = vunpack.c.l.b16 %v5047
  %v5703 = vunpack.c.h.b16 %v5047
  %v5704 = vunpack.c.l.b16 %v5048
  %v5705 = vunpack.c.l.b16 %v5049
  %v5706 = vunpack.c.h.b16 %v5049
  %v5707 = vunpack.c.l.b16 %v5050
  %v5708 = vunpack.c.l.b16 %v5051
  %v5709 = vunpack.c.h.b16 %v5051
  %v5710 = vunpack.c.l.b16 %v5052
  %v5711 = vunpack.c.l.b16 %v5053
  %v5712 = vunpack.c.h.b16 %v5053
  %v5713 = vunpack.c.l.b16 %v5054
  %v5714 = vunpack.c.l.b16 %v5055
  %v5715 = vunpack.c.h.b16 %v5055
  %v5716 = vunpack.c.l.b16 %v5056
  %v5717 = vunpack.c.l.b16 %v5057
  %v5718 = vunpack.c.h.b16 %v5057
  %v5719 = vunpack.c.l.b16 %v5058
  %v5720 = vunpack.c.l.b16 %v5059
  %v5721 = vunpack.c.h.b16 %v5059
  %v5722 = vunpack.c.l.b16 %v5060
  %v5723 = vpack.c.b16 %v5642, %v5639
  %v5724 = vpack.c.b16 %v5643, %v5640
  %v5725 = vpack.c.b16 %v5644, %v5641
  %v5726 = vpack.c.b16 %v5648, %v5645
  %v5727 = vpack.c.b16 %v5649, %v5646
  %v5728 = vpack.c.b16 %v5650, %v5647
  %v5729 = vpack.c.b16 %v5654, %v5651
  %v5730 = vpack.c.b16 %v5655, %v5652
  %v5731 = vpack.c.b16 %v5656, %v5653
  %v5732 = vpack.c.b16 %v5660, %v5657
  %v5733 = vpack.c.b16 %v5661, %v5658
  %v5734 = vpack.c.b16 %v5662, %v5659
  %v5735 = vpack.c.b16 %v5666, %v5663
  %v5736 = vpack.c.b16 %v5667, %v5664
  %v5737 = vpack.c.b16 %v5668, %v5665
  %v5738 = vpack.c.b16 %v5672, %v5669
  %v5739 = vpack.c.b16 %v5673, %v5670
  %v5740 = vpack.c.b16 %v5674, %v5671
  %v5741 = vpack.c.b16 %v5678, %v5675
  %v5742 = vpack.c.b16 %v5679, %v5676
  %v5743 = vpack.c.b16 %v5680, %v5677
  %v5744 = vpack.c.b16 %v5684, %v5681
  %v5745 = vpack.c.b16 %v5685, %v5682
  %v5746 = vpack.c.b16 %v5686, %v5683
  %v5747 = vpack.c.b16 %v5690, %v5687
  %v5748 = vpack.c.b16 %v5691, %v5688
  %v5749 = vpack.c.b16 %v5692, %v5689
  %v5750 = vpack.c.b16 %v5696, %v5693
  %v5751 = vpack.c.b16 %v5697, %v5694
  %v5752 = vpack.c.b16 %v5698, %v5695
  %v5753 = vpack.c.b16 %v5702, %v5699
  %v5754 = vpack.c.b16 %v5703, %v5700
  %v5755 = vpack.c.b16 %v5704, %v5701
  %v5756 = vpack.c.b16 %v5708, %v5705
  %v5757 = vpack.c.b16 %v5709, %v5706
  %v5758 = vpack.c.b16 %v5710, %v5707
  %v5759 = vpack.c.b16 %v5714, %v5711
  %v5760 = vpack.c.b16 %v5715, %v5712
  %v5761 = vpack.c.b16 %v5716, %v5713
  %v5762 = vpack.c.b16 %v5720, %v5717
  %v5763 = vpack.c.b16 %v5721, %v5718
  %v5764 = vpack.c.b16 %v5722, %v5719
  %v5805 = vsel %vm5359, %v5062, 0
  %v5808 = vsel %vm5359, %v5064, 0
  %v5811 = vsel %vm5359, %v5066, 0
  %v5814 = vsel %vm5359, %v5068, 0
  %v5817 = vsel %vm5359, %v5070, 0
  %v5820 = vsel %vm5375, %v5762, 0
  %v5823 = vsel %vm5375, %v5763, 0
  %v5826 = vsel %vm5375, %v5764, 0
  %5828 = vmatpush.bf16.msra.mxu0 %v5744
  %5829 = vmatpush.bf16.msra.mxu0 %v5741
  %5830 = vmatpush.bf16.msra.mxu0 %v5738
  %5831 = vmatpush.bf16.msra.mxu0 %v5735
  %5832 = vmatpush.bf16.msra.mxu0 %v5732
  %5833 = vmatpush.bf16.msra.mxu0 %v5729
  %5834 = vmatpush.bf16.msra.mxu0 %v5726
  %5835 = vmatpush.bf16.msra.mxu0 %v5723
  %5836 = vmatmul.bf16.gmra.mxu0 %v5061
  %v5837 = vpop.f32.mrf.mxu0
  %v5838 = vadd.f32 %v5428, %v5837
  %v5839 = vpop.f32.mrf.mxu0
  %v5840 = vadd.f32 %v5430, %v5839
  %5841 = vmatmul.bf16.gmra.mxu0 %v5063
  %v5842 = vpop.f32.mrf.mxu0
  %v5843 = vadd.f32 %v5433, %v5842
  %v5844 = vpop.f32.mrf.mxu0
  %v5845 = vadd.f32 %v5435, %v5844
  %5846 = vmatmul.bf16.gmra.mxu0 %v5065
  %v5847 = vpop.f32.mrf.mxu0
  %v5848 = vadd.f32 %v5438, %v5847
  %v5849 = vpop.f32.mrf.mxu0
  %v5850 = vadd.f32 %v5440, %v5849
  %5851 = vmatmul.bf16.gmra.mxu0 %v5067
  %v5852 = vpop.f32.mrf.mxu0
  %v5853 = vadd.f32 %v5443, %v5852
  %v5854 = vpop.f32.mrf.mxu0
  %v5855 = vadd.f32 %v5445, %v5854
  %5856 = vmatmul.bf16.gmra.mxu0 %v5069
  %v5857 = vpop.f32.mrf.mxu0
  %v5858 = vadd.f32 %v5448, %v5857
  %v5859 = vpop.f32.mrf.mxu0
  %5860 = vdwg.mxu0
  %5861 = vmatpush.bf16.msra.mxu0 0
  %5862 = vmatpush.bf16.msra.mxu0 0
  %5863 = vmatpush.bf16.msra.mxu0 %v5820
  %5864 = vmatpush.bf16.msra.mxu0 %v5759
  %5865 = vmatpush.bf16.msra.mxu0 %v5756
  %5866 = vmatpush.bf16.msra.mxu0 %v5753
  %5867 = vmatpush.bf16.msra.mxu0 %v5750
  %5868 = vmatpush.bf16.msra.mxu0 %v5747
  %5869 = vmatmul.bf16.gmra.mxu0 %v5805
  %v5870 = vpop.f32.mrf.mxu0
  %v5871 = vadd.f32 %v5838, %v5870
  %v5872 = vpop.f32.mrf.mxu0
  %v5873 = vadd.f32 %v5840, %v5872
  %5874 = vmatmul.bf16.gmra.mxu0 %v5808
  %v5875 = vpop.f32.mrf.mxu0
  %v5876 = vadd.f32 %v5843, %v5875
  %v5877 = vpop.f32.mrf.mxu0
  %v5878 = vadd.f32 %v5845, %v5877
  %5879 = vmatmul.bf16.gmra.mxu0 %v5811
  %v5880 = vpop.f32.mrf.mxu0
  %v5881 = vadd.f32 %v5848, %v5880
  %v5882 = vpop.f32.mrf.mxu0
  %v5883 = vadd.f32 %v5850, %v5882
  %5884 = vmatmul.bf16.gmra.mxu0 %v5814
  %v5885 = vpop.f32.mrf.mxu0
  %v5886 = vadd.f32 %v5853, %v5885
  %v5887 = vpop.f32.mrf.mxu0
  %v5888 = vadd.f32 %v5855, %v5887
  %5889 = vmatmul.bf16.gmra.mxu0 %v5817
  %v5890 = vpop.f32.mrf.mxu0
  %v5891 = vadd.f32 %v5858, %v5890
  %v5892 = vpop.f32.mrf.mxu0
  %5893 = vdwg.mxu0
  %5894 = vmatpush.bf16.msra.mxu0 %v5745
  %5895 = vmatpush.bf16.msra.mxu0 %v5742
  %5896 = vmatpush.bf16.msra.mxu0 %v5739
  %5897 = vmatpush.bf16.msra.mxu0 %v5736
  %5898 = vmatpush.bf16.msra.mxu0 %v5733
  %5899 = vmatpush.bf16.msra.mxu0 %v5730
  %5900 = vmatpush.bf16.msra.mxu0 %v5727
  %5901 = vmatpush.bf16.msra.mxu0 %v5724
  %5902 = vmatmul.bf16.gmra.mxu0 %v5061
  %v5903 = vpop.f32.mrf.mxu0
  %v5904 = vadd.f32 %v5494, %v5903
  %v5905 = vpop.f32.mrf.mxu0
  %v5906 = vadd.f32 %v5496, %v5905
  %5907 = vmatmul.bf16.gmra.mxu0 %v5063
  %v5908 = vpop.f32.mrf.mxu0
  %v5909 = vadd.f32 %v5499, %v5908
  %v5910 = vpop.f32.mrf.mxu0
  %v5911 = vadd.f32 %v5501, %v5910
  %5912 = vmatmul.bf16.gmra.mxu0 %v5065
  %v5913 = vpop.f32.mrf.mxu0
  %v5914 = vadd.f32 %v5504, %v5913
  %v5915 = vpop.f32.mrf.mxu0
  %v5916 = vadd.f32 %v5506, %v5915
  %5917 = vmatmul.bf16.gmra.mxu0 %v5067
  %v5918 = vpop.f32.mrf.mxu0
  %v5919 = vadd.f32 %v5509, %v5918
  %v5920 = vpop.f32.mrf.mxu0
  %v5921 = vadd.f32 %v5511, %v5920
  %5922 = vmatmul.bf16.gmra.mxu0 %v5069
  %v5923 = vpop.f32.mrf.mxu0
  %v5924 = vadd.f32 %v5514, %v5923
  %v5925 = vpop.f32.mrf.mxu0
  %5926 = vdwg.mxu0
  %5927 = vmatpush.bf16.msra.mxu0 0
  %5928 = vmatpush.bf16.msra.mxu0 0
  %5929 = vmatpush.bf16.msra.mxu0 %v5823
  %5930 = vmatpush.bf16.msra.mxu0 %v5760
  %5931 = vmatpush.bf16.msra.mxu0 %v5757
  %5932 = vmatpush.bf16.msra.mxu0 %v5754
  %5933 = vmatpush.bf16.msra.mxu0 %v5751
  %5934 = vmatpush.bf16.msra.mxu0 %v5748
  %5935 = vmatmul.bf16.gmra.mxu0 %v5805
  %v5936 = vpop.f32.mrf.mxu0
  %v5937 = vadd.f32 %v5904, %v5936
  %v5938 = vpop.f32.mrf.mxu0
  %v5939 = vadd.f32 %v5906, %v5938
  %5940 = vmatmul.bf16.gmra.mxu0 %v5808
  %v5941 = vpop.f32.mrf.mxu0
  %v5942 = vadd.f32 %v5909, %v5941
  %v5943 = vpop.f32.mrf.mxu0
  %v5944 = vadd.f32 %v5911, %v5943
  %5945 = vmatmul.bf16.gmra.mxu0 %v5811
  %v5946 = vpop.f32.mrf.mxu0
  %v5947 = vadd.f32 %v5914, %v5946
  %v5948 = vpop.f32.mrf.mxu0
  %v5949 = vadd.f32 %v5916, %v5948
  %5950 = vmatmul.bf16.gmra.mxu0 %v5814
  %v5951 = vpop.f32.mrf.mxu0
  %v5952 = vadd.f32 %v5919, %v5951
  %v5953 = vpop.f32.mrf.mxu0
  %v5954 = vadd.f32 %v5921, %v5953
  %5955 = vmatmul.bf16.gmra.mxu0 %v5817
  %v5956 = vpop.f32.mrf.mxu0
  %v5957 = vadd.f32 %v5924, %v5956
  %v5958 = vpop.f32.mrf.mxu0
  %5959 = vdwg.mxu0
  %5960 = vmatpush.bf16.msra.mxu0 %v5746
  %5961 = vmatpush.bf16.msra.mxu0 %v5743
  %5962 = vmatpush.bf16.msra.mxu0 %v5740
  %5963 = vmatpush.bf16.msra.mxu0 %v5737
  %5964 = vmatpush.bf16.msra.mxu0 %v5734
  %5965 = vmatpush.bf16.msra.mxu0 %v5731
  %5966 = vmatpush.bf16.msra.mxu0 %v5728
  %5967 = vmatpush.bf16.msra.mxu0 %v5725
  %5968 = vmatmul.bf16.gmra.mxu0 %v5061
  %v5969 = vpop.f32.mrf.mxu0
  %v5970 = vadd.f32 %v5560, %v5969
  %v5971 = vpop.f32.mrf.mxu0
  %v5972 = vadd.f32 %v5562, %v5971
  %5973 = vmatmul.bf16.gmra.mxu0 %v5063
  %v5974 = vpop.f32.mrf.mxu0
  %v5975 = vadd.f32 %v5565, %v5974
  %v5976 = vpop.f32.mrf.mxu0
  %v5977 = vadd.f32 %v5567, %v5976
  %5978 = vmatmul.bf16.gmra.mxu0 %v5065
  %v5979 = vpop.f32.mrf.mxu0
  %v5980 = vadd.f32 %v5570, %v5979
  %v5981 = vpop.f32.mrf.mxu0
  %v5982 = vadd.f32 %v5572, %v5981
  %5983 = vmatmul.bf16.gmra.mxu0 %v5067
  %v5984 = vpop.f32.mrf.mxu0
  %v5985 = vadd.f32 %v5575, %v5984
  %v5986 = vpop.f32.mrf.mxu0
  %v5987 = vadd.f32 %v5577, %v5986
  %5988 = vmatmul.bf16.gmra.mxu0 %v5069
  %v5989 = vpop.f32.mrf.mxu0
  %v5990 = vadd.f32 %v5580, %v5989
  %v5991 = vpop.f32.mrf.mxu0
  %5992 = vdwg.mxu0
  %5993 = vmatpush.bf16.msra.mxu0 0
  %5994 = vmatpush.bf16.msra.mxu0 0
  %5995 = vmatpush.bf16.msra.mxu0 %v5826
  %5996 = vmatpush.bf16.msra.mxu0 %v5761
  %5997 = vmatpush.bf16.msra.mxu0 %v5758
  %5998 = vmatpush.bf16.msra.mxu0 %v5755
  %5999 = vmatpush.bf16.msra.mxu0 %v5752
  %6000 = vmatpush.bf16.msra.mxu0 %v5749
  %6001 = vmatmul.bf16.gmra.mxu0 %v5805
  %v6002 = vpop.f32.mrf.mxu0
  %v6003 = vadd.f32 %v5970, %v6002
  %v6004 = vpop.f32.mrf.mxu0
  %v6005 = vadd.f32 %v5972, %v6004
  %6006 = vmatmul.bf16.gmra.mxu0 %v5808
  %v6007 = vpop.f32.mrf.mxu0
  %v6008 = vadd.f32 %v5975, %v6007
  %v6009 = vpop.f32.mrf.mxu0
  %v6010 = vadd.f32 %v5977, %v6009
  %6011 = vmatmul.bf16.gmra.mxu0 %v5811
  %v6012 = vpop.f32.mrf.mxu0
  %v6013 = vadd.f32 %v5980, %v6012
  %v6014 = vpop.f32.mrf.mxu0
  %v6015 = vadd.f32 %v5982, %v6014
  %6016 = vmatmul.bf16.gmra.mxu0 %v5814
  %v6017 = vpop.f32.mrf.mxu0
  %v6018 = vadd.f32 %v5985, %v6017
  %v6019 = vpop.f32.mrf.mxu0
  %v6020 = vadd.f32 %v5987, %v6019
  %6021 = vmatmul.bf16.gmra.mxu0 %v5817
  %v6022 = vpop.f32.mrf.mxu0
  %v6023 = vadd.f32 %v5990, %v6022
  %v6024 = vpop.f32.mrf.mxu0
  %6025 = vdwg.mxu0
  %v6026 = vpack.c.bf16 %v4591, %v4589
  %v6027 = vpack.c.bf16 %v4592, %v4590
  %v6028 = vpack.c.bf16 %v4595, %v4593
  %v6029 = vpack.c.bf16 %v4596, %v4594
  %v6030 = vpack.c.bf16 %v4599, %v4597
  %v6031 = vpack.c.bf16 %v4600, %v4598
  %v6032 = vpack.c.bf16 %v4603, %v4601
  %v6033 = vpack.c.bf16 %v4604, %v4602
  %v6034 = vpack.c.bf16 %v4605, %v4605
  %v6035 = vpack.c.bf16 %v4606, %v4606
  %v6037 = vsel %vm5359, %v6027, 0
  %v6040 = vsel %vm5359, %v6029, 0
  %v6043 = vsel %vm5359, %v6031, 0
  %v6046 = vsel %vm5359, %v6033, 0
  %v6049 = vsel %vm5359, %v6035, 0
  %6051 = vmatpush.bf16.msra.mxu0 %v5299
  %6052 = vmatpush.bf16.msra.mxu0 %v5296
  %6053 = vmatpush.bf16.msra.mxu0 %v5293
  %6054 = vmatpush.bf16.msra.mxu0 %v5290
  %6055 = vmatpush.bf16.msra.mxu0 %v5287
  %6056 = vmatpush.bf16.msra.mxu0 %v5284
  %6057 = vmatpush.bf16.msra.mxu0 %v5281
  %6058 = vmatpush.bf16.msra.mxu0 %v5278
  %6059 = vmatmul.bf16.gmra.mxu0 %v6026
  %v6060 = vpop.f32.mrf.mxu0
  %v6061 = vadd.f32 0.0, %v6060
  %v6062 = vpop.f32.mrf.mxu0
  %v6063 = vadd.f32 0.0, %v6062
  %6064 = vmatmul.bf16.gmra.mxu0 %v6028
  %v6065 = vpop.f32.mrf.mxu0
  %v6066 = vadd.f32 0.0, %v6065
  %v6067 = vpop.f32.mrf.mxu0
  %v6068 = vadd.f32 0.0, %v6067
  %6069 = vmatmul.bf16.gmra.mxu0 %v6030
  %v6070 = vpop.f32.mrf.mxu0
  %v6071 = vadd.f32 0.0, %v6070
  %v6072 = vpop.f32.mrf.mxu0
  %v6073 = vadd.f32 0.0, %v6072
  %6074 = vmatmul.bf16.gmra.mxu0 %v6032
  %v6075 = vpop.f32.mrf.mxu0
  %v6076 = vadd.f32 0.0, %v6075
  %v6077 = vpop.f32.mrf.mxu0
  %v6078 = vadd.f32 0.0, %v6077
  %6079 = vmatmul.bf16.gmra.mxu0 %v6034
  %v6080 = vpop.f32.mrf.mxu0
  %v6081 = vadd.f32 0.0, %v6080
  %v6082 = vpop.f32.mrf.mxu0
  %6083 = vdwg.mxu0
  %6084 = vmatpush.bf16.msra.mxu0 0
  %6085 = vmatpush.bf16.msra.mxu0 0
  %6086 = vmatpush.bf16.msra.mxu0 %v5377
  %6087 = vmatpush.bf16.msra.mxu0 %v5314
  %6088 = vmatpush.bf16.msra.mxu0 %v5311
  %6089 = vmatpush.bf16.msra.mxu0 %v5308
  %6090 = vmatpush.bf16.msra.mxu0 %v5305
  %6091 = vmatpush.bf16.msra.mxu0 %v5302
  %6092 = vmatmul.bf16.gmra.mxu0 %v6037
  %v6093 = vpop.f32.mrf.mxu0
  %v6094 = vadd.f32 %v6061, %v6093
  %v6095 = vpop.f32.mrf.mxu0
  %v6096 = vadd.f32 %v6063, %v6095
  %6097 = vmatmul.bf16.gmra.mxu0 %v6040
  %v6098 = vpop.f32.mrf.mxu0
  %v6099 = vadd.f32 %v6066, %v6098
  %v6100 = vpop.f32.mrf.mxu0
  %v6101 = vadd.f32 %v6068, %v6100
  %6102 = vmatmul.bf16.gmra.mxu0 %v6043
  %v6103 = vpop.f32.mrf.mxu0
  %v6104 = vadd.f32 %v6071, %v6103
  %v6105 = vpop.f32.mrf.mxu0
  %v6106 = vadd.f32 %v6073, %v6105
  %6107 = vmatmul.bf16.gmra.mxu0 %v6046
  %v6108 = vpop.f32.mrf.mxu0
  %v6109 = vadd.f32 %v6076, %v6108
  %v6110 = vpop.f32.mrf.mxu0
  %v6111 = vadd.f32 %v6078, %v6110
  %6112 = vmatmul.bf16.gmra.mxu0 %v6049
  %v6113 = vpop.f32.mrf.mxu0
  %v6114 = vadd.f32 %v6081, %v6113
  %v6115 = vpop.f32.mrf.mxu0
  %6116 = vdwg.mxu0
  %6117 = vmatpush.bf16.msra.mxu0 %v5300
  %6118 = vmatpush.bf16.msra.mxu0 %v5297
  %6119 = vmatpush.bf16.msra.mxu0 %v5294
  %6120 = vmatpush.bf16.msra.mxu0 %v5291
  %6121 = vmatpush.bf16.msra.mxu0 %v5288
  %6122 = vmatpush.bf16.msra.mxu0 %v5285
  %6123 = vmatpush.bf16.msra.mxu0 %v5282
  %6124 = vmatpush.bf16.msra.mxu0 %v5279
  %6125 = vmatmul.bf16.gmra.mxu0 %v6026
  %v6126 = vpop.f32.mrf.mxu0
  %v6127 = vadd.f32 0.0, %v6126
  %v6128 = vpop.f32.mrf.mxu0
  %v6129 = vadd.f32 0.0, %v6128
  %6130 = vmatmul.bf16.gmra.mxu0 %v6028
  %v6131 = vpop.f32.mrf.mxu0
  %v6132 = vadd.f32 0.0, %v6131
  %v6133 = vpop.f32.mrf.mxu0
  %v6134 = vadd.f32 0.0, %v6133
  %6135 = vmatmul.bf16.gmra.mxu0 %v6030
  %v6136 = vpop.f32.mrf.mxu0
  %v6137 = vadd.f32 0.0, %v6136
  %v6138 = vpop.f32.mrf.mxu0
  %v6139 = vadd.f32 0.0, %v6138
  %6140 = vmatmul.bf16.gmra.mxu0 %v6032
  %v6141 = vpop.f32.mrf.mxu0
  %v6142 = vadd.f32 0.0, %v6141
  %v6143 = vpop.f32.mrf.mxu0
  %v6144 = vadd.f32 0.0, %v6143
  %6145 = vmatmul.bf16.gmra.mxu0 %v6034
  %v6146 = vpop.f32.mrf.mxu0
  %v6147 = vadd.f32 0.0, %v6146
  %v6148 = vpop.f32.mrf.mxu0
  %6149 = vdwg.mxu0
  %6150 = vmatpush.bf16.msra.mxu0 0
  %6151 = vmatpush.bf16.msra.mxu0 0
  %6152 = vmatpush.bf16.msra.mxu0 %v5380
  %6153 = vmatpush.bf16.msra.mxu0 %v5315
  %6154 = vmatpush.bf16.msra.mxu0 %v5312
  %6155 = vmatpush.bf16.msra.mxu0 %v5309
  %6156 = vmatpush.bf16.msra.mxu0 %v5306
  %6157 = vmatpush.bf16.msra.mxu0 %v5303
  %6158 = vmatmul.bf16.gmra.mxu0 %v6037
  %v6159 = vpop.f32.mrf.mxu0
  %v6160 = vadd.f32 %v6127, %v6159
  %v6161 = vpop.f32.mrf.mxu0
  %v6162 = vadd.f32 %v6129, %v6161
  %6163 = vmatmul.bf16.gmra.mxu0 %v6040
  %v6164 = vpop.f32.mrf.mxu0
  %v6165 = vadd.f32 %v6132, %v6164
  %v6166 = vpop.f32.mrf.mxu0
  %v6167 = vadd.f32 %v6134, %v6166
  %6168 = vmatmul.bf16.gmra.mxu0 %v6043
  %v6169 = vpop.f32.mrf.mxu0
  %v6170 = vadd.f32 %v6137, %v6169
  %v6171 = vpop.f32.mrf.mxu0
  %v6172 = vadd.f32 %v6139, %v6171
  %6173 = vmatmul.bf16.gmra.mxu0 %v6046
  %v6174 = vpop.f32.mrf.mxu0
  %v6175 = vadd.f32 %v6142, %v6174
  %v6176 = vpop.f32.mrf.mxu0
  %v6177 = vadd.f32 %v6144, %v6176
  %6178 = vmatmul.bf16.gmra.mxu0 %v6049
  %v6179 = vpop.f32.mrf.mxu0
  %v6180 = vadd.f32 %v6147, %v6179
  %v6181 = vpop.f32.mrf.mxu0
  %6182 = vdwg.mxu0
  %6183 = vmatpush.bf16.msra.mxu0 %v5301
  %6184 = vmatpush.bf16.msra.mxu0 %v5298
  %6185 = vmatpush.bf16.msra.mxu0 %v5295
  %6186 = vmatpush.bf16.msra.mxu0 %v5292
  %6187 = vmatpush.bf16.msra.mxu0 %v5289
  %6188 = vmatpush.bf16.msra.mxu0 %v5286
  %6189 = vmatpush.bf16.msra.mxu0 %v5283
  %6190 = vmatpush.bf16.msra.mxu0 %v5280
  %6191 = vmatmul.bf16.gmra.mxu0 %v6026
  %v6192 = vpop.f32.mrf.mxu0
  %v6193 = vadd.f32 0.0, %v6192
  %v6194 = vpop.f32.mrf.mxu0
  %v6195 = vadd.f32 0.0, %v6194
  %6196 = vmatmul.bf16.gmra.mxu0 %v6028
  %v6197 = vpop.f32.mrf.mxu0
  %v6198 = vadd.f32 0.0, %v6197
  %v6199 = vpop.f32.mrf.mxu0
  %v6200 = vadd.f32 0.0, %v6199
  %6201 = vmatmul.bf16.gmra.mxu0 %v6030
  %v6202 = vpop.f32.mrf.mxu0
  %v6203 = vadd.f32 0.0, %v6202
  %v6204 = vpop.f32.mrf.mxu0
  %v6205 = vadd.f32 0.0, %v6204
  %6206 = vmatmul.bf16.gmra.mxu0 %v6032
  %v6207 = vpop.f32.mrf.mxu0
  %v6208 = vadd.f32 0.0, %v6207
  %v6209 = vpop.f32.mrf.mxu0
  %v6210 = vadd.f32 0.0, %v6209
  %6211 = vmatmul.bf16.gmra.mxu0 %v6034
  %v6212 = vpop.f32.mrf.mxu0
  %v6213 = vadd.f32 0.0, %v6212
  %v6214 = vpop.f32.mrf.mxu0
  %6215 = vdwg.mxu0
  %6216 = vmatpush.bf16.msra.mxu0 0
  %6217 = vmatpush.bf16.msra.mxu0 0
  %6218 = vmatpush.bf16.msra.mxu0 %v5383
  %6219 = vmatpush.bf16.msra.mxu0 %v5316
  %6220 = vmatpush.bf16.msra.mxu0 %v5313
  %6221 = vmatpush.bf16.msra.mxu0 %v5310
  %6222 = vmatpush.bf16.msra.mxu0 %v5307
  %6223 = vmatpush.bf16.msra.mxu0 %v5304
  %6224 = vmatmul.bf16.gmra.mxu0 %v6037
  %v6225 = vpop.f32.mrf.mxu0
  %v6226 = vadd.f32 %v6193, %v6225
  %v6227 = vpop.f32.mrf.mxu0
  %v6228 = vadd.f32 %v6195, %v6227
  %6229 = vmatmul.bf16.gmra.mxu0 %v6040
  %v6230 = vpop.f32.mrf.mxu0
  %v6231 = vadd.f32 %v6198, %v6230
  %v6232 = vpop.f32.mrf.mxu0
  %v6233 = vadd.f32 %v6200, %v6232
  %6234 = vmatmul.bf16.gmra.mxu0 %v6043
  %v6235 = vpop.f32.mrf.mxu0
  %v6236 = vadd.f32 %v6203, %v6235
  %v6237 = vpop.f32.mrf.mxu0
  %v6238 = vadd.f32 %v6205, %v6237
  %6239 = vmatmul.bf16.gmra.mxu0 %v6046
  %v6240 = vpop.f32.mrf.mxu0
  %v6241 = vadd.f32 %v6208, %v6240
  %v6242 = vpop.f32.mrf.mxu0
  %v6243 = vadd.f32 %v6210, %v6242
  %6244 = vmatmul.bf16.gmra.mxu0 %v6049
  %v6245 = vpop.f32.mrf.mxu0
  %v6246 = vadd.f32 %v6213, %v6245
  %v6247 = vpop.f32.mrf.mxu0
  %6248 = vdwg.mxu0
  %6249 = vmatpush.bf16.msra.mxu0 %v5744
  %6250 = vmatpush.bf16.msra.mxu0 %v5741
  %6251 = vmatpush.bf16.msra.mxu0 %v5738
  %6252 = vmatpush.bf16.msra.mxu0 %v5735
  %6253 = vmatpush.bf16.msra.mxu0 %v5732
  %6254 = vmatpush.bf16.msra.mxu0 %v5729
  %6255 = vmatpush.bf16.msra.mxu0 %v5726
  %6256 = vmatpush.bf16.msra.mxu0 %v5723
  %6257 = vmatmul.bf16.gmra.mxu0 %v5071
  %v6258 = vpop.f32.mrf.mxu0
  %v6259 = vadd.f32 %v6094, %v6258
  %v6260 = vpop.f32.mrf.mxu0
  %v6261 = vadd.f32 %v6096, %v6260
  %6262 = vmatmul.bf16.gmra.mxu0 %v5073
  %v6263 = vpop.f32.mrf.mxu0
  %v6264 = vadd.f32 %v6099, %v6263
  %v6265 = vpop.f32.mrf.mxu0
  %v6266 = vadd.f32 %v6101, %v6265
  %6267 = vmatmul.bf16.gmra.mxu0 %v5075
  %v6268 = vpop.f32.mrf.mxu0
  %v6269 = vadd.f32 %v6104, %v6268
  %v6270 = vpop.f32.mrf.mxu0
  %v6271 = vadd.f32 %v6106, %v6270
  %6272 = vmatmul.bf16.gmra.mxu0 %v5077
  %v6273 = vpop.f32.mrf.mxu0
  %v6274 = vadd.f32 %v6109, %v6273
  %v6275 = vpop.f32.mrf.mxu0
  %v6276 = vadd.f32 %v6111, %v6275
  %6277 = vmatmul.bf16.gmra.mxu0 %v5079
  %v6278 = vpop.f32.mrf.mxu0
  %v6279 = vadd.f32 %v6114, %v6278
  %v6280 = vpop.f32.mrf.mxu0
  %6281 = vdwg.mxu0
  %6282 = vmatpush.bf16.msra.mxu0 0
  %6283 = vmatpush.bf16.msra.mxu0 0
  %6284 = vmatpush.bf16.msra.mxu0 %v5820
  %6285 = vmatpush.bf16.msra.mxu0 %v5759
  %6286 = vmatpush.bf16.msra.mxu0 %v5756
  %6287 = vmatpush.bf16.msra.mxu0 %v5753
  %6288 = vmatpush.bf16.msra.mxu0 %v5750
  %6289 = vmatpush.bf16.msra.mxu0 %v5747
  %6290 = vmatmul.bf16.gmra.mxu0 %v5361
  %v6291 = vpop.f32.mrf.mxu0
  %v6292 = vadd.f32 %v6259, %v6291
  %v6293 = vpop.f32.mrf.mxu0
  %v6294 = vadd.f32 %v6261, %v6293
  %6295 = vmatmul.bf16.gmra.mxu0 %v5364
  %v6296 = vpop.f32.mrf.mxu0
  %v6297 = vadd.f32 %v6264, %v6296
  %v6298 = vpop.f32.mrf.mxu0
  %v6299 = vadd.f32 %v6266, %v6298
  %6300 = vmatmul.bf16.gmra.mxu0 %v5367
  %v6301 = vpop.f32.mrf.mxu0
  %v6302 = vadd.f32 %v6269, %v6301
  %v6303 = vpop.f32.mrf.mxu0
  %v6304 = vadd.f32 %v6271, %v6303
  %6305 = vmatmul.bf16.gmra.mxu0 %v5370
  %v6306 = vpop.f32.mrf.mxu0
  %v6307 = vadd.f32 %v6274, %v6306
  %v6308 = vpop.f32.mrf.mxu0
  %v6309 = vadd.f32 %v6276, %v6308
  %6310 = vmatmul.bf16.gmra.mxu0 %v5373
  %v6311 = vpop.f32.mrf.mxu0
  %v6312 = vadd.f32 %v6279, %v6311
  %v6313 = vpop.f32.mrf.mxu0
  %6314 = vdwg.mxu0
  %6315 = vmatpush.bf16.msra.mxu0 %v5745
  %6316 = vmatpush.bf16.msra.mxu0 %v5742
  %6317 = vmatpush.bf16.msra.mxu0 %v5739
  %6318 = vmatpush.bf16.msra.mxu0 %v5736
  %6319 = vmatpush.bf16.msra.mxu0 %v5733
  %6320 = vmatpush.bf16.msra.mxu0 %v5730
  %6321 = vmatpush.bf16.msra.mxu0 %v5727
  %6322 = vmatpush.bf16.msra.mxu0 %v5724
  %6323 = vmatmul.bf16.gmra.mxu0 %v5071
  %v6324 = vpop.f32.mrf.mxu0
  %v6325 = vadd.f32 %v6160, %v6324
  %v6326 = vpop.f32.mrf.mxu0
  %v6327 = vadd.f32 %v6162, %v6326
  %6328 = vmatmul.bf16.gmra.mxu0 %v5073
  %v6329 = vpop.f32.mrf.mxu0
  %v6330 = vadd.f32 %v6165, %v6329
  %v6331 = vpop.f32.mrf.mxu0
  %v6332 = vadd.f32 %v6167, %v6331
  %6333 = vmatmul.bf16.gmra.mxu0 %v5075
  %v6334 = vpop.f32.mrf.mxu0
  %v6335 = vadd.f32 %v6170, %v6334
  %v6336 = vpop.f32.mrf.mxu0
  %v6337 = vadd.f32 %v6172, %v6336
  %6338 = vmatmul.bf16.gmra.mxu0 %v5077
  %v6339 = vpop.f32.mrf.mxu0
  %v6340 = vadd.f32 %v6175, %v6339
  %v6341 = vpop.f32.mrf.mxu0
  %v6342 = vadd.f32 %v6177, %v6341
  %6343 = vmatmul.bf16.gmra.mxu0 %v5079
  %v6344 = vpop.f32.mrf.mxu0
  %v6345 = vadd.f32 %v6180, %v6344
  %v6346 = vpop.f32.mrf.mxu0
  %6347 = vdwg.mxu0
  %6348 = vmatpush.bf16.msra.mxu0 0
  %6349 = vmatpush.bf16.msra.mxu0 0
  %6350 = vmatpush.bf16.msra.mxu0 %v5823
  %6351 = vmatpush.bf16.msra.mxu0 %v5760
  %6352 = vmatpush.bf16.msra.mxu0 %v5757
  %6353 = vmatpush.bf16.msra.mxu0 %v5754
  %6354 = vmatpush.bf16.msra.mxu0 %v5751
  %6355 = vmatpush.bf16.msra.mxu0 %v5748
  %6356 = vmatmul.bf16.gmra.mxu0 %v5361
  %v6357 = vpop.f32.mrf.mxu0
  %v6358 = vadd.f32 %v6325, %v6357
  %v6359 = vpop.f32.mrf.mxu0
  %v6360 = vadd.f32 %v6327, %v6359
  %6361 = vmatmul.bf16.gmra.mxu0 %v5364
  %v6362 = vpop.f32.mrf.mxu0
  %v6363 = vadd.f32 %v6330, %v6362
  %v6364 = vpop.f32.mrf.mxu0
  %v6365 = vadd.f32 %v6332, %v6364
  %6366 = vmatmul.bf16.gmra.mxu0 %v5367
  %v6367 = vpop.f32.mrf.mxu0
  %v6368 = vadd.f32 %v6335, %v6367
  %v6369 = vpop.f32.mrf.mxu0
  %v6370 = vadd.f32 %v6337, %v6369
  %6371 = vmatmul.bf16.gmra.mxu0 %v5370
  %v6372 = vpop.f32.mrf.mxu0
  %v6373 = vadd.f32 %v6340, %v6372
  %v6374 = vpop.f32.mrf.mxu0
  %v6375 = vadd.f32 %v6342, %v6374
  %6376 = vmatmul.bf16.gmra.mxu0 %v5373
  %v6377 = vpop.f32.mrf.mxu0
  %v6378 = vadd.f32 %v6345, %v6377
  %v6379 = vpop.f32.mrf.mxu0
  %6380 = vdwg.mxu0
  %6381 = vmatpush.bf16.msra.mxu0 %v5746
  %6382 = vmatpush.bf16.msra.mxu0 %v5743
  %6383 = vmatpush.bf16.msra.mxu0 %v5740
  %6384 = vmatpush.bf16.msra.mxu0 %v5737
  %6385 = vmatpush.bf16.msra.mxu0 %v5734
  %6386 = vmatpush.bf16.msra.mxu0 %v5731
  %6387 = vmatpush.bf16.msra.mxu0 %v5728
  %6388 = vmatpush.bf16.msra.mxu0 %v5725
  %6389 = vmatmul.bf16.gmra.mxu0 %v5071
  %v6390 = vpop.f32.mrf.mxu0
  %v6391 = vadd.f32 %v6226, %v6390
  %v6392 = vpop.f32.mrf.mxu0
  %v6393 = vadd.f32 %v6228, %v6392
  %6394 = vmatmul.bf16.gmra.mxu0 %v5073
  %v6395 = vpop.f32.mrf.mxu0
  %v6396 = vadd.f32 %v6231, %v6395
  %v6397 = vpop.f32.mrf.mxu0
  %v6398 = vadd.f32 %v6233, %v6397
  %6399 = vmatmul.bf16.gmra.mxu0 %v5075
  %v6400 = vpop.f32.mrf.mxu0
  %v6401 = vadd.f32 %v6236, %v6400
  %v6402 = vpop.f32.mrf.mxu0
  %v6403 = vadd.f32 %v6238, %v6402
  %6404 = vmatmul.bf16.gmra.mxu0 %v5077
  %v6405 = vpop.f32.mrf.mxu0
  %v6406 = vadd.f32 %v6241, %v6405
  %v6407 = vpop.f32.mrf.mxu0
  %v6408 = vadd.f32 %v6243, %v6407
  %6409 = vmatmul.bf16.gmra.mxu0 %v5079
  %v6410 = vpop.f32.mrf.mxu0
  %v6411 = vadd.f32 %v6246, %v6410
  %v6412 = vpop.f32.mrf.mxu0
  %6413 = vdwg.mxu0
  %6414 = vmatpush.bf16.msra.mxu0 0
  %6415 = vmatpush.bf16.msra.mxu0 0
  %6416 = vmatpush.bf16.msra.mxu0 %v5826
  %6417 = vmatpush.bf16.msra.mxu0 %v5761
  %6418 = vmatpush.bf16.msra.mxu0 %v5758
  %6419 = vmatpush.bf16.msra.mxu0 %v5755
  %6420 = vmatpush.bf16.msra.mxu0 %v5752
  %6421 = vmatpush.bf16.msra.mxu0 %v5749
  %6422 = vmatmul.bf16.gmra.mxu0 %v5361
  %v6423 = vpop.f32.mrf.mxu0
  %v6424 = vadd.f32 %v6391, %v6423
  %v6425 = vpop.f32.mrf.mxu0
  %v6426 = vadd.f32 %v6393, %v6425
  %6427 = vmatmul.bf16.gmra.mxu0 %v5364
  %v6428 = vpop.f32.mrf.mxu0
  %v6429 = vadd.f32 %v6396, %v6428
  %v6430 = vpop.f32.mrf.mxu0
  %v6431 = vadd.f32 %v6398, %v6430
  %6432 = vmatmul.bf16.gmra.mxu0 %v5367
  %v6433 = vpop.f32.mrf.mxu0
  %v6434 = vadd.f32 %v6401, %v6433
  %v6435 = vpop.f32.mrf.mxu0
  %v6436 = vadd.f32 %v6403, %v6435
  %6437 = vmatmul.bf16.gmra.mxu0 %v5370
  %v6438 = vpop.f32.mrf.mxu0
  %v6439 = vadd.f32 %v6406, %v6438
  %v6440 = vpop.f32.mrf.mxu0
  %v6441 = vadd.f32 %v6408, %v6440
  %6442 = vmatmul.bf16.gmra.mxu0 %v5373
  %v6443 = vpop.f32.mrf.mxu0
  %v6444 = vadd.f32 %v6411, %v6443
  %v6445 = vpop.f32.mrf.mxu0
  %6446 = vdwg.mxu0
  %s6447 = scalar_lea.vmem %s3, 672
  %v6448 = vld [vmem:[%s6447] sm:$0xff]
  %v6449 = vld [vmem:[%s6447 + $0x8] sm:$0xf]
  %v6450 = vld [vmem:[%s6447 + $0xc] sm:$0xff]
  %v6451 = vld [vmem:[%s6447 + $0x14] sm:$0xf]
  %v6452 = vld [vmem:[%s6447 + $0x18] sm:$0xff]
  %v6453 = vld [vmem:[%s6447 + $0x20] sm:$0xf]
  %v6454 = vld [vmem:[%s6447 + $0x24] sm:$0xff]
  %v6455 = vld [vmem:[%s6447 + $0x2c] sm:$0xf]
  %v6456 = vld [vmem:[%s6447 + $0x30] sm:$0xff]
  %v6457 = vld [vmem:[%s6447 + $0x38] sm:$0xf]
  %v6458 = vld [vmem:[%s6447 + $0x3c] sm:$0xff]
  %v6459 = vld [vmem:[%s6447 + $0x44] sm:$0xf]
  %v6460 = vld [vmem:[%s6447 + $0x48] sm:$0xff]
  %v6461 = vld [vmem:[%s6447 + $0x50] sm:$0xf]
  %v6462 = vld [vmem:[%s6447 + $0x54] sm:$0xff]
  %v6463 = vld [vmem:[%s6447 + $0x5c] sm:$0xf]
  %v6464 = vld [vmem:[%s6447 + $0x60] sm:$0xff]
  %v6465 = vld [vmem:[%s6447 + $0x68] sm:$0xf]
  %v6466 = vld [vmem:[%s6447 + $0x6c] sm:$0xff]
  %v6467 = vld [vmem:[%s6447 + $0x74] sm:$0xf]
  %v6468 = vld [vmem:[%s6447 + $0x78] sm:$0xff]
  %v6469 = vld [vmem:[%s6447 + $0x80] sm:$0xf]
  %v6470 = vld [vmem:[%s6447 + $0x84] sm:$0xff]
  %v6471 = vld [vmem:[%s6447 + $0x8c] sm:$0xf]
  %v6472 = vld [vmem:[%s6447 + $0x90] sm:$0xff]
  %v6473 = vld [vmem:[%s6447 + $0x98] sm:$0xf]
  %v6474 = vld [vmem:[%s6447 + $0x9c] sm:$0xff]
  %v6475 = vld [vmem:[%s6447 + $0xa4] sm:$0xf]
  %v6476 = vld [vmem:[%s6447 + $0xa8] sm:$0xff]
  %v6477 = vld [vmem:[%s6447 + $0xb0] sm:$0xf]
  %v6478 = vld [vmem:[%s6447 + $0xb4] sm:$0xff]
  %v6479 = vld [vmem:[%s6447 + $0xbc] sm:$0xf]
  %v6480 = vld [vmem:[%s6447 + $0xc0] sm:$0xff]
  %v6481 = vld [vmem:[%s6447 + $0xc8] sm:$0xf]
  %v6482 = vld [vmem:[%s6447 + $0xcc] sm:$0xff]
  %v6483 = vld [vmem:[%s6447 + $0xd4] sm:$0xf]
  %v6484 = vld [vmem:[%s6447 + $0xd8] sm:$0xff]
  %v6485 = vld [vmem:[%s6447 + $0xe0] sm:$0xf]
  %v6486 = vld [vmem:[%s6447 + $0xe4] sm:$0xff]
  %v6487 = vld [vmem:[%s6447 + $0xec] sm:$0xf]
  %v6488 = vld [vmem:[%s6447 + $0xf0] sm:$0xff]
  %v6489 = vld [vmem:[%s6447 + $0xf8] sm:$0xf]
  %v6490 = vld [vmem:[%s6447 + $0xfc] sm:$0xff]
  %v6491 = vld [vmem:[%s6447 + $0x104] sm:$0xf]
  %v6492 = vld [vmem:[%s6447 + $0x108] sm:$0xff]
  %v6493 = vld [vmem:[%s6447 + $0x110] sm:$0xf]
  %v6494 = vld [vmem:[%s6447 + $0x114] sm:$0xff]
  %v6495 = vld [vmem:[%s6447 + $0x11c] sm:$0xf]
  %v6496 = vld [vmem:[%s6447 + $0x120] sm:$0xff]
  %v6497 = vld [vmem:[%s6447 + $0x128] sm:$0xf]
  %v6498 = vld [vmem:[%s6447 + $0x12c] sm:$0xff]
  %v6499 = vld [vmem:[%s6447 + $0x134] sm:$0xf]
  %v6500 = vld [vmem:[%s6447 + $0x138] sm:$0xff]
  %v6501 = vld [vmem:[%s6447 + $0x140] sm:$0xf]
  %v6502 = vld [vmem:[%s6447 + $0x144] sm:$0x33]
  %v6503 = vld [vmem:[%s6447 + $0x14c] sm:$0x3]
  %v6560 = vunpack.c.l.b16 %v6448
  %v6561 = vunpack.c.h.b16 %v6448
  %v6562 = vunpack.c.l.b16 %v6449
  %v6563 = vunpack.c.l.b16 %v6450
  %v6564 = vunpack.c.h.b16 %v6450
  %v6565 = vunpack.c.l.b16 %v6451
  %v6566 = vunpack.c.l.b16 %v6452
  %v6567 = vunpack.c.h.b16 %v6452
  %v6568 = vunpack.c.l.b16 %v6453
  %v6569 = vunpack.c.l.b16 %v6454
  %v6570 = vunpack.c.h.b16 %v6454
  %v6571 = vunpack.c.l.b16 %v6455
  %v6572 = vunpack.c.l.b16 %v6456
  %v6573 = vunpack.c.h.b16 %v6456
  %v6574 = vunpack.c.l.b16 %v6457
  %v6575 = vunpack.c.l.b16 %v6458
  %v6576 = vunpack.c.h.b16 %v6458
  %v6577 = vunpack.c.l.b16 %v6459
  %v6578 = vunpack.c.l.b16 %v6460
  %v6579 = vunpack.c.h.b16 %v6460
  %v6580 = vunpack.c.l.b16 %v6461
  %v6581 = vunpack.c.l.b16 %v6462
  %v6582 = vunpack.c.h.b16 %v6462
  %v6583 = vunpack.c.l.b16 %v6463
  %v6584 = vunpack.c.l.b16 %v6464
  %v6585 = vunpack.c.h.b16 %v6464
  %v6586 = vunpack.c.l.b16 %v6465
  %v6587 = vunpack.c.l.b16 %v6466
  %v6588 = vunpack.c.h.b16 %v6466
  %v6589 = vunpack.c.l.b16 %v6467
  %v6590 = vunpack.c.l.b16 %v6468
  %v6591 = vunpack.c.h.b16 %v6468
  %v6592 = vunpack.c.l.b16 %v6469
  %v6593 = vunpack.c.l.b16 %v6470
  %v6594 = vunpack.c.h.b16 %v6470
  %v6595 = vunpack.c.l.b16 %v6471
  %v6596 = vunpack.c.l.b16 %v6472
  %v6597 = vunpack.c.h.b16 %v6472
  %v6598 = vunpack.c.l.b16 %v6473
  %v6599 = vunpack.c.l.b16 %v6474
  %v6600 = vunpack.c.h.b16 %v6474
  %v6601 = vunpack.c.l.b16 %v6475
  %v6602 = vunpack.c.l.b16 %v6476
  %v6603 = vunpack.c.h.b16 %v6476
  %v6604 = vunpack.c.l.b16 %v6477
  %v6605 = vunpack.c.l.b16 %v6478
  %v6606 = vunpack.c.h.b16 %v6478
  %v6607 = vunpack.c.l.b16 %v6479
  %v6608 = vunpack.c.l.b16 %v6480
  %v6609 = vunpack.c.h.b16 %v6480
  %v6610 = vunpack.c.l.b16 %v6481
  %v6611 = vunpack.c.l.b16 %v6482
  %v6612 = vunpack.c.h.b16 %v6482
  %v6613 = vunpack.c.l.b16 %v6483
  %v6614 = vunpack.c.l.b16 %v6484
  %v6615 = vunpack.c.h.b16 %v6484
  %v6616 = vunpack.c.l.b16 %v6485
  %v6617 = vunpack.c.l.b16 %v6486
  %v6618 = vunpack.c.h.b16 %v6486
  %v6619 = vunpack.c.l.b16 %v6487
  %v6620 = vunpack.c.l.b16 %v6488
  %v6621 = vunpack.c.h.b16 %v6488
  %v6622 = vunpack.c.l.b16 %v6489
  %v6623 = vunpack.c.l.b16 %v6490
  %v6624 = vunpack.c.h.b16 %v6490
  %v6625 = vunpack.c.l.b16 %v6491
  %v6626 = vunpack.c.l.b16 %v6492
  %v6627 = vunpack.c.h.b16 %v6492
  %v6628 = vunpack.c.l.b16 %v6493
  %v6629 = vunpack.c.l.b16 %v6494
  %v6630 = vunpack.c.h.b16 %v6494
  %v6631 = vunpack.c.l.b16 %v6495
  %v6632 = vunpack.c.l.b16 %v6496
  %v6633 = vunpack.c.h.b16 %v6496
  %v6634 = vunpack.c.l.b16 %v6497
  %v6635 = vunpack.c.l.b16 %v6498
  %v6636 = vunpack.c.h.b16 %v6498
  %v6637 = vunpack.c.l.b16 %v6499
  %v6638 = vunpack.c.l.b16 %v6500
  %v6639 = vunpack.c.h.b16 %v6500
  %v6640 = vunpack.c.l.b16 %v6501
  %v6641 = vunpack.c.l.b16 %v6502
  %v6642 = vunpack.c.h.b16 %v6502
  %v6643 = vunpack.c.l.b16 %v6503
  %v6644 = vpack.c.b16 %v6563, %v6560
  %v6645 = vpack.c.b16 %v6564, %v6561
  %v6646 = vpack.c.b16 %v6565, %v6562
  %v6647 = vpack.c.b16 %v6569, %v6566
  %v6648 = vpack.c.b16 %v6570, %v6567
  %v6649 = vpack.c.b16 %v6571, %v6568
  %v6650 = vpack.c.b16 %v6575, %v6572
  %v6651 = vpack.c.b16 %v6576, %v6573
  %v6652 = vpack.c.b16 %v6577, %v6574
  %v6653 = vpack.c.b16 %v6581, %v6578
  %v6654 = vpack.c.b16 %v6582, %v6579
  %v6655 = vpack.c.b16 %v6583, %v6580
  %v6656 = vpack.c.b16 %v6587, %v6584
  %v6657 = vpack.c.b16 %v6588, %v6585
  %v6658 = vpack.c.b16 %v6589, %v6586
  %v6659 = vpack.c.b16 %v6593, %v6590
  %v6660 = vpack.c.b16 %v6594, %v6591
  %v6661 = vpack.c.b16 %v6595, %v6592
  %v6662 = vpack.c.b16 %v6599, %v6596
  %v6663 = vpack.c.b16 %v6600, %v6597
  %v6664 = vpack.c.b16 %v6601, %v6598
  %v6665 = vpack.c.b16 %v6605, %v6602
  %v6666 = vpack.c.b16 %v6606, %v6603
  %v6667 = vpack.c.b16 %v6607, %v6604
  %v6668 = vpack.c.b16 %v6611, %v6608
  %v6669 = vpack.c.b16 %v6612, %v6609
  %v6670 = vpack.c.b16 %v6613, %v6610
  %v6671 = vpack.c.b16 %v6617, %v6614
  %v6672 = vpack.c.b16 %v6618, %v6615
  %v6673 = vpack.c.b16 %v6619, %v6616
  %v6674 = vpack.c.b16 %v6623, %v6620
  %v6675 = vpack.c.b16 %v6624, %v6621
  %v6676 = vpack.c.b16 %v6625, %v6622
  %v6677 = vpack.c.b16 %v6629, %v6626
  %v6678 = vpack.c.b16 %v6630, %v6627
  %v6679 = vpack.c.b16 %v6631, %v6628
  %v6680 = vpack.c.b16 %v6635, %v6632
  %v6681 = vpack.c.b16 %v6636, %v6633
  %v6682 = vpack.c.b16 %v6637, %v6634
  %v6683 = vpack.c.b16 %v6641, %v6638
  %v6684 = vpack.c.b16 %v6642, %v6639
  %v6685 = vpack.c.b16 %v6643, %v6640
  %v6726 = vsel %vm5375, %v6683, 0
  %v6729 = vsel %vm5375, %v6684, 0
  %v6732 = vsel %vm5375, %v6685, 0
  %6734 = vmatpush.bf16.msra.mxu0 %v6665
  %6735 = vmatpush.bf16.msra.mxu0 %v6662
  %6736 = vmatpush.bf16.msra.mxu0 %v6659
  %6737 = vmatpush.bf16.msra.mxu0 %v6656
  %6738 = vmatpush.bf16.msra.mxu0 %v6653
  %6739 = vmatpush.bf16.msra.mxu0 %v6650
  %6740 = vmatpush.bf16.msra.mxu0 %v6647
  %6741 = vmatpush.bf16.msra.mxu0 %v6644
  %6742 = vmatmul.bf16.gmra.mxu0 %v6026
  %v6743 = vpop.f32.mrf.mxu0
  %v6744 = vadd.f32 0.0, %v6743
  %v6745 = vpop.f32.mrf.mxu0
  %v6746 = vadd.f32 0.0, %v6745
  %6747 = vmatmul.bf16.gmra.mxu0 %v6028
  %v6748 = vpop.f32.mrf.mxu0
  %v6749 = vadd.f32 0.0, %v6748
  %v6750 = vpop.f32.mrf.mxu0
  %v6751 = vadd.f32 0.0, %v6750
  %6752 = vmatmul.bf16.gmra.mxu0 %v6030
  %v6753 = vpop.f32.mrf.mxu0
  %v6754 = vadd.f32 0.0, %v6753
  %v6755 = vpop.f32.mrf.mxu0
  %v6756 = vadd.f32 0.0, %v6755
  %6757 = vmatmul.bf16.gmra.mxu0 %v6032
  %v6758 = vpop.f32.mrf.mxu0
  %v6759 = vadd.f32 0.0, %v6758
  %v6760 = vpop.f32.mrf.mxu0
  %v6761 = vadd.f32 0.0, %v6760
  %6762 = vmatmul.bf16.gmra.mxu0 %v6034
  %v6763 = vpop.f32.mrf.mxu0
  %v6764 = vadd.f32 0.0, %v6763
  %v6765 = vpop.f32.mrf.mxu0
  %6766 = vdwg.mxu0
  %6767 = vmatpush.bf16.msra.mxu0 0
  %6768 = vmatpush.bf16.msra.mxu0 0
  %6769 = vmatpush.bf16.msra.mxu0 %v6726
  %6770 = vmatpush.bf16.msra.mxu0 %v6680
  %6771 = vmatpush.bf16.msra.mxu0 %v6677
  %6772 = vmatpush.bf16.msra.mxu0 %v6674
  %6773 = vmatpush.bf16.msra.mxu0 %v6671
  %6774 = vmatpush.bf16.msra.mxu0 %v6668
  %6775 = vmatmul.bf16.gmra.mxu0 %v6037
  %v6776 = vpop.f32.mrf.mxu0
  %v6777 = vadd.f32 %v6744, %v6776
  %v6778 = vpop.f32.mrf.mxu0
  %v6779 = vadd.f32 %v6746, %v6778
  %6780 = vmatmul.bf16.gmra.mxu0 %v6040
  %v6781 = vpop.f32.mrf.mxu0
  %v6782 = vadd.f32 %v6749, %v6781
  %v6783 = vpop.f32.mrf.mxu0
  %v6784 = vadd.f32 %v6751, %v6783
  %6785 = vmatmul.bf16.gmra.mxu0 %v6043
  %v6786 = vpop.f32.mrf.mxu0
  %v6787 = vadd.f32 %v6754, %v6786
  %v6788 = vpop.f32.mrf.mxu0
  %v6789 = vadd.f32 %v6756, %v6788
  %6790 = vmatmul.bf16.gmra.mxu0 %v6046
  %v6791 = vpop.f32.mrf.mxu0
  %v6792 = vadd.f32 %v6759, %v6791
  %v6793 = vpop.f32.mrf.mxu0
  %v6794 = vadd.f32 %v6761, %v6793
  %6795 = vmatmul.bf16.gmra.mxu0 %v6049
  %v6796 = vpop.f32.mrf.mxu0
  %v6797 = vadd.f32 %v6764, %v6796
  %v6798 = vpop.f32.mrf.mxu0
  %6799 = vdwg.mxu0
  %6800 = vmatpush.bf16.msra.mxu0 %v6666
  %6801 = vmatpush.bf16.msra.mxu0 %v6663
  %6802 = vmatpush.bf16.msra.mxu0 %v6660
  %6803 = vmatpush.bf16.msra.mxu0 %v6657
  %6804 = vmatpush.bf16.msra.mxu0 %v6654
  %6805 = vmatpush.bf16.msra.mxu0 %v6651
  %6806 = vmatpush.bf16.msra.mxu0 %v6648
  %6807 = vmatpush.bf16.msra.mxu0 %v6645
  %6808 = vmatmul.bf16.gmra.mxu0 %v6026
  %v6809 = vpop.f32.mrf.mxu0
  %v6810 = vadd.f32 0.0, %v6809
  %v6811 = vpop.f32.mrf.mxu0
  %v6812 = vadd.f32 0.0, %v6811
  %6813 = vmatmul.bf16.gmra.mxu0 %v6028
  %v6814 = vpop.f32.mrf.mxu0
  %v6815 = vadd.f32 0.0, %v6814
  %v6816 = vpop.f32.mrf.mxu0
  %v6817 = vadd.f32 0.0, %v6816
  %6818 = vmatmul.bf16.gmra.mxu0 %v6030
  %v6819 = vpop.f32.mrf.mxu0
  %v6820 = vadd.f32 0.0, %v6819
  %v6821 = vpop.f32.mrf.mxu0
  %v6822 = vadd.f32 0.0, %v6821
  %6823 = vmatmul.bf16.gmra.mxu0 %v6032
  %v6824 = vpop.f32.mrf.mxu0
  %v6825 = vadd.f32 0.0, %v6824
  %v6826 = vpop.f32.mrf.mxu0
  %v6827 = vadd.f32 0.0, %v6826
  %6828 = vmatmul.bf16.gmra.mxu0 %v6034
  %v6829 = vpop.f32.mrf.mxu0
  %v6830 = vadd.f32 0.0, %v6829
  %v6831 = vpop.f32.mrf.mxu0
  %6832 = vdwg.mxu0
  %6833 = vmatpush.bf16.msra.mxu0 0
  %6834 = vmatpush.bf16.msra.mxu0 0
  %6835 = vmatpush.bf16.msra.mxu0 %v6729
  %6836 = vmatpush.bf16.msra.mxu0 %v6681
  %6837 = vmatpush.bf16.msra.mxu0 %v6678
  %6838 = vmatpush.bf16.msra.mxu0 %v6675
  %6839 = vmatpush.bf16.msra.mxu0 %v6672
  %6840 = vmatpush.bf16.msra.mxu0 %v6669
  %6841 = vmatmul.bf16.gmra.mxu0 %v6037
  %v6842 = vpop.f32.mrf.mxu0
  %v6843 = vadd.f32 %v6810, %v6842
  %v6844 = vpop.f32.mrf.mxu0
  %v6845 = vadd.f32 %v6812, %v6844
  %6846 = vmatmul.bf16.gmra.mxu0 %v6040
  %v6847 = vpop.f32.mrf.mxu0
  %v6848 = vadd.f32 %v6815, %v6847
  %v6849 = vpop.f32.mrf.mxu0
  %v6850 = vadd.f32 %v6817, %v6849
  %6851 = vmatmul.bf16.gmra.mxu0 %v6043
  %v6852 = vpop.f32.mrf.mxu0
  %v6853 = vadd.f32 %v6820, %v6852
  %v6854 = vpop.f32.mrf.mxu0
  %v6855 = vadd.f32 %v6822, %v6854
  %6856 = vmatmul.bf16.gmra.mxu0 %v6046
  %v6857 = vpop.f32.mrf.mxu0
  %v6858 = vadd.f32 %v6825, %v6857
  %v6859 = vpop.f32.mrf.mxu0
  %v6860 = vadd.f32 %v6827, %v6859
  %6861 = vmatmul.bf16.gmra.mxu0 %v6049
  %v6862 = vpop.f32.mrf.mxu0
  %v6863 = vadd.f32 %v6830, %v6862
  %v6864 = vpop.f32.mrf.mxu0
  %6865 = vdwg.mxu0
  %6866 = vmatpush.bf16.msra.mxu0 %v6667
  %6867 = vmatpush.bf16.msra.mxu0 %v6664
  %6868 = vmatpush.bf16.msra.mxu0 %v6661
  %6869 = vmatpush.bf16.msra.mxu0 %v6658
  %6870 = vmatpush.bf16.msra.mxu0 %v6655
  %6871 = vmatpush.bf16.msra.mxu0 %v6652
  %6872 = vmatpush.bf16.msra.mxu0 %v6649
  %6873 = vmatpush.bf16.msra.mxu0 %v6646
  %6874 = vmatmul.bf16.gmra.mxu0 %v6026
  %v6875 = vpop.f32.mrf.mxu0
  %v6876 = vadd.f32 0.0, %v6875
  %v6877 = vpop.f32.mrf.mxu0
  %v6878 = vadd.f32 0.0, %v6877
  %6879 = vmatmul.bf16.gmra.mxu0 %v6028
  %v6880 = vpop.f32.mrf.mxu0
  %v6881 = vadd.f32 0.0, %v6880
  %v6882 = vpop.f32.mrf.mxu0
  %v6883 = vadd.f32 0.0, %v6882
  %6884 = vmatmul.bf16.gmra.mxu0 %v6030
  %v6885 = vpop.f32.mrf.mxu0
  %v6886 = vadd.f32 0.0, %v6885
  %v6887 = vpop.f32.mrf.mxu0
  %v6888 = vadd.f32 0.0, %v6887
  %6889 = vmatmul.bf16.gmra.mxu0 %v6032
  %v6890 = vpop.f32.mrf.mxu0
  %v6891 = vadd.f32 0.0, %v6890
  %v6892 = vpop.f32.mrf.mxu0
  %v6893 = vadd.f32 0.0, %v6892
  %6894 = vmatmul.bf16.gmra.mxu0 %v6034
  %v6895 = vpop.f32.mrf.mxu0
  %v6896 = vadd.f32 0.0, %v6895
  %v6897 = vpop.f32.mrf.mxu0
  %6898 = vdwg.mxu0
  %6899 = vmatpush.bf16.msra.mxu0 0
  %6900 = vmatpush.bf16.msra.mxu0 0
  %6901 = vmatpush.bf16.msra.mxu0 %v6732
  %6902 = vmatpush.bf16.msra.mxu0 %v6682
  %6903 = vmatpush.bf16.msra.mxu0 %v6679
  %6904 = vmatpush.bf16.msra.mxu0 %v6676
  %6905 = vmatpush.bf16.msra.mxu0 %v6673
  %6906 = vmatpush.bf16.msra.mxu0 %v6670
  %6907 = vmatmul.bf16.gmra.mxu0 %v6037
  %v6908 = vpop.f32.mrf.mxu0
  %v6909 = vadd.f32 %v6876, %v6908
  %v6910 = vpop.f32.mrf.mxu0
  %v6911 = vadd.f32 %v6878, %v6910
  %6912 = vmatmul.bf16.gmra.mxu0 %v6040
  %v6913 = vpop.f32.mrf.mxu0
  %v6914 = vadd.f32 %v6881, %v6913
  %v6915 = vpop.f32.mrf.mxu0
  %v6916 = vadd.f32 %v6883, %v6915
  %6917 = vmatmul.bf16.gmra.mxu0 %v6043
  %v6918 = vpop.f32.mrf.mxu0
  %v6919 = vadd.f32 %v6886, %v6918
  %v6920 = vpop.f32.mrf.mxu0
  %v6921 = vadd.f32 %v6888, %v6920
  %6922 = vmatmul.bf16.gmra.mxu0 %v6046
  %v6923 = vpop.f32.mrf.mxu0
  %v6924 = vadd.f32 %v6891, %v6923
  %v6925 = vpop.f32.mrf.mxu0
  %v6926 = vadd.f32 %v6893, %v6925
  %6927 = vmatmul.bf16.gmra.mxu0 %v6049
  %v6928 = vpop.f32.mrf.mxu0
  %v6929 = vadd.f32 %v6896, %v6928
  %v6930 = vpop.f32.mrf.mxu0
  %6931 = vdwg.mxu0
  %v6932 = vadd.f32 %v5871, %v6777
  %v6933 = vadd.f32 %v5937, %v6843
  %v6934 = vadd.f32 %v6003, %v6909
  %v6935 = vadd.f32 %v5873, %v6779
  %v6936 = vadd.f32 %v5939, %v6845
  %v6937 = vadd.f32 %v6005, %v6911
  %v6938 = vadd.f32 %v5876, %v6782
  %v6939 = vadd.f32 %v5942, %v6848
  %v6940 = vadd.f32 %v6008, %v6914
  %v6941 = vadd.f32 %v5878, %v6784
  %v6942 = vadd.f32 %v5944, %v6850
  %v6943 = vadd.f32 %v6010, %v6916
  %v6944 = vadd.f32 %v5881, %v6787
  %v6945 = vadd.f32 %v5947, %v6853
  %v6946 = vadd.f32 %v6013, %v6919
  %v6947 = vadd.f32 %v5883, %v6789
  %v6948 = vadd.f32 %v5949, %v6855
  %v6949 = vadd.f32 %v6015, %v6921
  %v6950 = vadd.f32 %v5886, %v6792
  %v6951 = vadd.f32 %v5952, %v6858
  %v6952 = vadd.f32 %v6018, %v6924
  %v6953 = vadd.f32 %v5888, %v6794
  %v6954 = vadd.f32 %v5954, %v6860
  %v6955 = vadd.f32 %v6020, %v6926
  %v6956 = vadd.f32 %v5891, %v6797
  %v6957 = vadd.f32 %v5957, %v6863
  %v6958 = vadd.f32 %v6023, %v6929
  %v6959 = vpack.c.bf16 %v4987, %v4985
  %v6960 = vpack.c.bf16 %v4988, %v4986
  %v6961 = vpack.c.bf16 %v4991, %v4989
  %v6962 = vpack.c.bf16 %v4992, %v4990
  %v6963 = vpack.c.bf16 %v4995, %v4993
  %v6964 = vpack.c.bf16 %v4996, %v4994
  %v6965 = vpack.c.bf16 %v4999, %v4997
  %v6966 = vpack.c.bf16 %v5000, %v4998
  %v6967 = vpack.c.bf16 %v5001, %v5001
  %v6968 = vpack.c.bf16 %v5002, %v5002
  %v6970 = vsel %vm5359, %v6960, 0
  %v6973 = vsel %vm5359, %v6962, 0
  %v6976 = vsel %vm5359, %v6964, 0
  %v6979 = vsel %vm5359, %v6966, 0
  %v6982 = vsel %vm5359, %v6968, 0
  %6984 = vmatpush.bf16.msra.mxu0 %v6665
  %6985 = vmatpush.bf16.msra.mxu0 %v6662
  %6986 = vmatpush.bf16.msra.mxu0 %v6659
  %6987 = vmatpush.bf16.msra.mxu0 %v6656
  %6988 = vmatpush.bf16.msra.mxu0 %v6653
  %6989 = vmatpush.bf16.msra.mxu0 %v6650
  %6990 = vmatpush.bf16.msra.mxu0 %v6647
  %6991 = vmatpush.bf16.msra.mxu0 %v6644
  %6992 = vmatmul.bf16.gmra.mxu0 %v6959
  %v6993 = vpop.f32.mrf.mxu0
  %v6994 = vadd.f32 0.0, %v6993
  %v6995 = vpop.f32.mrf.mxu0
  %v6996 = vadd.f32 0.0, %v6995
  %6997 = vmatmul.bf16.gmra.mxu0 %v6961
  %v6998 = vpop.f32.mrf.mxu0
  %v6999 = vadd.f32 0.0, %v6998
  %v7000 = vpop.f32.mrf.mxu0
  %v7001 = vadd.f32 0.0, %v7000
  %7002 = vmatmul.bf16.gmra.mxu0 %v6963
  %v7003 = vpop.f32.mrf.mxu0
  %v7004 = vadd.f32 0.0, %v7003
  %v7005 = vpop.f32.mrf.mxu0
  %v7006 = vadd.f32 0.0, %v7005
  %7007 = vmatmul.bf16.gmra.mxu0 %v6965
  %v7008 = vpop.f32.mrf.mxu0
  %v7009 = vadd.f32 0.0, %v7008
  %v7010 = vpop.f32.mrf.mxu0
  %v7011 = vadd.f32 0.0, %v7010
  %7012 = vmatmul.bf16.gmra.mxu0 %v6967
  %v7013 = vpop.f32.mrf.mxu0
  %v7014 = vadd.f32 0.0, %v7013
  %v7015 = vpop.f32.mrf.mxu0
  %7016 = vdwg.mxu0
  %7017 = vmatpush.bf16.msra.mxu0 0
  %7018 = vmatpush.bf16.msra.mxu0 0
  %7019 = vmatpush.bf16.msra.mxu0 %v6726
  %7020 = vmatpush.bf16.msra.mxu0 %v6680
  %7021 = vmatpush.bf16.msra.mxu0 %v6677
  %7022 = vmatpush.bf16.msra.mxu0 %v6674
  %7023 = vmatpush.bf16.msra.mxu0 %v6671
  %7024 = vmatpush.bf16.msra.mxu0 %v6668
  %7025 = vmatmul.bf16.gmra.mxu0 %v6970
  %v7026 = vpop.f32.mrf.mxu0
  %v7027 = vadd.f32 %v6994, %v7026
  %v7028 = vpop.f32.mrf.mxu0
  %v7029 = vadd.f32 %v6996, %v7028
  %7030 = vmatmul.bf16.gmra.mxu0 %v6973
  %v7031 = vpop.f32.mrf.mxu0
  %v7032 = vadd.f32 %v6999, %v7031
  %v7033 = vpop.f32.mrf.mxu0
  %v7034 = vadd.f32 %v7001, %v7033
  %7035 = vmatmul.bf16.gmra.mxu0 %v6976
  %v7036 = vpop.f32.mrf.mxu0
  %v7037 = vadd.f32 %v7004, %v7036
  %v7038 = vpop.f32.mrf.mxu0
  %v7039 = vadd.f32 %v7006, %v7038
  %7040 = vmatmul.bf16.gmra.mxu0 %v6979
  %v7041 = vpop.f32.mrf.mxu0
  %v7042 = vadd.f32 %v7009, %v7041
  %v7043 = vpop.f32.mrf.mxu0
  %v7044 = vadd.f32 %v7011, %v7043
  %7045 = vmatmul.bf16.gmra.mxu0 %v6982
  %v7046 = vpop.f32.mrf.mxu0
  %v7047 = vadd.f32 %v7014, %v7046
  %v7048 = vpop.f32.mrf.mxu0
  %7049 = vdwg.mxu0
  %7050 = vmatpush.bf16.msra.mxu0 %v6666
  %7051 = vmatpush.bf16.msra.mxu0 %v6663
  %7052 = vmatpush.bf16.msra.mxu0 %v6660
  %7053 = vmatpush.bf16.msra.mxu0 %v6657
  %7054 = vmatpush.bf16.msra.mxu0 %v6654
  %7055 = vmatpush.bf16.msra.mxu0 %v6651
  %7056 = vmatpush.bf16.msra.mxu0 %v6648
  %7057 = vmatpush.bf16.msra.mxu0 %v6645
  %7058 = vmatmul.bf16.gmra.mxu0 %v6959
  %v7059 = vpop.f32.mrf.mxu0
  %v7060 = vadd.f32 0.0, %v7059
  %v7061 = vpop.f32.mrf.mxu0
  %v7062 = vadd.f32 0.0, %v7061
  %7063 = vmatmul.bf16.gmra.mxu0 %v6961
  %v7064 = vpop.f32.mrf.mxu0
  %v7065 = vadd.f32 0.0, %v7064
  %v7066 = vpop.f32.mrf.mxu0
  %v7067 = vadd.f32 0.0, %v7066
  %7068 = vmatmul.bf16.gmra.mxu0 %v6963
  %v7069 = vpop.f32.mrf.mxu0
  %v7070 = vadd.f32 0.0, %v7069
  %v7071 = vpop.f32.mrf.mxu0
  %v7072 = vadd.f32 0.0, %v7071
  %7073 = vmatmul.bf16.gmra.mxu0 %v6965
  %v7074 = vpop.f32.mrf.mxu0
  %v7075 = vadd.f32 0.0, %v7074
  %v7076 = vpop.f32.mrf.mxu0
  %v7077 = vadd.f32 0.0, %v7076
  %7078 = vmatmul.bf16.gmra.mxu0 %v6967
  %v7079 = vpop.f32.mrf.mxu0
  %v7080 = vadd.f32 0.0, %v7079
  %v7081 = vpop.f32.mrf.mxu0
  %7082 = vdwg.mxu0
  %7083 = vmatpush.bf16.msra.mxu0 0
  %7084 = vmatpush.bf16.msra.mxu0 0
  %7085 = vmatpush.bf16.msra.mxu0 %v6729
  %7086 = vmatpush.bf16.msra.mxu0 %v6681
  %7087 = vmatpush.bf16.msra.mxu0 %v6678
  %7088 = vmatpush.bf16.msra.mxu0 %v6675
  %7089 = vmatpush.bf16.msra.mxu0 %v6672
  %7090 = vmatpush.bf16.msra.mxu0 %v6669
  %7091 = vmatmul.bf16.gmra.mxu0 %v6970
  %v7092 = vpop.f32.mrf.mxu0
  %v7093 = vadd.f32 %v7060, %v7092
  %v7094 = vpop.f32.mrf.mxu0
  %v7095 = vadd.f32 %v7062, %v7094
  %7096 = vmatmul.bf16.gmra.mxu0 %v6973
  %v7097 = vpop.f32.mrf.mxu0
  %v7098 = vadd.f32 %v7065, %v7097
  %v7099 = vpop.f32.mrf.mxu0
  %v7100 = vadd.f32 %v7067, %v7099
  %7101 = vmatmul.bf16.gmra.mxu0 %v6976
  %v7102 = vpop.f32.mrf.mxu0
  %v7103 = vadd.f32 %v7070, %v7102
  %v7104 = vpop.f32.mrf.mxu0
  %v7105 = vadd.f32 %v7072, %v7104
  %7106 = vmatmul.bf16.gmra.mxu0 %v6979
  %v7107 = vpop.f32.mrf.mxu0
  %v7108 = vadd.f32 %v7075, %v7107
  %v7109 = vpop.f32.mrf.mxu0
  %v7110 = vadd.f32 %v7077, %v7109
  %7111 = vmatmul.bf16.gmra.mxu0 %v6982
  %v7112 = vpop.f32.mrf.mxu0
  %v7113 = vadd.f32 %v7080, %v7112
  %v7114 = vpop.f32.mrf.mxu0
  %7115 = vdwg.mxu0
  %7116 = vmatpush.bf16.msra.mxu0 %v6667
  %7117 = vmatpush.bf16.msra.mxu0 %v6664
  %7118 = vmatpush.bf16.msra.mxu0 %v6661
  %7119 = vmatpush.bf16.msra.mxu0 %v6658
  %7120 = vmatpush.bf16.msra.mxu0 %v6655
  %7121 = vmatpush.bf16.msra.mxu0 %v6652
  %7122 = vmatpush.bf16.msra.mxu0 %v6649
  %7123 = vmatpush.bf16.msra.mxu0 %v6646
  %7124 = vmatmul.bf16.gmra.mxu0 %v6959
  %v7125 = vpop.f32.mrf.mxu0
  %v7126 = vadd.f32 0.0, %v7125
  %v7127 = vpop.f32.mrf.mxu0
  %v7128 = vadd.f32 0.0, %v7127
  %7129 = vmatmul.bf16.gmra.mxu0 %v6961
  %v7130 = vpop.f32.mrf.mxu0
  %v7131 = vadd.f32 0.0, %v7130
  %v7132 = vpop.f32.mrf.mxu0
  %v7133 = vadd.f32 0.0, %v7132
  %7134 = vmatmul.bf16.gmra.mxu0 %v6963
  %v7135 = vpop.f32.mrf.mxu0
  %v7136 = vadd.f32 0.0, %v7135
  %v7137 = vpop.f32.mrf.mxu0
  %v7138 = vadd.f32 0.0, %v7137
  %7139 = vmatmul.bf16.gmra.mxu0 %v6965
  %v7140 = vpop.f32.mrf.mxu0
  %v7141 = vadd.f32 0.0, %v7140
  %v7142 = vpop.f32.mrf.mxu0
  %v7143 = vadd.f32 0.0, %v7142
  %7144 = vmatmul.bf16.gmra.mxu0 %v6967
  %v7145 = vpop.f32.mrf.mxu0
  %v7146 = vadd.f32 0.0, %v7145
  %v7147 = vpop.f32.mrf.mxu0
  %7148 = vdwg.mxu0
  %7149 = vmatpush.bf16.msra.mxu0 0
  %7150 = vmatpush.bf16.msra.mxu0 0
  %7151 = vmatpush.bf16.msra.mxu0 %v6732
  %7152 = vmatpush.bf16.msra.mxu0 %v6682
  %7153 = vmatpush.bf16.msra.mxu0 %v6679
  %7154 = vmatpush.bf16.msra.mxu0 %v6676
  %7155 = vmatpush.bf16.msra.mxu0 %v6673
  %7156 = vmatpush.bf16.msra.mxu0 %v6670
  %7157 = vmatmul.bf16.gmra.mxu0 %v6970
  %v7158 = vpop.f32.mrf.mxu0
  %v7159 = vadd.f32 %v7126, %v7158
  %v7160 = vpop.f32.mrf.mxu0
  %v7161 = vadd.f32 %v7128, %v7160
  %7162 = vmatmul.bf16.gmra.mxu0 %v6973
  %v7163 = vpop.f32.mrf.mxu0
  %v7164 = vadd.f32 %v7131, %v7163
  %v7165 = vpop.f32.mrf.mxu0
  %v7166 = vadd.f32 %v7133, %v7165
  %7167 = vmatmul.bf16.gmra.mxu0 %v6976
  %v7168 = vpop.f32.mrf.mxu0
  %v7169 = vadd.f32 %v7136, %v7168
  %v7170 = vpop.f32.mrf.mxu0
  %v7171 = vadd.f32 %v7138, %v7170
  %7172 = vmatmul.bf16.gmra.mxu0 %v6979
  %v7173 = vpop.f32.mrf.mxu0
  %v7174 = vadd.f32 %v7141, %v7173
  %v7175 = vpop.f32.mrf.mxu0
  %v7176 = vadd.f32 %v7143, %v7175
  %7177 = vmatmul.bf16.gmra.mxu0 %v6982
  %v7178 = vpop.f32.mrf.mxu0
  %v7179 = vadd.f32 %v7146, %v7178
  %v7180 = vpop.f32.mrf.mxu0
  %7181 = vdwg.mxu0
  %v7182 = vadd.f32 %v6292, %v7027
  %v7183 = vadd.f32 %v6358, %v7093
  %v7184 = vadd.f32 %v6424, %v7159
  %v7185 = vadd.f32 %v6294, %v7029
  %v7186 = vadd.f32 %v6360, %v7095
  %v7187 = vadd.f32 %v6426, %v7161
  %v7188 = vadd.f32 %v6297, %v7032
  %v7189 = vadd.f32 %v6363, %v7098
  %v7190 = vadd.f32 %v6429, %v7164
  %v7191 = vadd.f32 %v6299, %v7034
  %v7192 = vadd.f32 %v6365, %v7100
  %v7193 = vadd.f32 %v6431, %v7166
  %v7194 = vadd.f32 %v6302, %v7037
  %v7195 = vadd.f32 %v6368, %v7103
  %v7196 = vadd.f32 %v6434, %v7169
  %v7197 = vadd.f32 %v6304, %v7039
  %v7198 = vadd.f32 %v6370, %v7105
  %v7199 = vadd.f32 %v6436, %v7171
  %v7200 = vadd.f32 %v6307, %v7042
  %v7201 = vadd.f32 %v6373, %v7108
  %v7202 = vadd.f32 %v6439, %v7174
  %v7203 = vadd.f32 %v6309, %v7044
  %v7204 = vadd.f32 %v6375, %v7110
  %v7205 = vadd.f32 %v6441, %v7176
  %v7206 = vadd.f32 %v6312, %v7047
  %v7207 = vadd.f32 %v6378, %v7113
  %v7208 = vadd.f32 %v6444, %v7179
  %s7209 = scalar_lea.vmem %s3, 1008
  %v7210 = vld [vmem:[%s7209] sm:$0xff]
  %v7211 = vld [vmem:[%s7209 + $0x8] sm:$0xf]
  %v7212 = vld [vmem:[%s7209 + $0xc] sm:$0xff]
  %v7213 = vld [vmem:[%s7209 + $0x14] sm:$0xf]
  %v7214 = vld [vmem:[%s7209 + $0x18] sm:$0xff]
  %v7215 = vld [vmem:[%s7209 + $0x20] sm:$0xf]
  %v7216 = vld [vmem:[%s7209 + $0x24] sm:$0xff]
  %v7217 = vld [vmem:[%s7209 + $0x2c] sm:$0xf]
  %v7218 = vld [vmem:[%s7209 + $0x30] sm:$0xff]
  %v7219 = vld [vmem:[%s7209 + $0x38] sm:$0xf]
  %v7220 = vld [vmem:[%s7209 + $0x3c] sm:$0xff]
  %v7221 = vld [vmem:[%s7209 + $0x44] sm:$0xf]
  %v7222 = vld [vmem:[%s7209 + $0x48] sm:$0xff]
  %v7223 = vld [vmem:[%s7209 + $0x50] sm:$0xf]
  %v7224 = vld [vmem:[%s7209 + $0x54] sm:$0xff]
  %v7225 = vld [vmem:[%s7209 + $0x5c] sm:$0xf]
  %v7226 = vld [vmem:[%s7209 + $0x60] sm:$0xff]
  %v7227 = vld [vmem:[%s7209 + $0x68] sm:$0xf]
  %v7228 = vld [vmem:[%s7209 + $0x6c] sm:$0xff]
  %v7229 = vld [vmem:[%s7209 + $0x74] sm:$0xf]
  %v7230 = vld [vmem:[%s7209 + $0x78] sm:$0xff]
  %v7231 = vld [vmem:[%s7209 + $0x80] sm:$0xf]
  %v7232 = vld [vmem:[%s7209 + $0x84] sm:$0xff]
  %v7233 = vld [vmem:[%s7209 + $0x8c] sm:$0xf]
  %v7234 = vld [vmem:[%s7209 + $0x90] sm:$0xff]
  %v7235 = vld [vmem:[%s7209 + $0x98] sm:$0xf]
  %v7236 = vld [vmem:[%s7209 + $0x9c] sm:$0xff]
  %v7237 = vld [vmem:[%s7209 + $0xa4] sm:$0xf]
  %v7238 = vld [vmem:[%s7209 + $0xa8] sm:$0xff]
  %v7239 = vld [vmem:[%s7209 + $0xb0] sm:$0xf]
  %v7240 = vld [vmem:[%s7209 + $0xb4] sm:$0xff]
  %v7241 = vld [vmem:[%s7209 + $0xbc] sm:$0xf]
  %v7242 = vld [vmem:[%s7209 + $0xc0] sm:$0xff]
  %v7243 = vld [vmem:[%s7209 + $0xc8] sm:$0xf]
  %v7244 = vld [vmem:[%s7209 + $0xcc] sm:$0xff]
  %v7245 = vld [vmem:[%s7209 + $0xd4] sm:$0xf]
  %v7246 = vld [vmem:[%s7209 + $0xd8] sm:$0xff]
  %v7247 = vld [vmem:[%s7209 + $0xe0] sm:$0xf]
  %v7248 = vld [vmem:[%s7209 + $0xe4] sm:$0xff]
  %v7249 = vld [vmem:[%s7209 + $0xec] sm:$0xf]
  %v7250 = vld [vmem:[%s7209 + $0xf0] sm:$0xff]
  %v7251 = vld [vmem:[%s7209 + $0xf8] sm:$0xf]
  %v7252 = vld [vmem:[%s7209 + $0xfc] sm:$0xff]
  %v7253 = vld [vmem:[%s7209 + $0x104] sm:$0xf]
  %v7254 = vld [vmem:[%s7209 + $0x108] sm:$0xff]
  %v7255 = vld [vmem:[%s7209 + $0x110] sm:$0xf]
  %v7256 = vld [vmem:[%s7209 + $0x114] sm:$0xff]
  %v7257 = vld [vmem:[%s7209 + $0x11c] sm:$0xf]
  %v7258 = vld [vmem:[%s7209 + $0x120] sm:$0xff]
  %v7259 = vld [vmem:[%s7209 + $0x128] sm:$0xf]
  %v7260 = vld [vmem:[%s7209 + $0x12c] sm:$0xff]
  %v7261 = vld [vmem:[%s7209 + $0x134] sm:$0xf]
  %v7262 = vld [vmem:[%s7209 + $0x138] sm:$0xff]
  %v7263 = vld [vmem:[%s7209 + $0x140] sm:$0xf]
  %v7264 = vld [vmem:[%s7209 + $0x144] sm:$0x33]
  %v7265 = vld [vmem:[%s7209 + $0x14c] sm:$0x3]
  %v7322 = vunpack.c.l.b16 %v7210
  %v7323 = vunpack.c.h.b16 %v7210
  %v7324 = vunpack.c.l.b16 %v7211
  %v7325 = vunpack.c.l.b16 %v7212
  %v7326 = vunpack.c.h.b16 %v7212
  %v7327 = vunpack.c.l.b16 %v7213
  %v7328 = vunpack.c.l.b16 %v7214
  %v7329 = vunpack.c.h.b16 %v7214
  %v7330 = vunpack.c.l.b16 %v7215
  %v7331 = vunpack.c.l.b16 %v7216
  %v7332 = vunpack.c.h.b16 %v7216
  %v7333 = vunpack.c.l.b16 %v7217
  %v7334 = vunpack.c.l.b16 %v7218
  %v7335 = vunpack.c.h.b16 %v7218
  %v7336 = vunpack.c.l.b16 %v7219
  %v7337 = vunpack.c.l.b16 %v7220
  %v7338 = vunpack.c.h.b16 %v7220
  %v7339 = vunpack.c.l.b16 %v7221
  %v7340 = vunpack.c.l.b16 %v7222
  %v7341 = vunpack.c.h.b16 %v7222
  %v7342 = vunpack.c.l.b16 %v7223
  %v7343 = vunpack.c.l.b16 %v7224
  %v7344 = vunpack.c.h.b16 %v7224
  %v7345 = vunpack.c.l.b16 %v7225
  %v7346 = vunpack.c.l.b16 %v7226
  %v7347 = vunpack.c.h.b16 %v7226
  %v7348 = vunpack.c.l.b16 %v7227
  %v7349 = vunpack.c.l.b16 %v7228
  %v7350 = vunpack.c.h.b16 %v7228
  %v7351 = vunpack.c.l.b16 %v7229
  %v7352 = vunpack.c.l.b16 %v7230
  %v7353 = vunpack.c.h.b16 %v7230
  %v7354 = vunpack.c.l.b16 %v7231
  %v7355 = vunpack.c.l.b16 %v7232
  %v7356 = vunpack.c.h.b16 %v7232
  %v7357 = vunpack.c.l.b16 %v7233
  %v7358 = vunpack.c.l.b16 %v7234
  %v7359 = vunpack.c.h.b16 %v7234
  %v7360 = vunpack.c.l.b16 %v7235
  %v7361 = vunpack.c.l.b16 %v7236
  %v7362 = vunpack.c.h.b16 %v7236
  %v7363 = vunpack.c.l.b16 %v7237
  %v7364 = vunpack.c.l.b16 %v7238
  %v7365 = vunpack.c.h.b16 %v7238
  %v7366 = vunpack.c.l.b16 %v7239
  %v7367 = vunpack.c.l.b16 %v7240
  %v7368 = vunpack.c.h.b16 %v7240
  %v7369 = vunpack.c.l.b16 %v7241
  %v7370 = vunpack.c.l.b16 %v7242
  %v7371 = vunpack.c.h.b16 %v7242
  %v7372 = vunpack.c.l.b16 %v7243
  %v7373 = vunpack.c.l.b16 %v7244
  %v7374 = vunpack.c.h.b16 %v7244
  %v7375 = vunpack.c.l.b16 %v7245
  %v7376 = vunpack.c.l.b16 %v7246
  %v7377 = vunpack.c.h.b16 %v7246
  %v7378 = vunpack.c.l.b16 %v7247
  %v7379 = vunpack.c.l.b16 %v7248
  %v7380 = vunpack.c.h.b16 %v7248
  %v7381 = vunpack.c.l.b16 %v7249
  %v7382 = vunpack.c.l.b16 %v7250
  %v7383 = vunpack.c.h.b16 %v7250
  %v7384 = vunpack.c.l.b16 %v7251
  %v7385 = vunpack.c.l.b16 %v7252
  %v7386 = vunpack.c.h.b16 %v7252
  %v7387 = vunpack.c.l.b16 %v7253
  %v7388 = vunpack.c.l.b16 %v7254
  %v7389 = vunpack.c.h.b16 %v7254
  %v7390 = vunpack.c.l.b16 %v7255
  %v7391 = vunpack.c.l.b16 %v7256
  %v7392 = vunpack.c.h.b16 %v7256
  %v7393 = vunpack.c.l.b16 %v7257
  %v7394 = vunpack.c.l.b16 %v7258
  %v7395 = vunpack.c.h.b16 %v7258
  %v7396 = vunpack.c.l.b16 %v7259
  %v7397 = vunpack.c.l.b16 %v7260
  %v7398 = vunpack.c.h.b16 %v7260
  %v7399 = vunpack.c.l.b16 %v7261
  %v7400 = vunpack.c.l.b16 %v7262
  %v7401 = vunpack.c.h.b16 %v7262
  %v7402 = vunpack.c.l.b16 %v7263
  %v7403 = vunpack.c.l.b16 %v7264
  %v7404 = vunpack.c.h.b16 %v7264
  %v7405 = vunpack.c.l.b16 %v7265
  %v7406 = vpack.c.b16 %v7325, %v7322
  %v7407 = vpack.c.b16 %v7326, %v7323
  %v7408 = vpack.c.b16 %v7327, %v7324
  %v7409 = vpack.c.b16 %v7331, %v7328
  %v7410 = vpack.c.b16 %v7332, %v7329
  %v7411 = vpack.c.b16 %v7333, %v7330
  %v7412 = vpack.c.b16 %v7337, %v7334
  %v7413 = vpack.c.b16 %v7338, %v7335
  %v7414 = vpack.c.b16 %v7339, %v7336
  %v7415 = vpack.c.b16 %v7343, %v7340
  %v7416 = vpack.c.b16 %v7344, %v7341
  %v7417 = vpack.c.b16 %v7345, %v7342
  %v7418 = vpack.c.b16 %v7349, %v7346
  %v7419 = vpack.c.b16 %v7350, %v7347
  %v7420 = vpack.c.b16 %v7351, %v7348
  %v7421 = vpack.c.b16 %v7355, %v7352
  %v7422 = vpack.c.b16 %v7356, %v7353
  %v7423 = vpack.c.b16 %v7357, %v7354
  %v7424 = vpack.c.b16 %v7361, %v7358
  %v7425 = vpack.c.b16 %v7362, %v7359
  %v7426 = vpack.c.b16 %v7363, %v7360
  %v7427 = vpack.c.b16 %v7367, %v7364
  %v7428 = vpack.c.b16 %v7368, %v7365
  %v7429 = vpack.c.b16 %v7369, %v7366
  %v7430 = vpack.c.b16 %v7373, %v7370
  %v7431 = vpack.c.b16 %v7374, %v7371
  %v7432 = vpack.c.b16 %v7375, %v7372
  %v7433 = vpack.c.b16 %v7379, %v7376
  %v7434 = vpack.c.b16 %v7380, %v7377
  %v7435 = vpack.c.b16 %v7381, %v7378
  %v7436 = vpack.c.b16 %v7385, %v7382
  %v7437 = vpack.c.b16 %v7386, %v7383
  %v7438 = vpack.c.b16 %v7387, %v7384
  %v7439 = vpack.c.b16 %v7391, %v7388
  %v7440 = vpack.c.b16 %v7392, %v7389
  %v7441 = vpack.c.b16 %v7393, %v7390
  %v7442 = vpack.c.b16 %v7397, %v7394
  %v7443 = vpack.c.b16 %v7398, %v7395
  %v7444 = vpack.c.b16 %v7399, %v7396
  %v7445 = vpack.c.b16 %v7403, %v7400
  %v7446 = vpack.c.b16 %v7404, %v7401
  %v7447 = vpack.c.b16 %v7405, %v7402
  %v7488 = vsel %vm5375, %v7445, 0
  %v7491 = vsel %vm5375, %v7446, 0
  %v7494 = vsel %vm5375, %v7447, 0
  %7496 = vmatpush.bf16.msra.mxu0 %v7427
  %7497 = vmatpush.bf16.msra.mxu0 %v7424
  %7498 = vmatpush.bf16.msra.mxu0 %v7421
  %7499 = vmatpush.bf16.msra.mxu0 %v7418
  %7500 = vmatpush.bf16.msra.mxu0 %v7415
  %7501 = vmatpush.bf16.msra.mxu0 %v7412
  %7502 = vmatpush.bf16.msra.mxu0 %v7409
  %7503 = vmatpush.bf16.msra.mxu0 %v7406
  %7504 = vmatmul.bf16.gmra.mxu0 %v6959
  %v7505 = vpop.f32.mrf.mxu0
  %v7506 = vadd.f32 0.0, %v7505
  %v7507 = vpop.f32.mrf.mxu0
  %v7508 = vadd.f32 0.0, %v7507
  %7509 = vmatmul.bf16.gmra.mxu0 %v6961
  %v7510 = vpop.f32.mrf.mxu0
  %v7511 = vadd.f32 0.0, %v7510
  %v7512 = vpop.f32.mrf.mxu0
  %v7513 = vadd.f32 0.0, %v7512
  %7514 = vmatmul.bf16.gmra.mxu0 %v6963
  %v7515 = vpop.f32.mrf.mxu0
  %v7516 = vadd.f32 0.0, %v7515
  %v7517 = vpop.f32.mrf.mxu0
  %v7518 = vadd.f32 0.0, %v7517
  %7519 = vmatmul.bf16.gmra.mxu0 %v6965
  %v7520 = vpop.f32.mrf.mxu0
  %v7521 = vadd.f32 0.0, %v7520
  %v7522 = vpop.f32.mrf.mxu0
  %v7523 = vadd.f32 0.0, %v7522
  %7524 = vmatmul.bf16.gmra.mxu0 %v6967
  %v7525 = vpop.f32.mrf.mxu0
  %v7526 = vadd.f32 0.0, %v7525
  %v7527 = vpop.f32.mrf.mxu0
  %7528 = vdwg.mxu0
  %7529 = vmatpush.bf16.msra.mxu0 0
  %7530 = vmatpush.bf16.msra.mxu0 0
  %7531 = vmatpush.bf16.msra.mxu0 %v7488
  %7532 = vmatpush.bf16.msra.mxu0 %v7442
  %7533 = vmatpush.bf16.msra.mxu0 %v7439
  %7534 = vmatpush.bf16.msra.mxu0 %v7436
  %7535 = vmatpush.bf16.msra.mxu0 %v7433
  %7536 = vmatpush.bf16.msra.mxu0 %v7430
  %7537 = vmatmul.bf16.gmra.mxu0 %v6970
  %v7538 = vpop.f32.mrf.mxu0
  %v7539 = vadd.f32 %v7506, %v7538
  %v7540 = vpop.f32.mrf.mxu0
  %v7541 = vadd.f32 %v7508, %v7540
  %7542 = vmatmul.bf16.gmra.mxu0 %v6973
  %v7543 = vpop.f32.mrf.mxu0
  %v7544 = vadd.f32 %v7511, %v7543
  %v7545 = vpop.f32.mrf.mxu0
  %v7546 = vadd.f32 %v7513, %v7545
  %7547 = vmatmul.bf16.gmra.mxu0 %v6976
  %v7548 = vpop.f32.mrf.mxu0
  %v7549 = vadd.f32 %v7516, %v7548
  %v7550 = vpop.f32.mrf.mxu0
  %v7551 = vadd.f32 %v7518, %v7550
  %7552 = vmatmul.bf16.gmra.mxu0 %v6979
  %v7553 = vpop.f32.mrf.mxu0
  %v7554 = vadd.f32 %v7521, %v7553
  %v7555 = vpop.f32.mrf.mxu0
  %v7556 = vadd.f32 %v7523, %v7555
  %7557 = vmatmul.bf16.gmra.mxu0 %v6982
  %v7558 = vpop.f32.mrf.mxu0
  %v7559 = vadd.f32 %v7526, %v7558
  %v7560 = vpop.f32.mrf.mxu0
  %7561 = vdwg.mxu0
  %7562 = vmatpush.bf16.msra.mxu0 %v7428
  %7563 = vmatpush.bf16.msra.mxu0 %v7425
  %7564 = vmatpush.bf16.msra.mxu0 %v7422
  %7565 = vmatpush.bf16.msra.mxu0 %v7419
  %7566 = vmatpush.bf16.msra.mxu0 %v7416
  %7567 = vmatpush.bf16.msra.mxu0 %v7413
  %7568 = vmatpush.bf16.msra.mxu0 %v7410
  %7569 = vmatpush.bf16.msra.mxu0 %v7407
  %7570 = vmatmul.bf16.gmra.mxu0 %v6959
  %v7571 = vpop.f32.mrf.mxu0
  %v7572 = vadd.f32 0.0, %v7571
  %v7573 = vpop.f32.mrf.mxu0
  %v7574 = vadd.f32 0.0, %v7573
  %7575 = vmatmul.bf16.gmra.mxu0 %v6961
  %v7576 = vpop.f32.mrf.mxu0
  %v7577 = vadd.f32 0.0, %v7576
  %v7578 = vpop.f32.mrf.mxu0
  %v7579 = vadd.f32 0.0, %v7578
  %7580 = vmatmul.bf16.gmra.mxu0 %v6963
  %v7581 = vpop.f32.mrf.mxu0
  %v7582 = vadd.f32 0.0, %v7581
  %v7583 = vpop.f32.mrf.mxu0
  %v7584 = vadd.f32 0.0, %v7583
  %7585 = vmatmul.bf16.gmra.mxu0 %v6965
  %v7586 = vpop.f32.mrf.mxu0
  %v7587 = vadd.f32 0.0, %v7586
  %v7588 = vpop.f32.mrf.mxu0
  %v7589 = vadd.f32 0.0, %v7588
  %7590 = vmatmul.bf16.gmra.mxu0 %v6967
  %v7591 = vpop.f32.mrf.mxu0
  %v7592 = vadd.f32 0.0, %v7591
  %v7593 = vpop.f32.mrf.mxu0
  %7594 = vdwg.mxu0
  %7595 = vmatpush.bf16.msra.mxu0 0
  %7596 = vmatpush.bf16.msra.mxu0 0
  %7597 = vmatpush.bf16.msra.mxu0 %v7491
  %7598 = vmatpush.bf16.msra.mxu0 %v7443
  %7599 = vmatpush.bf16.msra.mxu0 %v7440
  %7600 = vmatpush.bf16.msra.mxu0 %v7437
  %7601 = vmatpush.bf16.msra.mxu0 %v7434
  %7602 = vmatpush.bf16.msra.mxu0 %v7431
  %7603 = vmatmul.bf16.gmra.mxu0 %v6970
  %v7604 = vpop.f32.mrf.mxu0
  %v7605 = vadd.f32 %v7572, %v7604
  %v7606 = vpop.f32.mrf.mxu0
  %v7607 = vadd.f32 %v7574, %v7606
  %7608 = vmatmul.bf16.gmra.mxu0 %v6973
  %v7609 = vpop.f32.mrf.mxu0
  %v7610 = vadd.f32 %v7577, %v7609
  %v7611 = vpop.f32.mrf.mxu0
  %v7612 = vadd.f32 %v7579, %v7611
  %7613 = vmatmul.bf16.gmra.mxu0 %v6976
  %v7614 = vpop.f32.mrf.mxu0
  %v7615 = vadd.f32 %v7582, %v7614
  %v7616 = vpop.f32.mrf.mxu0
  %v7617 = vadd.f32 %v7584, %v7616
  %7618 = vmatmul.bf16.gmra.mxu0 %v6979
  %v7619 = vpop.f32.mrf.mxu0
  %v7620 = vadd.f32 %v7587, %v7619
  %v7621 = vpop.f32.mrf.mxu0
  %v7622 = vadd.f32 %v7589, %v7621
  %7623 = vmatmul.bf16.gmra.mxu0 %v6982
  %v7624 = vpop.f32.mrf.mxu0
  %v7625 = vadd.f32 %v7592, %v7624
  %v7626 = vpop.f32.mrf.mxu0
  %7627 = vdwg.mxu0
  %7628 = vmatpush.bf16.msra.mxu0 %v7429
  %7629 = vmatpush.bf16.msra.mxu0 %v7426
  %7630 = vmatpush.bf16.msra.mxu0 %v7423
  %7631 = vmatpush.bf16.msra.mxu0 %v7420
  %7632 = vmatpush.bf16.msra.mxu0 %v7417
  %7633 = vmatpush.bf16.msra.mxu0 %v7414
  %7634 = vmatpush.bf16.msra.mxu0 %v7411
  %7635 = vmatpush.bf16.msra.mxu0 %v7408
  %7636 = vmatmul.bf16.gmra.mxu0 %v6959
  %v7637 = vpop.f32.mrf.mxu0
  %v7638 = vadd.f32 0.0, %v7637
  %v7639 = vpop.f32.mrf.mxu0
  %v7640 = vadd.f32 0.0, %v7639
  %7641 = vmatmul.bf16.gmra.mxu0 %v6961
  %v7642 = vpop.f32.mrf.mxu0
  %v7643 = vadd.f32 0.0, %v7642
  %v7644 = vpop.f32.mrf.mxu0
  %v7645 = vadd.f32 0.0, %v7644
  %7646 = vmatmul.bf16.gmra.mxu0 %v6963
  %v7647 = vpop.f32.mrf.mxu0
  %v7648 = vadd.f32 0.0, %v7647
  %v7649 = vpop.f32.mrf.mxu0
  %v7650 = vadd.f32 0.0, %v7649
  %7651 = vmatmul.bf16.gmra.mxu0 %v6965
  %v7652 = vpop.f32.mrf.mxu0
  %v7653 = vadd.f32 0.0, %v7652
  %v7654 = vpop.f32.mrf.mxu0
  %v7655 = vadd.f32 0.0, %v7654
  %7656 = vmatmul.bf16.gmra.mxu0 %v6967
  %v7657 = vpop.f32.mrf.mxu0
  %v7658 = vadd.f32 0.0, %v7657
  %v7659 = vpop.f32.mrf.mxu0
  %7660 = vdwg.mxu0
  %7661 = vmatpush.bf16.msra.mxu0 0
  %7662 = vmatpush.bf16.msra.mxu0 0
  %7663 = vmatpush.bf16.msra.mxu0 %v7494
  %7664 = vmatpush.bf16.msra.mxu0 %v7444
  %7665 = vmatpush.bf16.msra.mxu0 %v7441
  %7666 = vmatpush.bf16.msra.mxu0 %v7438
  %7667 = vmatpush.bf16.msra.mxu0 %v7435
  %7668 = vmatpush.bf16.msra.mxu0 %v7432
  %7669 = vmatmul.bf16.gmra.mxu0 %v6970
  %v7670 = vpop.f32.mrf.mxu0
  %v7671 = vadd.f32 %v7638, %v7670
  %v7672 = vpop.f32.mrf.mxu0
  %v7673 = vadd.f32 %v7640, %v7672
  %7674 = vmatmul.bf16.gmra.mxu0 %v6973
  %v7675 = vpop.f32.mrf.mxu0
  %v7676 = vadd.f32 %v7643, %v7675
  %v7677 = vpop.f32.mrf.mxu0
  %v7678 = vadd.f32 %v7645, %v7677
  %7679 = vmatmul.bf16.gmra.mxu0 %v6976
  %v7680 = vpop.f32.mrf.mxu0
  %v7681 = vadd.f32 %v7648, %v7680
  %v7682 = vpop.f32.mrf.mxu0
  %v7683 = vadd.f32 %v7650, %v7682
  %7684 = vmatmul.bf16.gmra.mxu0 %v6979
  %v7685 = vpop.f32.mrf.mxu0
  %v7686 = vadd.f32 %v7653, %v7685
  %v7687 = vpop.f32.mrf.mxu0
  %v7688 = vadd.f32 %v7655, %v7687
  %7689 = vmatmul.bf16.gmra.mxu0 %v6982
  %v7690 = vpop.f32.mrf.mxu0
  %v7691 = vadd.f32 %v7658, %v7690
  %v7692 = vpop.f32.mrf.mxu0
  %7693 = vdwg.mxu0
  %v7694 = vadd.f32 %v6932, %v7539
  %v7695 = vadd.f32 %v6933, %v7605
  %v7696 = vadd.f32 %v6934, %v7671
  %v7697 = vadd.f32 %v6935, %v7541
  %v7698 = vadd.f32 %v6936, %v7607
  %v7699 = vadd.f32 %v6937, %v7673
  %v7700 = vadd.f32 %v6938, %v7544
  %v7701 = vadd.f32 %v6939, %v7610
  %v7702 = vadd.f32 %v6940, %v7676
  %v7703 = vadd.f32 %v6941, %v7546
  %v7704 = vadd.f32 %v6942, %v7612
  %v7705 = vadd.f32 %v6943, %v7678
  %v7706 = vadd.f32 %v6944, %v7549
  %v7707 = vadd.f32 %v6945, %v7615
  %v7708 = vadd.f32 %v6946, %v7681
  %v7709 = vadd.f32 %v6947, %v7551
  %v7710 = vadd.f32 %v6948, %v7617
  %v7711 = vadd.f32 %v6949, %v7683
  %v7712 = vadd.f32 %v6950, %v7554
  %v7713 = vadd.f32 %v6951, %v7620
  %v7714 = vadd.f32 %v6952, %v7686
  %v7715 = vadd.f32 %v6953, %v7556
  %v7716 = vadd.f32 %v6954, %v7622
  %v7717 = vadd.f32 %v6955, %v7688
  %v7718 = vadd.f32 %v6956, %v7559
  %v7719 = vadd.f32 %v6957, %v7625
  %v7720 = vadd.f32 %v6958, %v7691
  %v7721 = vpack.c.bf16 %v4605, %v4603
  %v7722 = vpack.c.bf16 %v4606, %v4604
  %v7723 = vpack.c.bf16 %v4607, %v4607
  %v7724 = vpack.c.bf16 %v4608, %v4608
  %v7726 = vsel %vm5359, %v7722, 0
  %v7729 = vsel %vm5359, %v7724, 0
  %7731 = vmatpush.bf16.msra.mxu0 %v7427
  %7732 = vmatpush.bf16.msra.mxu0 %v7424
  %7733 = vmatpush.bf16.msra.mxu0 %v7421
  %7734 = vmatpush.bf16.msra.mxu0 %v7418
  %7735 = vmatpush.bf16.msra.mxu0 %v7415
  %7736 = vmatpush.bf16.msra.mxu0 %v7412
  %7737 = vmatpush.bf16.msra.mxu0 %v7409
  %7738 = vmatpush.bf16.msra.mxu0 %v7406
  %7739 = vmatmul.bf16.gmra.mxu0 %v5063
  %v7740 = vpop.f32.mrf.mxu0
  %v7741 = vadd.f32 0.0, %v7740
  %v7742 = vpop.f32.mrf.mxu0
  %v7743 = vadd.f32 0.0, %v7742
  %7744 = vmatmul.bf16.gmra.mxu0 %v5065
  %v7745 = vpop.f32.mrf.mxu0
  %v7746 = vadd.f32 0.0, %v7745
  %v7747 = vpop.f32.mrf.mxu0
  %v7748 = vadd.f32 0.0, %v7747
  %7749 = vmatmul.bf16.gmra.mxu0 %v5067
  %v7750 = vpop.f32.mrf.mxu0
  %v7751 = vadd.f32 0.0, %v7750
  %v7752 = vpop.f32.mrf.mxu0
  %v7753 = vadd.f32 0.0, %v7752
  %7754 = vmatmul.bf16.gmra.mxu0 %v7721
  %v7755 = vpop.f32.mrf.mxu0
  %v7756 = vadd.f32 0.0, %v7755
  %v7757 = vpop.f32.mrf.mxu0
  %v7758 = vadd.f32 0.0, %v7757
  %7759 = vmatmul.bf16.gmra.mxu0 %v7723
  %v7760 = vpop.f32.mrf.mxu0
  %v7761 = vadd.f32 0.0, %v7760
  %v7762 = vpop.f32.mrf.mxu0
  %7763 = vdwg.mxu0
  %7764 = vmatpush.bf16.msra.mxu0 0
  %7765 = vmatpush.bf16.msra.mxu0 0
  %7766 = vmatpush.bf16.msra.mxu0 %v7488
  %7767 = vmatpush.bf16.msra.mxu0 %v7442
  %7768 = vmatpush.bf16.msra.mxu0 %v7439
  %7769 = vmatpush.bf16.msra.mxu0 %v7436
  %7770 = vmatpush.bf16.msra.mxu0 %v7433
  %7771 = vmatpush.bf16.msra.mxu0 %v7430
  %7772 = vmatmul.bf16.gmra.mxu0 %v5808
  %v7773 = vpop.f32.mrf.mxu0
  %v7774 = vadd.f32 %v7741, %v7773
  %v7775 = vpop.f32.mrf.mxu0
  %v7776 = vadd.f32 %v7743, %v7775
  %7777 = vmatmul.bf16.gmra.mxu0 %v5811
  %v7778 = vpop.f32.mrf.mxu0
  %v7779 = vadd.f32 %v7746, %v7778
  %v7780 = vpop.f32.mrf.mxu0
  %v7781 = vadd.f32 %v7748, %v7780
  %7782 = vmatmul.bf16.gmra.mxu0 %v5814
  %v7783 = vpop.f32.mrf.mxu0
  %v7784 = vadd.f32 %v7751, %v7783
  %v7785 = vpop.f32.mrf.mxu0
  %v7786 = vadd.f32 %v7753, %v7785
  %7787 = vmatmul.bf16.gmra.mxu0 %v7726
  %v7788 = vpop.f32.mrf.mxu0
  %v7789 = vadd.f32 %v7756, %v7788
  %v7790 = vpop.f32.mrf.mxu0
  %v7791 = vadd.f32 %v7758, %v7790
  %7792 = vmatmul.bf16.gmra.mxu0 %v7729
  %v7793 = vpop.f32.mrf.mxu0
  %v7794 = vadd.f32 %v7761, %v7793
  %v7795 = vpop.f32.mrf.mxu0
  %7796 = vdwg.mxu0
  %7797 = vmatpush.bf16.msra.mxu0 %v7428
  %7798 = vmatpush.bf16.msra.mxu0 %v7425
  %7799 = vmatpush.bf16.msra.mxu0 %v7422
  %7800 = vmatpush.bf16.msra.mxu0 %v7419
  %7801 = vmatpush.bf16.msra.mxu0 %v7416
  %7802 = vmatpush.bf16.msra.mxu0 %v7413
  %7803 = vmatpush.bf16.msra.mxu0 %v7410
  %7804 = vmatpush.bf16.msra.mxu0 %v7407
  %7805 = vmatmul.bf16.gmra.mxu0 %v5063
  %v7806 = vpop.f32.mrf.mxu0
  %v7807 = vadd.f32 0.0, %v7806
  %v7808 = vpop.f32.mrf.mxu0
  %v7809 = vadd.f32 0.0, %v7808
  %7810 = vmatmul.bf16.gmra.mxu0 %v5065
  %v7811 = vpop.f32.mrf.mxu0
  %v7812 = vadd.f32 0.0, %v7811
  %v7813 = vpop.f32.mrf.mxu0
  %v7814 = vadd.f32 0.0, %v7813
  %7815 = vmatmul.bf16.gmra.mxu0 %v5067
  %v7816 = vpop.f32.mrf.mxu0
  %v7817 = vadd.f32 0.0, %v7816
  %v7818 = vpop.f32.mrf.mxu0
  %v7819 = vadd.f32 0.0, %v7818
  %7820 = vmatmul.bf16.gmra.mxu0 %v7721
  %v7821 = vpop.f32.mrf.mxu0
  %v7822 = vadd.f32 0.0, %v7821
  %v7823 = vpop.f32.mrf.mxu0
  %v7824 = vadd.f32 0.0, %v7823
  %7825 = vmatmul.bf16.gmra.mxu0 %v7723
  %v7826 = vpop.f32.mrf.mxu0
  %v7827 = vadd.f32 0.0, %v7826
  %v7828 = vpop.f32.mrf.mxu0
  %7829 = vdwg.mxu0
  %7830 = vmatpush.bf16.msra.mxu0 0
  %7831 = vmatpush.bf16.msra.mxu0 0
  %7832 = vmatpush.bf16.msra.mxu0 %v7491
  %7833 = vmatpush.bf16.msra.mxu0 %v7443
  %7834 = vmatpush.bf16.msra.mxu0 %v7440
  %7835 = vmatpush.bf16.msra.mxu0 %v7437
  %7836 = vmatpush.bf16.msra.mxu0 %v7434
  %7837 = vmatpush.bf16.msra.mxu0 %v7431
  %7838 = vmatmul.bf16.gmra.mxu0 %v5808
  %v7839 = vpop.f32.mrf.mxu0
  %v7840 = vadd.f32 %v7807, %v7839
  %v7841 = vpop.f32.mrf.mxu0
  %v7842 = vadd.f32 %v7809, %v7841
  %7843 = vmatmul.bf16.gmra.mxu0 %v5811
  %v7844 = vpop.f32.mrf.mxu0
  %v7845 = vadd.f32 %v7812, %v7844
  %v7846 = vpop.f32.mrf.mxu0
  %v7847 = vadd.f32 %v7814, %v7846
  %7848 = vmatmul.bf16.gmra.mxu0 %v5814
  %v7849 = vpop.f32.mrf.mxu0
  %v7850 = vadd.f32 %v7817, %v7849
  %v7851 = vpop.f32.mrf.mxu0
  %v7852 = vadd.f32 %v7819, %v7851
  %7853 = vmatmul.bf16.gmra.mxu0 %v7726
  %v7854 = vpop.f32.mrf.mxu0
  %v7855 = vadd.f32 %v7822, %v7854
  %v7856 = vpop.f32.mrf.mxu0
  %v7857 = vadd.f32 %v7824, %v7856
  %7858 = vmatmul.bf16.gmra.mxu0 %v7729
  %v7859 = vpop.f32.mrf.mxu0
  %v7860 = vadd.f32 %v7827, %v7859
  %v7861 = vpop.f32.mrf.mxu0
  %7862 = vdwg.mxu0
  %7863 = vmatpush.bf16.msra.mxu0 %v7429
  %7864 = vmatpush.bf16.msra.mxu0 %v7426
  %7865 = vmatpush.bf16.msra.mxu0 %v7423
  %7866 = vmatpush.bf16.msra.mxu0 %v7420
  %7867 = vmatpush.bf16.msra.mxu0 %v7417
  %7868 = vmatpush.bf16.msra.mxu0 %v7414
  %7869 = vmatpush.bf16.msra.mxu0 %v7411
  %7870 = vmatpush.bf16.msra.mxu0 %v7408
  %7871 = vmatmul.bf16.gmra.mxu0 %v5063
  %v7872 = vpop.f32.mrf.mxu0
  %v7873 = vadd.f32 0.0, %v7872
  %v7874 = vpop.f32.mrf.mxu0
  %v7875 = vadd.f32 0.0, %v7874
  %7876 = vmatmul.bf16.gmra.mxu0 %v5065
  %v7877 = vpop.f32.mrf.mxu0
  %v7878 = vadd.f32 0.0, %v7877
  %v7879 = vpop.f32.mrf.mxu0
  %v7880 = vadd.f32 0.0, %v7879
  %7881 = vmatmul.bf16.gmra.mxu0 %v5067
  %v7882 = vpop.f32.mrf.mxu0
  %v7883 = vadd.f32 0.0, %v7882
  %v7884 = vpop.f32.mrf.mxu0
  %v7885 = vadd.f32 0.0, %v7884
  %7886 = vmatmul.bf16.gmra.mxu0 %v7721
  %v7887 = vpop.f32.mrf.mxu0
  %v7888 = vadd.f32 0.0, %v7887
  %v7889 = vpop.f32.mrf.mxu0
  %v7890 = vadd.f32 0.0, %v7889
  %7891 = vmatmul.bf16.gmra.mxu0 %v7723
  %v7892 = vpop.f32.mrf.mxu0
  %v7893 = vadd.f32 0.0, %v7892
  %v7894 = vpop.f32.mrf.mxu0
  %7895 = vdwg.mxu0
  %7896 = vmatpush.bf16.msra.mxu0 0
  %7897 = vmatpush.bf16.msra.mxu0 0
  %7898 = vmatpush.bf16.msra.mxu0 %v7494
  %7899 = vmatpush.bf16.msra.mxu0 %v7444
  %7900 = vmatpush.bf16.msra.mxu0 %v7441
  %7901 = vmatpush.bf16.msra.mxu0 %v7438
  %7902 = vmatpush.bf16.msra.mxu0 %v7435
  %7903 = vmatpush.bf16.msra.mxu0 %v7432
  %7904 = vmatmul.bf16.gmra.mxu0 %v5808
  %v7905 = vpop.f32.mrf.mxu0
  %v7906 = vadd.f32 %v7873, %v7905
  %v7907 = vpop.f32.mrf.mxu0
  %v7908 = vadd.f32 %v7875, %v7907
  %7909 = vmatmul.bf16.gmra.mxu0 %v5811
  %v7910 = vpop.f32.mrf.mxu0
  %v7911 = vadd.f32 %v7878, %v7910
  %v7912 = vpop.f32.mrf.mxu0
  %v7913 = vadd.f32 %v7880, %v7912
  %7914 = vmatmul.bf16.gmra.mxu0 %v5814
  %v7915 = vpop.f32.mrf.mxu0
  %v7916 = vadd.f32 %v7883, %v7915
  %v7917 = vpop.f32.mrf.mxu0
  %v7918 = vadd.f32 %v7885, %v7917
  %7919 = vmatmul.bf16.gmra.mxu0 %v7726
  %v7920 = vpop.f32.mrf.mxu0
  %v7921 = vadd.f32 %v7888, %v7920
  %v7922 = vpop.f32.mrf.mxu0
  %v7923 = vadd.f32 %v7890, %v7922
  %7924 = vmatmul.bf16.gmra.mxu0 %v7729
  %v7925 = vpop.f32.mrf.mxu0
  %v7926 = vadd.f32 %v7893, %v7925
  %v7927 = vpop.f32.mrf.mxu0
  %7928 = vdwg.mxu0
  %v7929 = vadd.f32 %v7182, %v7774
  %v7930 = vadd.f32 %v7183, %v7840
  %v7931 = vadd.f32 %v7184, %v7906
  %v7932 = vadd.f32 %v7185, %v7776
  %v7933 = vadd.f32 %v7186, %v7842
  %v7934 = vadd.f32 %v7187, %v7908
  %v7935 = vadd.f32 %v7188, %v7779
  %v7936 = vadd.f32 %v7189, %v7845
  %v7937 = vadd.f32 %v7190, %v7911
  %v7938 = vadd.f32 %v7191, %v7781
  %v7939 = vadd.f32 %v7192, %v7847
  %v7940 = vadd.f32 %v7193, %v7913
  %v7941 = vadd.f32 %v7194, %v7784
  %v7942 = vadd.f32 %v7195, %v7850
  %v7943 = vadd.f32 %v7196, %v7916
  %v7944 = vadd.f32 %v7197, %v7786
  %v7945 = vadd.f32 %v7198, %v7852
  %v7946 = vadd.f32 %v7199, %v7918
  %v7947 = vadd.f32 %v7200, %v7789
  %v7948 = vadd.f32 %v7201, %v7855
  %v7949 = vadd.f32 %v7202, %v7921
  %v7950 = vadd.f32 %v7203, %v7791
  %v7951 = vadd.f32 %v7204, %v7857
  %v7952 = vadd.f32 %v7205, %v7923
  %v7953 = vadd.f32 %v7206, %v7794
  %v7954 = vadd.f32 %v7207, %v7860
  %v7955 = vadd.f32 %v7208, %v7926
  %s7956 = scalar_lea.vmem %s3, 1344
  %v7957 = vld [vmem:[%s7956] sm:$0xff]
  %v7958 = vld [vmem:[%s7956 + $0x8] sm:$0xf]
  %v7959 = vld [vmem:[%s7956 + $0xc] sm:$0xff]
  %v7960 = vld [vmem:[%s7956 + $0x14] sm:$0xf]
  %v7961 = vld [vmem:[%s7956 + $0x18] sm:$0xff]
  %v7962 = vld [vmem:[%s7956 + $0x20] sm:$0xf]
  %v7963 = vld [vmem:[%s7956 + $0x24] sm:$0xff]
  %v7964 = vld [vmem:[%s7956 + $0x2c] sm:$0xf]
  %v7965 = vld [vmem:[%s7956 + $0x30] sm:$0xff]
  %v7966 = vld [vmem:[%s7956 + $0x38] sm:$0xf]
  %v7967 = vld [vmem:[%s7956 + $0x3c] sm:$0xff]
  %v7968 = vld [vmem:[%s7956 + $0x44] sm:$0xf]
  %v7969 = vld [vmem:[%s7956 + $0x48] sm:$0xff]
  %v7970 = vld [vmem:[%s7956 + $0x50] sm:$0xf]
  %v7971 = vld [vmem:[%s7956 + $0x54] sm:$0xff]
  %v7972 = vld [vmem:[%s7956 + $0x5c] sm:$0xf]
  %v7973 = vld [vmem:[%s7956 + $0x60] sm:$0xff]
  %v7974 = vld [vmem:[%s7956 + $0x68] sm:$0xf]
  %v7975 = vld [vmem:[%s7956 + $0x6c] sm:$0xff]
  %v7976 = vld [vmem:[%s7956 + $0x74] sm:$0xf]
  %v7977 = vld [vmem:[%s7956 + $0x78] sm:$0xff]
  %v7978 = vld [vmem:[%s7956 + $0x80] sm:$0xf]
  %v7979 = vld [vmem:[%s7956 + $0x84] sm:$0xff]
  %v7980 = vld [vmem:[%s7956 + $0x8c] sm:$0xf]
  %v7981 = vld [vmem:[%s7956 + $0x90] sm:$0xff]
  %v7982 = vld [vmem:[%s7956 + $0x98] sm:$0xf]
  %v7983 = vld [vmem:[%s7956 + $0x9c] sm:$0xff]
  %v7984 = vld [vmem:[%s7956 + $0xa4] sm:$0xf]
  %v7985 = vld [vmem:[%s7956 + $0xa8] sm:$0xff]
  %v7986 = vld [vmem:[%s7956 + $0xb0] sm:$0xf]
  %v7987 = vld [vmem:[%s7956 + $0xb4] sm:$0xff]
  %v7988 = vld [vmem:[%s7956 + $0xbc] sm:$0xf]
  %v7989 = vld [vmem:[%s7956 + $0xc0] sm:$0xff]
  %v7990 = vld [vmem:[%s7956 + $0xc8] sm:$0xf]
  %v7991 = vld [vmem:[%s7956 + $0xcc] sm:$0xff]
  %v7992 = vld [vmem:[%s7956 + $0xd4] sm:$0xf]
  %v7993 = vld [vmem:[%s7956 + $0xd8] sm:$0xff]
  %v7994 = vld [vmem:[%s7956 + $0xe0] sm:$0xf]
  %v7995 = vld [vmem:[%s7956 + $0xe4] sm:$0xff]
  %v7996 = vld [vmem:[%s7956 + $0xec] sm:$0xf]
  %v7997 = vld [vmem:[%s7956 + $0xf0] sm:$0xff]
  %v7998 = vld [vmem:[%s7956 + $0xf8] sm:$0xf]
  %v7999 = vld [vmem:[%s7956 + $0xfc] sm:$0xff]
  %v8000 = vld [vmem:[%s7956 + $0x104] sm:$0xf]
  %v8001 = vld [vmem:[%s7956 + $0x108] sm:$0xff]
  %v8002 = vld [vmem:[%s7956 + $0x110] sm:$0xf]
  %v8003 = vld [vmem:[%s7956 + $0x114] sm:$0xff]
  %v8004 = vld [vmem:[%s7956 + $0x11c] sm:$0xf]
  %v8005 = vld [vmem:[%s7956 + $0x120] sm:$0xff]
  %v8006 = vld [vmem:[%s7956 + $0x128] sm:$0xf]
  %v8007 = vld [vmem:[%s7956 + $0x12c] sm:$0xff]
  %v8008 = vld [vmem:[%s7956 + $0x134] sm:$0xf]
  %v8009 = vld [vmem:[%s7956 + $0x138] sm:$0xff]
  %v8010 = vld [vmem:[%s7956 + $0x140] sm:$0xf]
  %v8011 = vld [vmem:[%s7956 + $0x144] sm:$0x33]
  %v8012 = vld [vmem:[%s7956 + $0x14c] sm:$0x3]
  %v8069 = vunpack.c.l.b16 %v7957
  %v8070 = vunpack.c.h.b16 %v7957
  %v8071 = vunpack.c.l.b16 %v7958
  %v8072 = vunpack.c.l.b16 %v7959
  %v8073 = vunpack.c.h.b16 %v7959
  %v8074 = vunpack.c.l.b16 %v7960
  %v8075 = vunpack.c.l.b16 %v7961
  %v8076 = vunpack.c.h.b16 %v7961
  %v8077 = vunpack.c.l.b16 %v7962
  %v8078 = vunpack.c.l.b16 %v7963
  %v8079 = vunpack.c.h.b16 %v7963
  %v8080 = vunpack.c.l.b16 %v7964
  %v8081 = vunpack.c.l.b16 %v7965
  %v8082 = vunpack.c.h.b16 %v7965
  %v8083 = vunpack.c.l.b16 %v7966
  %v8084 = vunpack.c.l.b16 %v7967
  %v8085 = vunpack.c.h.b16 %v7967
  %v8086 = vunpack.c.l.b16 %v7968
  %v8087 = vunpack.c.l.b16 %v7969
  %v8088 = vunpack.c.h.b16 %v7969
  %v8089 = vunpack.c.l.b16 %v7970
  %v8090 = vunpack.c.l.b16 %v7971
  %v8091 = vunpack.c.h.b16 %v7971
  %v8092 = vunpack.c.l.b16 %v7972
  %v8093 = vunpack.c.l.b16 %v7973
  %v8094 = vunpack.c.h.b16 %v7973
  %v8095 = vunpack.c.l.b16 %v7974
  %v8096 = vunpack.c.l.b16 %v7975
  %v8097 = vunpack.c.h.b16 %v7975
  %v8098 = vunpack.c.l.b16 %v7976
  %v8099 = vunpack.c.l.b16 %v7977
  %v8100 = vunpack.c.h.b16 %v7977
  %v8101 = vunpack.c.l.b16 %v7978
  %v8102 = vunpack.c.l.b16 %v7979
  %v8103 = vunpack.c.h.b16 %v7979
  %v8104 = vunpack.c.l.b16 %v7980
  %v8105 = vunpack.c.l.b16 %v7981
  %v8106 = vunpack.c.h.b16 %v7981
  %v8107 = vunpack.c.l.b16 %v7982
  %v8108 = vunpack.c.l.b16 %v7983
  %v8109 = vunpack.c.h.b16 %v7983
  %v8110 = vunpack.c.l.b16 %v7984
  %v8111 = vunpack.c.l.b16 %v7985
  %v8112 = vunpack.c.h.b16 %v7985
  %v8113 = vunpack.c.l.b16 %v7986
  %v8114 = vunpack.c.l.b16 %v7987
  %v8115 = vunpack.c.h.b16 %v7987
  %v8116 = vunpack.c.l.b16 %v7988
  %v8117 = vunpack.c.l.b16 %v7989
  %v8118 = vunpack.c.h.b16 %v7989
  %v8119 = vunpack.c.l.b16 %v7990
  %v8120 = vunpack.c.l.b16 %v7991
  %v8121 = vunpack.c.h.b16 %v7991
  %v8122 = vunpack.c.l.b16 %v7992
  %v8123 = vunpack.c.l.b16 %v7993
  %v8124 = vunpack.c.h.b16 %v7993
  %v8125 = vunpack.c.l.b16 %v7994
  %v8126 = vunpack.c.l.b16 %v7995
  %v8127 = vunpack.c.h.b16 %v7995
  %v8128 = vunpack.c.l.b16 %v7996
  %v8129 = vunpack.c.l.b16 %v7997
  %v8130 = vunpack.c.h.b16 %v7997
  %v8131 = vunpack.c.l.b16 %v7998
  %v8132 = vunpack.c.l.b16 %v7999
  %v8133 = vunpack.c.h.b16 %v7999
  %v8134 = vunpack.c.l.b16 %v8000
  %v8135 = vunpack.c.l.b16 %v8001
  %v8136 = vunpack.c.h.b16 %v8001
  %v8137 = vunpack.c.l.b16 %v8002
  %v8138 = vunpack.c.l.b16 %v8003
  %v8139 = vunpack.c.h.b16 %v8003
  %v8140 = vunpack.c.l.b16 %v8004
  %v8141 = vunpack.c.l.b16 %v8005
  %v8142 = vunpack.c.h.b16 %v8005
  %v8143 = vunpack.c.l.b16 %v8006
  %v8144 = vunpack.c.l.b16 %v8007
  %v8145 = vunpack.c.h.b16 %v8007
  %v8146 = vunpack.c.l.b16 %v8008
  %v8147 = vunpack.c.l.b16 %v8009
  %v8148 = vunpack.c.h.b16 %v8009
  %v8149 = vunpack.c.l.b16 %v8010
  %v8150 = vunpack.c.l.b16 %v8011
  %v8151 = vunpack.c.h.b16 %v8011
  %v8152 = vunpack.c.l.b16 %v8012
  %v8153 = vpack.c.b16 %v8072, %v8069
  %v8154 = vpack.c.b16 %v8073, %v8070
  %v8155 = vpack.c.b16 %v8074, %v8071
  %v8156 = vpack.c.b16 %v8078, %v8075
  %v8157 = vpack.c.b16 %v8079, %v8076
  %v8158 = vpack.c.b16 %v8080, %v8077
  %v8159 = vpack.c.b16 %v8084, %v8081
  %v8160 = vpack.c.b16 %v8085, %v8082
  %v8161 = vpack.c.b16 %v8086, %v8083
  %v8162 = vpack.c.b16 %v8090, %v8087
  %v8163 = vpack.c.b16 %v8091, %v8088
  %v8164 = vpack.c.b16 %v8092, %v8089
  %v8165 = vpack.c.b16 %v8096, %v8093
  %v8166 = vpack.c.b16 %v8097, %v8094
  %v8167 = vpack.c.b16 %v8098, %v8095
  %v8168 = vpack.c.b16 %v8102, %v8099
  %v8169 = vpack.c.b16 %v8103, %v8100
  %v8170 = vpack.c.b16 %v8104, %v8101
  %v8171 = vpack.c.b16 %v8108, %v8105
  %v8172 = vpack.c.b16 %v8109, %v8106
  %v8173 = vpack.c.b16 %v8110, %v8107
  %v8174 = vpack.c.b16 %v8114, %v8111
  %v8175 = vpack.c.b16 %v8115, %v8112
  %v8176 = vpack.c.b16 %v8116, %v8113
  %v8177 = vpack.c.b16 %v8120, %v8117
  %v8178 = vpack.c.b16 %v8121, %v8118
  %v8179 = vpack.c.b16 %v8122, %v8119
  %v8180 = vpack.c.b16 %v8126, %v8123
  %v8181 = vpack.c.b16 %v8127, %v8124
  %v8182 = vpack.c.b16 %v8128, %v8125
  %v8183 = vpack.c.b16 %v8132, %v8129
  %v8184 = vpack.c.b16 %v8133, %v8130
  %v8185 = vpack.c.b16 %v8134, %v8131
  %v8186 = vpack.c.b16 %v8138, %v8135
  %v8187 = vpack.c.b16 %v8139, %v8136
  %v8188 = vpack.c.b16 %v8140, %v8137
  %v8189 = vpack.c.b16 %v8144, %v8141
  %v8190 = vpack.c.b16 %v8145, %v8142
  %v8191 = vpack.c.b16 %v8146, %v8143
  %v8192 = vpack.c.b16 %v8150, %v8147
  %v8193 = vpack.c.b16 %v8151, %v8148
  %v8194 = vpack.c.b16 %v8152, %v8149
  %v8235 = vsel %vm5375, %v8192, 0
  %v8238 = vsel %vm5375, %v8193, 0
  %v8241 = vsel %vm5375, %v8194, 0
  %8243 = vmatpush.bf16.msra.mxu0 %v8174
  %8244 = vmatpush.bf16.msra.mxu0 %v8171
  %8245 = vmatpush.bf16.msra.mxu0 %v8168
  %8246 = vmatpush.bf16.msra.mxu0 %v8165
  %8247 = vmatpush.bf16.msra.mxu0 %v8162
  %8248 = vmatpush.bf16.msra.mxu0 %v8159
  %8249 = vmatpush.bf16.msra.mxu0 %v8156
  %8250 = vmatpush.bf16.msra.mxu0 %v8153
  %8251 = vmatmul.bf16.gmra.mxu0 %v5063
  %v8252 = vpop.f32.mrf.mxu0
  %v8253 = vadd.f32 0.0, %v8252
  %v8254 = vpop.f32.mrf.mxu0
  %v8255 = vadd.f32 0.0, %v8254
  %8256 = vmatmul.bf16.gmra.mxu0 %v5065
  %v8257 = vpop.f32.mrf.mxu0
  %v8258 = vadd.f32 0.0, %v8257
  %v8259 = vpop.f32.mrf.mxu0
  %v8260 = vadd.f32 0.0, %v8259
  %8261 = vmatmul.bf16.gmra.mxu0 %v5067
  %v8262 = vpop.f32.mrf.mxu0
  %v8263 = vadd.f32 0.0, %v8262
  %v8264 = vpop.f32.mrf.mxu0
  %v8265 = vadd.f32 0.0, %v8264
  %8266 = vmatmul.bf16.gmra.mxu0 %v7721
  %v8267 = vpop.f32.mrf.mxu0
  %v8268 = vadd.f32 0.0, %v8267
  %v8269 = vpop.f32.mrf.mxu0
  %v8270 = vadd.f32 0.0, %v8269
  %8271 = vmatmul.bf16.gmra.mxu0 %v7723
  %v8272 = vpop.f32.mrf.mxu0
  %v8273 = vadd.f32 0.0, %v8272
  %v8274 = vpop.f32.mrf.mxu0
  %8275 = vdwg.mxu0
  %8276 = vmatpush.bf16.msra.mxu0 0
  %8277 = vmatpush.bf16.msra.mxu0 0
  %8278 = vmatpush.bf16.msra.mxu0 %v8235
  %8279 = vmatpush.bf16.msra.mxu0 %v8189
  %8280 = vmatpush.bf16.msra.mxu0 %v8186
  %8281 = vmatpush.bf16.msra.mxu0 %v8183
  %8282 = vmatpush.bf16.msra.mxu0 %v8180
  %8283 = vmatpush.bf16.msra.mxu0 %v8177
  %8284 = vmatmul.bf16.gmra.mxu0 %v5808
  %v8285 = vpop.f32.mrf.mxu0
  %v8286 = vadd.f32 %v8253, %v8285
  %v8287 = vpop.f32.mrf.mxu0
  %v8288 = vadd.f32 %v8255, %v8287
  %8289 = vmatmul.bf16.gmra.mxu0 %v5811
  %v8290 = vpop.f32.mrf.mxu0
  %v8291 = vadd.f32 %v8258, %v8290
  %v8292 = vpop.f32.mrf.mxu0
  %v8293 = vadd.f32 %v8260, %v8292
  %8294 = vmatmul.bf16.gmra.mxu0 %v5814
  %v8295 = vpop.f32.mrf.mxu0
  %v8296 = vadd.f32 %v8263, %v8295
  %v8297 = vpop.f32.mrf.mxu0
  %v8298 = vadd.f32 %v8265, %v8297
  %8299 = vmatmul.bf16.gmra.mxu0 %v7726
  %v8300 = vpop.f32.mrf.mxu0
  %v8301 = vadd.f32 %v8268, %v8300
  %v8302 = vpop.f32.mrf.mxu0
  %v8303 = vadd.f32 %v8270, %v8302
  %8304 = vmatmul.bf16.gmra.mxu0 %v7729
  %v8305 = vpop.f32.mrf.mxu0
  %v8306 = vadd.f32 %v8273, %v8305
  %v8307 = vpop.f32.mrf.mxu0
  %8308 = vdwg.mxu0
  %8309 = vmatpush.bf16.msra.mxu0 %v8175
  %8310 = vmatpush.bf16.msra.mxu0 %v8172
  %8311 = vmatpush.bf16.msra.mxu0 %v8169
  %8312 = vmatpush.bf16.msra.mxu0 %v8166
  %8313 = vmatpush.bf16.msra.mxu0 %v8163
  %8314 = vmatpush.bf16.msra.mxu0 %v8160
  %8315 = vmatpush.bf16.msra.mxu0 %v8157
  %8316 = vmatpush.bf16.msra.mxu0 %v8154
  %8317 = vmatmul.bf16.gmra.mxu0 %v5063
  %v8318 = vpop.f32.mrf.mxu0
  %v8319 = vadd.f32 0.0, %v8318
  %v8320 = vpop.f32.mrf.mxu0
  %v8321 = vadd.f32 0.0, %v8320
  %8322 = vmatmul.bf16.gmra.mxu0 %v5065
  %v8323 = vpop.f32.mrf.mxu0
  %v8324 = vadd.f32 0.0, %v8323
  %v8325 = vpop.f32.mrf.mxu0
  %v8326 = vadd.f32 0.0, %v8325
  %8327 = vmatmul.bf16.gmra.mxu0 %v5067
  %v8328 = vpop.f32.mrf.mxu0
  %v8329 = vadd.f32 0.0, %v8328
  %v8330 = vpop.f32.mrf.mxu0
  %v8331 = vadd.f32 0.0, %v8330
  %8332 = vmatmul.bf16.gmra.mxu0 %v7721
  %v8333 = vpop.f32.mrf.mxu0
  %v8334 = vadd.f32 0.0, %v8333
  %v8335 = vpop.f32.mrf.mxu0
  %v8336 = vadd.f32 0.0, %v8335
  %8337 = vmatmul.bf16.gmra.mxu0 %v7723
  %v8338 = vpop.f32.mrf.mxu0
  %v8339 = vadd.f32 0.0, %v8338
  %v8340 = vpop.f32.mrf.mxu0
  %8341 = vdwg.mxu0
  %8342 = vmatpush.bf16.msra.mxu0 0
  %8343 = vmatpush.bf16.msra.mxu0 0
  %8344 = vmatpush.bf16.msra.mxu0 %v8238
  %8345 = vmatpush.bf16.msra.mxu0 %v8190
  %8346 = vmatpush.bf16.msra.mxu0 %v8187
  %8347 = vmatpush.bf16.msra.mxu0 %v8184
  %8348 = vmatpush.bf16.msra.mxu0 %v8181
  %8349 = vmatpush.bf16.msra.mxu0 %v8178
  %8350 = vmatmul.bf16.gmra.mxu0 %v5808
  %v8351 = vpop.f32.mrf.mxu0
  %v8352 = vadd.f32 %v8319, %v8351
  %v8353 = vpop.f32.mrf.mxu0
  %v8354 = vadd.f32 %v8321, %v8353
  %8355 = vmatmul.bf16.gmra.mxu0 %v5811
  %v8356 = vpop.f32.mrf.mxu0
  %v8357 = vadd.f32 %v8324, %v8356
  %v8358 = vpop.f32.mrf.mxu0
  %v8359 = vadd.f32 %v8326, %v8358
  %8360 = vmatmul.bf16.gmra.mxu0 %v5814
  %v8361 = vpop.f32.mrf.mxu0
  %v8362 = vadd.f32 %v8329, %v8361
  %v8363 = vpop.f32.mrf.mxu0
  %v8364 = vadd.f32 %v8331, %v8363
  %8365 = vmatmul.bf16.gmra.mxu0 %v7726
  %v8366 = vpop.f32.mrf.mxu0
  %v8367 = vadd.f32 %v8334, %v8366
  %v8368 = vpop.f32.mrf.mxu0
  %v8369 = vadd.f32 %v8336, %v8368
  %8370 = vmatmul.bf16.gmra.mxu0 %v7729
  %v8371 = vpop.f32.mrf.mxu0
  %v8372 = vadd.f32 %v8339, %v8371
  %v8373 = vpop.f32.mrf.mxu0
  %8374 = vdwg.mxu0
  %8375 = vmatpush.bf16.msra.mxu0 %v8176
  %8376 = vmatpush.bf16.msra.mxu0 %v8173
  %8377 = vmatpush.bf16.msra.mxu0 %v8170
  %8378 = vmatpush.bf16.msra.mxu0 %v8167
  %8379 = vmatpush.bf16.msra.mxu0 %v8164
  %8380 = vmatpush.bf16.msra.mxu0 %v8161
  %8381 = vmatpush.bf16.msra.mxu0 %v8158
  %8382 = vmatpush.bf16.msra.mxu0 %v8155
  %8383 = vmatmul.bf16.gmra.mxu0 %v5063
  %v8384 = vpop.f32.mrf.mxu0
  %v8385 = vadd.f32 0.0, %v8384
  %v8386 = vpop.f32.mrf.mxu0
  %v8387 = vadd.f32 0.0, %v8386
  %8388 = vmatmul.bf16.gmra.mxu0 %v5065
  %v8389 = vpop.f32.mrf.mxu0
  %v8390 = vadd.f32 0.0, %v8389
  %v8391 = vpop.f32.mrf.mxu0
  %v8392 = vadd.f32 0.0, %v8391
  %8393 = vmatmul.bf16.gmra.mxu0 %v5067
  %v8394 = vpop.f32.mrf.mxu0
  %v8395 = vadd.f32 0.0, %v8394
  %v8396 = vpop.f32.mrf.mxu0
  %v8397 = vadd.f32 0.0, %v8396
  %8398 = vmatmul.bf16.gmra.mxu0 %v7721
  %v8399 = vpop.f32.mrf.mxu0
  %v8400 = vadd.f32 0.0, %v8399
  %v8401 = vpop.f32.mrf.mxu0
  %v8402 = vadd.f32 0.0, %v8401
  %8403 = vmatmul.bf16.gmra.mxu0 %v7723
  %v8404 = vpop.f32.mrf.mxu0
  %v8405 = vadd.f32 0.0, %v8404
  %v8406 = vpop.f32.mrf.mxu0
  %8407 = vdwg.mxu0
  %8408 = vmatpush.bf16.msra.mxu0 0
  %8409 = vmatpush.bf16.msra.mxu0 0
  %8410 = vmatpush.bf16.msra.mxu0 %v8241
  %8411 = vmatpush.bf16.msra.mxu0 %v8191
  %8412 = vmatpush.bf16.msra.mxu0 %v8188
  %8413 = vmatpush.bf16.msra.mxu0 %v8185
  %8414 = vmatpush.bf16.msra.mxu0 %v8182
  %8415 = vmatpush.bf16.msra.mxu0 %v8179
  %8416 = vmatmul.bf16.gmra.mxu0 %v5808
  %v8417 = vpop.f32.mrf.mxu0
  %v8418 = vadd.f32 %v8385, %v8417
  %v8419 = vpop.f32.mrf.mxu0
  %v8420 = vadd.f32 %v8387, %v8419
  %8421 = vmatmul.bf16.gmra.mxu0 %v5811
  %v8422 = vpop.f32.mrf.mxu0
  %v8423 = vadd.f32 %v8390, %v8422
  %v8424 = vpop.f32.mrf.mxu0
  %v8425 = vadd.f32 %v8392, %v8424
  %8426 = vmatmul.bf16.gmra.mxu0 %v5814
  %v8427 = vpop.f32.mrf.mxu0
  %v8428 = vadd.f32 %v8395, %v8427
  %v8429 = vpop.f32.mrf.mxu0
  %v8430 = vadd.f32 %v8397, %v8429
  %8431 = vmatmul.bf16.gmra.mxu0 %v7726
  %v8432 = vpop.f32.mrf.mxu0
  %v8433 = vadd.f32 %v8400, %v8432
  %v8434 = vpop.f32.mrf.mxu0
  %v8435 = vadd.f32 %v8402, %v8434
  %8436 = vmatmul.bf16.gmra.mxu0 %v7729
  %v8437 = vpop.f32.mrf.mxu0
  %v8438 = vadd.f32 %v8405, %v8437
  %v8439 = vpop.f32.mrf.mxu0
  %8440 = vdwg.mxu0
  %v8441 = vadd.f32 %v7694, %v8286
  %v8442 = vadd.f32 %v7695, %v8352
  %v8443 = vadd.f32 %v7696, %v8418
  %v8444 = vadd.f32 %v7697, %v8288
  %v8445 = vadd.f32 %v7698, %v8354
  %v8446 = vadd.f32 %v7699, %v8420
  %v8447 = vadd.f32 %v7700, %v8291
  %v8448 = vadd.f32 %v7701, %v8357
  %v8449 = vadd.f32 %v7702, %v8423
  %v8450 = vadd.f32 %v7703, %v8293
  %v8451 = vadd.f32 %v7704, %v8359
  %v8452 = vadd.f32 %v7705, %v8425
  %v8453 = vadd.f32 %v7706, %v8296
  %v8454 = vadd.f32 %v7707, %v8362
  %v8455 = vadd.f32 %v7708, %v8428
  %v8456 = vadd.f32 %v7709, %v8298
  %v8457 = vadd.f32 %v7710, %v8364
  %v8458 = vadd.f32 %v7711, %v8430
  %v8459 = vadd.f32 %v7712, %v8301
  %v8460 = vadd.f32 %v7713, %v8367
  %v8461 = vadd.f32 %v7714, %v8433
  %v8462 = vadd.f32 %v7715, %v8303
  %v8463 = vadd.f32 %v7716, %v8369
  %v8464 = vadd.f32 %v7717, %v8435
  %v8465 = vadd.f32 %v7718, %v8306
  %v8466 = vadd.f32 %v7719, %v8372
  %v8467 = vadd.f32 %v7720, %v8438
  %v8468 = vpack.c.bf16 %v5001, %v4999
  %v8469 = vpack.c.bf16 %v5002, %v5000
  %v8470 = vpack.c.bf16 %v5003, %v5003
  %v8471 = vpack.c.bf16 %v5004, %v5004
  %v8473 = vsel %vm5359, %v8469, 0
  %v8476 = vsel %vm5359, %v8471, 0
  %8478 = vmatpush.bf16.msra.mxu0 %v8174
  %8479 = vmatpush.bf16.msra.mxu0 %v8171
  %8480 = vmatpush.bf16.msra.mxu0 %v8168
  %8481 = vmatpush.bf16.msra.mxu0 %v8165
  %8482 = vmatpush.bf16.msra.mxu0 %v8162
  %8483 = vmatpush.bf16.msra.mxu0 %v8159
  %8484 = vmatpush.bf16.msra.mxu0 %v8156
  %8485 = vmatpush.bf16.msra.mxu0 %v8153
  %8486 = vmatmul.bf16.gmra.mxu0 %v5073
  %v8487 = vpop.f32.mrf.mxu0
  %v8488 = vadd.f32 0.0, %v8487
  %v8489 = vpop.f32.mrf.mxu0
  %v8490 = vadd.f32 0.0, %v8489
  %8491 = vmatmul.bf16.gmra.mxu0 %v5075
  %v8492 = vpop.f32.mrf.mxu0
  %v8493 = vadd.f32 0.0, %v8492
  %v8494 = vpop.f32.mrf.mxu0
  %v8495 = vadd.f32 0.0, %v8494
  %8496 = vmatmul.bf16.gmra.mxu0 %v5077
  %v8497 = vpop.f32.mrf.mxu0
  %v8498 = vadd.f32 0.0, %v8497
  %v8499 = vpop.f32.mrf.mxu0
  %v8500 = vadd.f32 0.0, %v8499
  %8501 = vmatmul.bf16.gmra.mxu0 %v8468
  %v8502 = vpop.f32.mrf.mxu0
  %v8503 = vadd.f32 0.0, %v8502
  %v8504 = vpop.f32.mrf.mxu0
  %v8505 = vadd.f32 0.0, %v8504
  %8506 = vmatmul.bf16.gmra.mxu0 %v8470
  %v8507 = vpop.f32.mrf.mxu0
  %v8508 = vadd.f32 0.0, %v8507
  %v8509 = vpop.f32.mrf.mxu0
  %8510 = vdwg.mxu0
  %8511 = vmatpush.bf16.msra.mxu0 0
  %8512 = vmatpush.bf16.msra.mxu0 0
  %8513 = vmatpush.bf16.msra.mxu0 %v8235
  %8514 = vmatpush.bf16.msra.mxu0 %v8189
  %8515 = vmatpush.bf16.msra.mxu0 %v8186
  %8516 = vmatpush.bf16.msra.mxu0 %v8183
  %8517 = vmatpush.bf16.msra.mxu0 %v8180
  %8518 = vmatpush.bf16.msra.mxu0 %v8177
  %8519 = vmatmul.bf16.gmra.mxu0 %v5364
  %v8520 = vpop.f32.mrf.mxu0
  %v8521 = vadd.f32 %v8488, %v8520
  %v8522 = vpop.f32.mrf.mxu0
  %v8523 = vadd.f32 %v8490, %v8522
  %8524 = vmatmul.bf16.gmra.mxu0 %v5367
  %v8525 = vpop.f32.mrf.mxu0
  %v8526 = vadd.f32 %v8493, %v8525
  %v8527 = vpop.f32.mrf.mxu0
  %v8528 = vadd.f32 %v8495, %v8527
  %8529 = vmatmul.bf16.gmra.mxu0 %v5370
  %v8530 = vpop.f32.mrf.mxu0
  %v8531 = vadd.f32 %v8498, %v8530
  %v8532 = vpop.f32.mrf.mxu0
  %v8533 = vadd.f32 %v8500, %v8532
  %8534 = vmatmul.bf16.gmra.mxu0 %v8473
  %v8535 = vpop.f32.mrf.mxu0
  %v8536 = vadd.f32 %v8503, %v8535
  %v8537 = vpop.f32.mrf.mxu0
  %v8538 = vadd.f32 %v8505, %v8537
  %8539 = vmatmul.bf16.gmra.mxu0 %v8476
  %v8540 = vpop.f32.mrf.mxu0
  %v8541 = vadd.f32 %v8508, %v8540
  %v8542 = vpop.f32.mrf.mxu0
  %8543 = vdwg.mxu0
  %8544 = vmatpush.bf16.msra.mxu0 %v8175
  %8545 = vmatpush.bf16.msra.mxu0 %v8172
  %8546 = vmatpush.bf16.msra.mxu0 %v8169
  %8547 = vmatpush.bf16.msra.mxu0 %v8166
  %8548 = vmatpush.bf16.msra.mxu0 %v8163
  %8549 = vmatpush.bf16.msra.mxu0 %v8160
  %8550 = vmatpush.bf16.msra.mxu0 %v8157
  %8551 = vmatpush.bf16.msra.mxu0 %v8154
  %8552 = vmatmul.bf16.gmra.mxu0 %v5073
  %v8553 = vpop.f32.mrf.mxu0
  %v8554 = vadd.f32 0.0, %v8553
  %v8555 = vpop.f32.mrf.mxu0
  %v8556 = vadd.f32 0.0, %v8555
  %8557 = vmatmul.bf16.gmra.mxu0 %v5075
  %v8558 = vpop.f32.mrf.mxu0
  %v8559 = vadd.f32 0.0, %v8558
  %v8560 = vpop.f32.mrf.mxu0
  %v8561 = vadd.f32 0.0, %v8560
  %8562 = vmatmul.bf16.gmra.mxu0 %v5077
  %v8563 = vpop.f32.mrf.mxu0
  %v8564 = vadd.f32 0.0, %v8563
  %v8565 = vpop.f32.mrf.mxu0
  %v8566 = vadd.f32 0.0, %v8565
  %8567 = vmatmul.bf16.gmra.mxu0 %v8468
  %v8568 = vpop.f32.mrf.mxu0
  %v8569 = vadd.f32 0.0, %v8568
  %v8570 = vpop.f32.mrf.mxu0
  %v8571 = vadd.f32 0.0, %v8570
  %8572 = vmatmul.bf16.gmra.mxu0 %v8470
  %v8573 = vpop.f32.mrf.mxu0
  %v8574 = vadd.f32 0.0, %v8573
  %v8575 = vpop.f32.mrf.mxu0
  %8576 = vdwg.mxu0
  %8577 = vmatpush.bf16.msra.mxu0 0
  %8578 = vmatpush.bf16.msra.mxu0 0
  %8579 = vmatpush.bf16.msra.mxu0 %v8238
  %8580 = vmatpush.bf16.msra.mxu0 %v8190
  %8581 = vmatpush.bf16.msra.mxu0 %v8187
  %8582 = vmatpush.bf16.msra.mxu0 %v8184
  %8583 = vmatpush.bf16.msra.mxu0 %v8181
  %8584 = vmatpush.bf16.msra.mxu0 %v8178
  %8585 = vmatmul.bf16.gmra.mxu0 %v5364
  %v8586 = vpop.f32.mrf.mxu0
  %v8587 = vadd.f32 %v8554, %v8586
  %v8588 = vpop.f32.mrf.mxu0
  %v8589 = vadd.f32 %v8556, %v8588
  %8590 = vmatmul.bf16.gmra.mxu0 %v5367
  %v8591 = vpop.f32.mrf.mxu0
  %v8592 = vadd.f32 %v8559, %v8591
  %v8593 = vpop.f32.mrf.mxu0
  %v8594 = vadd.f32 %v8561, %v8593
  %8595 = vmatmul.bf16.gmra.mxu0 %v5370
  %v8596 = vpop.f32.mrf.mxu0
  %v8597 = vadd.f32 %v8564, %v8596
  %v8598 = vpop.f32.mrf.mxu0
  %v8599 = vadd.f32 %v8566, %v8598
  %8600 = vmatmul.bf16.gmra.mxu0 %v8473
  %v8601 = vpop.f32.mrf.mxu0
  %v8602 = vadd.f32 %v8569, %v8601
  %v8603 = vpop.f32.mrf.mxu0
  %v8604 = vadd.f32 %v8571, %v8603
  %8605 = vmatmul.bf16.gmra.mxu0 %v8476
  %v8606 = vpop.f32.mrf.mxu0
  %v8607 = vadd.f32 %v8574, %v8606
  %v8608 = vpop.f32.mrf.mxu0
  %8609 = vdwg.mxu0
  %8610 = vmatpush.bf16.msra.mxu0 %v8176
  %8611 = vmatpush.bf16.msra.mxu0 %v8173
  %8612 = vmatpush.bf16.msra.mxu0 %v8170
  %8613 = vmatpush.bf16.msra.mxu0 %v8167
  %8614 = vmatpush.bf16.msra.mxu0 %v8164
  %8615 = vmatpush.bf16.msra.mxu0 %v8161
  %8616 = vmatpush.bf16.msra.mxu0 %v8158
  %8617 = vmatpush.bf16.msra.mxu0 %v8155
  %8618 = vmatmul.bf16.gmra.mxu0 %v5073
  %v8619 = vpop.f32.mrf.mxu0
  %v8620 = vadd.f32 0.0, %v8619
  %v8621 = vpop.f32.mrf.mxu0
  %v8622 = vadd.f32 0.0, %v8621
  %8623 = vmatmul.bf16.gmra.mxu0 %v5075
  %v8624 = vpop.f32.mrf.mxu0
  %v8625 = vadd.f32 0.0, %v8624
  %v8626 = vpop.f32.mrf.mxu0
  %v8627 = vadd.f32 0.0, %v8626
  %8628 = vmatmul.bf16.gmra.mxu0 %v5077
  %v8629 = vpop.f32.mrf.mxu0
  %v8630 = vadd.f32 0.0, %v8629
  %v8631 = vpop.f32.mrf.mxu0
  %v8632 = vadd.f32 0.0, %v8631
  %8633 = vmatmul.bf16.gmra.mxu0 %v8468
  %v8634 = vpop.f32.mrf.mxu0
  %v8635 = vadd.f32 0.0, %v8634
  %v8636 = vpop.f32.mrf.mxu0
  %v8637 = vadd.f32 0.0, %v8636
  %8638 = vmatmul.bf16.gmra.mxu0 %v8470
  %v8639 = vpop.f32.mrf.mxu0
  %v8640 = vadd.f32 0.0, %v8639
  %v8641 = vpop.f32.mrf.mxu0
  %8642 = vdwg.mxu0
  %8643 = vmatpush.bf16.msra.mxu0 0
  %8644 = vmatpush.bf16.msra.mxu0 0
  %8645 = vmatpush.bf16.msra.mxu0 %v8241
  %8646 = vmatpush.bf16.msra.mxu0 %v8191
  %8647 = vmatpush.bf16.msra.mxu0 %v8188
  %8648 = vmatpush.bf16.msra.mxu0 %v8185
  %8649 = vmatpush.bf16.msra.mxu0 %v8182
  %8650 = vmatpush.bf16.msra.mxu0 %v8179
  %8651 = vmatmul.bf16.gmra.mxu0 %v5364
  %v8652 = vpop.f32.mrf.mxu0
  %v8653 = vadd.f32 %v8620, %v8652
  %v8654 = vpop.f32.mrf.mxu0
  %v8655 = vadd.f32 %v8622, %v8654
  %8656 = vmatmul.bf16.gmra.mxu0 %v5367
  %v8657 = vpop.f32.mrf.mxu0
  %v8658 = vadd.f32 %v8625, %v8657
  %v8659 = vpop.f32.mrf.mxu0
  %v8660 = vadd.f32 %v8627, %v8659
  %8661 = vmatmul.bf16.gmra.mxu0 %v5370
  %v8662 = vpop.f32.mrf.mxu0
  %v8663 = vadd.f32 %v8630, %v8662
  %v8664 = vpop.f32.mrf.mxu0
  %v8665 = vadd.f32 %v8632, %v8664
  %8666 = vmatmul.bf16.gmra.mxu0 %v8473
  %v8667 = vpop.f32.mrf.mxu0
  %v8668 = vadd.f32 %v8635, %v8667
  %v8669 = vpop.f32.mrf.mxu0
  %v8670 = vadd.f32 %v8637, %v8669
  %8671 = vmatmul.bf16.gmra.mxu0 %v8476
  %v8672 = vpop.f32.mrf.mxu0
  %v8673 = vadd.f32 %v8640, %v8672
  %v8674 = vpop.f32.mrf.mxu0
  %8675 = vdwg.mxu0
  %v8676 = vadd.f32 %v7929, %v8521
  %v8677 = vadd.f32 %v7930, %v8587
  %v8678 = vadd.f32 %v7931, %v8653
  %v8679 = vadd.f32 %v7932, %v8523
  %v8680 = vadd.f32 %v7933, %v8589
  %v8681 = vadd.f32 %v7934, %v8655
  %v8682 = vadd.f32 %v7935, %v8526
  %v8683 = vadd.f32 %v7936, %v8592
  %v8684 = vadd.f32 %v7937, %v8658
  %v8685 = vadd.f32 %v7938, %v8528
  %v8686 = vadd.f32 %v7939, %v8594
  %v8687 = vadd.f32 %v7940, %v8660
  %v8688 = vadd.f32 %v7941, %v8531
  %v8689 = vadd.f32 %v7942, %v8597
  %v8690 = vadd.f32 %v7943, %v8663
  %v8691 = vadd.f32 %v7944, %v8533
  %v8692 = vadd.f32 %v7945, %v8599
  %v8693 = vadd.f32 %v7946, %v8665
  %v8694 = vadd.f32 %v7947, %v8536
  %v8695 = vadd.f32 %v7948, %v8602
  %v8696 = vadd.f32 %v7949, %v8668
  %v8697 = vadd.f32 %v7950, %v8538
  %v8698 = vadd.f32 %v7951, %v8604
  %v8699 = vadd.f32 %v7952, %v8670
  %v8700 = vadd.f32 %v7953, %v8541
  %v8701 = vadd.f32 %v7954, %v8607
  %v8702 = vadd.f32 %v7955, %v8673
  %8721 = vrot.lane.b32.xlu0 %v8442, 76
  %v8722 = vpop.permute.xlu0 %8721
  %8723 = vrot.lane.b32.xlu0 %v8443, 76
  %v8724 = vpop.permute.xlu0 %8723
  %8725 = vrot.lane.b32.xlu0 %v8445, 76
  %v8726 = vpop.permute.xlu0 %8725
  %8727 = vrot.lane.b32.xlu0 %v8446, 76
  %v8728 = vpop.permute.xlu0 %8727
  %8729 = vrot.lane.b32.xlu0 %v8448, 76
  %v8730 = vpop.permute.xlu0 %8729
  %8731 = vrot.lane.b32.xlu0 %v8449, 76
  %v8732 = vpop.permute.xlu0 %8731
  %8733 = vrot.lane.b32.xlu0 %v8451, 76
  %v8734 = vpop.permute.xlu0 %8733
  %8735 = vrot.lane.b32.xlu0 %v8452, 76
  %v8736 = vpop.permute.xlu0 %8735
  %8737 = vrot.lane.b32.xlu0 %v8454, 76
  %v8738 = vpop.permute.xlu0 %8737
  %8739 = vrot.lane.b32.xlu0 %v8455, 76
  %v8740 = vpop.permute.xlu0 %8739
  %8741 = vrot.lane.b32.xlu0 %v8457, 76
  %v8742 = vpop.permute.xlu0 %8741
  %8743 = vrot.lane.b32.xlu0 %v8458, 76
  %v8744 = vpop.permute.xlu0 %8743
  %8745 = vrot.lane.b32.xlu0 %v8460, 76
  %v8746 = vpop.permute.xlu0 %8745
  %8747 = vrot.lane.b32.xlu0 %v8461, 76
  %v8748 = vpop.permute.xlu0 %8747
  %8749 = vrot.lane.b32.xlu0 %v8463, 76
  %v8750 = vpop.permute.xlu0 %8749
  %8751 = vrot.lane.b32.xlu0 %v8464, 76
  %v8752 = vpop.permute.xlu0 %8751
  %8753 = vrot.lane.b32.xlu0 %v8466, 76
  %v8754 = vpop.permute.xlu0 %8753
  %8755 = vrot.lane.b32.xlu0 %v8467, 76
  %v8756 = vpop.permute.xlu0 %8755
  %vm8757 = vcmask 621568
  %v8758 = vsel %vm8757, %v8722, %v8724
  %v8759 = vsel %vm8757, %v8726, %v8728
  %v8760 = vsel %vm8757, %v8730, %v8732
  %v8761 = vsel %vm8757, %v8734, %v8736
  %v8762 = vsel %vm8757, %v8738, %v8740
  %v8763 = vsel %vm8757, %v8742, %v8744
  %v8764 = vsel %vm8757, %v8746, %v8748
  %v8765 = vsel %vm8757, %v8750, %v8752
  %v8766 = vsel %vm8757, %v8754, %v8756
  %v8785 = vmax.f32 %v8441, %v8758
  %v8786 = vmax.f32 %v8442, %v8724
  %v8787 = vmax.f32 %v8444, %v8759
  %v8788 = vmax.f32 %v8445, %v8728
  %v8789 = vmax.f32 %v8447, %v8760
  %v8790 = vmax.f32 %v8448, %v8732
  %v8791 = vmax.f32 %v8450, %v8761
  %v8792 = vmax.f32 %v8451, %v8736
  %v8793 = vmax.f32 %v8453, %v8762
  %v8794 = vmax.f32 %v8454, %v8740
  %v8795 = vmax.f32 %v8456, %v8763
  %v8796 = vmax.f32 %v8457, %v8744
  %v8797 = vmax.f32 %v8459, %v8764
  %v8798 = vmax.f32 %v8460, %v8748
  %v8799 = vmax.f32 %v8462, %v8765
  %v8800 = vmax.f32 %v8463, %v8752
  %v8801 = vmax.f32 %v8465, %v8766
  %v8802 = vmax.f32 %v8466, %v8756
  %8821 = vrot.lane.b32.xlu0 %v8677, 76
  %v8822 = vpop.permute.xlu0 %8821
  %8823 = vrot.lane.b32.xlu0 %v8678, 76
  %v8824 = vpop.permute.xlu0 %8823
  %8825 = vrot.lane.b32.xlu0 %v8680, 76
  %v8826 = vpop.permute.xlu0 %8825
  %8827 = vrot.lane.b32.xlu0 %v8681, 76
  %v8828 = vpop.permute.xlu0 %8827
  %8829 = vrot.lane.b32.xlu0 %v8683, 76
  %v8830 = vpop.permute.xlu0 %8829
  %8831 = vrot.lane.b32.xlu0 %v8684, 76
  %v8832 = vpop.permute.xlu0 %8831
  %8833 = vrot.lane.b32.xlu0 %v8686, 76
  %v8834 = vpop.permute.xlu0 %8833
  %8835 = vrot.lane.b32.xlu0 %v8687, 76
  %v8836 = vpop.permute.xlu0 %8835
  %8837 = vrot.lane.b32.xlu0 %v8689, 76
  %v8838 = vpop.permute.xlu0 %8837
  %8839 = vrot.lane.b32.xlu0 %v8690, 76
  %v8840 = vpop.permute.xlu0 %8839
  %8841 = vrot.lane.b32.xlu0 %v8692, 76
  %v8842 = vpop.permute.xlu0 %8841
  %8843 = vrot.lane.b32.xlu0 %v8693, 76
  %v8844 = vpop.permute.xlu0 %8843
  %8845 = vrot.lane.b32.xlu0 %v8695, 76
  %v8846 = vpop.permute.xlu0 %8845
  %8847 = vrot.lane.b32.xlu0 %v8696, 76
  %v8848 = vpop.permute.xlu0 %8847
  %8849 = vrot.lane.b32.xlu0 %v8698, 76
  %v8850 = vpop.permute.xlu0 %8849
  %8851 = vrot.lane.b32.xlu0 %v8699, 76
  %v8852 = vpop.permute.xlu0 %8851
  %8853 = vrot.lane.b32.xlu0 %v8701, 76
  %v8854 = vpop.permute.xlu0 %8853
  %8855 = vrot.lane.b32.xlu0 %v8702, 76
  %v8856 = vpop.permute.xlu0 %8855
  %v8857 = vsel %vm8757, %v8822, %v8824
  %v8858 = vsel %vm8757, %v8826, %v8828
  %v8859 = vsel %vm8757, %v8830, %v8832
  %v8860 = vsel %vm8757, %v8834, %v8836
  %v8861 = vsel %vm8757, %v8838, %v8840
  %v8862 = vsel %vm8757, %v8842, %v8844
  %v8863 = vsel %vm8757, %v8846, %v8848
  %v8864 = vsel %vm8757, %v8850, %v8852
  %v8865 = vsel %vm8757, %v8854, %v8856
  %v8884 = vmax.f32 %v8676, %v8857
  %v8885 = vmax.f32 %v8677, %v8824
  %v8886 = vmax.f32 %v8679, %v8858
  %v8887 = vmax.f32 %v8680, %v8828
  %v8888 = vmax.f32 %v8682, %v8859
  %v8889 = vmax.f32 %v8683, %v8832
  %v8890 = vmax.f32 %v8685, %v8860
  %v8891 = vmax.f32 %v8686, %v8836
  %v8892 = vmax.f32 %v8688, %v8861
  %v8893 = vmax.f32 %v8689, %v8840
  %v8894 = vmax.f32 %v8691, %v8862
  %v8895 = vmax.f32 %v8692, %v8844
  %v8896 = vmax.f32 %v8694, %v8863
  %v8897 = vmax.f32 %v8695, %v8848
  %v8898 = vmax.f32 %v8697, %v8864
  %v8899 = vmax.f32 %v8698, %v8852
  %v8900 = vmax.f32 %v8700, %v8865
  %v8901 = vmax.f32 %v8701, %v8856
  %v8902 = vmax.f32 %v8785, %v8884
  %v8903 = vmax.f32 %v8786, %v8885
  %v8904 = vmax.f32 %v8787, %v8886
  %v8905 = vmax.f32 %v8788, %v8887
  %v8906 = vmax.f32 %v8789, %v8888
  %v8907 = vmax.f32 %v8790, %v8889
  %v8908 = vmax.f32 %v8791, %v8890
  %v8909 = vmax.f32 %v8792, %v8891
  %v8910 = vmax.f32 %v8793, %v8892
  %v8911 = vmax.f32 %v8794, %v8893
  %v8912 = vmax.f32 %v8795, %v8894
  %v8913 = vmax.f32 %v8796, %v8895
  %v8914 = vmax.f32 %v8797, %v8896
  %v8915 = vmax.f32 %v8798, %v8897
  %v8916 = vmax.f32 %v8799, %v8898
  %v8917 = vmax.f32 %v8800, %v8899
  %v8918 = vmax.f32 %v8801, %v8900
  %v8919 = vmax.f32 %v8802, %v8901
  %v8920 = vld [vmem:[%s4] sm:$0x3]
  %v8922 = vperm.slane %v8920, 0
  %v8923 = vperm.slane %v8920, 1
  %v8926 = vadd.f32 %v8902, %v8922
  %v8927 = vadd.f32 %v8903, %v8923
  %v8928 = vadd.f32 %v8904, %v8922
  %v8929 = vadd.f32 %v8905, %v8923
  %v8930 = vadd.f32 %v8906, %v8922
  %v8931 = vadd.f32 %v8907, %v8923
  %v8932 = vadd.f32 %v8908, %v8922
  %v8933 = vadd.f32 %v8909, %v8923
  %v8934 = vadd.f32 %v8910, %v8922
  %v8935 = vadd.f32 %v8911, %v8923
  %v8936 = vadd.f32 %v8912, %v8922
  %v8937 = vadd.f32 %v8913, %v8923
  %v8938 = vadd.f32 %v8914, %v8922
  %v8939 = vadd.f32 %v8915, %v8923
  %v8940 = vadd.f32 %v8916, %v8922
  %v8941 = vadd.f32 %v8917, %v8923
  %v8942 = vadd.f32 %v8918, %v8922
  %v8943 = vadd.f32 %v8919, %v8923
  %v8944 = vmax.f32 %v8926, 0.0
  %v8945 = vmax.f32 %v8927, 0.0
  %v8946 = vmax.f32 %v8928, 0.0
  %v8947 = vmax.f32 %v8929, 0.0
  %v8948 = vmax.f32 %v8930, 0.0
  %v8949 = vmax.f32 %v8931, 0.0
  %v8950 = vmax.f32 %v8932, 0.0
  %v8951 = vmax.f32 %v8933, 0.0
  %v8952 = vmax.f32 %v8934, 0.0
  %v8953 = vmax.f32 %v8935, 0.0
  %v8954 = vmax.f32 %v8936, 0.0
  %v8955 = vmax.f32 %v8937, 0.0
  %v8956 = vmax.f32 %v8938, 0.0
  %v8957 = vmax.f32 %v8939, 0.0
  %v8958 = vmax.f32 %v8940, 0.0
  %v8959 = vmax.f32 %v8941, 0.0
  %v8960 = vmax.f32 %v8942, 0.0
  %v8961 = vmax.f32 %v8943, 0.0
  %v8962 = vpack.c.bf16 %v8944, %v8944
  %v8963 = vpack.c.bf16 %v8945, %v8945
  %v8964 = vld [vmem:[%s5] sm:$0xf]
  %v8965 = vld [vmem:[%s5 + $0x4] sm:$0xf]
  %v8966 = vld [vmem:[%s5 + $0x8] sm:$0xf]
  %v8967 = vld [vmem:[%s5 + $0xc] sm:$0xf]
  %v8968 = vld [vmem:[%s5 + $0x10] sm:$0xf]
  %v8969 = vld [vmem:[%s5 + $0x14] sm:$0xf]
  %v8970 = vld [vmem:[%s5 + $0x18] sm:$0xf]
  %v8971 = vld [vmem:[%s5 + $0x1c] sm:$0xf]
  %v8972 = vld [vmem:[%s5 + $0x20] sm:$0xf]
  %v8973 = vld [vmem:[%s5 + $0x24] sm:$0xf]
  %v8974 = vld [vmem:[%s5 + $0x28] sm:$0xf]
  %v8975 = vld [vmem:[%s5 + $0x2c] sm:$0xf]
  %v8976 = vld [vmem:[%s5 + $0x30] sm:$0xf]
  %v8977 = vld [vmem:[%s5 + $0x34] sm:$0xf]
  %v8978 = vld [vmem:[%s5 + $0x38] sm:$0xf]
  %v8979 = vld [vmem:[%s5 + $0x3c] sm:$0xf]
  %v8980 = vld [vmem:[%s5 + $0x40] sm:$0xf]
  %v8981 = vld [vmem:[%s5 + $0x44] sm:$0xf]
  %v8982 = vld [vmem:[%s5 + $0x48] sm:$0xf]
  %v8983 = vld [vmem:[%s5 + $0x4c] sm:$0xf]
  %v8984 = vld [vmem:[%s5 + $0x50] sm:$0xf]
  %v8985 = vld [vmem:[%s5 + $0x54] sm:$0xf]
  %v8986 = vld [vmem:[%s5 + $0x58] sm:$0x3]
  %v8987 = vpack.c.bf16 %v8946, %v8946
  %v8988 = vpack.c.bf16 %v8947, %v8947
  %s8989 = scalar_lea.vmem %s5, 92
  %v8990 = vld [vmem:[%s8989] sm:$0xf]
  %v8991 = vld [vmem:[%s8989 + $0x4] sm:$0xf]
  %v8992 = vld [vmem:[%s8989 + $0x8] sm:$0xf]
  %v8993 = vld [vmem:[%s8989 + $0xc] sm:$0xf]
  %v8994 = vld [vmem:[%s8989 + $0x10] sm:$0xf]
  %v8995 = vld [vmem:[%s8989 + $0x14] sm:$0xf]
  %v8996 = vld [vmem:[%s8989 + $0x18] sm:$0xf]
  %v8997 = vld [vmem:[%s8989 + $0x1c] sm:$0xf]
  %v8998 = vld [vmem:[%s8989 + $0x20] sm:$0xf]
  %v8999 = vld [vmem:[%s8989 + $0x24] sm:$0xf]
  %v9000 = vld [vmem:[%s8989 + $0x28] sm:$0xf]
  %v9001 = vld [vmem:[%s8989 + $0x2c] sm:$0xf]
  %v9002 = vld [vmem:[%s8989 + $0x30] sm:$0xf]
  %v9003 = vld [vmem:[%s8989 + $0x34] sm:$0xf]
  %v9004 = vld [vmem:[%s8989 + $0x38] sm:$0xf]
  %v9005 = vld [vmem:[%s8989 + $0x3c] sm:$0xf]
  %v9006 = vld [vmem:[%s8989 + $0x40] sm:$0xf]
  %v9007 = vld [vmem:[%s8989 + $0x44] sm:$0xf]
  %v9008 = vld [vmem:[%s8989 + $0x48] sm:$0xf]
  %v9009 = vld [vmem:[%s8989 + $0x4c] sm:$0xf]
  %v9010 = vld [vmem:[%s8989 + $0x50] sm:$0xf]
  %v9011 = vld [vmem:[%s8989 + $0x54] sm:$0xf]
  %v9012 = vld [vmem:[%s8989 + $0x58] sm:$0x3]
  %v9036 = vunpack.c.l.b16 %v8990
  %v9037 = vunpack.c.l.b16 %v8991
  %v9038 = vunpack.c.l.b16 %v8992
  %v9039 = vunpack.c.l.b16 %v8993
  %v9040 = vunpack.c.l.b16 %v8994
  %v9041 = vunpack.c.l.b16 %v8995
  %v9042 = vunpack.c.l.b16 %v8996
  %v9043 = vunpack.c.l.b16 %v8997
  %v9044 = vunpack.c.l.b16 %v8998
  %v9045 = vunpack.c.l.b16 %v8999
  %v9046 = vunpack.c.l.b16 %v9000
  %v9047 = vunpack.c.l.b16 %v9001
  %v9048 = vunpack.c.l.b16 %v9002
  %v9049 = vunpack.c.l.b16 %v9003
  %v9050 = vunpack.c.l.b16 %v9004
  %v9051 = vunpack.c.l.b16 %v9005
  %v9052 = vunpack.c.l.b16 %v9006
  %v9053 = vunpack.c.l.b16 %v9007
  %v9054 = vunpack.c.l.b16 %v9008
  %v9055 = vunpack.c.l.b16 %v9009
  %v9056 = vunpack.c.l.b16 %v9010
  %v9057 = vunpack.c.l.b16 %v9011
  %v9058 = vunpack.c.l.b16 %v9012
  %v9059 = vpack.c.b16 %v9037, %v9036
  %v9060 = vpack.c.b16 %v9039, %v9038
  %v9061 = vpack.c.b16 %v9041, %v9040
  %v9062 = vpack.c.b16 %v9043, %v9042
  %v9063 = vpack.c.b16 %v9045, %v9044
  %v9064 = vpack.c.b16 %v9047, %v9046
  %v9065 = vpack.c.b16 %v9049, %v9048
  %v9066 = vpack.c.b16 %v9051, %v9050
  %v9067 = vpack.c.b16 %v9053, %v9052
  %v9068 = vpack.c.b16 %v9055, %v9054
  %v9069 = vpack.c.b16 %v9057, %v9056
  %v9070 = vpack.c.b16 %v9058, %v9058
  %vm9082 = vcmask 424960
  %v9084 = vsel %vm9082, %v8988, 0
  %vm9086 = vcmask 1041408
  %v9088 = vsel %vm9086, %v9070, 0
  %9090 = vmatpush.bf16.msra.mxu0 %v9066
  %9091 = vmatpush.bf16.msra.mxu0 %v9065
  %9092 = vmatpush.bf16.msra.mxu0 %v9064
  %9093 = vmatpush.bf16.msra.mxu0 %v9063
  %9094 = vmatpush.bf16.msra.mxu0 %v9062
  %9095 = vmatpush.bf16.msra.mxu0 %v9061
  %9096 = vmatpush.bf16.msra.mxu0 %v9060
  %9097 = vmatpush.bf16.msra.mxu0 %v9059
  %9098 = vmatmul.bf16.gmra.mxu0 %v8987
  %v9099 = vpop.f32.mrf.mxu0
  %v9100 = vadd.f32 0.0, %v9099
  %v9101 = vpop.f32.mrf.mxu0
  %9102 = vdwg.mxu0
  %9103 = vmatpush.bf16.msra.mxu0 0
  %9104 = vmatpush.bf16.msra.mxu0 0
  %9105 = vmatpush.bf16.msra.mxu0 0
  %9106 = vmatpush.bf16.msra.mxu0 0
  %9107 = vmatpush.bf16.msra.mxu0 %v9088
  %9108 = vmatpush.bf16.msra.mxu0 %v9069
  %9109 = vmatpush.bf16.msra.mxu0 %v9068
  %9110 = vmatpush.bf16.msra.mxu0 %v9067
  %9111 = vmatmul.bf16.gmra.mxu0 %v9084
  %v9112 = vpop.f32.mrf.mxu0
  %v9113 = vadd.f32 %v9100, %v9112
  %v9114 = vpop.f32.mrf.mxu0
  %9115 = vdwg.mxu0
  %v9139 = vunpack.c.l.b16 %v8964
  %v9140 = vunpack.c.l.b16 %v8965
  %v9141 = vunpack.c.l.b16 %v8966
  %v9142 = vunpack.c.l.b16 %v8967
  %v9143 = vunpack.c.l.b16 %v8968
  %v9144 = vunpack.c.l.b16 %v8969
  %v9145 = vunpack.c.l.b16 %v8970
  %v9146 = vunpack.c.l.b16 %v8971
  %v9147 = vunpack.c.l.b16 %v8972
  %v9148 = vunpack.c.l.b16 %v8973
  %v9149 = vunpack.c.l.b16 %v8974
  %v9150 = vunpack.c.l.b16 %v8975
  %v9151 = vunpack.c.l.b16 %v8976
  %v9152 = vunpack.c.l.b16 %v8977
  %v9153 = vunpack.c.l.b16 %v8978
  %v9154 = vunpack.c.l.b16 %v8979
  %v9155 = vunpack.c.l.b16 %v8980
  %v9156 = vunpack.c.l.b16 %v8981
  %v9157 = vunpack.c.l.b16 %v8982
  %v9158 = vunpack.c.l.b16 %v8983
  %v9159 = vunpack.c.l.b16 %v8984
  %v9160 = vunpack.c.l.b16 %v8985
  %v9161 = vunpack.c.l.b16 %v8986
  %v9162 = vpack.c.b16 %v9140, %v9139
  %v9163 = vpack.c.b16 %v9142, %v9141
  %v9164 = vpack.c.b16 %v9144, %v9143
  %v9165 = vpack.c.b16 %v9146, %v9145
  %v9166 = vpack.c.b16 %v9148, %v9147
  %v9167 = vpack.c.b16 %v9150, %v9149
  %v9168 = vpack.c.b16 %v9152, %v9151
  %v9169 = vpack.c.b16 %v9154, %v9153
  %v9170 = vpack.c.b16 %v9156, %v9155
  %v9171 = vpack.c.b16 %v9158, %v9157
  %v9172 = vpack.c.b16 %v9160, %v9159
  %v9173 = vpack.c.b16 %v9161, %v9161
  %v9186 = vsel %vm9082, %v8963, 0
  %v9189 = vsel %vm9086, %v9173, 0
  %9191 = vmatpush.bf16.msra.mxu0 %v9169
  %9192 = vmatpush.bf16.msra.mxu0 %v9168
  %9193 = vmatpush.bf16.msra.mxu0 %v9167
  %9194 = vmatpush.bf16.msra.mxu0 %v9166
  %9195 = vmatpush.bf16.msra.mxu0 %v9165
  %9196 = vmatpush.bf16.msra.mxu0 %v9164
  %9197 = vmatpush.bf16.msra.mxu0 %v9163
  %9198 = vmatpush.bf16.msra.mxu0 %v9162
  %9199 = vmatmul.bf16.gmra.mxu0 %v8962
  %v9200 = vpop.f32.mrf.mxu0
  %v9201 = vadd.f32 %v9113, %v9200
  %v9202 = vpop.f32.mrf.mxu0
  %9203 = vdwg.mxu0
  %9204 = vmatpush.bf16.msra.mxu0 0
  %9205 = vmatpush.bf16.msra.mxu0 0
  %9206 = vmatpush.bf16.msra.mxu0 0
  %9207 = vmatpush.bf16.msra.mxu0 0
  %9208 = vmatpush.bf16.msra.mxu0 %v9189
  %9209 = vmatpush.bf16.msra.mxu0 %v9172
  %9210 = vmatpush.bf16.msra.mxu0 %v9171
  %9211 = vmatpush.bf16.msra.mxu0 %v9170
  %9212 = vmatmul.bf16.gmra.mxu0 %v9186
  %v9213 = vpop.f32.mrf.mxu0
  %v9214 = vadd.f32 %v9201, %v9213
  %v9215 = vpop.f32.mrf.mxu0
  %9216 = vdwg.mxu0
  %v9217 = vpack.c.bf16 %v8948, %v8948
  %v9218 = vpack.c.bf16 %v8949, %v8949
  %s9219 = scalar_lea.vmem %s5, 184
  %v9220 = vld [vmem:[%s9219] sm:$0xf]
  %v9221 = vld [vmem:[%s9219 + $0x4] sm:$0xf]
  %v9222 = vld [vmem:[%s9219 + $0x8] sm:$0xf]
  %v9223 = vld [vmem:[%s9219 + $0xc] sm:$0xf]
  %v9224 = vld [vmem:[%s9219 + $0x10] sm:$0xf]
  %v9225 = vld [vmem:[%s9219 + $0x14] sm:$0xf]
  %v9226 = vld [vmem:[%s9219 + $0x18] sm:$0xf]
  %v9227 = vld [vmem:[%s9219 + $0x1c] sm:$0xf]
  %v9228 = vld [vmem:[%s9219 + $0x20] sm:$0xf]
  %v9229 = vld [vmem:[%s9219 + $0x24] sm:$0xf]
  %v9230 = vld [vmem:[%s9219 + $0x28] sm:$0xf]
  %v9231 = vld [vmem:[%s9219 + $0x2c] sm:$0xf]
  %v9232 = vld [vmem:[%s9219 + $0x30] sm:$0xf]
  %v9233 = vld [vmem:[%s9219 + $0x34] sm:$0xf]
  %v9234 = vld [vmem:[%s9219 + $0x38] sm:$0xf]
  %v9235 = vld [vmem:[%s9219 + $0x3c] sm:$0xf]
  %v9236 = vld [vmem:[%s9219 + $0x40] sm:$0xf]
  %v9237 = vld [vmem:[%s9219 + $0x44] sm:$0xf]
  %v9238 = vld [vmem:[%s9219 + $0x48] sm:$0xf]
  %v9239 = vld [vmem:[%s9219 + $0x4c] sm:$0xf]
  %v9240 = vld [vmem:[%s9219 + $0x50] sm:$0xf]
  %v9241 = vld [vmem:[%s9219 + $0x54] sm:$0xf]
  %v9242 = vld [vmem:[%s9219 + $0x58] sm:$0x3]
  %v9266 = vunpack.c.l.b16 %v9220
  %v9267 = vunpack.c.l.b16 %v9221
  %v9268 = vunpack.c.l.b16 %v9222
  %v9269 = vunpack.c.l.b16 %v9223
  %v9270 = vunpack.c.l.b16 %v9224
  %v9271 = vunpack.c.l.b16 %v9225
  %v9272 = vunpack.c.l.b16 %v9226
  %v9273 = vunpack.c.l.b16 %v9227
  %v9274 = vunpack.c.l.b16 %v9228
  %v9275 = vunpack.c.l.b16 %v9229
  %v9276 = vunpack.c.l.b16 %v9230
  %v9277 = vunpack.c.l.b16 %v9231
  %v9278 = vunpack.c.l.b16 %v9232
  %v9279 = vunpack.c.l.b16 %v9233
  %v9280 = vunpack.c.l.b16 %v9234
  %v9281 = vunpack.c.l.b16 %v9235
  %v9282 = vunpack.c.l.b16 %v9236
  %v9283 = vunpack.c.l.b16 %v9237
  %v9284 = vunpack.c.l.b16 %v9238
  %v9285 = vunpack.c.l.b16 %v9239
  %v9286 = vunpack.c.l.b16 %v9240
  %v9287 = vunpack.c.l.b16 %v9241
  %v9288 = vunpack.c.l.b16 %v9242
  %v9289 = vpack.c.b16 %v9267, %v9266
  %v9290 = vpack.c.b16 %v9269, %v9268
  %v9291 = vpack.c.b16 %v9271, %v9270
  %v9292 = vpack.c.b16 %v9273, %v9272
  %v9293 = vpack.c.b16 %v9275, %v9274
  %v9294 = vpack.c.b16 %v9277, %v9276
  %v9295 = vpack.c.b16 %v9279, %v9278
  %v9296 = vpack.c.b16 %v9281, %v9280
  %v9297 = vpack.c.b16 %v9283, %v9282
  %v9298 = vpack.c.b16 %v9285, %v9284
  %v9299 = vpack.c.b16 %v9287, %v9286
  %v9300 = vpack.c.b16 %v9288, %v9288
  %v9313 = vsel %vm9082, %v9218, 0
  %v9316 = vsel %vm9086, %v9300, 0
  %9318 = vmatpush.bf16.msra.mxu0 %v9296
  %9319 = vmatpush.bf16.msra.mxu0 %v9295
  %9320 = vmatpush.bf16.msra.mxu0 %v9294
  %9321 = vmatpush.bf16.msra.mxu0 %v9293
  %9322 = vmatpush.bf16.msra.mxu0 %v9292
  %9323 = vmatpush.bf16.msra.mxu0 %v9291
  %9324 = vmatpush.bf16.msra.mxu0 %v9290
  %9325 = vmatpush.bf16.msra.mxu0 %v9289
  %9326 = vmatmul.bf16.gmra.mxu0 %v9217
  %v9327 = vpop.f32.mrf.mxu0
  %v9328 = vadd.f32 0.0, %v9327
  %v9329 = vpop.f32.mrf.mxu0
  %9330 = vdwg.mxu0
  %9331 = vmatpush.bf16.msra.mxu0 0
  %9332 = vmatpush.bf16.msra.mxu0 0
  %9333 = vmatpush.bf16.msra.mxu0 0
  %9334 = vmatpush.bf16.msra.mxu0 0
  %9335 = vmatpush.bf16.msra.mxu0 %v9316
  %9336 = vmatpush.bf16.msra.mxu0 %v9299
  %9337 = vmatpush.bf16.msra.mxu0 %v9298
  %9338 = vmatpush.bf16.msra.mxu0 %v9297
  %9339 = vmatmul.bf16.gmra.mxu0 %v9313
  %v9340 = vpop.f32.mrf.mxu0
  %v9341 = vadd.f32 %v9328, %v9340
  %v9342 = vpop.f32.mrf.mxu0
  %9343 = vdwg.mxu0
  %v9344 = vadd.f32 %v9214, %v9341
  %v9345 = vpack.c.bf16 %v8950, %v8950
  %v9346 = vpack.c.bf16 %v8951, %v8951
  %s9347 = scalar_lea.vmem %s5, 276
  %v9348 = vld [vmem:[%s9347] sm:$0xf]
  %v9349 = vld [vmem:[%s9347 + $0x4] sm:$0xf]
  %v9350 = vld [vmem:[%s9347 + $0x8] sm:$0xf]
  %v9351 = vld [vmem:[%s9347 + $0xc] sm:$0xf]
  %v9352 = vld [vmem:[%s9347 + $0x10] sm:$0xf]
  %v9353 = vld [vmem:[%s9347 + $0x14] sm:$0xf]
  %v9354 = vld [vmem:[%s9347 + $0x18] sm:$0xf]
  %v9355 = vld [vmem:[%s9347 + $0x1c] sm:$0xf]
  %v9356 = vld [vmem:[%s9347 + $0x20] sm:$0xf]
  %v9357 = vld [vmem:[%s9347 + $0x24] sm:$0xf]
  %v9358 = vld [vmem:[%s9347 + $0x28] sm:$0xf]
  %v9359 = vld [vmem:[%s9347 + $0x2c] sm:$0xf]
  %v9360 = vld [vmem:[%s9347 + $0x30] sm:$0xf]
  %v9361 = vld [vmem:[%s9347 + $0x34] sm:$0xf]
  %v9362 = vld [vmem:[%s9347 + $0x38] sm:$0xf]
  %v9363 = vld [vmem:[%s9347 + $0x3c] sm:$0xf]
  %v9364 = vld [vmem:[%s9347 + $0x40] sm:$0xf]
  %v9365 = vld [vmem:[%s9347 + $0x44] sm:$0xf]
  %v9366 = vld [vmem:[%s9347 + $0x48] sm:$0xf]
  %v9367 = vld [vmem:[%s9347 + $0x4c] sm:$0xf]
  %v9368 = vld [vmem:[%s9347 + $0x50] sm:$0xf]
  %v9369 = vld [vmem:[%s9347 + $0x54] sm:$0xf]
  %v9370 = vld [vmem:[%s9347 + $0x58] sm:$0x3]
  %v9394 = vunpack.c.l.b16 %v9348
  %v9395 = vunpack.c.l.b16 %v9349
  %v9396 = vunpack.c.l.b16 %v9350
  %v9397 = vunpack.c.l.b16 %v9351
  %v9398 = vunpack.c.l.b16 %v9352
  %v9399 = vunpack.c.l.b16 %v9353
  %v9400 = vunpack.c.l.b16 %v9354
  %v9401 = vunpack.c.l.b16 %v9355
  %v9402 = vunpack.c.l.b16 %v9356
  %v9403 = vunpack.c.l.b16 %v9357
  %v9404 = vunpack.c.l.b16 %v9358
  %v9405 = vunpack.c.l.b16 %v9359
  %v9406 = vunpack.c.l.b16 %v9360
  %v9407 = vunpack.c.l.b16 %v9361
  %v9408 = vunpack.c.l.b16 %v9362
  %v9409 = vunpack.c.l.b16 %v9363
  %v9410 = vunpack.c.l.b16 %v9364
  %v9411 = vunpack.c.l.b16 %v9365
  %v9412 = vunpack.c.l.b16 %v9366
  %v9413 = vunpack.c.l.b16 %v9367
  %v9414 = vunpack.c.l.b16 %v9368
  %v9415 = vunpack.c.l.b16 %v9369
  %v9416 = vunpack.c.l.b16 %v9370
  %v9417 = vpack.c.b16 %v9395, %v9394
  %v9418 = vpack.c.b16 %v9397, %v9396
  %v9419 = vpack.c.b16 %v9399, %v9398
  %v9420 = vpack.c.b16 %v9401, %v9400
  %v9421 = vpack.c.b16 %v9403, %v9402
  %v9422 = vpack.c.b16 %v9405, %v9404
  %v9423 = vpack.c.b16 %v9407, %v9406
  %v9424 = vpack.c.b16 %v9409, %v9408
  %v9425 = vpack.c.b16 %v9411, %v9410
  %v9426 = vpack.c.b16 %v9413, %v9412
  %v9427 = vpack.c.b16 %v9415, %v9414
  %v9428 = vpack.c.b16 %v9416, %v9416
  %v9441 = vsel %vm9082, %v9346, 0
  %v9444 = vsel %vm9086, %v9428, 0
  %9446 = vmatpush.bf16.msra.mxu0 %v9424
  %9447 = vmatpush.bf16.msra.mxu0 %v9423
  %9448 = vmatpush.bf16.msra.mxu0 %v9422
  %9449 = vmatpush.bf16.msra.mxu0 %v9421
  %9450 = vmatpush.bf16.msra.mxu0 %v9420
  %9451 = vmatpush.bf16.msra.mxu0 %v9419
  %9452 = vmatpush.bf16.msra.mxu0 %v9418
  %9453 = vmatpush.bf16.msra.mxu0 %v9417
  %9454 = vmatmul.bf16.gmra.mxu0 %v9345
  %v9455 = vpop.f32.mrf.mxu0
  %v9456 = vadd.f32 0.0, %v9455
  %v9457 = vpop.f32.mrf.mxu0
  %9458 = vdwg.mxu0
  %9459 = vmatpush.bf16.msra.mxu0 0
  %9460 = vmatpush.bf16.msra.mxu0 0
  %9461 = vmatpush.bf16.msra.mxu0 0
  %9462 = vmatpush.bf16.msra.mxu0 0
  %9463 = vmatpush.bf16.msra.mxu0 %v9444
  %9464 = vmatpush.bf16.msra.mxu0 %v9427
  %9465 = vmatpush.bf16.msra.mxu0 %v9426
  %9466 = vmatpush.bf16.msra.mxu0 %v9425
  %9467 = vmatmul.bf16.gmra.mxu0 %v9441
  %v9468 = vpop.f32.mrf.mxu0
  %v9469 = vadd.f32 %v9456, %v9468
  %v9470 = vpop.f32.mrf.mxu0
  %9471 = vdwg.mxu0
  %v9472 = vadd.f32 %v9344, %v9469
  %v9473 = vpack.c.bf16 %v8952, %v8952
  %v9474 = vpack.c.bf16 %v8953, %v8953
  %s9475 = scalar_lea.vmem %s5, 368
  %v9476 = vld [vmem:[%s9475] sm:$0xf]
  %v9477 = vld [vmem:[%s9475 + $0x4] sm:$0xf]
  %v9478 = vld [vmem:[%s9475 + $0x8] sm:$0xf]
  %v9479 = vld [vmem:[%s9475 + $0xc] sm:$0xf]
  %v9480 = vld [vmem:[%s9475 + $0x10] sm:$0xf]
  %v9481 = vld [vmem:[%s9475 + $0x14] sm:$0xf]
  %v9482 = vld [vmem:[%s9475 + $0x18] sm:$0xf]
  %v9483 = vld [vmem:[%s9475 + $0x1c] sm:$0xf]
  %v9484 = vld [vmem:[%s9475 + $0x20] sm:$0xf]
  %v9485 = vld [vmem:[%s9475 + $0x24] sm:$0xf]
  %v9486 = vld [vmem:[%s9475 + $0x28] sm:$0xf]
  %v9487 = vld [vmem:[%s9475 + $0x2c] sm:$0xf]
  %v9488 = vld [vmem:[%s9475 + $0x30] sm:$0xf]
  %v9489 = vld [vmem:[%s9475 + $0x34] sm:$0xf]
  %v9490 = vld [vmem:[%s9475 + $0x38] sm:$0xf]
  %v9491 = vld [vmem:[%s9475 + $0x3c] sm:$0xf]
  %v9492 = vld [vmem:[%s9475 + $0x40] sm:$0xf]
  %v9493 = vld [vmem:[%s9475 + $0x44] sm:$0xf]
  %v9494 = vld [vmem:[%s9475 + $0x48] sm:$0xf]
  %v9495 = vld [vmem:[%s9475 + $0x4c] sm:$0xf]
  %v9496 = vld [vmem:[%s9475 + $0x50] sm:$0xf]
  %v9497 = vld [vmem:[%s9475 + $0x54] sm:$0xf]
  %v9498 = vld [vmem:[%s9475 + $0x58] sm:$0x3]
  %v9522 = vunpack.c.l.b16 %v9476
  %v9523 = vunpack.c.l.b16 %v9477
  %v9524 = vunpack.c.l.b16 %v9478
  %v9525 = vunpack.c.l.b16 %v9479
  %v9526 = vunpack.c.l.b16 %v9480
  %v9527 = vunpack.c.l.b16 %v9481
  %v9528 = vunpack.c.l.b16 %v9482
  %v9529 = vunpack.c.l.b16 %v9483
  %v9530 = vunpack.c.l.b16 %v9484
  %v9531 = vunpack.c.l.b16 %v9485
  %v9532 = vunpack.c.l.b16 %v9486
  %v9533 = vunpack.c.l.b16 %v9487
  %v9534 = vunpack.c.l.b16 %v9488
  %v9535 = vunpack.c.l.b16 %v9489
  %v9536 = vunpack.c.l.b16 %v9490
  %v9537 = vunpack.c.l.b16 %v9491
  %v9538 = vunpack.c.l.b16 %v9492
  %v9539 = vunpack.c.l.b16 %v9493
  %v9540 = vunpack.c.l.b16 %v9494
  %v9541 = vunpack.c.l.b16 %v9495
  %v9542 = vunpack.c.l.b16 %v9496
  %v9543 = vunpack.c.l.b16 %v9497
  %v9544 = vunpack.c.l.b16 %v9498
  %v9545 = vpack.c.b16 %v9523, %v9522
  %v9546 = vpack.c.b16 %v9525, %v9524
  %v9547 = vpack.c.b16 %v9527, %v9526
  %v9548 = vpack.c.b16 %v9529, %v9528
  %v9549 = vpack.c.b16 %v9531, %v9530
  %v9550 = vpack.c.b16 %v9533, %v9532
  %v9551 = vpack.c.b16 %v9535, %v9534
  %v9552 = vpack.c.b16 %v9537, %v9536
  %v9553 = vpack.c.b16 %v9539, %v9538
  %v9554 = vpack.c.b16 %v9541, %v9540
  %v9555 = vpack.c.b16 %v9543, %v9542
  %v9556 = vpack.c.b16 %v9544, %v9544
  %v9569 = vsel %vm9082, %v9474, 0
  %v9572 = vsel %vm9086, %v9556, 0
  %9574 = vmatpush.bf16.msra.mxu0 %v9552
  %9575 = vmatpush.bf16.msra.mxu0 %v9551
  %9576 = vmatpush.bf16.msra.mxu0 %v9550
  %9577 = vmatpush.bf16.msra.mxu0 %v9549
  %9578 = vmatpush.bf16.msra.mxu0 %v9548
  %9579 = vmatpush.bf16.msra.mxu0 %v9547
  %9580 = vmatpush.bf16.msra.mxu0 %v9546
  %9581 = vmatpush.bf16.msra.mxu0 %v9545
  %9582 = vmatmul.bf16.gmra.mxu0 %v9473
  %v9583 = vpop.f32.mrf.mxu0
  %v9584 = vadd.f32 0.0, %v9583
  %v9585 = vpop.f32.mrf.mxu0
  %9586 = vdwg.mxu0
  %9587 = vmatpush.bf16.msra.mxu0 0
  %9588 = vmatpush.bf16.msra.mxu0 0
  %9589 = vmatpush.bf16.msra.mxu0 0
  %9590 = vmatpush.bf16.msra.mxu0 0
  %9591 = vmatpush.bf16.msra.mxu0 %v9572
  %9592 = vmatpush.bf16.msra.mxu0 %v9555
  %9593 = vmatpush.bf16.msra.mxu0 %v9554
  %9594 = vmatpush.bf16.msra.mxu0 %v9553
  %9595 = vmatmul.bf16.gmra.mxu0 %v9569
  %v9596 = vpop.f32.mrf.mxu0
  %v9597 = vadd.f32 %v9584, %v9596
  %v9598 = vpop.f32.mrf.mxu0
  %9599 = vdwg.mxu0
  %v9600 = vadd.f32 %v9472, %v9597
  %v9601 = vpack.c.bf16 %v8954, %v8954
  %v9602 = vpack.c.bf16 %v8955, %v8955
  %s9603 = scalar_lea.vmem %s5, 460
  %v9604 = vld [vmem:[%s9603] sm:$0xf]
  %v9605 = vld [vmem:[%s9603 + $0x4] sm:$0xf]
  %v9606 = vld [vmem:[%s9603 + $0x8] sm:$0xf]
  %v9607 = vld [vmem:[%s9603 + $0xc] sm:$0xf]
  %v9608 = vld [vmem:[%s9603 + $0x10] sm:$0xf]
  %v9609 = vld [vmem:[%s9603 + $0x14] sm:$0xf]
  %v9610 = vld [vmem:[%s9603 + $0x18] sm:$0xf]
  %v9611 = vld [vmem:[%s9603 + $0x1c] sm:$0xf]
  %v9612 = vld [vmem:[%s9603 + $0x20] sm:$0xf]
  %v9613 = vld [vmem:[%s9603 + $0x24] sm:$0xf]
  %v9614 = vld [vmem:[%s9603 + $0x28] sm:$0xf]
  %v9615 = vld [vmem:[%s9603 + $0x2c] sm:$0xf]
  %v9616 = vld [vmem:[%s9603 + $0x30] sm:$0xf]
  %v9617 = vld [vmem:[%s9603 + $0x34] sm:$0xf]
  %v9618 = vld [vmem:[%s9603 + $0x38] sm:$0xf]
  %v9619 = vld [vmem:[%s9603 + $0x3c] sm:$0xf]
  %v9620 = vld [vmem:[%s9603 + $0x40] sm:$0xf]
  %v9621 = vld [vmem:[%s9603 + $0x44] sm:$0xf]
  %v9622 = vld [vmem:[%s9603 + $0x48] sm:$0xf]
  %v9623 = vld [vmem:[%s9603 + $0x4c] sm:$0xf]
  %v9624 = vld [vmem:[%s9603 + $0x50] sm:$0xf]
  %v9625 = vld [vmem:[%s9603 + $0x54] sm:$0xf]
  %v9626 = vld [vmem:[%s9603 + $0x58] sm:$0x3]
  %v9650 = vunpack.c.l.b16 %v9604
  %v9651 = vunpack.c.l.b16 %v9605
  %v9652 = vunpack.c.l.b16 %v9606
  %v9653 = vunpack.c.l.b16 %v9607
  %v9654 = vunpack.c.l.b16 %v9608
  %v9655 = vunpack.c.l.b16 %v9609
  %v9656 = vunpack.c.l.b16 %v9610
  %v9657 = vunpack.c.l.b16 %v9611
  %v9658 = vunpack.c.l.b16 %v9612
  %v9659 = vunpack.c.l.b16 %v9613
  %v9660 = vunpack.c.l.b16 %v9614
  %v9661 = vunpack.c.l.b16 %v9615
  %v9662 = vunpack.c.l.b16 %v9616
  %v9663 = vunpack.c.l.b16 %v9617
  %v9664 = vunpack.c.l.b16 %v9618
  %v9665 = vunpack.c.l.b16 %v9619
  %v9666 = vunpack.c.l.b16 %v9620
  %v9667 = vunpack.c.l.b16 %v9621
  %v9668 = vunpack.c.l.b16 %v9622
  %v9669 = vunpack.c.l.b16 %v9623
  %v9670 = vunpack.c.l.b16 %v9624
  %v9671 = vunpack.c.l.b16 %v9625
  %v9672 = vunpack.c.l.b16 %v9626
  %v9673 = vpack.c.b16 %v9651, %v9650
  %v9674 = vpack.c.b16 %v9653, %v9652
  %v9675 = vpack.c.b16 %v9655, %v9654
  %v9676 = vpack.c.b16 %v9657, %v9656
  %v9677 = vpack.c.b16 %v9659, %v9658
  %v9678 = vpack.c.b16 %v9661, %v9660
  %v9679 = vpack.c.b16 %v9663, %v9662
  %v9680 = vpack.c.b16 %v9665, %v9664
  %v9681 = vpack.c.b16 %v9667, %v9666
  %v9682 = vpack.c.b16 %v9669, %v9668
  %v9683 = vpack.c.b16 %v9671, %v9670
  %v9684 = vpack.c.b16 %v9672, %v9672
  %v9697 = vsel %vm9082, %v9602, 0
  %v9700 = vsel %vm9086, %v9684, 0
  %9702 = vmatpush.bf16.msra.mxu0 %v9680
  %9703 = vmatpush.bf16.msra.mxu0 %v9679
  %9704 = vmatpush.bf16.msra.mxu0 %v9678
  %9705 = vmatpush.bf16.msra.mxu0 %v9677
  %9706 = vmatpush.bf16.msra.mxu0 %v9676
  %9707 = vmatpush.bf16.msra.mxu0 %v9675
  %9708 = vmatpush.bf16.msra.mxu0 %v9674
  %9709 = vmatpush.bf16.msra.mxu0 %v9673
  %9710 = vmatmul.bf16.gmra.mxu0 %v9601
  %v9711 = vpop.f32.mrf.mxu0
  %v9712 = vadd.f32 0.0, %v9711
  %v9713 = vpop.f32.mrf.mxu0
  %9714 = vdwg.mxu0
  %9715 = vmatpush.bf16.msra.mxu0 0
  %9716 = vmatpush.bf16.msra.mxu0 0
  %9717 = vmatpush.bf16.msra.mxu0 0
  %9718 = vmatpush.bf16.msra.mxu0 0
  %9719 = vmatpush.bf16.msra.mxu0 %v9700
  %9720 = vmatpush.bf16.msra.mxu0 %v9683
  %9721 = vmatpush.bf16.msra.mxu0 %v9682
  %9722 = vmatpush.bf16.msra.mxu0 %v9681
  %9723 = vmatmul.bf16.gmra.mxu0 %v9697
  %v9724 = vpop.f32.mrf.mxu0
  %v9725 = vadd.f32 %v9712, %v9724
  %v9726 = vpop.f32.mrf.mxu0
  %9727 = vdwg.mxu0
  %v9728 = vadd.f32 %v9600, %v9725
  %v9729 = vpack.c.bf16 %v8956, %v8956
  %v9730 = vpack.c.bf16 %v8957, %v8957
  %s9731 = scalar_lea.vmem %s5, 552
  %v9732 = vld [vmem:[%s9731] sm:$0xf]
  %v9733 = vld [vmem:[%s9731 + $0x4] sm:$0xf]
  %v9734 = vld [vmem:[%s9731 + $0x8] sm:$0xf]
  %v9735 = vld [vmem:[%s9731 + $0xc] sm:$0xf]
  %v9736 = vld [vmem:[%s9731 + $0x10] sm:$0xf]
  %v9737 = vld [vmem:[%s9731 + $0x14] sm:$0xf]
  %v9738 = vld [vmem:[%s9731 + $0x18] sm:$0xf]
  %v9739 = vld [vmem:[%s9731 + $0x1c] sm:$0xf]
  %v9740 = vld [vmem:[%s9731 + $0x20] sm:$0xf]
  %v9741 = vld [vmem:[%s9731 + $0x24] sm:$0xf]
  %v9742 = vld [vmem:[%s9731 + $0x28] sm:$0xf]
  %v9743 = vld [vmem:[%s9731 + $0x2c] sm:$0xf]
  %v9744 = vld [vmem:[%s9731 + $0x30] sm:$0xf]
  %v9745 = vld [vmem:[%s9731 + $0x34] sm:$0xf]
  %v9746 = vld [vmem:[%s9731 + $0x38] sm:$0xf]
  %v9747 = vld [vmem:[%s9731 + $0x3c] sm:$0xf]
  %v9748 = vld [vmem:[%s9731 + $0x40] sm:$0xf]
  %v9749 = vld [vmem:[%s9731 + $0x44] sm:$0xf]
  %v9750 = vld [vmem:[%s9731 + $0x48] sm:$0xf]
  %v9751 = vld [vmem:[%s9731 + $0x4c] sm:$0xf]
  %v9752 = vld [vmem:[%s9731 + $0x50] sm:$0xf]
  %v9753 = vld [vmem:[%s9731 + $0x54] sm:$0xf]
  %v9754 = vld [vmem:[%s9731 + $0x58] sm:$0x3]
  %v9778 = vunpack.c.l.b16 %v9732
  %v9779 = vunpack.c.l.b16 %v9733
  %v9780 = vunpack.c.l.b16 %v9734
  %v9781 = vunpack.c.l.b16 %v9735
  %v9782 = vunpack.c.l.b16 %v9736
  %v9783 = vunpack.c.l.b16 %v9737
  %v9784 = vunpack.c.l.b16 %v9738
  %v9785 = vunpack.c.l.b16 %v9739
  %v9786 = vunpack.c.l.b16 %v9740
  %v9787 = vunpack.c.l.b16 %v9741
  %v9788 = vunpack.c.l.b16 %v9742
  %v9789 = vunpack.c.l.b16 %v9743
  %v9790 = vunpack.c.l.b16 %v9744
  %v9791 = vunpack.c.l.b16 %v9745
  %v9792 = vunpack.c.l.b16 %v9746
  %v9793 = vunpack.c.l.b16 %v9747
  %v9794 = vunpack.c.l.b16 %v9748
  %v9795 = vunpack.c.l.b16 %v9749
  %v9796 = vunpack.c.l.b16 %v9750
  %v9797 = vunpack.c.l.b16 %v9751
  %v9798 = vunpack.c.l.b16 %v9752
  %v9799 = vunpack.c.l.b16 %v9753
  %v9800 = vunpack.c.l.b16 %v9754
  %v9801 = vpack.c.b16 %v9779, %v9778
  %v9802 = vpack.c.b16 %v9781, %v9780
  %v9803 = vpack.c.b16 %v9783, %v9782
  %v9804 = vpack.c.b16 %v9785, %v9784
  %v9805 = vpack.c.b16 %v9787, %v9786
  %v9806 = vpack.c.b16 %v9789, %v9788
  %v9807 = vpack.c.b16 %v9791, %v9790
  %v9808 = vpack.c.b16 %v9793, %v9792
  %v9809 = vpack.c.b16 %v9795, %v9794
  %v9810 = vpack.c.b16 %v9797, %v9796
  %v9811 = vpack.c.b16 %v9799, %v9798
  %v9812 = vpack.c.b16 %v9800, %v9800
  %v9825 = vsel %vm9082, %v9730, 0
  %v9828 = vsel %vm9086, %v9812, 0
  %9830 = vmatpush.bf16.msra.mxu0 %v9808
  %9831 = vmatpush.bf16.msra.mxu0 %v9807
  %9832 = vmatpush.bf16.msra.mxu0 %v9806
  %9833 = vmatpush.bf16.msra.mxu0 %v9805
  %9834 = vmatpush.bf16.msra.mxu0 %v9804
  %9835 = vmatpush.bf16.msra.mxu0 %v9803
  %9836 = vmatpush.bf16.msra.mxu0 %v9802
  %9837 = vmatpush.bf16.msra.mxu0 %v9801
  %9838 = vmatmul.bf16.gmra.mxu0 %v9729
  %v9839 = vpop.f32.mrf.mxu0
  %v9840 = vadd.f32 0.0, %v9839
  %v9841 = vpop.f32.mrf.mxu0
  %9842 = vdwg.mxu0
  %9843 = vmatpush.bf16.msra.mxu0 0
  %9844 = vmatpush.bf16.msra.mxu0 0
  %9845 = vmatpush.bf16.msra.mxu0 0
  %9846 = vmatpush.bf16.msra.mxu0 0
  %9847 = vmatpush.bf16.msra.mxu0 %v9828
  %9848 = vmatpush.bf16.msra.mxu0 %v9811
  %9849 = vmatpush.bf16.msra.mxu0 %v9810
  %9850 = vmatpush.bf16.msra.mxu0 %v9809
  %9851 = vmatmul.bf16.gmra.mxu0 %v9825
  %v9852 = vpop.f32.mrf.mxu0
  %v9853 = vadd.f32 %v9840, %v9852
  %v9854 = vpop.f32.mrf.mxu0
  %9855 = vdwg.mxu0
  %v9856 = vadd.f32 %v9728, %v9853
  %v9857 = vpack.c.bf16 %v8958, %v8958
  %v9858 = vpack.c.bf16 %v8959, %v8959
  %s9859 = scalar_lea.vmem %s5, 644
  %v9860 = vld [vmem:[%s9859] sm:$0xf]
  %v9861 = vld [vmem:[%s9859 + $0x4] sm:$0xf]
  %v9862 = vld [vmem:[%s9859 + $0x8] sm:$0xf]
  %v9863 = vld [vmem:[%s9859 + $0xc] sm:$0xf]
  %v9864 = vld [vmem:[%s9859 + $0x10] sm:$0xf]
  %v9865 = vld [vmem:[%s9859 + $0x14] sm:$0xf]
  %v9866 = vld [vmem:[%s9859 + $0x18] sm:$0xf]
  %v9867 = vld [vmem:[%s9859 + $0x1c] sm:$0xf]
  %v9868 = vld [vmem:[%s9859 + $0x20] sm:$0xf]
  %v9869 = vld [vmem:[%s9859 + $0x24] sm:$0xf]
  %v9870 = vld [vmem:[%s9859 + $0x28] sm:$0xf]
  %v9871 = vld [vmem:[%s9859 + $0x2c] sm:$0xf]
  %v9872 = vld [vmem:[%s9859 + $0x30] sm:$0xf]
  %v9873 = vld [vmem:[%s9859 + $0x34] sm:$0xf]
  %v9874 = vld [vmem:[%s9859 + $0x38] sm:$0xf]
  %v9875 = vld [vmem:[%s9859 + $0x3c] sm:$0xf]
  %v9876 = vld [vmem:[%s9859 + $0x40] sm:$0xf]
  %v9877 = vld [vmem:[%s9859 + $0x44] sm:$0xf]
  %v9878 = vld [vmem:[%s9859 + $0x48] sm:$0xf]
  %v9879 = vld [vmem:[%s9859 + $0x4c] sm:$0xf]
  %v9880 = vld [vmem:[%s9859 + $0x50] sm:$0xf]
  %v9881 = vld [vmem:[%s9859 + $0x54] sm:$0xf]
  %v9882 = vld [vmem:[%s9859 + $0x58] sm:$0x3]
  %v9906 = vunpack.c.l.b16 %v9860
  %v9907 = vunpack.c.l.b16 %v9861
  %v9908 = vunpack.c.l.b16 %v9862
  %v9909 = vunpack.c.l.b16 %v9863
  %v9910 = vunpack.c.l.b16 %v9864
  %v9911 = vunpack.c.l.b16 %v9865
  %v9912 = vunpack.c.l.b16 %v9866
  %v9913 = vunpack.c.l.b16 %v9867
  %v9914 = vunpack.c.l.b16 %v9868
  %v9915 = vunpack.c.l.b16 %v9869
  %v9916 = vunpack.c.l.b16 %v9870
  %v9917 = vunpack.c.l.b16 %v9871
  %v9918 = vunpack.c.l.b16 %v9872
  %v9919 = vunpack.c.l.b16 %v9873
  %v9920 = vunpack.c.l.b16 %v9874
  %v9921 = vunpack.c.l.b16 %v9875
  %v9922 = vunpack.c.l.b16 %v9876
  %v9923 = vunpack.c.l.b16 %v9877
  %v9924 = vunpack.c.l.b16 %v9878
  %v9925 = vunpack.c.l.b16 %v9879
  %v9926 = vunpack.c.l.b16 %v9880
  %v9927 = vunpack.c.l.b16 %v9881
  %v9928 = vunpack.c.l.b16 %v9882
  %v9929 = vpack.c.b16 %v9907, %v9906
  %v9930 = vpack.c.b16 %v9909, %v9908
  %v9931 = vpack.c.b16 %v9911, %v9910
  %v9932 = vpack.c.b16 %v9913, %v9912
  %v9933 = vpack.c.b16 %v9915, %v9914
  %v9934 = vpack.c.b16 %v9917, %v9916
  %v9935 = vpack.c.b16 %v9919, %v9918
  %v9936 = vpack.c.b16 %v9921, %v9920
  %v9937 = vpack.c.b16 %v9923, %v9922
  %v9938 = vpack.c.b16 %v9925, %v9924
  %v9939 = vpack.c.b16 %v9927, %v9926
  %v9940 = vpack.c.b16 %v9928, %v9928
  %v9953 = vsel %vm9082, %v9858, 0
  %v9956 = vsel %vm9086, %v9940, 0
  %9958 = vmatpush.bf16.msra.mxu0 %v9936
  %9959 = vmatpush.bf16.msra.mxu0 %v9935
  %9960 = vmatpush.bf16.msra.mxu0 %v9934
  %9961 = vmatpush.bf16.msra.mxu0 %v9933
  %9962 = vmatpush.bf16.msra.mxu0 %v9932
  %9963 = vmatpush.bf16.msra.mxu0 %v9931
  %9964 = vmatpush.bf16.msra.mxu0 %v9930
  %9965 = vmatpush.bf16.msra.mxu0 %v9929
  %9966 = vmatmul.bf16.gmra.mxu0 %v9857
  %v9967 = vpop.f32.mrf.mxu0
  %v9968 = vadd.f32 0.0, %v9967
  %v9969 = vpop.f32.mrf.mxu0
  %9970 = vdwg.mxu0
  %9971 = vmatpush.bf16.msra.mxu0 0
  %9972 = vmatpush.bf16.msra.mxu0 0
  %9973 = vmatpush.bf16.msra.mxu0 0
  %9974 = vmatpush.bf16.msra.mxu0 0
  %9975 = vmatpush.bf16.msra.mxu0 %v9956
  %9976 = vmatpush.bf16.msra.mxu0 %v9939
  %9977 = vmatpush.bf16.msra.mxu0 %v9938
  %9978 = vmatpush.bf16.msra.mxu0 %v9937
  %9979 = vmatmul.bf16.gmra.mxu0 %v9953
  %v9980 = vpop.f32.mrf.mxu0
  %v9981 = vadd.f32 %v9968, %v9980
  %v9982 = vpop.f32.mrf.mxu0
  %9983 = vdwg.mxu0
  %v9984 = vadd.f32 %v9856, %v9981
  %v9985 = vpack.c.bf16 %v8960, %v8960
  %v9986 = vpack.c.bf16 %v8961, %v8961
  %s9987 = scalar_lea.vmem %s5, 736
  %v9988 = vld [vmem:[%s9987] sm:$0xf]
  %v9989 = vld [vmem:[%s9987 + $0x4] sm:$0xf]
  %v9990 = vld [vmem:[%s9987 + $0x8] sm:$0xf]
  %v9991 = vld [vmem:[%s9987 + $0xc] sm:$0xf]
  %v9992 = vld [vmem:[%s9987 + $0x10] sm:$0xf]
  %v9993 = vld [vmem:[%s9987 + $0x14] sm:$0xf]
  %v9994 = vld [vmem:[%s9987 + $0x18] sm:$0xf]
  %v9995 = vld [vmem:[%s9987 + $0x1c] sm:$0xf]
  %v9996 = vld [vmem:[%s9987 + $0x20] sm:$0xf]
  %v9997 = vld [vmem:[%s9987 + $0x24] sm:$0xf]
  %v9998 = vld [vmem:[%s9987 + $0x28] sm:$0xf]
  %v9999 = vld [vmem:[%s9987 + $0x2c] sm:$0xf]
  %v10000 = vld [vmem:[%s9987 + $0x30] sm:$0xf]
  %v10001 = vld [vmem:[%s9987 + $0x34] sm:$0xf]
  %v10002 = vld [vmem:[%s9987 + $0x38] sm:$0xf]
  %v10003 = vld [vmem:[%s9987 + $0x3c] sm:$0xf]
  %v10004 = vld [vmem:[%s9987 + $0x40] sm:$0xf]
  %v10005 = vld [vmem:[%s9987 + $0x44] sm:$0xf]
  %v10006 = vld [vmem:[%s9987 + $0x48] sm:$0xf]
  %v10007 = vld [vmem:[%s9987 + $0x4c] sm:$0xf]
  %v10008 = vld [vmem:[%s9987 + $0x50] sm:$0xf]
  %v10009 = vld [vmem:[%s9987 + $0x54] sm:$0xf]
  %v10010 = vld [vmem:[%s9987 + $0x58] sm:$0x3]
  %v10034 = vunpack.c.l.b16 %v9988
  %v10035 = vunpack.c.l.b16 %v9989
  %v10036 = vunpack.c.l.b16 %v9990
  %v10037 = vunpack.c.l.b16 %v9991
  %v10038 = vunpack.c.l.b16 %v9992
  %v10039 = vunpack.c.l.b16 %v9993
  %v10040 = vunpack.c.l.b16 %v9994
  %v10041 = vunpack.c.l.b16 %v9995
  %v10042 = vunpack.c.l.b16 %v9996
  %v10043 = vunpack.c.l.b16 %v9997
  %v10044 = vunpack.c.l.b16 %v9998
  %v10045 = vunpack.c.l.b16 %v9999
  %v10046 = vunpack.c.l.b16 %v10000
  %v10047 = vunpack.c.l.b16 %v10001
  %v10048 = vunpack.c.l.b16 %v10002
  %v10049 = vunpack.c.l.b16 %v10003
  %v10050 = vunpack.c.l.b16 %v10004
  %v10051 = vunpack.c.l.b16 %v10005
  %v10052 = vunpack.c.l.b16 %v10006
  %v10053 = vunpack.c.l.b16 %v10007
  %v10054 = vunpack.c.l.b16 %v10008
  %v10055 = vunpack.c.l.b16 %v10009
  %v10056 = vunpack.c.l.b16 %v10010
  %v10057 = vpack.c.b16 %v10035, %v10034
  %v10058 = vpack.c.b16 %v10037, %v10036
  %v10059 = vpack.c.b16 %v10039, %v10038
  %v10060 = vpack.c.b16 %v10041, %v10040
  %v10061 = vpack.c.b16 %v10043, %v10042
  %v10062 = vpack.c.b16 %v10045, %v10044
  %v10063 = vpack.c.b16 %v10047, %v10046
  %v10064 = vpack.c.b16 %v10049, %v10048
  %v10065 = vpack.c.b16 %v10051, %v10050
  %v10066 = vpack.c.b16 %v10053, %v10052
  %v10067 = vpack.c.b16 %v10055, %v10054
  %v10068 = vpack.c.b16 %v10056, %v10056
  %v10081 = vsel %vm9082, %v9986, 0
  %v10084 = vsel %vm9086, %v10068, 0
  %10086 = vmatpush.bf16.msra.mxu0 %v10064
  %10087 = vmatpush.bf16.msra.mxu0 %v10063
  %10088 = vmatpush.bf16.msra.mxu0 %v10062
  %10089 = vmatpush.bf16.msra.mxu0 %v10061
  %10090 = vmatpush.bf16.msra.mxu0 %v10060
  %10091 = vmatpush.bf16.msra.mxu0 %v10059
  %10092 = vmatpush.bf16.msra.mxu0 %v10058
  %10093 = vmatpush.bf16.msra.mxu0 %v10057
  %10094 = vmatmul.bf16.gmra.mxu0 %v9985
  %v10095 = vpop.f32.mrf.mxu0
  %v10096 = vadd.f32 0.0, %v10095
  %v10097 = vpop.f32.mrf.mxu0
  %10098 = vdwg.mxu0
  %10099 = vmatpush.bf16.msra.mxu0 0
  %10100 = vmatpush.bf16.msra.mxu0 0
  %10101 = vmatpush.bf16.msra.mxu0 0
  %10102 = vmatpush.bf16.msra.mxu0 0
  %10103 = vmatpush.bf16.msra.mxu0 %v10084
  %10104 = vmatpush.bf16.msra.mxu0 %v10067
  %10105 = vmatpush.bf16.msra.mxu0 %v10066
  %10106 = vmatpush.bf16.msra.mxu0 %v10065
  %10107 = vmatmul.bf16.gmra.mxu0 %v10081
  %v10108 = vpop.f32.mrf.mxu0
  %v10109 = vadd.f32 %v10096, %v10108
  %v10110 = vpop.f32.mrf.mxu0
  %10111 = vdwg.mxu0
  %v10112 = vadd.f32 %v9984, %v10109
  %v10113 = vld [vmem:[%s6] sm:$0x1]
  %v10115 = vperm.slane %v10113, 0
  %v10117 = vadd.f32 %v10112, %v10115
  %v10118 = vmax.f32 %v10117, 0.0
  %v10119 = vpack.c.bf16 %v10118, %v10118
  %v10120 = vld [vmem:[%s7] sm:$0xf]
  %v10121 = vld [vmem:[%s7 + $0x4] sm:$0xf]
  %v10122 = vld [vmem:[%s7 + $0x8] sm:$0xf]
  %v10123 = vld [vmem:[%s7 + $0xc] sm:$0xf]
  %v10124 = vld [vmem:[%s7 + $0x10] sm:$0xf]
  %v10125 = vld [vmem:[%s7 + $0x14] sm:$0xf]
  %v10126 = vld [vmem:[%s7 + $0x18] sm:$0x1]
  %v10127 = vld [vmem:[%s8] sm:$0x1]
  %v10129 = vperm.slane %v10127, 0
  %v10138 = vunpack.c.l.b16 %v10120
  %v10139 = vunpack.c.l.b16 %v10121
  %v10140 = vunpack.c.l.b16 %v10122
  %v10141 = vunpack.c.l.b16 %v10123
  %v10142 = vunpack.c.l.b16 %v10124
  %v10143 = vunpack.c.l.b16 %v10125
  %v10144 = vunpack.c.l.b16 %v10126
  %v10145 = vpack.c.b16 %v10139, %v10138
  %v10146 = vpack.c.b16 %v10141, %v10140
  %v10147 = vpack.c.b16 %v10143, %v10142
  %v10148 = vpack.c.b16 %v10144, %v10144
  %vm10152 = vcmask 408576
  %v10154 = vsel %vm10152, %v10119, 0
  %vm10156 = vcmask 1040384
  %v10158 = vsel %vm10156, %v10148, 0
  %10160 = vmatpush.bf16.msra.mxu0 0
  %10161 = vmatpush.bf16.msra.mxu0 0
  %10162 = vmatpush.bf16.msra.mxu0 0
  %10163 = vmatpush.bf16.msra.mxu0 0
  %10164 = vmatpush.bf16.msra.mxu0 %v10158
  %10165 = vmatpush.bf16.msra.mxu0 %v10147
  %10166 = vmatpush.bf16.msra.mxu0 %v10146
  %10167 = vmatpush.bf16.msra.mxu0 %v10145
  %10168 = vmatmul.bf16.gmra.mxu0 %v10154
  %v10169 = vpop.f32.mrf.mxu0
  %v10170 = vadd.f32 %v10129, %v10169
  %v10171 = vpop.f32.mrf.mxu0
  %10172 = vdwg.mxu0
  %vm10173 = vcmask 56320
  %10174 = vst.msk [vmem:[%s9] sm:$0xff] %vm10173, %v10170
  // Predicated region
  $region38: #{net_forward.1} parent=0 // pred_check
    _
  $region39: #{net_forward.1} parent=0 // pred_check_branch
    %10176 = sbr.rel (0) target = $region41
  $region40: #{net_forward.1} parent=0 // pred_region
    _
  $region41: #{net_forward.1} parent=0 // pred_fallthru
    _
  // Predicated region
  $region42: #{net_forward.1} parent=0 // pred_check
    _
  $region43: #{net_forward.1} parent=0 // pred_check_branch
    %10178 = sbr.rel (0) target = $region45
  $region44: #{net_forward.1} parent=0 // pred_region
    _
  $region45: #{net_forward.1} parent=0 // pred_fallthru
    _

</llo_original>
